<compile_context>
chip_gen: v7x
topology: tpu7x:2x2x1
jax: 0.10.0
libtpu: 0.0.40
codegen_flags: <defaults>
</compile_context>

<pallas_src>
import jax
import jax.numpy as jnp
from jax import lax
from jax.experimental import pallas as pl
from jax.experimental.pallas import tpu as pltpu
from jax.scipy.special import erf

# ---------------- small BART-like config ----------------
D_MODEL = 32
N_HEADS = 4
HEAD_DIM = D_MODEL // N_HEADS
FFN_DIM = 64
N_LAYERS = 2
VOCAB = 50
PAD_IDX = 1
MAX_POS = 16
LN_EPS = 1e-5
SCALING = HEAD_DIM ** -0.5


# ---------------- in-kernel helpers (traced inside the fused kernel) ----------------
def _matmul_t(x, w):
    # x @ w.T with f32 accumulation on the MXU  (PyTorch Linear stores weight as (out, in))
    return lax.dot_general(x, w, (((1,), (1,)), ((), ())),
                           preferred_element_type=jnp.float32)


def _layernorm(x, g, b):
    # biased-variance LayerNorm, like torch.nn.LayerNorm
    mean = jnp.mean(x, axis=-1, keepdims=True)
    xc = x - mean
    var = jnp.mean(xc * xc, axis=-1, keepdims=True)
    return xc * lax.rsqrt(var + LN_EPS) * g + b


def _softmax_lastdim(s):
    s = s - jnp.max(s, axis=-1, keepdims=True)
    e = jnp.exp(s)
    # exact divide kept (vs pl.reciprocal(approx=True)) so the 1e-4 reference check holds
    return e / jnp.sum(e, axis=-1, keepdims=True)


def _mha(q, k, v, add_mask, head_masks):
    # q: (T, D); k, v: (Lk, D); add_mask broadcastable to (T, Lk).
    # Heads are realised with lane masks so every matmul operand stays D_MODEL-lane wide
    # (no 8-lane slices / transposes); per-head outputs assemble by summation.
    out = None
    for m in head_masks:                      # m: (1, D), 1.0 on this head's lanes
        s = _matmul_t(q * m, k) + add_mask    # (T, Lk) per-head scores
        p = _softmax_lastdim(s)
        o = jnp.dot(p, v * m, preferred_element_type=jnp.float32)   # (T, D), head lanes only
        out = o if out is None else out + o
    return out


# ---------------- the fused decoder kernel ----------------
def _decoder_kernel(
        x_ref, enc_ref, causal_ref, cross_ref,
        ln_emb_g_ref, ln_emb_b_ref,
        qkv_w_ref, qkv_b_ref, so_w_ref, so_b_ref, ln1_g_ref, ln1_b_ref,
        xq_w_ref, xq_b_ref, xkv_w_ref, xkv_b_ref, xo_w_ref, xo_b_ref,
        ln2_g_ref, ln2_b_ref,
        fc1_w_ref, fc1_b_ref, fc2_w_ref, fc2_b_ref, ln3_g_ref, ln3_b_ref,
        o_ref):
    D = D_MODEL

    # per-head lane masks, built once per invocation (hoisted out of the layer loop)
    lane = lax.broadcasted_iota(jnp.int32, (1, D), 1)
    head_masks = [
        jnp.logical_and(lane >= h * HEAD_DIM, lane < (h + 1) * HEAD_DIM).astype(jnp.float32)
        for h in range(N_HEADS)
    ]

    causal = causal_ref[...]        # (T, T) additive causal mask
    cross_add = cross_ref[0]        # (1, S) additive encoder key-padding mask (-inf at pads)
    enc = enc_ref[0]                # (S, D) encoder hidden states for this batch element

    # embedding LayerNorm (dropout in eval mode is identity)
    x = _layernorm(x_ref[0], ln_emb_g_ref[...], ln_emb_b_ref[...])   # (T, D)

    for li in range(N_LAYERS):
        # ----- decoder self-attention (causal mask; q-scaling folded into qkv_w) -----
        residual = x
        qkv = _matmul_t(x, qkv_w_ref[li]) + qkv_b_ref[li]            # (T, 3D) lane-dense
        q = qkv[:, 0:D]
        k = qkv[:, D:2 * D]
        v = qkv[:, 2 * D:3 * D]
        a = _mha(q, k, v, causal, head_masks)
        a = _matmul_t(a, so_w_ref[li]) + so_b_ref[li]
        x = _layernorm(residual + a, ln1_g_ref[li], ln1_b_ref[li])

        # ----- encoder-decoder cross-attention (key-padding additive mask) -----
        residual = x
        q = _matmul_t(x, xq_w_ref[li]) + xq_b_ref[li]                # (T, D)
        kv = _matmul_t(enc, xkv_w_ref[li]) + xkv_b_ref[li]           # (S, 2D) fused K/V
        k = kv[:, 0:D]
        v = kv[:, D:2 * D]
        a = _mha(q, k, v, cross_add, head_masks)
        a = _matmul_t(a, xo_w_ref[li]) + xo_b_ref[li]
        x = _layernorm(residual + a, ln2_g_ref[li], ln2_b_ref[li])

        # ----- feed-forward (exact-erf GELU, as F.gelu default) -----
        residual = x
        h = _matmul_t(x, fc1_w_ref[li]) + fc1_b_ref[li]              # (T, F)
        h = 0.5 * h * (1.0 + erf(h * (2.0 ** -0.5)))
        h = _matmul_t(h, fc2_w_ref[li]) + fc2_b_ref[li]              # (T, D)
        x = _layernorm(residual + h, ln3_g_ref[li], ln3_b_ref[li])

    o_ref[0] = x


# ---------------- glue (plain JAX) ----------------
def create_position_ids(input_ids, padding_idx):
    mask = (input_ids != padding_idx).astype(jnp.int32)
    return jnp.cumsum(mask, axis=1) * mask + padding_idx


def pack_params(params):
    """Stack per-layer weights, fuse QKV / cross-KV, and fold the q scaling in."""
    ls = params['layers']

    def stw(name):                                   # (L, out, in)
        return jnp.stack([l[name] for l in ls], axis=0)

    def stb(name):                                   # (L, 1, out)
        return jnp.stack([l[name][None, :] for l in ls], axis=0)

    qkv_w = jnp.stack(
        [jnp.concatenate([l['q_w'] * SCALING, l['k_w'], l['v_w']], axis=0) for l in ls], axis=0)
    qkv_b = jnp.stack(
        [jnp.concatenate([l['q_b'] * SCALING, l['k_b'], l['v_b']], axis=0)[None, :] for l in ls],
        axis=0)
    xkv_w = jnp.stack(
        [jnp.concatenate([l['xk_w'], l['xv_w']], axis=0) for l in ls], axis=0)
    xkv_b = jnp.stack(
        [jnp.concatenate([l['xk_b'], l['xv_b']], axis=0)[None, :] for l in ls], axis=0)
    xq_w = jnp.stack([l['xq_w'] * SCALING for l in ls], axis=0)
    xq_b = jnp.stack([(l['xq_b'] * SCALING)[None, :] for l in ls], axis=0)

    return {
        'embed_tokens': params['embed_tokens'],
        'embed_positions': params['embed_positions'],
        'ln_emb_g': params['ln_emb_g'].reshape(1, D_MODEL),
        'ln_emb_b': params['ln_emb_b'].reshape(1, D_MODEL),
        'qkv_w': qkv_w, 'qkv_b': qkv_b,
        'so_w': stw('o_w'), 'so_b': stb('o_b'),
        'ln1_g': stb('ln1_g'), 'ln1_b': stb('ln1_b'),
        'xq_w': xq_w, 'xq_b': xq_b,
        'xkv_w': xkv_w, 'xkv_b': xkv_b,
        'xo_w': stw('xo_w'), 'xo_b': stb('xo_b'),
        'ln2_g': stb('ln2_g'), 'ln2_b': stb('ln2_b'),
        'fc1_w': stw('fc1_w'), 'fc1_b': stb('fc1_b'),
        'fc2_w': stw('fc2_w'), 'fc2_b': stb('fc2_b'),
        'ln3_g': stb('ln3_g'), 'ln3_b': stb('ln3_b'),
    }


def bart_decoder_forward(packed, input_ids, encoder_hidden_states,
                         encoder_padding_mask, combined_mask):
    B, T = input_ids.shape
    S = encoder_hidden_states.shape[0]
    D, F, L = D_MODEL, FFN_DIM, N_LAYERS

    # encoder_padding_mask transform exactly as in BartDecoder.forward + SelfAttention's
    # masked_fill(-inf): pad positions become an additive -inf, valid positions 0.
    enc_pad_add = (1.0 - encoder_padding_mask.astype(jnp.float32)) * -10000.0        # (B, S)
    cross_add = jnp.where(enc_pad_add != 0.0, -jnp.inf, 0.0).astype(jnp.float32)      # (B, S)
    cross_add = cross_add[:, None, :]                                                 # (B, 1, S)

    # TODO(synk): token/position embedding gathers stay in plain JAX (no tiled-gather win here).
    pos_ids = create_position_ids(input_ids, PAD_IDX)
    x = packed['embed_tokens'][input_ids] + packed['embed_positions'][pos_ids]        # (B, T, D)

    enc = jnp.transpose(encoder_hidden_states, (1, 0, 2))                             # (B, S, D)

    full = lambda shape: pl.BlockSpec(shape, lambda b: (0,) * len(shape))

    out = pl.pallas_call(
        _decoder_kernel,
        out_shape=jax.ShapeDtypeStruct((B, T, D), jnp.float32),
        grid=(B,),
        in_specs=[
            pl.BlockSpec((1, T, D), lambda b: (b, 0, 0)),   # x (token+pos embeddings)
            pl.BlockSpec((1, S, D), lambda b: (b, 0, 0)),   # encoder hidden states
            pl.BlockSpec((T, T), lambda b: (0, 0)),         # causal additive mask
            pl.BlockSpec((1, 1, S), lambda b: (b, 0, 0)),   # cross additive mask
            full((1, D)), full((1, D)),                     # embedding LN gamma/beta
            full((L, 3 * D, D)), full((L, 1, 3 * D)),       # fused QKV (q pre-scaled)
            full((L, D, D)), full((L, 1, D)),               # self out-proj
            full((L, 1, D)), full((L, 1, D)),               # LN1
            full((L, D, D)), full((L, 1, D)),               # cross q (pre-scaled)
            full((L, 2 * D, D)), full((L, 1, 2 * D)),       # fused cross KV
            full((L, D, D)), full((L, 1, D)),               # cross out-proj
            full((L, 1, D)), full((L, 1, D)),               # LN2
            full((L, F, D)), full((L, 1, F)),               # fc1
            full((L, D, F)), full((L, 1, D)),               # fc2
            full((L, 1, D)), full((L, 1, D)),               # LN3
        ],
        out_specs=pl.BlockSpec((1, T, D), lambda b: (b, 0, 0)),
        compiler_params=pltpu.CompilerParams(dimension_semantics=("parallel",)),
    )(x, enc, combined_mask, cross_add,
      packed['ln_emb_g'], packed['ln_emb_b'],
      packed['qkv_w'], packed['qkv_b'], packed['so_w'], packed['so_b'],
      packed['ln1_g'], packed['ln1_b'],
      packed['xq_w'], packed['xq_b'], packed['xkv_w'], packed['xkv_b'],
      packed['xo_w'], packed['xo_b'], packed['ln2_g'], packed['ln2_b'],
      packed['fc1_w'], packed['fc1_b'], packed['fc2_w'], packed['fc2_b'],
      packed['ln3_g'], packed['ln3_b'])

    # (x, next_cache, all_hidden_states, all_self_attns) with output_* flags = False
    return out, None, [], []


# ---------------- parameter init (raw, per layer) ----------------
def init_params(key):
    def lin_init(k, dout, din):
        k1, k2 = jax.random.split(k)
        return (0.02 * jax.random.normal(k1, (dout, din), jnp.float32),
                0.02 * jax.random.normal(k2, (dout,), jnp.float32))

    keys = jax.random.split(key, 2 + N_LAYERS)
    embed_tokens = 0.02 * jax.random.normal(keys[0], (VOCAB, D_MODEL), jnp.float32)
    embed_tokens = embed_tokens.at[PAD_IDX].set(0.0)
    embed_positions = 0.02 * jax.random.normal(
        keys[1], (MAX_POS + PAD_IDX + 1, D_MODEL), jnp.float32)
    embed_positions = embed_positions.at[PAD_IDX].set(0.0)

    params = {
        'embed_tokens': embed_tokens,
        'embed_positions': embed_positions,
        'ln_emb_g': jnp.ones((D_MODEL,), jnp.float32),
        'ln_emb_b': jnp.zeros((D_MODEL,), jnp.float32),
        'layers': [],
    }
    for li in range(N_LAYERS):
        lk = jax.random.split(keys[2 + li], 10)
        layer = {}
        for name, k in zip(['q', 'k', 'v', 'o', 'xq', 'xk', 'xv', 'xo'], lk[:8]):
            w, b = lin_init(k, D_MODEL, D_MODEL)
            layer[name + '_w'] = w
            layer[name + '_b'] = b
        w1, b1 = lin_init(lk[8], FFN_DIM, D_MODEL)
        w2, b2 = lin_init(lk[9], D_MODEL, FFN_DIM)
        layer.update(fc1_w=w1, fc1_b=b1, fc2_w=w2, fc2_b=b2)
        for ln in ['ln1', 'ln2', 'ln3']:
            layer[ln + '_g'] = jnp.ones((D_MODEL,), jnp.float32)
            layer[ln + '_b'] = jnp.zeros((D_MODEL,), jnp.float32)
        params['layers'].append(layer)
    return params


# ---------------- pure-JAX reference (correctness check) ----------------
def ref_forward(params, input_ids, encoder_hidden_states, encoder_padding_mask, combined_mask):
    def ln(x, g, b):
        m = x.mean(-1, keepdims=True)
        v = ((x - m) ** 2).mean(-1, keepdims=True)
        return (x - m) / jnp.sqrt(v + LN_EPS) * g + b

    def linf(x, w, b):
        return x @ w.T + b

    def attn(q, k, v, am, kpm):
        s = jnp.einsum('bhtd,bhsd->bhts', q, k) + am
        if kpm is not None:
            s = jnp.where(kpm[:, None, None, :] > 0.5, -jnp.inf, s)
        p = jax.nn.softmax(s, axis=-1)
        return jnp.einsum('bhts,bhsd->bhtd', p, v)

    B, T = input_ids.shape
    S = encoder_hidden_states.shape[0]
    enc_pad_add = (1.0 - encoder_padding_mask.astype(jnp.float32)) * -10000.0
    kpm = (enc_pad_add != 0.0).astype(jnp.float32)
    pos = create_position_ids(input_ids, PAD_IDX)
    x = params['embed_tokens'][input_ids] + params['embed_positions'][pos]
    x = ln(x, params['ln_emb_g'], params['ln_emb_b'])
    enc = jnp.transpose(encoder_hidden_states, (1, 0, 2))

    def heads(y, L):
        return y.reshape(B, L, N_HEADS, HEAD_DIM).transpose(0, 2, 1, 3)

    for layer in params['layers']:
        r = x
        q = linf(x, layer['q_w'], layer['q_b']) * SCALING
        k = linf(x, layer['k_w'], layer['k_b'])
        v = linf(x, layer['v_w'], layer['v_b'])
        a = attn(heads(q, T), heads(k, T), heads(v, T), combined_mask, None)
        a = a.transpose(0, 2, 1, 3).reshape(B, T, D_MODEL)
        x = ln(r + linf(a, layer['o_w'], layer['o_b']), layer['ln1_g'], layer['ln1_b'])

        r = x
        q = linf(x, layer['xq_w'], layer['xq_b']) * SCALING
        k = linf(enc, layer['xk_w'], layer['xk_b'])
        v = linf(enc, layer['xv_w'], layer['xv_b'])
        a = attn(heads(q, T), heads(k, S), heads(v, S), jnp.zeros((T, S), jnp.float32), kpm)
        a = a.transpose(0, 2, 1, 3).reshape(B, T, D_MODEL)
        x = ln(r + linf(a, layer['xo_w'], layer['xo_b']), layer['ln2_g'], layer['ln2_b'])

        r = x
        h = linf(x, layer['fc1_w'], layer['fc1_b'])
        h = 0.5 * h * (1.0 + erf(h * (2.0 ** -0.5)))
        x = ln(r + linf(h, layer['fc2_w'], layer['fc2_b']), layer['ln3_g'], layer['ln3_b'])
    return x


if __name__ == "__main__":
    key = jax.random.PRNGKey(0)
    kp, ki, ke = jax.random.split(key, 3)
    params = init_params(kp)
    packed = pack_params(params)

    B, T, S = 2, 8, 10
    input_ids = jax.random.randint(ki, (B, T), 0, VOCAB, dtype=jnp.int32)
    input_ids = input_ids.at[0, -2:].set(PAD_IDX)                       # some decoder pad tokens
    encoder_hidden_states = 0.5 * jax.random.normal(ke, (S, B, D_MODEL), jnp.float32)
    encoder_padding_mask = jnp.ones((B, S), jnp.float32).at[0, -3:].set(0.0)
    combined_mask = jnp.triu(jnp.full((T, T), float('-inf'), jnp.float32), k=1)

    fwd = jax.jit(bart_decoder_forward)
    out, _, _, _ = fwd(packed, input_ids, encoder_hidden_states,
                       encoder_padding_mask, combined_mask)
    out = jax.block_until_ready(out)

    ref = ref_forward(params, input_ids, encoder_hidden_states,
                      encoder_padding_mask, combined_mask)
    assert out.shape == (B, T, D_MODEL)
    max_err = float(jnp.max(jnp.abs(out - ref)))
    assert jnp.allclose(out, ref, atol=1e-4, rtol=1e-4), max_err
    print("KERNEL_OK")
</pallas_src>

<mosaic_0001>
module attributes {stable_mosaic.version = 11 : i64} {
  func.func @_decoder_kernel(%arg0: i32, %arg1: memref<1x8x32xf32, #tpu.memory_space<vmem>>, %arg2: memref<1x10x32xf32, #tpu.memory_space<vmem>>, %arg3: memref<8x8xf32, #tpu.memory_space<vmem>>, %arg4: memref<1x1x10xf32, #tpu.memory_space<vmem>>, %arg5: memref<1x32xf32, #tpu.memory_space<vmem>>, %arg6: memref<1x32xf32, #tpu.memory_space<vmem>>, %arg7: memref<2x96x32xf32, #tpu.memory_space<vmem>>, %arg8: memref<2x1x96xf32, #tpu.memory_space<vmem>>, %arg9: memref<2x32x32xf32, #tpu.memory_space<vmem>>, %arg10: memref<2x1x32xf32, #tpu.memory_space<vmem>>, %arg11: memref<2x1x32xf32, #tpu.memory_space<vmem>>, %arg12: memref<2x1x32xf32, #tpu.memory_space<vmem>>, %arg13: memref<2x32x32xf32, #tpu.memory_space<vmem>>, %arg14: memref<2x1x32xf32, #tpu.memory_space<vmem>>, %arg15: memref<2x64x32xf32, #tpu.memory_space<vmem>>, %arg16: memref<2x1x64xf32, #tpu.memory_space<vmem>>, %arg17: memref<2x32x32xf32, #tpu.memory_space<vmem>>, %arg18: memref<2x1x32xf32, #tpu.memory_space<vmem>>, %arg19: memref<2x1x32xf32, #tpu.memory_space<vmem>>, %arg20: memref<2x1x32xf32, #tpu.memory_space<vmem>>, %arg21: memref<2x64x32xf32, #tpu.memory_space<vmem>>, %arg22: memref<2x1x64xf32, #tpu.memory_space<vmem>>, %arg23: memref<2x32x64xf32, #tpu.memory_space<vmem>>, %arg24: memref<2x1x32xf32, #tpu.memory_space<vmem>>, %arg25: memref<2x1x32xf32, #tpu.memory_space<vmem>>, %arg26: memref<2x1x32xf32, #tpu.memory_space<vmem>>, %arg27: memref<1x8x32xf32, #tpu.memory_space<vmem>>) attributes {dimension_semantics = [#tpu.dimension_semantics<parallel>], iteration_bounds = array<i64: 2>, scalar_prefetch = 0 : i64, scratch_operands = 0 : i64, tpu.core_type = #tpu.core_type<tc>, window_params = [{transform_indices = @transform_0, window_bounds = array<i64: 1, 8, 32>}, {transform_indices = @transform_1, window_bounds = array<i64: 1, 10, 32>}, {pipeline_mode = #tpu.pipeline_mode<synchronous>, transform_indices = @transform_2, window_bounds = array<i64: 8, 8>}, {transform_indices = @transform_3, window_bounds = array<i64: 1, 1, 10>}, {pipeline_mode = #tpu.pipeline_mode<synchronous>, transform_indices = @transform_4, window_bounds = array<i64: 1, 32>}, {pipeline_mode = #tpu.pipeline_mode<synchronous>, transform_indices = @transform_5, window_bounds = array<i64: 1, 32>}, {pipeline_mode = #tpu.pipeline_mode<synchronous>, transform_indices = @transform_6, window_bounds = array<i64: 2, 96, 32>}, {pipeline_mode = #tpu.pipeline_mode<synchronous>, transform_indices = @transform_7, window_bounds = array<i64: 2, 1, 96>}, {pipeline_mode = #tpu.pipeline_mode<synchronous>, transform_indices = @transform_8, window_bounds = array<i64: 2, 32, 32>}, {pipeline_mode = #tpu.pipeline_mode<synchronous>, transform_indices = @transform_9, window_bounds = array<i64: 2, 1, 32>}, {pipeline_mode = #tpu.pipeline_mode<synchronous>, transform_indices = @transform_10, window_bounds = array<i64: 2, 1, 32>}, {pipeline_mode = #tpu.pipeline_mode<synchronous>, transform_indices = @transform_11, window_bounds = array<i64: 2, 1, 32>}, {pipeline_mode = #tpu.pipeline_mode<synchronous>, transform_indices = @transform_12, window_bounds = array<i64: 2, 32, 32>}, {pipeline_mode = #tpu.pipeline_mode<synchronous>, transform_indices = @transform_13, window_bounds = array<i64: 2, 1, 32>}, {pipeline_mode = #tpu.pipeline_mode<synchronous>, transform_indices = @transform_14, window_bounds = array<i64: 2, 64, 32>}, {pipeline_mode = #tpu.pipeline_mode<synchronous>, transform_indices = @transform_15, window_bounds = array<i64: 2, 1, 64>}, {pipeline_mode = #tpu.pipeline_mode<synchronous>, transform_indices = @transform_16, window_bounds = array<i64: 2, 32, 32>}, {pipeline_mode = #tpu.pipeline_mode<synchronous>, transform_indices = @transform_17, window_bounds = array<i64: 2, 1, 32>}, {pipeline_mode = #tpu.pipeline_mode<synchronous>, transform_indices = @transform_18, window_bounds = array<i64: 2, 1, 32>}, {pipeline_mode = #tpu.pipeline_mode<synchronous>, transform_indices = @transform_19, window_bounds = array<i64: 2, 1, 32>}, {pipeline_mode = #tpu.pipeline_mode<synchronous>, transform_indices = @transform_20, window_bounds = array<i64: 2, 64, 32>}, {pipeline_mode = #tpu.pipeline_mode<synchronous>, transform_indices = @transform_21, window_bounds = array<i64: 2, 1, 64>}, {pipeline_mode = #tpu.pipeline_mode<synchronous>, transform_indices = @transform_22, window_bounds = array<i64: 2, 32, 64>}, {pipeline_mode = #tpu.pipeline_mode<synchronous>, transform_indices = @transform_23, window_bounds = array<i64: 2, 1, 32>}, {pipeline_mode = #tpu.pipeline_mode<synchronous>, transform_indices = @transform_24, window_bounds = array<i64: 2, 1, 32>}, {pipeline_mode = #tpu.pipeline_mode<synchronous>, transform_indices = @transform_25, window_bounds = array<i64: 2, 1, 32>}, {transform_indices = @transform_26, window_bounds = array<i64: 1, 8, 32>}]} {
    %0 = tpu.iota {dimensions = array<i32: 1>} : vector<1x32xi32>
    %c0_i32 = arith.constant 0 : i32
    %1 = vector.broadcast %c0_i32 : i32 to vector<1x32xi32>
    %2 = arith.cmpi sge, %0, %1 : vector<1x32xi32>
    %c8_i32 = arith.constant 8 : i32
    %3 = vector.broadcast %c8_i32 : i32 to vector<1x32xi32>
    %4 = arith.cmpi slt, %0, %3 : vector<1x32xi32>
    %5 = arith.andi %2, %4 : vector<1x32xi1>
    %6 = arith.extui %5 : vector<1x32xi1> to vector<1x32xi32>
    %7 = arith.sitofp %6 : vector<1x32xi32> to vector<1x32xf32>
    %c8_i32_0 = arith.constant 8 : i32
    %8 = vector.broadcast %c8_i32_0 : i32 to vector<1x32xi32>
    %9 = arith.cmpi sge, %0, %8 : vector<1x32xi32>
    %c16_i32 = arith.constant 16 : i32
    %10 = vector.broadcast %c16_i32 : i32 to vector<1x32xi32>
    %11 = arith.cmpi slt, %0, %10 : vector<1x32xi32>
    %12 = arith.andi %9, %11 : vector<1x32xi1>
    %13 = arith.extui %12 : vector<1x32xi1> to vector<1x32xi32>
    %14 = arith.sitofp %13 : vector<1x32xi32> to vector<1x32xf32>
    %c16_i32_1 = arith.constant 16 : i32
    %15 = vector.broadcast %c16_i32_1 : i32 to vector<1x32xi32>
    %16 = arith.cmpi sge, %0, %15 : vector<1x32xi32>
    %c24_i32 = arith.constant 24 : i32
    %17 = vector.broadcast %c24_i32 : i32 to vector<1x32xi32>
    %18 = arith.cmpi slt, %0, %17 : vector<1x32xi32>
    %19 = arith.andi %16, %18 : vector<1x32xi1>
    %20 = arith.extui %19 : vector<1x32xi1> to vector<1x32xi32>
    %21 = arith.sitofp %20 : vector<1x32xi32> to vector<1x32xf32>
    %c24_i32_2 = arith.constant 24 : i32
    %22 = vector.broadcast %c24_i32_2 : i32 to vector<1x32xi32>
    %23 = arith.cmpi sge, %0, %22 : vector<1x32xi32>
    %c32_i32 = arith.constant 32 : i32
    %24 = vector.broadcast %c32_i32 : i32 to vector<1x32xi32>
    %25 = arith.cmpi slt, %0, %24 : vector<1x32xi32>
    %26 = arith.andi %23, %25 : vector<1x32xi1>
    %27 = arith.extui %26 : vector<1x32xi1> to vector<1x32xi32>
    %28 = arith.sitofp %27 : vector<1x32xi32> to vector<1x32xf32>
    %c0 = arith.constant 0 : index
    %c0_3 = arith.constant 0 : index
    %29 = vector.load %arg3[%c0, %c0_3] : memref<8x8xf32, #tpu.memory_space<vmem>>, vector<8x8xf32>
    %c0_4 = arith.constant 0 : index
    %c0_5 = arith.constant 0 : index
    %c0_6 = arith.constant 0 : index
    %30 = vector.load %arg4[%c0_4, %c0_5, %c0_6] : memref<1x1x10xf32, #tpu.memory_space<vmem>>, vector<1x1x10xf32>
    %31 = vector.shape_cast %30 : vector<1x1x10xf32> to vector<1x10xf32>
    %c0_7 = arith.constant 0 : index
    %c0_8 = arith.constant 0 : index
    %c0_9 = arith.constant 0 : index
    %32 = vector.load %arg2[%c0_7, %c0_8, %c0_9] : memref<1x10x32xf32, #tpu.memory_space<vmem>>, vector<1x10x32xf32>
    %33 = vector.shape_cast %32 : vector<1x10x32xf32> to vector<10x32xf32>
    %c0_10 = arith.constant 0 : index
    %c0_11 = arith.constant 0 : index
    %c0_12 = arith.constant 0 : index
    %34 = vector.load %arg1[%c0_10, %c0_11, %c0_12] : memref<1x8x32xf32, #tpu.memory_space<vmem>>, vector<1x8x32xf32>
    %35 = vector.shape_cast %34 : vector<1x8x32xf32> to vector<8x32xf32>
    %c0_13 = arith.constant 0 : index
    %c0_14 = arith.constant 0 : index
    %36 = vector.load %arg5[%c0_13, %c0_14] : memref<1x32xf32, #tpu.memory_space<vmem>>, vector<1x32xf32>
    %c0_15 = arith.constant 0 : index
    %c0_16 = arith.constant 0 : index
    %37 = vector.load %arg6[%c0_15, %c0_16] : memref<1x32xf32, #tpu.memory_space<vmem>>, vector<1x32xf32>
    %cst = arith.constant dense<0.000000e+00> : vector<8xf32>
    %38 = vector.multi_reduction <add>, %35, %cst [1] : vector<8x32xf32> to vector<8xf32>
    %39 = vector.shape_cast %38 : vector<8xf32> to vector<8x1xf32>
    %cst_17 = arith.constant 3.200000e+01 : f32
    %40 = vector.broadcast %cst_17 : f32 to vector<8x1xf32>
    %41 = arith.divf %39, %40 : vector<8x1xf32>
    %42 = vector.broadcast %41 : vector<8x1xf32> to vector<8x32xf32>
    %43 = arith.subf %35, %42 : vector<8x32xf32>
    %44 = arith.mulf %43, %43 : vector<8x32xf32>
    %cst_18 = arith.constant dense<0.000000e+00> : vector<8xf32>
    %45 = vector.multi_reduction <add>, %44, %cst_18 [1] : vector<8x32xf32> to vector<8xf32>
    %46 = vector.shape_cast %45 : vector<8xf32> to vector<8x1xf32>
    %cst_19 = arith.constant 3.200000e+01 : f32
    %47 = vector.broadcast %cst_19 : f32 to vector<8x1xf32>
    %48 = arith.divf %46, %47 : vector<8x1xf32>
    %cst_20 = arith.constant 9.99999974E-6 : f32
    %49 = vector.broadcast %cst_20 : f32 to vector<8x1xf32>
    %50 = arith.addf %48, %49 : vector<8x1xf32>
    %51 = math.rsqrt %50 : vector<8x1xf32>
    %52 = vector.broadcast %51 : vector<8x1xf32> to vector<8x32xf32>
    %53 = arith.mulf %43, %52 : vector<8x32xf32>
    %54 = vector.broadcast %36 : vector<1x32xf32> to vector<8x32xf32>
    %55 = arith.mulf %53, %54 : vector<8x32xf32>
    %56 = vector.broadcast %37 : vector<1x32xf32> to vector<8x32xf32>
    %57 = arith.addf %55, %56 : vector<8x32xf32>
    %c0_21 = arith.constant 0 : index
    %c0_22 = arith.constant 0 : index
    %c0_23 = arith.constant 0 : index
    %58 = vector.load %arg7[%c0_21, %c0_22, %c0_23] : memref<2x96x32xf32, #tpu.memory_space<vmem>>, vector<1x96x32xf32>
    %59 = vector.shape_cast %58 : vector<1x96x32xf32> to vector<96x32xf32>
    %cst_24 = arith.constant dense<0.000000e+00> : vector<8x96xf32>
    %60 = tpu.matmul %57, %59, %cst_24 {dimension_numbers = #tpu.dot_dimension_numbers<[1], [1], [0], [0], [0, 0, 1, 0], [], []>} : vector<8x32xf32>, vector<96x32xf32>, vector<8x96xf32> -> vector<8x96xf32>
    %c0_25 = arith.constant 0 : index
    %c0_26 = arith.constant 0 : index
    %c0_27 = arith.constant 0 : index
    %61 = vector.load %arg8[%c0_25, %c0_26, %c0_27] : memref<2x1x96xf32, #tpu.memory_space<vmem>>, vector<1x1x96xf32>
    %62 = vector.shape_cast %61 : vector<1x1x96xf32> to vector<1x96xf32>
    %63 = vector.broadcast %62 : vector<1x96xf32> to vector<8x96xf32>
    %64 = arith.addf %60, %63 : vector<8x96xf32>
    %65 = vector.extract_strided_slice %64 {offsets = [0, 0], sizes = [8, 32], strides = [1, 1]} : vector<8x96xf32> to vector<8x32xf32>
    %66 = vector.extract_strided_slice %64 {offsets = [0, 32], sizes = [8, 32], strides = [1, 1]} : vector<8x96xf32> to vector<8x32xf32>
    %67 = vector.extract_strided_slice %64 {offsets = [0, 64], sizes = [8, 32], strides = [1, 1]} : vector<8x96xf32> to vector<8x32xf32>
    %68 = vector.broadcast %7 : vector<1x32xf32> to vector<8x32xf32>
    %69 = arith.mulf %65, %68 : vector<8x32xf32>
    %cst_28 = arith.constant dense<0.000000e+00> : vector<8x8xf32>
    %70 = tpu.matmul %69, %66, %cst_28 {dimension_numbers = #tpu.dot_dimension_numbers<[1], [1], [0], [0], [0, 0, 1, 0], [], []>} : vector<8x32xf32>, vector<8x32xf32>, vector<8x8xf32> -> vector<8x8xf32>
    %71 = arith.addf %70, %29 : vector<8x8xf32>
    %cst_29 = arith.constant dense<0xFF800000> : vector<8xf32>
    %72 = vector.multi_reduction <maximumf>, %71, %cst_29 [1] : vector<8x8xf32> to vector<8xf32>
    %73 = vector.shape_cast %72 : vector<8xf32> to vector<8x1xf32>
    %74 = vector.broadcast %73 : vector<8x1xf32> to vector<8x8xf32>
    %75 = arith.subf %71, %74 : vector<8x8xf32>
    %76 = math.exp %75 : vector<8x8xf32>
    %cst_30 = arith.constant dense<0.000000e+00> : vector<8xf32>
    %77 = vector.multi_reduction <add>, %76, %cst_30 [1] : vector<8x8xf32> to vector<8xf32>
    %78 = vector.shape_cast %77 : vector<8xf32> to vector<8x1xf32>
    %79 = vector.broadcast %78 : vector<8x1xf32> to vector<8x8xf32>
    %80 = arith.divf %76, %79 : vector<8x8xf32>
    %81 = vector.broadcast %7 : vector<1x32xf32> to vector<8x32xf32>
    %82 = arith.mulf %67, %81 : vector<8x32xf32>
    %cst_31 = arith.constant dense<0.000000e+00> : vector<8x32xf32>
    %83 = tpu.matmul %80, %82, %cst_31 {dimension_numbers = #tpu.dot_dimension_numbers<[1], [0], [0], [1], [0, 0, 1, 1], [], []>} : vector<8x8xf32>, vector<8x32xf32>, vector<8x32xf32> -> vector<8x32xf32>
    %84 = vector.broadcast %14 : vector<1x32xf32> to vector<8x32xf32>
    %85 = arith.mulf %65, %84 : vector<8x32xf32>
    %cst_32 = arith.constant dense<0.000000e+00> : vector<8x8xf32>
    %86 = tpu.matmul %85, %66, %cst_32 {dimension_numbers = #tpu.dot_dimension_numbers<[1], [1], [0], [0], [0, 0, 1, 0], [], []>} : vector<8x32xf32>, vector<8x32xf32>, vector<8x8xf32> -> vector<8x8xf32>
    %87 = arith.addf %86, %29 : vector<8x8xf32>
    %cst_33 = arith.constant dense<0xFF800000> : vector<8xf32>
    %88 = vector.multi_reduction <maximumf>, %87, %cst_33 [1] : vector<8x8xf32> to vector<8xf32>
    %89 = vector.shape_cast %88 : vector<8xf32> to vector<8x1xf32>
    %90 = vector.broadcast %89 : vector<8x1xf32> to vector<8x8xf32>
    %91 = arith.subf %87, %90 : vector<8x8xf32>
    %92 = math.exp %91 : vector<8x8xf32>
    %cst_34 = arith.constant dense<0.000000e+00> : vector<8xf32>
    %93 = vector.multi_reduction <add>, %92, %cst_34 [1] : vector<8x8xf32> to vector<8xf32>
    %94 = vector.shape_cast %93 : vector<8xf32> to vector<8x1xf32>
    %95 = vector.broadcast %94 : vector<8x1xf32> to vector<8x8xf32>
    %96 = arith.divf %92, %95 : vector<8x8xf32>
    %97 = vector.broadcast %14 : vector<1x32xf32> to vector<8x32xf32>
    %98 = arith.mulf %67, %97 : vector<8x32xf32>
    %cst_35 = arith.constant dense<0.000000e+00> : vector<8x32xf32>
    %99 = tpu.matmul %96, %98, %cst_35 {dimension_numbers = #tpu.dot_dimension_numbers<[1], [0], [0], [1], [0, 0, 1, 1], [], []>} : vector<8x8xf32>, vector<8x32xf32>, vector<8x32xf32> -> vector<8x32xf32>
    %100 = arith.addf %83, %99 : vector<8x32xf32>
    %101 = vector.broadcast %21 : vector<1x32xf32> to vector<8x32xf32>
    %102 = arith.mulf %65, %101 : vector<8x32xf32>
    %cst_36 = arith.constant dense<0.000000e+00> : vector<8x8xf32>
    %103 = tpu.matmul %102, %66, %cst_36 {dimension_numbers = #tpu.dot_dimension_numbers<[1], [1], [0], [0], [0, 0, 1, 0], [], []>} : vector<8x32xf32>, vector<8x32xf32>, vector<8x8xf32> -> vector<8x8xf32>
    %104 = arith.addf %103, %29 : vector<8x8xf32>
    %cst_37 = arith.constant dense<0xFF800000> : vector<8xf32>
    %105 = vector.multi_reduction <maximumf>, %104, %cst_37 [1] : vector<8x8xf32> to vector<8xf32>
    %106 = vector.shape_cast %105 : vector<8xf32> to vector<8x1xf32>
    %107 = vector.broadcast %106 : vector<8x1xf32> to vector<8x8xf32>
    %108 = arith.subf %104, %107 : vector<8x8xf32>
    %109 = math.exp %108 : vector<8x8xf32>
    %cst_38 = arith.constant dense<0.000000e+00> : vector<8xf32>
    %110 = vector.multi_reduction <add>, %109, %cst_38 [1] : vector<8x8xf32> to vector<8xf32>
    %111 = vector.shape_cast %110 : vector<8xf32> to vector<8x1xf32>
    %112 = vector.broadcast %111 : vector<8x1xf32> to vector<8x8xf32>
    %113 = arith.divf %109, %112 : vector<8x8xf32>
    %114 = vector.broadcast %21 : vector<1x32xf32> to vector<8x32xf32>
    %115 = arith.mulf %67, %114 : vector<8x32xf32>
    %cst_39 = arith.constant dense<0.000000e+00> : vector<8x32xf32>
    %116 = tpu.matmul %113, %115, %cst_39 {dimension_numbers = #tpu.dot_dimension_numbers<[1], [0], [0], [1], [0, 0, 1, 1], [], []>} : vector<8x8xf32>, vector<8x32xf32>, vector<8x32xf32> -> vector<8x32xf32>
    %117 = arith.addf %100, %116 : vector<8x32xf32>
    %118 = vector.broadcast %28 : vector<1x32xf32> to vector<8x32xf32>
    %119 = arith.mulf %65, %118 : vector<8x32xf32>
    %cst_40 = arith.constant dense<0.000000e+00> : vector<8x8xf32>
    %120 = tpu.matmul %119, %66, %cst_40 {dimension_numbers = #tpu.dot_dimension_numbers<[1], [1], [0], [0], [0, 0, 1, 0], [], []>} : vector<8x32xf32>, vector<8x32xf32>, vector<8x8xf32> -> vector<8x8xf32>
    %121 = arith.addf %120, %29 : vector<8x8xf32>
    %cst_41 = arith.constant dense<0xFF800000> : vector<8xf32>
    %122 = vector.multi_reduction <maximumf>, %121, %cst_41 [1] : vector<8x8xf32> to vector<8xf32>
    %123 = vector.shape_cast %122 : vector<8xf32> to vector<8x1xf32>
    %124 = vector.broadcast %123 : vector<8x1xf32> to vector<8x8xf32>
    %125 = arith.subf %121, %124 : vector<8x8xf32>
    %126 = math.exp %125 : vector<8x8xf32>
    %cst_42 = arith.constant dense<0.000000e+00> : vector<8xf32>
    %127 = vector.multi_reduction <add>, %126, %cst_42 [1] : vector<8x8xf32> to vector<8xf32>
    %128 = vector.shape_cast %127 : vector<8xf32> to vector<8x1xf32>
    %129 = vector.broadcast %128 : vector<8x1xf32> to vector<8x8xf32>
    %130 = arith.divf %126, %129 : vector<8x8xf32>
    %131 = vector.broadcast %28 : vector<1x32xf32> to vector<8x32xf32>
    %132 = arith.mulf %67, %131 : vector<8x32xf32>
    %cst_43 = arith.constant dense<0.000000e+00> : vector<8x32xf32>
    %133 = tpu.matmul %130, %132, %cst_43 {dimension_numbers = #tpu.dot_dimension_numbers<[1], [0], [0], [1], [0, 0, 1, 1], [], []>} : vector<8x8xf32>, vector<8x32xf32>, vector<8x32xf32> -> vector<8x32xf32>
    %134 = arith.addf %117, %133 : vector<8x32xf32>
    %c0_44 = arith.constant 0 : index
    %c0_45 = arith.constant 0 : index
    %c0_46 = arith.constant 0 : index
    %135 = vector.load %arg9[%c0_44, %c0_45, %c0_46] : memref<2x32x32xf32, #tpu.memory_space<vmem>>, vector<1x32x32xf32>
    %136 = vector.shape_cast %135 : vector<1x32x32xf32> to vector<32x32xf32>
    %cst_47 = arith.constant dense<0.000000e+00> : vector<8x32xf32>
    %137 = tpu.matmul %134, %136, %cst_47 {dimension_numbers = #tpu.dot_dimension_numbers<[1], [1], [0], [0], [0, 0, 1, 0], [], []>} : vector<8x32xf32>, vector<32x32xf32>, vector<8x32xf32> -> vector<8x32xf32>
    %c0_48 = arith.constant 0 : index
    %c0_49 = arith.constant 0 : index
    %c0_50 = arith.constant 0 : index
    %138 = vector.load %arg10[%c0_48, %c0_49, %c0_50] : memref<2x1x32xf32, #tpu.memory_space<vmem>>, vector<1x1x32xf32>
    %139 = vector.shape_cast %138 : vector<1x1x32xf32> to vector<1x32xf32>
    %140 = vector.broadcast %139 : vector<1x32xf32> to vector<8x32xf32>
    %141 = arith.addf %137, %140 : vector<8x32xf32>
    %142 = arith.addf %57, %141 : vector<8x32xf32>
    %c0_51 = arith.constant 0 : index
    %c0_52 = arith.constant 0 : index
    %c0_53 = arith.constant 0 : index
    %143 = vector.load %arg11[%c0_51, %c0_52, %c0_53] : memref<2x1x32xf32, #tpu.memory_space<vmem>>, vector<1x1x32xf32>
    %144 = vector.shape_cast %143 : vector<1x1x32xf32> to vector<1x32xf32>
    %c0_54 = arith.constant 0 : index
    %c0_55 = arith.constant 0 : index
    %c0_56 = arith.constant 0 : index
    %145 = vector.load %arg12[%c0_54, %c0_55, %c0_56] : memref<2x1x32xf32, #tpu.memory_space<vmem>>, vector<1x1x32xf32>
    %146 = vector.shape_cast %145 : vector<1x1x32xf32> to vector<1x32xf32>
    %cst_57 = arith.constant dense<0.000000e+00> : vector<8xf32>
    %147 = vector.multi_reduction <add>, %142, %cst_57 [1] : vector<8x32xf32> to vector<8xf32>
    %148 = vector.shape_cast %147 : vector<8xf32> to vector<8x1xf32>
    %cst_58 = arith.constant 3.200000e+01 : f32
    %149 = vector.broadcast %cst_58 : f32 to vector<8x1xf32>
    %150 = arith.divf %148, %149 : vector<8x1xf32>
    %151 = vector.broadcast %150 : vector<8x1xf32> to vector<8x32xf32>
    %152 = arith.subf %142, %151 : vector<8x32xf32>
    %153 = arith.mulf %152, %152 : vector<8x32xf32>
    %cst_59 = arith.constant dense<0.000000e+00> : vector<8xf32>
    %154 = vector.multi_reduction <add>, %153, %cst_59 [1] : vector<8x32xf32> to vector<8xf32>
    %155 = vector.shape_cast %154 : vector<8xf32> to vector<8x1xf32>
    %cst_60 = arith.constant 3.200000e+01 : f32
    %156 = vector.broadcast %cst_60 : f32 to vector<8x1xf32>
    %157 = arith.divf %155, %156 : vector<8x1xf32>
    %cst_61 = arith.constant 9.99999974E-6 : f32
    %158 = vector.broadcast %cst_61 : f32 to vector<8x1xf32>
    %159 = arith.addf %157, %158 : vector<8x1xf32>
    %160 = math.rsqrt %159 : vector<8x1xf32>
    %161 = vector.broadcast %160 : vector<8x1xf32> to vector<8x32xf32>
    %162 = arith.mulf %152, %161 : vector<8x32xf32>
    %163 = vector.broadcast %144 : vector<1x32xf32> to vector<8x32xf32>
    %164 = arith.mulf %162, %163 : vector<8x32xf32>
    %165 = vector.broadcast %146 : vector<1x32xf32> to vector<8x32xf32>
    %166 = arith.addf %164, %165 : vector<8x32xf32>
    %c0_62 = arith.constant 0 : index
    %c0_63 = arith.constant 0 : index
    %c0_64 = arith.constant 0 : index
    %167 = vector.load %arg13[%c0_62, %c0_63, %c0_64] : memref<2x32x32xf32, #tpu.memory_space<vmem>>, vector<1x32x32xf32>
    %168 = vector.shape_cast %167 : vector<1x32x32xf32> to vector<32x32xf32>
    %cst_65 = arith.constant dense<0.000000e+00> : vector<8x32xf32>
    %169 = tpu.matmul %166, %168, %cst_65 {dimension_numbers = #tpu.dot_dimension_numbers<[1], [1], [0], [0], [0, 0, 1, 0], [], []>} : vector<8x32xf32>, vector<32x32xf32>, vector<8x32xf32> -> vector<8x32xf32>
    %c0_66 = arith.constant 0 : index
    %c0_67 = arith.constant 0 : index
    %c0_68 = arith.constant 0 : index
    %170 = vector.load %arg14[%c0_66, %c0_67, %c0_68] : memref<2x1x32xf32, #tpu.memory_space<vmem>>, vector<1x1x32xf32>
    %171 = vector.shape_cast %170 : vector<1x1x32xf32> to vector<1x32xf32>
    %172 = vector.broadcast %171 : vector<1x32xf32> to vector<8x32xf32>
    %173 = arith.addf %169, %172 : vector<8x32xf32>
    %c0_69 = arith.constant 0 : index
    %c0_70 = arith.constant 0 : index
    %c0_71 = arith.constant 0 : index
    %174 = vector.load %arg15[%c0_69, %c0_70, %c0_71] : memref<2x64x32xf32, #tpu.memory_space<vmem>>, vector<1x64x32xf32>
    %175 = vector.shape_cast %174 : vector<1x64x32xf32> to vector<64x32xf32>
    %cst_72 = arith.constant dense<0.000000e+00> : vector<10x64xf32>
    %176 = tpu.matmul %33, %175, %cst_72 {dimension_numbers = #tpu.dot_dimension_numbers<[1], [1], [0], [0], [0, 0, 1, 0], [], []>} : vector<10x32xf32>, vector<64x32xf32>, vector<10x64xf32> -> vector<10x64xf32>
    %c0_73 = arith.constant 0 : index
    %c0_74 = arith.constant 0 : index
    %c0_75 = arith.constant 0 : index
    %177 = vector.load %arg16[%c0_73, %c0_74, %c0_75] : memref<2x1x64xf32, #tpu.memory_space<vmem>>, vector<1x1x64xf32>
    %178 = vector.shape_cast %177 : vector<1x1x64xf32> to vector<1x64xf32>
    %179 = vector.broadcast %178 : vector<1x64xf32> to vector<10x64xf32>
    %180 = arith.addf %176, %179 : vector<10x64xf32>
    %181 = vector.extract_strided_slice %180 {offsets = [0, 0], sizes = [10, 32], strides = [1, 1]} : vector<10x64xf32> to vector<10x32xf32>
    %182 = vector.extract_strided_slice %180 {offsets = [0, 32], sizes = [10, 32], strides = [1, 1]} : vector<10x64xf32> to vector<10x32xf32>
    %183 = vector.broadcast %7 : vector<1x32xf32> to vector<8x32xf32>
    %184 = arith.mulf %173, %183 : vector<8x32xf32>
    %cst_76 = arith.constant dense<0.000000e+00> : vector<8x10xf32>
    %185 = tpu.matmul %184, %181, %cst_76 {dimension_numbers = #tpu.dot_dimension_numbers<[1], [1], [0], [0], [0, 0, 1, 0], [], []>} : vector<8x32xf32>, vector<10x32xf32>, vector<8x10xf32> -> vector<8x10xf32>
    %186 = vector.broadcast %31 : vector<1x10xf32> to vector<8x10xf32>
    %187 = arith.addf %185, %186 : vector<8x10xf32>
    %cst_77 = arith.constant dense<0xFF800000> : vector<8xf32>
    %188 = vector.multi_reduction <maximumf>, %187, %cst_77 [1] : vector<8x10xf32> to vector<8xf32>
    %189 = vector.shape_cast %188 : vector<8xf32> to vector<8x1xf32>
    %190 = vector.broadcast %189 : vector<8x1xf32> to vector<8x10xf32>
    %191 = arith.subf %187, %190 : vector<8x10xf32>
    %192 = math.exp %191 : vector<8x10xf32>
    %cst_78 = arith.constant dense<0.000000e+00> : vector<8xf32>
    %193 = vector.multi_reduction <add>, %192, %cst_78 [1] : vector<8x10xf32> to vector<8xf32>
    %194 = vector.shape_cast %193 : vector<8xf32> to vector<8x1xf32>
    %195 = vector.broadcast %194 : vector<8x1xf32> to vector<8x10xf32>
    %196 = arith.divf %192, %195 : vector<8x10xf32>
    %197 = vector.broadcast %7 : vector<1x32xf32> to vector<10x32xf32>
    %198 = arith.mulf %182, %197 : vector<10x32xf32>
    %cst_79 = arith.constant dense<0.000000e+00> : vector<8x32xf32>
    %199 = tpu.matmul %196, %198, %cst_79 {dimension_numbers = #tpu.dot_dimension_numbers<[1], [0], [0], [1], [0, 0, 1, 1], [], []>} : vector<8x10xf32>, vector<10x32xf32>, vector<8x32xf32> -> vector<8x32xf32>
    %200 = vector.broadcast %14 : vector<1x32xf32> to vector<8x32xf32>
    %201 = arith.mulf %173, %200 : vector<8x32xf32>
    %cst_80 = arith.constant dense<0.000000e+00> : vector<8x10xf32>
    %202 = tpu.matmul %201, %181, %cst_80 {dimension_numbers = #tpu.dot_dimension_numbers<[1], [1], [0], [0], [0, 0, 1, 0], [], []>} : vector<8x32xf32>, vector<10x32xf32>, vector<8x10xf32> -> vector<8x10xf32>
    %203 = vector.broadcast %31 : vector<1x10xf32> to vector<8x10xf32>
    %204 = arith.addf %202, %203 : vector<8x10xf32>
    %cst_81 = arith.constant dense<0xFF800000> : vector<8xf32>
    %205 = vector.multi_reduction <maximumf>, %204, %cst_81 [1] : vector<8x10xf32> to vector<8xf32>
    %206 = vector.shape_cast %205 : vector<8xf32> to vector<8x1xf32>
    %207 = vector.broadcast %206 : vector<8x1xf32> to vector<8x10xf32>
    %208 = arith.subf %204, %207 : vector<8x10xf32>
    %209 = math.exp %208 : vector<8x10xf32>
    %cst_82 = arith.constant dense<0.000000e+00> : vector<8xf32>
    %210 = vector.multi_reduction <add>, %209, %cst_82 [1] : vector<8x10xf32> to vector<8xf32>
    %211 = vector.shape_cast %210 : vector<8xf32> to vector<8x1xf32>
    %212 = vector.broadcast %211 : vector<8x1xf32> to vector<8x10xf32>
    %213 = arith.divf %209, %212 : vector<8x10xf32>
    %214 = vector.broadcast %14 : vector<1x32xf32> to vector<10x32xf32>
    %215 = arith.mulf %182, %214 : vector<10x32xf32>
    %cst_83 = arith.constant dense<0.000000e+00> : vector<8x32xf32>
    %216 = tpu.matmul %213, %215, %cst_83 {dimension_numbers = #tpu.dot_dimension_numbers<[1], [0], [0], [1], [0, 0, 1, 1], [], []>} : vector<8x10xf32>, vector<10x32xf32>, vector<8x32xf32> -> vector<8x32xf32>
    %217 = arith.addf %199, %216 : vector<8x32xf32>
    %218 = vector.broadcast %21 : vector<1x32xf32> to vector<8x32xf32>
    %219 = arith.mulf %173, %218 : vector<8x32xf32>
    %cst_84 = arith.constant dense<0.000000e+00> : vector<8x10xf32>
    %220 = tpu.matmul %219, %181, %cst_84 {dimension_numbers = #tpu.dot_dimension_numbers<[1], [1], [0], [0], [0, 0, 1, 0], [], []>} : vector<8x32xf32>, vector<10x32xf32>, vector<8x10xf32> -> vector<8x10xf32>
    %221 = vector.broadcast %31 : vector<1x10xf32> to vector<8x10xf32>
    %222 = arith.addf %220, %221 : vector<8x10xf32>
    %cst_85 = arith.constant dense<0xFF800000> : vector<8xf32>
    %223 = vector.multi_reduction <maximumf>, %222, %cst_85 [1] : vector<8x10xf32> to vector<8xf32>
    %224 = vector.shape_cast %223 : vector<8xf32> to vector<8x1xf32>
    %225 = vector.broadcast %224 : vector<8x1xf32> to vector<8x10xf32>
    %226 = arith.subf %222, %225 : vector<8x10xf32>
    %227 = math.exp %226 : vector<8x10xf32>
    %cst_86 = arith.constant dense<0.000000e+00> : vector<8xf32>
    %228 = vector.multi_reduction <add>, %227, %cst_86 [1] : vector<8x10xf32> to vector<8xf32>
    %229 = vector.shape_cast %228 : vector<8xf32> to vector<8x1xf32>
    %230 = vector.broadcast %229 : vector<8x1xf32> to vector<8x10xf32>
    %231 = arith.divf %227, %230 : vector<8x10xf32>
    %232 = vector.broadcast %21 : vector<1x32xf32> to vector<10x32xf32>
    %233 = arith.mulf %182, %232 : vector<10x32xf32>
    %cst_87 = arith.constant dense<0.000000e+00> : vector<8x32xf32>
    %234 = tpu.matmul %231, %233, %cst_87 {dimension_numbers = #tpu.dot_dimension_numbers<[1], [0], [0], [1], [0, 0, 1, 1], [], []>} : vector<8x10xf32>, vector<10x32xf32>, vector<8x32xf32> -> vector<8x32xf32>
    %235 = arith.addf %217, %234 : vector<8x32xf32>
    %236 = vector.broadcast %28 : vector<1x32xf32> to vector<8x32xf32>
    %237 = arith.mulf %173, %236 : vector<8x32xf32>
    %cst_88 = arith.constant dense<0.000000e+00> : vector<8x10xf32>
    %238 = tpu.matmul %237, %181, %cst_88 {dimension_numbers = #tpu.dot_dimension_numbers<[1], [1], [0], [0], [0, 0, 1, 0], [], []>} : vector<8x32xf32>, vector<10x32xf32>, vector<8x10xf32> -> vector<8x10xf32>
    %239 = vector.broadcast %31 : vector<1x10xf32> to vector<8x10xf32>
    %240 = arith.addf %238, %239 : vector<8x10xf32>
    %cst_89 = arith.constant dense<0xFF800000> : vector<8xf32>
    %241 = vector.multi_reduction <maximumf>, %240, %cst_89 [1] : vector<8x10xf32> to vector<8xf32>
    %242 = vector.shape_cast %241 : vector<8xf32> to vector<8x1xf32>
    %243 = vector.broadcast %242 : vector<8x1xf32> to vector<8x10xf32>
    %244 = arith.subf %240, %243 : vector<8x10xf32>
    %245 = math.exp %244 : vector<8x10xf32>
    %cst_90 = arith.constant dense<0.000000e+00> : vector<8xf32>
    %246 = vector.multi_reduction <add>, %245, %cst_90 [1] : vector<8x10xf32> to vector<8xf32>
    %247 = vector.shape_cast %246 : vector<8xf32> to vector<8x1xf32>
    %248 = vector.broadcast %247 : vector<8x1xf32> to vector<8x10xf32>
    %249 = arith.divf %245, %248 : vector<8x10xf32>
    %250 = vector.broadcast %28 : vector<1x32xf32> to vector<10x32xf32>
    %251 = arith.mulf %182, %250 : vector<10x32xf32>
    %cst_91 = arith.constant dense<0.000000e+00> : vector<8x32xf32>
    %252 = tpu.matmul %249, %251, %cst_91 {dimension_numbers = #tpu.dot_dimension_numbers<[1], [0], [0], [1], [0, 0, 1, 1], [], []>} : vector<8x10xf32>, vector<10x32xf32>, vector<8x32xf32> -> vector<8x32xf32>
    %253 = arith.addf %235, %252 : vector<8x32xf32>
    %c0_92 = arith.constant 0 : index
    %c0_93 = arith.constant 0 : index
    %c0_94 = arith.constant 0 : index
    %254 = vector.load %arg17[%c0_92, %c0_93, %c0_94] : memref<2x32x32xf32, #tpu.memory_space<vmem>>, vector<1x32x32xf32>
    %255 = vector.shape_cast %254 : vector<1x32x32xf32> to vector<32x32xf32>
    %cst_95 = arith.constant dense<0.000000e+00> : vector<8x32xf32>
    %256 = tpu.matmul %253, %255, %cst_95 {dimension_numbers = #tpu.dot_dimension_numbers<[1], [1], [0], [0], [0, 0, 1, 0], [], []>} : vector<8x32xf32>, vector<32x32xf32>, vector<8x32xf32> -> vector<8x32xf32>
    %c0_96 = arith.constant 0 : index
    %c0_97 = arith.constant 0 : index
    %c0_98 = arith.constant 0 : index
    %257 = vector.load %arg18[%c0_96, %c0_97, %c0_98] : memref<2x1x32xf32, #tpu.memory_space<vmem>>, vector<1x1x32xf32>
    %258 = vector.shape_cast %257 : vector<1x1x32xf32> to vector<1x32xf32>
    %259 = vector.broadcast %258 : vector<1x32xf32> to vector<8x32xf32>
    %260 = arith.addf %256, %259 : vector<8x32xf32>
    %261 = arith.addf %166, %260 : vector<8x32xf32>
    %c0_99 = arith.constant 0 : index
    %c0_100 = arith.constant 0 : index
    %c0_101 = arith.constant 0 : index
    %262 = vector.load %arg19[%c0_99, %c0_100, %c0_101] : memref<2x1x32xf32, #tpu.memory_space<vmem>>, vector<1x1x32xf32>
    %263 = vector.shape_cast %262 : vector<1x1x32xf32> to vector<1x32xf32>
    %c0_102 = arith.constant 0 : index
    %c0_103 = arith.constant 0 : index
    %c0_104 = arith.constant 0 : index
    %264 = vector.load %arg20[%c0_102, %c0_103, %c0_104] : memref<2x1x32xf32, #tpu.memory_space<vmem>>, vector<1x1x32xf32>
    %265 = vector.shape_cast %264 : vector<1x1x32xf32> to vector<1x32xf32>
    %cst_105 = arith.constant dense<0.000000e+00> : vector<8xf32>
    %266 = vector.multi_reduction <add>, %261, %cst_105 [1] : vector<8x32xf32> to vector<8xf32>
    %267 = vector.shape_cast %266 : vector<8xf32> to vector<8x1xf32>
    %cst_106 = arith.constant 3.200000e+01 : f32
    %268 = vector.broadcast %cst_106 : f32 to vector<8x1xf32>
    %269 = arith.divf %267, %268 : vector<8x1xf32>
    %270 = vector.broadcast %269 : vector<8x1xf32> to vector<8x32xf32>
    %271 = arith.subf %261, %270 : vector<8x32xf32>
    %272 = arith.mulf %271, %271 : vector<8x32xf32>
    %cst_107 = arith.constant dense<0.000000e+00> : vector<8xf32>
    %273 = vector.multi_reduction <add>, %272, %cst_107 [1] : vector<8x32xf32> to vector<8xf32>
    %274 = vector.shape_cast %273 : vector<8xf32> to vector<8x1xf32>
    %cst_108 = arith.constant 3.200000e+01 : f32
    %275 = vector.broadcast %cst_108 : f32 to vector<8x1xf32>
    %276 = arith.divf %274, %275 : vector<8x1xf32>
    %cst_109 = arith.constant 9.99999974E-6 : f32
    %277 = vector.broadcast %cst_109 : f32 to vector<8x1xf32>
    %278 = arith.addf %276, %277 : vector<8x1xf32>
    %279 = math.rsqrt %278 : vector<8x1xf32>
    %280 = vector.broadcast %279 : vector<8x1xf32> to vector<8x32xf32>
    %281 = arith.mulf %271, %280 : vector<8x32xf32>
    %282 = vector.broadcast %263 : vector<1x32xf32> to vector<8x32xf32>
    %283 = arith.mulf %281, %282 : vector<8x32xf32>
    %284 = vector.broadcast %265 : vector<1x32xf32> to vector<8x32xf32>
    %285 = arith.addf %283, %284 : vector<8x32xf32>
    %c0_110 = arith.constant 0 : index
    %c0_111 = arith.constant 0 : index
    %c0_112 = arith.constant 0 : index
    %286 = vector.load %arg21[%c0_110, %c0_111, %c0_112] : memref<2x64x32xf32, #tpu.memory_space<vmem>>, vector<1x64x32xf32>
    %287 = vector.shape_cast %286 : vector<1x64x32xf32> to vector<64x32xf32>
    %cst_113 = arith.constant dense<0.000000e+00> : vector<8x64xf32>
    %288 = tpu.matmul %285, %287, %cst_113 {dimension_numbers = #tpu.dot_dimension_numbers<[1], [1], [0], [0], [0, 0, 1, 0], [], []>} : vector<8x32xf32>, vector<64x32xf32>, vector<8x64xf32> -> vector<8x64xf32>
    %c0_114 = arith.constant 0 : index
    %c0_115 = arith.constant 0 : index
    %c0_116 = arith.constant 0 : index
    %289 = vector.load %arg22[%c0_114, %c0_115, %c0_116] : memref<2x1x64xf32, #tpu.memory_space<vmem>>, vector<1x1x64xf32>
    %290 = vector.shape_cast %289 : vector<1x1x64xf32> to vector<1x64xf32>
    %291 = vector.broadcast %290 : vector<1x64xf32> to vector<8x64xf32>
    %292 = arith.addf %288, %291 : vector<8x64xf32>
    %cst_117 = arith.constant 5.000000e-01 : f32
    %293 = vector.broadcast %cst_117 : f32 to vector<8x64xf32>
    %294 = arith.mulf %293, %292 : vector<8x64xf32>
    %cst_118 = arith.constant 0.707106769 : f32
    %295 = vector.broadcast %cst_118 : f32 to vector<8x64xf32>
    %296 = arith.mulf %292, %295 : vector<8x64xf32>
    %297 = math.erf %296 : vector<8x64xf32>
    %cst_119 = arith.constant 1.000000e+00 : f32
    %298 = vector.broadcast %cst_119 : f32 to vector<8x64xf32>
    %299 = arith.addf %298, %297 : vector<8x64xf32>
    %300 = arith.mulf %294, %299 : vector<8x64xf32>
    %c0_120 = arith.constant 0 : index
    %c0_121 = arith.constant 0 : index
    %c0_122 = arith.constant 0 : index
    %301 = vector.load %arg23[%c0_120, %c0_121, %c0_122] : memref<2x32x64xf32, #tpu.memory_space<vmem>>, vector<1x32x64xf32>
    %302 = vector.shape_cast %301 : vector<1x32x64xf32> to vector<32x64xf32>
    %cst_123 = arith.constant dense<0.000000e+00> : vector<8x32xf32>
    %303 = tpu.matmul %300, %302, %cst_123 {dimension_numbers = #tpu.dot_dimension_numbers<[1], [1], [0], [0], [0, 0, 1, 0], [], []>} : vector<8x64xf32>, vector<32x64xf32>, vector<8x32xf32> -> vector<8x32xf32>
    %c0_124 = arith.constant 0 : index
    %c0_125 = arith.constant 0 : index
    %c0_126 = arith.constant 0 : index
    %304 = vector.load %arg24[%c0_124, %c0_125, %c0_126] : memref<2x1x32xf32, #tpu.memory_space<vmem>>, vector<1x1x32xf32>
    %305 = vector.shape_cast %304 : vector<1x1x32xf32> to vector<1x32xf32>
    %306 = vector.broadcast %305 : vector<1x32xf32> to vector<8x32xf32>
    %307 = arith.addf %303, %306 : vector<8x32xf32>
    %308 = arith.addf %285, %307 : vector<8x32xf32>
    %c0_127 = arith.constant 0 : index
    %c0_128 = arith.constant 0 : index
    %c0_129 = arith.constant 0 : index
    %309 = vector.load %arg25[%c0_127, %c0_128, %c0_129] : memref<2x1x32xf32, #tpu.memory_space<vmem>>, vector<1x1x32xf32>
    %310 = vector.shape_cast %309 : vector<1x1x32xf32> to vector<1x32xf32>
    %c0_130 = arith.constant 0 : index
    %c0_131 = arith.constant 0 : index
    %c0_132 = arith.constant 0 : index
    %311 = vector.load %arg26[%c0_130, %c0_131, %c0_132] : memref<2x1x32xf32, #tpu.memory_space<vmem>>, vector<1x1x32xf32>
    %312 = vector.shape_cast %311 : vector<1x1x32xf32> to vector<1x32xf32>
    %cst_133 = arith.constant dense<0.000000e+00> : vector<8xf32>
    %313 = vector.multi_reduction <add>, %308, %cst_133 [1] : vector<8x32xf32> to vector<8xf32>
    %314 = vector.shape_cast %313 : vector<8xf32> to vector<8x1xf32>
    %cst_134 = arith.constant 3.200000e+01 : f32
    %315 = vector.broadcast %cst_134 : f32 to vector<8x1xf32>
    %316 = arith.divf %314, %315 : vector<8x1xf32>
    %317 = vector.broadcast %316 : vector<8x1xf32> to vector<8x32xf32>
    %318 = arith.subf %308, %317 : vector<8x32xf32>
    %319 = arith.mulf %318, %318 : vector<8x32xf32>
    %cst_135 = arith.constant dense<0.000000e+00> : vector<8xf32>
    %320 = vector.multi_reduction <add>, %319, %cst_135 [1] : vector<8x32xf32> to vector<8xf32>
    %321 = vector.shape_cast %320 : vector<8xf32> to vector<8x1xf32>
    %cst_136 = arith.constant 3.200000e+01 : f32
    %322 = vector.broadcast %cst_136 : f32 to vector<8x1xf32>
    %323 = arith.divf %321, %322 : vector<8x1xf32>
    %cst_137 = arith.constant 9.99999974E-6 : f32
    %324 = vector.broadcast %cst_137 : f32 to vector<8x1xf32>
    %325 = arith.addf %323, %324 : vector<8x1xf32>
    %326 = math.rsqrt %325 : vector<8x1xf32>
    %327 = vector.broadcast %326 : vector<8x1xf32> to vector<8x32xf32>
    %328 = arith.mulf %318, %327 : vector<8x32xf32>
    %329 = vector.broadcast %310 : vector<1x32xf32> to vector<8x32xf32>
    %330 = arith.mulf %328, %329 : vector<8x32xf32>
    %331 = vector.broadcast %312 : vector<1x32xf32> to vector<8x32xf32>
    %332 = arith.addf %330, %331 : vector<8x32xf32>
    %c1 = arith.constant 1 : index
    %c0_138 = arith.constant 0 : index
    %c0_139 = arith.constant 0 : index
    %333 = vector.load %arg7[%c1, %c0_138, %c0_139] : memref<2x96x32xf32, #tpu.memory_space<vmem>>, vector<1x96x32xf32>
    %334 = vector.shape_cast %333 : vector<1x96x32xf32> to vector<96x32xf32>
    %cst_140 = arith.constant dense<0.000000e+00> : vector<8x96xf32>
    %335 = tpu.matmul %332, %334, %cst_140 {dimension_numbers = #tpu.dot_dimension_numbers<[1], [1], [0], [0], [0, 0, 1, 0], [], []>} : vector<8x32xf32>, vector<96x32xf32>, vector<8x96xf32> -> vector<8x96xf32>
    %c1_141 = arith.constant 1 : index
    %c0_142 = arith.constant 0 : index
    %c0_143 = arith.constant 0 : index
    %336 = vector.load %arg8[%c1_141, %c0_142, %c0_143] : memref<2x1x96xf32, #tpu.memory_space<vmem>>, vector<1x1x96xf32>
    %337 = vector.shape_cast %336 : vector<1x1x96xf32> to vector<1x96xf32>
    %338 = vector.broadcast %337 : vector<1x96xf32> to vector<8x96xf32>
    %339 = arith.addf %335, %338 : vector<8x96xf32>
    %340 = vector.extract_strided_slice %339 {offsets = [0, 0], sizes = [8, 32], strides = [1, 1]} : vector<8x96xf32> to vector<8x32xf32>
    %341 = vector.extract_strided_slice %339 {offsets = [0, 32], sizes = [8, 32], strides = [1, 1]} : vector<8x96xf32> to vector<8x32xf32>
    %342 = vector.extract_strided_slice %339 {offsets = [0, 64], sizes = [8, 32], strides = [1, 1]} : vector<8x96xf32> to vector<8x32xf32>
    %343 = vector.broadcast %7 : vector<1x32xf32> to vector<8x32xf32>
    %344 = arith.mulf %340, %343 : vector<8x32xf32>
    %cst_144 = arith.constant dense<0.000000e+00> : vector<8x8xf32>
    %345 = tpu.matmul %344, %341, %cst_144 {dimension_numbers = #tpu.dot_dimension_numbers<[1], [1], [0], [0], [0, 0, 1, 0], [], []>} : vector<8x32xf32>, vector<8x32xf32>, vector<8x8xf32> -> vector<8x8xf32>
    %346 = arith.addf %345, %29 : vector<8x8xf32>
    %cst_145 = arith.constant dense<0xFF800000> : vector<8xf32>
    %347 = vector.multi_reduction <maximumf>, %346, %cst_145 [1] : vector<8x8xf32> to vector<8xf32>
    %348 = vector.shape_cast %347 : vector<8xf32> to vector<8x1xf32>
    %349 = vector.broadcast %348 : vector<8x1xf32> to vector<8x8xf32>
    %350 = arith.subf %346, %349 : vector<8x8xf32>
    %351 = math.exp %350 : vector<8x8xf32>
    %cst_146 = arith.constant dense<0.000000e+00> : vector<8xf32>
    %352 = vector.multi_reduction <add>, %351, %cst_146 [1] : vector<8x8xf32> to vector<8xf32>
    %353 = vector.shape_cast %352 : vector<8xf32> to vector<8x1xf32>
    %354 = vector.broadcast %353 : vector<8x1xf32> to vector<8x8xf32>
    %355 = arith.divf %351, %354 : vector<8x8xf32>
    %356 = vector.broadcast %7 : vector<1x32xf32> to vector<8x32xf32>
    %357 = arith.mulf %342, %356 : vector<8x32xf32>
    %cst_147 = arith.constant dense<0.000000e+00> : vector<8x32xf32>
    %358 = tpu.matmul %355, %357, %cst_147 {dimension_numbers = #tpu.dot_dimension_numbers<[1], [0], [0], [1], [0, 0, 1, 1], [], []>} : vector<8x8xf32>, vector<8x32xf32>, vector<8x32xf32> -> vector<8x32xf32>
    %359 = vector.broadcast %14 : vector<1x32xf32> to vector<8x32xf32>
    %360 = arith.mulf %340, %359 : vector<8x32xf32>
    %cst_148 = arith.constant dense<0.000000e+00> : vector<8x8xf32>
    %361 = tpu.matmul %360, %341, %cst_148 {dimension_numbers = #tpu.dot_dimension_numbers<[1], [1], [0], [0], [0, 0, 1, 0], [], []>} : vector<8x32xf32>, vector<8x32xf32>, vector<8x8xf32> -> vector<8x8xf32>
    %362 = arith.addf %361, %29 : vector<8x8xf32>
    %cst_149 = arith.constant dense<0xFF800000> : vector<8xf32>
    %363 = vector.multi_reduction <maximumf>, %362, %cst_149 [1] : vector<8x8xf32> to vector<8xf32>
    %364 = vector.shape_cast %363 : vector<8xf32> to vector<8x1xf32>
    %365 = vector.broadcast %364 : vector<8x1xf32> to vector<8x8xf32>
    %366 = arith.subf %362, %365 : vector<8x8xf32>
    %367 = math.exp %366 : vector<8x8xf32>
    %cst_150 = arith.constant dense<0.000000e+00> : vector<8xf32>
    %368 = vector.multi_reduction <add>, %367, %cst_150 [1] : vector<8x8xf32> to vector<8xf32>
    %369 = vector.shape_cast %368 : vector<8xf32> to vector<8x1xf32>
    %370 = vector.broadcast %369 : vector<8x1xf32> to vector<8x8xf32>
    %371 = arith.divf %367, %370 : vector<8x8xf32>
    %372 = vector.broadcast %14 : vector<1x32xf32> to vector<8x32xf32>
    %373 = arith.mulf %342, %372 : vector<8x32xf32>
    %cst_151 = arith.constant dense<0.000000e+00> : vector<8x32xf32>
    %374 = tpu.matmul %371, %373, %cst_151 {dimension_numbers = #tpu.dot_dimension_numbers<[1], [0], [0], [1], [0, 0, 1, 1], [], []>} : vector<8x8xf32>, vector<8x32xf32>, vector<8x32xf32> -> vector<8x32xf32>
    %375 = arith.addf %358, %374 : vector<8x32xf32>
    %376 = vector.broadcast %21 : vector<1x32xf32> to vector<8x32xf32>
    %377 = arith.mulf %340, %376 : vector<8x32xf32>
    %cst_152 = arith.constant dense<0.000000e+00> : vector<8x8xf32>
    %378 = tpu.matmul %377, %341, %cst_152 {dimension_numbers = #tpu.dot_dimension_numbers<[1], [1], [0], [0], [0, 0, 1, 0], [], []>} : vector<8x32xf32>, vector<8x32xf32>, vector<8x8xf32> -> vector<8x8xf32>
    %379 = arith.addf %378, %29 : vector<8x8xf32>
    %cst_153 = arith.constant dense<0xFF800000> : vector<8xf32>
    %380 = vector.multi_reduction <maximumf>, %379, %cst_153 [1] : vector<8x8xf32> to vector<8xf32>
    %381 = vector.shape_cast %380 : vector<8xf32> to vector<8x1xf32>
    %382 = vector.broadcast %381 : vector<8x1xf32> to vector<8x8xf32>
    %383 = arith.subf %379, %382 : vector<8x8xf32>
    %384 = math.exp %383 : vector<8x8xf32>
    %cst_154 = arith.constant dense<0.000000e+00> : vector<8xf32>
    %385 = vector.multi_reduction <add>, %384, %cst_154 [1] : vector<8x8xf32> to vector<8xf32>
    %386 = vector.shape_cast %385 : vector<8xf32> to vector<8x1xf32>
    %387 = vector.broadcast %386 : vector<8x1xf32> to vector<8x8xf32>
    %388 = arith.divf %384, %387 : vector<8x8xf32>
    %389 = vector.broadcast %21 : vector<1x32xf32> to vector<8x32xf32>
    %390 = arith.mulf %342, %389 : vector<8x32xf32>
    %cst_155 = arith.constant dense<0.000000e+00> : vector<8x32xf32>
    %391 = tpu.matmul %388, %390, %cst_155 {dimension_numbers = #tpu.dot_dimension_numbers<[1], [0], [0], [1], [0, 0, 1, 1], [], []>} : vector<8x8xf32>, vector<8x32xf32>, vector<8x32xf32> -> vector<8x32xf32>
    %392 = arith.addf %375, %391 : vector<8x32xf32>
    %393 = vector.broadcast %28 : vector<1x32xf32> to vector<8x32xf32>
    %394 = arith.mulf %340, %393 : vector<8x32xf32>
    %cst_156 = arith.constant dense<0.000000e+00> : vector<8x8xf32>
    %395 = tpu.matmul %394, %341, %cst_156 {dimension_numbers = #tpu.dot_dimension_numbers<[1], [1], [0], [0], [0, 0, 1, 0], [], []>} : vector<8x32xf32>, vector<8x32xf32>, vector<8x8xf32> -> vector<8x8xf32>
    %396 = arith.addf %395, %29 : vector<8x8xf32>
    %cst_157 = arith.constant dense<0xFF800000> : vector<8xf32>
    %397 = vector.multi_reduction <maximumf>, %396, %cst_157 [1] : vector<8x8xf32> to vector<8xf32>
    %398 = vector.shape_cast %397 : vector<8xf32> to vector<8x1xf32>
    %399 = vector.broadcast %398 : vector<8x1xf32> to vector<8x8xf32>
    %400 = arith.subf %396, %399 : vector<8x8xf32>
    %401 = math.exp %400 : vector<8x8xf32>
    %cst_158 = arith.constant dense<0.000000e+00> : vector<8xf32>
    %402 = vector.multi_reduction <add>, %401, %cst_158 [1] : vector<8x8xf32> to vector<8xf32>
    %403 = vector.shape_cast %402 : vector<8xf32> to vector<8x1xf32>
    %404 = vector.broadcast %403 : vector<8x1xf32> to vector<8x8xf32>
    %405 = arith.divf %401, %404 : vector<8x8xf32>
    %406 = vector.broadcast %28 : vector<1x32xf32> to vector<8x32xf32>
    %407 = arith.mulf %342, %406 : vector<8x32xf32>
    %cst_159 = arith.constant dense<0.000000e+00> : vector<8x32xf32>
    %408 = tpu.matmul %405, %407, %cst_159 {dimension_numbers = #tpu.dot_dimension_numbers<[1], [0], [0], [1], [0, 0, 1, 1], [], []>} : vector<8x8xf32>, vector<8x32xf32>, vector<8x32xf32> -> vector<8x32xf32>
    %409 = arith.addf %392, %408 : vector<8x32xf32>
    %c1_160 = arith.constant 1 : index
    %c0_161 = arith.constant 0 : index
    %c0_162 = arith.constant 0 : index
    %410 = vector.load %arg9[%c1_160, %c0_161, %c0_162] : memref<2x32x32xf32, #tpu.memory_space<vmem>>, vector<1x32x32xf32>
    %411 = vector.shape_cast %410 : vector<1x32x32xf32> to vector<32x32xf32>
    %cst_163 = arith.constant dense<0.000000e+00> : vector<8x32xf32>
    %412 = tpu.matmul %409, %411, %cst_163 {dimension_numbers = #tpu.dot_dimension_numbers<[1], [1], [0], [0], [0, 0, 1, 0], [], []>} : vector<8x32xf32>, vector<32x32xf32>, vector<8x32xf32> -> vector<8x32xf32>
    %c1_164 = arith.constant 1 : index
    %c0_165 = arith.constant 0 : index
    %c0_166 = arith.constant 0 : index
    %413 = vector.load %arg10[%c1_164, %c0_165, %c0_166] : memref<2x1x32xf32, #tpu.memory_space<vmem>>, vector<1x1x32xf32>
    %414 = vector.shape_cast %413 : vector<1x1x32xf32> to vector<1x32xf32>
    %415 = vector.broadcast %414 : vector<1x32xf32> to vector<8x32xf32>
    %416 = arith.addf %412, %415 : vector<8x32xf32>
    %417 = arith.addf %332, %416 : vector<8x32xf32>
    %c1_167 = arith.constant 1 : index
    %c0_168 = arith.constant 0 : index
    %c0_169 = arith.constant 0 : index
    %418 = vector.load %arg11[%c1_167, %c0_168, %c0_169] : memref<2x1x32xf32, #tpu.memory_space<vmem>>, vector<1x1x32xf32>
    %419 = vector.shape_cast %418 : vector<1x1x32xf32> to vector<1x32xf32>
    %c1_170 = arith.constant 1 : index
    %c0_171 = arith.constant 0 : index
    %c0_172 = arith.constant 0 : index
    %420 = vector.load %arg12[%c1_170, %c0_171, %c0_172] : memref<2x1x32xf32, #tpu.memory_space<vmem>>, vector<1x1x32xf32>
    %421 = vector.shape_cast %420 : vector<1x1x32xf32> to vector<1x32xf32>
    %cst_173 = arith.constant dense<0.000000e+00> : vector<8xf32>
    %422 = vector.multi_reduction <add>, %417, %cst_173 [1] : vector<8x32xf32> to vector<8xf32>
    %423 = vector.shape_cast %422 : vector<8xf32> to vector<8x1xf32>
    %cst_174 = arith.constant 3.200000e+01 : f32
    %424 = vector.broadcast %cst_174 : f32 to vector<8x1xf32>
    %425 = arith.divf %423, %424 : vector<8x1xf32>
    %426 = vector.broadcast %425 : vector<8x1xf32> to vector<8x32xf32>
    %427 = arith.subf %417, %426 : vector<8x32xf32>
    %428 = arith.mulf %427, %427 : vector<8x32xf32>
    %cst_175 = arith.constant dense<0.000000e+00> : vector<8xf32>
    %429 = vector.multi_reduction <add>, %428, %cst_175 [1] : vector<8x32xf32> to vector<8xf32>
    %430 = vector.shape_cast %429 : vector<8xf32> to vector<8x1xf32>
    %cst_176 = arith.constant 3.200000e+01 : f32
    %431 = vector.broadcast %cst_176 : f32 to vector<8x1xf32>
    %432 = arith.divf %430, %431 : vector<8x1xf32>
    %cst_177 = arith.constant 9.99999974E-6 : f32
    %433 = vector.broadcast %cst_177 : f32 to vector<8x1xf32>
    %434 = arith.addf %432, %433 : vector<8x1xf32>
    %435 = math.rsqrt %434 : vector<8x1xf32>
    %436 = vector.broadcast %435 : vector<8x1xf32> to vector<8x32xf32>
    %437 = arith.mulf %427, %436 : vector<8x32xf32>
    %438 = vector.broadcast %419 : vector<1x32xf32> to vector<8x32xf32>
    %439 = arith.mulf %437, %438 : vector<8x32xf32>
    %440 = vector.broadcast %421 : vector<1x32xf32> to vector<8x32xf32>
    %441 = arith.addf %439, %440 : vector<8x32xf32>
    %c1_178 = arith.constant 1 : index
    %c0_179 = arith.constant 0 : index
    %c0_180 = arith.constant 0 : index
    %442 = vector.load %arg13[%c1_178, %c0_179, %c0_180] : memref<2x32x32xf32, #tpu.memory_space<vmem>>, vector<1x32x32xf32>
    %443 = vector.shape_cast %442 : vector<1x32x32xf32> to vector<32x32xf32>
    %cst_181 = arith.constant dense<0.000000e+00> : vector<8x32xf32>
    %444 = tpu.matmul %441, %443, %cst_181 {dimension_numbers = #tpu.dot_dimension_numbers<[1], [1], [0], [0], [0, 0, 1, 0], [], []>} : vector<8x32xf32>, vector<32x32xf32>, vector<8x32xf32> -> vector<8x32xf32>
    %c1_182 = arith.constant 1 : index
    %c0_183 = arith.constant 0 : index
    %c0_184 = arith.constant 0 : index
    %445 = vector.load %arg14[%c1_182, %c0_183, %c0_184] : memref<2x1x32xf32, #tpu.memory_space<vmem>>, vector<1x1x32xf32>
    %446 = vector.shape_cast %445 : vector<1x1x32xf32> to vector<1x32xf32>
    %447 = vector.broadcast %446 : vector<1x32xf32> to vector<8x32xf32>
    %448 = arith.addf %444, %447 : vector<8x32xf32>
    %c1_185 = arith.constant 1 : index
    %c0_186 = arith.constant 0 : index
    %c0_187 = arith.constant 0 : index
    %449 = vector.load %arg15[%c1_185, %c0_186, %c0_187] : memref<2x64x32xf32, #tpu.memory_space<vmem>>, vector<1x64x32xf32>
    %450 = vector.shape_cast %449 : vector<1x64x32xf32> to vector<64x32xf32>
    %cst_188 = arith.constant dense<0.000000e+00> : vector<10x64xf32>
    %451 = tpu.matmul %33, %450, %cst_188 {dimension_numbers = #tpu.dot_dimension_numbers<[1], [1], [0], [0], [0, 0, 1, 0], [], []>} : vector<10x32xf32>, vector<64x32xf32>, vector<10x64xf32> -> vector<10x64xf32>
    %c1_189 = arith.constant 1 : index
    %c0_190 = arith.constant 0 : index
    %c0_191 = arith.constant 0 : index
    %452 = vector.load %arg16[%c1_189, %c0_190, %c0_191] : memref<2x1x64xf32, #tpu.memory_space<vmem>>, vector<1x1x64xf32>
    %453 = vector.shape_cast %452 : vector<1x1x64xf32> to vector<1x64xf32>
    %454 = vector.broadcast %453 : vector<1x64xf32> to vector<10x64xf32>
    %455 = arith.addf %451, %454 : vector<10x64xf32>
    %456 = vector.extract_strided_slice %455 {offsets = [0, 0], sizes = [10, 32], strides = [1, 1]} : vector<10x64xf32> to vector<10x32xf32>
    %457 = vector.extract_strided_slice %455 {offsets = [0, 32], sizes = [10, 32], strides = [1, 1]} : vector<10x64xf32> to vector<10x32xf32>
    %458 = vector.broadcast %7 : vector<1x32xf32> to vector<8x32xf32>
    %459 = arith.mulf %448, %458 : vector<8x32xf32>
    %cst_192 = arith.constant dense<0.000000e+00> : vector<8x10xf32>
    %460 = tpu.matmul %459, %456, %cst_192 {dimension_numbers = #tpu.dot_dimension_numbers<[1], [1], [0], [0], [0, 0, 1, 0], [], []>} : vector<8x32xf32>, vector<10x32xf32>, vector<8x10xf32> -> vector<8x10xf32>
    %461 = vector.broadcast %31 : vector<1x10xf32> to vector<8x10xf32>
    %462 = arith.addf %460, %461 : vector<8x10xf32>
    %cst_193 = arith.constant dense<0xFF800000> : vector<8xf32>
    %463 = vector.multi_reduction <maximumf>, %462, %cst_193 [1] : vector<8x10xf32> to vector<8xf32>
    %464 = vector.shape_cast %463 : vector<8xf32> to vector<8x1xf32>
    %465 = vector.broadcast %464 : vector<8x1xf32> to vector<8x10xf32>
    %466 = arith.subf %462, %465 : vector<8x10xf32>
    %467 = math.exp %466 : vector<8x10xf32>
    %cst_194 = arith.constant dense<0.000000e+00> : vector<8xf32>
    %468 = vector.multi_reduction <add>, %467, %cst_194 [1] : vector<8x10xf32> to vector<8xf32>
    %469 = vector.shape_cast %468 : vector<8xf32> to vector<8x1xf32>
    %470 = vector.broadcast %469 : vector<8x1xf32> to vector<8x10xf32>
    %471 = arith.divf %467, %470 : vector<8x10xf32>
    %472 = vector.broadcast %7 : vector<1x32xf32> to vector<10x32xf32>
    %473 = arith.mulf %457, %472 : vector<10x32xf32>
    %cst_195 = arith.constant dense<0.000000e+00> : vector<8x32xf32>
    %474 = tpu.matmul %471, %473, %cst_195 {dimension_numbers = #tpu.dot_dimension_numbers<[1], [0], [0], [1], [0, 0, 1, 1], [], []>} : vector<8x10xf32>, vector<10x32xf32>, vector<8x32xf32> -> vector<8x32xf32>
    %475 = vector.broadcast %14 : vector<1x32xf32> to vector<8x32xf32>
    %476 = arith.mulf %448, %475 : vector<8x32xf32>
    %cst_196 = arith.constant dense<0.000000e+00> : vector<8x10xf32>
    %477 = tpu.matmul %476, %456, %cst_196 {dimension_numbers = #tpu.dot_dimension_numbers<[1], [1], [0], [0], [0, 0, 1, 0], [], []>} : vector<8x32xf32>, vector<10x32xf32>, vector<8x10xf32> -> vector<8x10xf32>
    %478 = vector.broadcast %31 : vector<1x10xf32> to vector<8x10xf32>
    %479 = arith.addf %477, %478 : vector<8x10xf32>
    %cst_197 = arith.constant dense<0xFF800000> : vector<8xf32>
    %480 = vector.multi_reduction <maximumf>, %479, %cst_197 [1] : vector<8x10xf32> to vector<8xf32>
    %481 = vector.shape_cast %480 : vector<8xf32> to vector<8x1xf32>
    %482 = vector.broadcast %481 : vector<8x1xf32> to vector<8x10xf32>
    %483 = arith.subf %479, %482 : vector<8x10xf32>
    %484 = math.exp %483 : vector<8x10xf32>
    %cst_198 = arith.constant dense<0.000000e+00> : vector<8xf32>
    %485 = vector.multi_reduction <add>, %484, %cst_198 [1] : vector<8x10xf32> to vector<8xf32>
    %486 = vector.shape_cast %485 : vector<8xf32> to vector<8x1xf32>
    %487 = vector.broadcast %486 : vector<8x1xf32> to vector<8x10xf32>
    %488 = arith.divf %484, %487 : vector<8x10xf32>
    %489 = vector.broadcast %14 : vector<1x32xf32> to vector<10x32xf32>
    %490 = arith.mulf %457, %489 : vector<10x32xf32>
    %cst_199 = arith.constant dense<0.000000e+00> : vector<8x32xf32>
    %491 = tpu.matmul %488, %490, %cst_199 {dimension_numbers = #tpu.dot_dimension_numbers<[1], [0], [0], [1], [0, 0, 1, 1], [], []>} : vector<8x10xf32>, vector<10x32xf32>, vector<8x32xf32> -> vector<8x32xf32>
    %492 = arith.addf %474, %491 : vector<8x32xf32>
    %493 = vector.broadcast %21 : vector<1x32xf32> to vector<8x32xf32>
    %494 = arith.mulf %448, %493 : vector<8x32xf32>
    %cst_200 = arith.constant dense<0.000000e+00> : vector<8x10xf32>
    %495 = tpu.matmul %494, %456, %cst_200 {dimension_numbers = #tpu.dot_dimension_numbers<[1], [1], [0], [0], [0, 0, 1, 0], [], []>} : vector<8x32xf32>, vector<10x32xf32>, vector<8x10xf32> -> vector<8x10xf32>
    %496 = vector.broadcast %31 : vector<1x10xf32> to vector<8x10xf32>
    %497 = arith.addf %495, %496 : vector<8x10xf32>
    %cst_201 = arith.constant dense<0xFF800000> : vector<8xf32>
    %498 = vector.multi_reduction <maximumf>, %497, %cst_201 [1] : vector<8x10xf32> to vector<8xf32>
    %499 = vector.shape_cast %498 : vector<8xf32> to vector<8x1xf32>
    %500 = vector.broadcast %499 : vector<8x1xf32> to vector<8x10xf32>
    %501 = arith.subf %497, %500 : vector<8x10xf32>
    %502 = math.exp %501 : vector<8x10xf32>
    %cst_202 = arith.constant dense<0.000000e+00> : vector<8xf32>
    %503 = vector.multi_reduction <add>, %502, %cst_202 [1] : vector<8x10xf32> to vector<8xf32>
    %504 = vector.shape_cast %503 : vector<8xf32> to vector<8x1xf32>
    %505 = vector.broadcast %504 : vector<8x1xf32> to vector<8x10xf32>
    %506 = arith.divf %502, %505 : vector<8x10xf32>
    %507 = vector.broadcast %21 : vector<1x32xf32> to vector<10x32xf32>
    %508 = arith.mulf %457, %507 : vector<10x32xf32>
    %cst_203 = arith.constant dense<0.000000e+00> : vector<8x32xf32>
    %509 = tpu.matmul %506, %508, %cst_203 {dimension_numbers = #tpu.dot_dimension_numbers<[1], [0], [0], [1], [0, 0, 1, 1], [], []>} : vector<8x10xf32>, vector<10x32xf32>, vector<8x32xf32> -> vector<8x32xf32>
    %510 = arith.addf %492, %509 : vector<8x32xf32>
    %511 = vector.broadcast %28 : vector<1x32xf32> to vector<8x32xf32>
    %512 = arith.mulf %448, %511 : vector<8x32xf32>
    %cst_204 = arith.constant dense<0.000000e+00> : vector<8x10xf32>
    %513 = tpu.matmul %512, %456, %cst_204 {dimension_numbers = #tpu.dot_dimension_numbers<[1], [1], [0], [0], [0, 0, 1, 0], [], []>} : vector<8x32xf32>, vector<10x32xf32>, vector<8x10xf32> -> vector<8x10xf32>
    %514 = vector.broadcast %31 : vector<1x10xf32> to vector<8x10xf32>
    %515 = arith.addf %513, %514 : vector<8x10xf32>
    %cst_205 = arith.constant dense<0xFF800000> : vector<8xf32>
    %516 = vector.multi_reduction <maximumf>, %515, %cst_205 [1] : vector<8x10xf32> to vector<8xf32>
    %517 = vector.shape_cast %516 : vector<8xf32> to vector<8x1xf32>
    %518 = vector.broadcast %517 : vector<8x1xf32> to vector<8x10xf32>
    %519 = arith.subf %515, %518 : vector<8x10xf32>
    %520 = math.exp %519 : vector<8x10xf32>
    %cst_206 = arith.constant dense<0.000000e+00> : vector<8xf32>
    %521 = vector.multi_reduction <add>, %520, %cst_206 [1] : vector<8x10xf32> to vector<8xf32>
    %522 = vector.shape_cast %521 : vector<8xf32> to vector<8x1xf32>
    %523 = vector.broadcast %522 : vector<8x1xf32> to vector<8x10xf32>
    %524 = arith.divf %520, %523 : vector<8x10xf32>
    %525 = vector.broadcast %28 : vector<1x32xf32> to vector<10x32xf32>
    %526 = arith.mulf %457, %525 : vector<10x32xf32>
    %cst_207 = arith.constant dense<0.000000e+00> : vector<8x32xf32>
    %527 = tpu.matmul %524, %526, %cst_207 {dimension_numbers = #tpu.dot_dimension_numbers<[1], [0], [0], [1], [0, 0, 1, 1], [], []>} : vector<8x10xf32>, vector<10x32xf32>, vector<8x32xf32> -> vector<8x32xf32>
    %528 = arith.addf %510, %527 : vector<8x32xf32>
    %c1_208 = arith.constant 1 : index
    %c0_209 = arith.constant 0 : index
    %c0_210 = arith.constant 0 : index
    %529 = vector.load %arg17[%c1_208, %c0_209, %c0_210] : memref<2x32x32xf32, #tpu.memory_space<vmem>>, vector<1x32x32xf32>
    %530 = vector.shape_cast %529 : vector<1x32x32xf32> to vector<32x32xf32>
    %cst_211 = arith.constant dense<0.000000e+00> : vector<8x32xf32>
    %531 = tpu.matmul %528, %530, %cst_211 {dimension_numbers = #tpu.dot_dimension_numbers<[1], [1], [0], [0], [0, 0, 1, 0], [], []>} : vector<8x32xf32>, vector<32x32xf32>, vector<8x32xf32> -> vector<8x32xf32>
    %c1_212 = arith.constant 1 : index
    %c0_213 = arith.constant 0 : index
    %c0_214 = arith.constant 0 : index
    %532 = vector.load %arg18[%c1_212, %c0_213, %c0_214] : memref<2x1x32xf32, #tpu.memory_space<vmem>>, vector<1x1x32xf32>
    %533 = vector.shape_cast %532 : vector<1x1x32xf32> to vector<1x32xf32>
    %534 = vector.broadcast %533 : vector<1x32xf32> to vector<8x32xf32>
    %535 = arith.addf %531, %534 : vector<8x32xf32>
    %536 = arith.addf %441, %535 : vector<8x32xf32>
    %c1_215 = arith.constant 1 : index
    %c0_216 = arith.constant 0 : index
    %c0_217 = arith.constant 0 : index
    %537 = vector.load %arg19[%c1_215, %c0_216, %c0_217] : memref<2x1x32xf32, #tpu.memory_space<vmem>>, vector<1x1x32xf32>
    %538 = vector.shape_cast %537 : vector<1x1x32xf32> to vector<1x32xf32>
    %c1_218 = arith.constant 1 : index
    %c0_219 = arith.constant 0 : index
    %c0_220 = arith.constant 0 : index
    %539 = vector.load %arg20[%c1_218, %c0_219, %c0_220] : memref<2x1x32xf32, #tpu.memory_space<vmem>>, vector<1x1x32xf32>
    %540 = vector.shape_cast %539 : vector<1x1x32xf32> to vector<1x32xf32>
    %cst_221 = arith.constant dense<0.000000e+00> : vector<8xf32>
    %541 = vector.multi_reduction <add>, %536, %cst_221 [1] : vector<8x32xf32> to vector<8xf32>
    %542 = vector.shape_cast %541 : vector<8xf32> to vector<8x1xf32>
    %cst_222 = arith.constant 3.200000e+01 : f32
    %543 = vector.broadcast %cst_222 : f32 to vector<8x1xf32>
    %544 = arith.divf %542, %543 : vector<8x1xf32>
    %545 = vector.broadcast %544 : vector<8x1xf32> to vector<8x32xf32>
    %546 = arith.subf %536, %545 : vector<8x32xf32>
    %547 = arith.mulf %546, %546 : vector<8x32xf32>
    %cst_223 = arith.constant dense<0.000000e+00> : vector<8xf32>
    %548 = vector.multi_reduction <add>, %547, %cst_223 [1] : vector<8x32xf32> to vector<8xf32>
    %549 = vector.shape_cast %548 : vector<8xf32> to vector<8x1xf32>
    %cst_224 = arith.constant 3.200000e+01 : f32
    %550 = vector.broadcast %cst_224 : f32 to vector<8x1xf32>
    %551 = arith.divf %549, %550 : vector<8x1xf32>
    %cst_225 = arith.constant 9.99999974E-6 : f32
    %552 = vector.broadcast %cst_225 : f32 to vector<8x1xf32>
    %553 = arith.addf %551, %552 : vector<8x1xf32>
    %554 = math.rsqrt %553 : vector<8x1xf32>
    %555 = vector.broadcast %554 : vector<8x1xf32> to vector<8x32xf32>
    %556 = arith.mulf %546, %555 : vector<8x32xf32>
    %557 = vector.broadcast %538 : vector<1x32xf32> to vector<8x32xf32>
    %558 = arith.mulf %556, %557 : vector<8x32xf32>
    %559 = vector.broadcast %540 : vector<1x32xf32> to vector<8x32xf32>
    %560 = arith.addf %558, %559 : vector<8x32xf32>
    %c1_226 = arith.constant 1 : index
    %c0_227 = arith.constant 0 : index
    %c0_228 = arith.constant 0 : index
    %561 = vector.load %arg21[%c1_226, %c0_227, %c0_228] : memref<2x64x32xf32, #tpu.memory_space<vmem>>, vector<1x64x32xf32>
    %562 = vector.shape_cast %561 : vector<1x64x32xf32> to vector<64x32xf32>
    %cst_229 = arith.constant dense<0.000000e+00> : vector<8x64xf32>
    %563 = tpu.matmul %560, %562, %cst_229 {dimension_numbers = #tpu.dot_dimension_numbers<[1], [1], [0], [0], [0, 0, 1, 0], [], []>} : vector<8x32xf32>, vector<64x32xf32>, vector<8x64xf32> -> vector<8x64xf32>
    %c1_230 = arith.constant 1 : index
    %c0_231 = arith.constant 0 : index
    %c0_232 = arith.constant 0 : index
    %564 = vector.load %arg22[%c1_230, %c0_231, %c0_232] : memref<2x1x64xf32, #tpu.memory_space<vmem>>, vector<1x1x64xf32>
    %565 = vector.shape_cast %564 : vector<1x1x64xf32> to vector<1x64xf32>
    %566 = vector.broadcast %565 : vector<1x64xf32> to vector<8x64xf32>
    %567 = arith.addf %563, %566 : vector<8x64xf32>
    %cst_233 = arith.constant 5.000000e-01 : f32
    %568 = vector.broadcast %cst_233 : f32 to vector<8x64xf32>
    %569 = arith.mulf %568, %567 : vector<8x64xf32>
    %cst_234 = arith.constant 0.707106769 : f32
    %570 = vector.broadcast %cst_234 : f32 to vector<8x64xf32>
    %571 = arith.mulf %567, %570 : vector<8x64xf32>
    %572 = math.erf %571 : vector<8x64xf32>
    %cst_235 = arith.constant 1.000000e+00 : f32
    %573 = vector.broadcast %cst_235 : f32 to vector<8x64xf32>
    %574 = arith.addf %573, %572 : vector<8x64xf32>
    %575 = arith.mulf %569, %574 : vector<8x64xf32>
    %c1_236 = arith.constant 1 : index
    %c0_237 = arith.constant 0 : index
    %c0_238 = arith.constant 0 : index
    %576 = vector.load %arg23[%c1_236, %c0_237, %c0_238] : memref<2x32x64xf32, #tpu.memory_space<vmem>>, vector<1x32x64xf32>
    %577 = vector.shape_cast %576 : vector<1x32x64xf32> to vector<32x64xf32>
    %cst_239 = arith.constant dense<0.000000e+00> : vector<8x32xf32>
    %578 = tpu.matmul %575, %577, %cst_239 {dimension_numbers = #tpu.dot_dimension_numbers<[1], [1], [0], [0], [0, 0, 1, 0], [], []>} : vector<8x64xf32>, vector<32x64xf32>, vector<8x32xf32> -> vector<8x32xf32>
    %c1_240 = arith.constant 1 : index
    %c0_241 = arith.constant 0 : index
    %c0_242 = arith.constant 0 : index
    %579 = vector.load %arg24[%c1_240, %c0_241, %c0_242] : memref<2x1x32xf32, #tpu.memory_space<vmem>>, vector<1x1x32xf32>
    %580 = vector.shape_cast %579 : vector<1x1x32xf32> to vector<1x32xf32>
    %581 = vector.broadcast %580 : vector<1x32xf32> to vector<8x32xf32>
    %582 = arith.addf %578, %581 : vector<8x32xf32>
    %583 = arith.addf %560, %582 : vector<8x32xf32>
    %c1_243 = arith.constant 1 : index
    %c0_244 = arith.constant 0 : index
    %c0_245 = arith.constant 0 : index
    %584 = vector.load %arg25[%c1_243, %c0_244, %c0_245] : memref<2x1x32xf32, #tpu.memory_space<vmem>>, vector<1x1x32xf32>
    %585 = vector.shape_cast %584 : vector<1x1x32xf32> to vector<1x32xf32>
    %c1_246 = arith.constant 1 : index
    %c0_247 = arith.constant 0 : index
    %c0_248 = arith.constant 0 : index
    %586 = vector.load %arg26[%c1_246, %c0_247, %c0_248] : memref<2x1x32xf32, #tpu.memory_space<vmem>>, vector<1x1x32xf32>
    %587 = vector.shape_cast %586 : vector<1x1x32xf32> to vector<1x32xf32>
    %cst_249 = arith.constant dense<0.000000e+00> : vector<8xf32>
    %588 = vector.multi_reduction <add>, %583, %cst_249 [1] : vector<8x32xf32> to vector<8xf32>
    %589 = vector.shape_cast %588 : vector<8xf32> to vector<8x1xf32>
    %cst_250 = arith.constant 3.200000e+01 : f32
    %590 = vector.broadcast %cst_250 : f32 to vector<8x1xf32>
    %591 = arith.divf %589, %590 : vector<8x1xf32>
    %592 = vector.broadcast %591 : vector<8x1xf32> to vector<8x32xf32>
    %593 = arith.subf %583, %592 : vector<8x32xf32>
    %594 = arith.mulf %593, %593 : vector<8x32xf32>
    %cst_251 = arith.constant dense<0.000000e+00> : vector<8xf32>
    %595 = vector.multi_reduction <add>, %594, %cst_251 [1] : vector<8x32xf32> to vector<8xf32>
    %596 = vector.shape_cast %595 : vector<8xf32> to vector<8x1xf32>
    %cst_252 = arith.constant 3.200000e+01 : f32
    %597 = vector.broadcast %cst_252 : f32 to vector<8x1xf32>
    %598 = arith.divf %596, %597 : vector<8x1xf32>
    %cst_253 = arith.constant 9.99999974E-6 : f32
    %599 = vector.broadcast %cst_253 : f32 to vector<8x1xf32>
    %600 = arith.addf %598, %599 : vector<8x1xf32>
    %601 = math.rsqrt %600 : vector<8x1xf32>
    %602 = vector.broadcast %601 : vector<8x1xf32> to vector<8x32xf32>
    %603 = arith.mulf %593, %602 : vector<8x32xf32>
    %604 = vector.broadcast %585 : vector<1x32xf32> to vector<8x32xf32>
    %605 = arith.mulf %603, %604 : vector<8x32xf32>
    %606 = vector.broadcast %587 : vector<1x32xf32> to vector<8x32xf32>
    %607 = arith.addf %605, %606 : vector<8x32xf32>
    %c0_254 = arith.constant 0 : index
    %c0_255 = arith.constant 0 : index
    %c0_256 = arith.constant 0 : index
    %608 = vector.load %arg27[%c0_254, %c0_255, %c0_256] : memref<1x8x32xf32, #tpu.memory_space<vmem>>, vector<1x8x32xf32>
    %609 = vector.shape_cast %608 : vector<1x8x32xf32> to vector<8x32xf32>
    %610 = vector.shape_cast %607 : vector<8x32xf32> to vector<1x8x32xf32>
    tpu.vector_store %arg27[%c0_254, %c0_255, %c0_256], %610 {strides = array<i32>} : memref<1x8x32xf32, #tpu.memory_space<vmem>>, vector<1x8x32xf32>,
    return
  }
  func.func @transform_0(%arg0: i32) -> (i32, i32, i32) {
    %c0_i32 = arith.constant 0 : i32
    %c0_i32_0 = arith.constant 0 : i32
    %c0_i32_1 = arith.constant 0 : i32
    return %arg0, %c0_i32, %c0_i32_0 : i32, i32, i32
  }
  func.func @transform_1(%arg0: i32) -> (i32, i32, i32) {
    %c0_i32 = arith.constant 0 : i32
    %c0_i32_0 = arith.constant 0 : i32
    %c0_i32_1 = arith.constant 0 : i32
    return %arg0, %c0_i32, %c0_i32_0 : i32, i32, i32
  }
  func.func @transform_2(%arg0: i32) -> (i32, i32) {
    %c0_i32 = arith.constant 0 : i32
    %c0_i32_0 = arith.constant 0 : i32
    %c0_i32_1 = arith.constant 0 : i32
    return %c0_i32, %c0_i32_0 : i32, i32
  }
  func.func @transform_3(%arg0: i32) -> (i32, i32, i32) {
    %c0_i32 = arith.constant 0 : i32
    %c0_i32_0 = arith.constant 0 : i32
    %c0_i32_1 = arith.constant 0 : i32
    return %arg0, %c0_i32, %c0_i32_0 : i32, i32, i32
  }
  func.func @transform_4(%arg0: i32) -> (i32, i32) {
    %c0_i32 = arith.constant 0 : i32
    %c0_i32_0 = arith.constant 0 : i32
    %c0_i32_1 = arith.constant 0 : i32
    return %c0_i32, %c0_i32_0 : i32, i32
  }
  func.func @transform_5(%arg0: i32) -> (i32, i32) {
    %c0_i32 = arith.constant 0 : i32
    %c0_i32_0 = arith.constant 0 : i32
    %c0_i32_1 = arith.constant 0 : i32
    return %c0_i32, %c0_i32_0 : i32, i32
  }
  func.func @transform_6(%arg0: i32) -> (i32, i32, i32) {
    %c0_i32 = arith.constant 0 : i32
    %c0_i32_0 = arith.constant 0 : i32
    %c0_i32_1 = arith.constant 0 : i32
    %c0_i32_2 = arith.constant 0 : i32
    return %c0_i32, %c0_i32_0, %c0_i32_1 : i32, i32, i32
  }
  func.func @transform_7(%arg0: i32) -> (i32, i32, i32) {
    %c0_i32 = arith.constant 0 : i32
    %c0_i32_0 = arith.constant 0 : i32
    %c0_i32_1 = arith.constant 0 : i32
    %c0_i32_2 = arith.constant 0 : i32
    return %c0_i32, %c0_i32_0, %c0_i32_1 : i32, i32, i32
  }
  func.func @transform_8(%arg0: i32) -> (i32, i32, i32) {
    %c0_i32 = arith.constant 0 : i32
    %c0_i32_0 = arith.constant 0 : i32
    %c0_i32_1 = arith.constant 0 : i32
    %c0_i32_2 = arith.constant 0 : i32
    return %c0_i32, %c0_i32_0, %c0_i32_1 : i32, i32, i32
  }
  func.func @transform_9(%arg0: i32) -> (i32, i32, i32) {
    %c0_i32 = arith.constant 0 : i32
    %c0_i32_0 = arith.constant 0 : i32
    %c0_i32_1 = arith.constant 0 : i32
    %c0_i32_2 = arith.constant 0 : i32
    return %c0_i32, %c0_i32_0, %c0_i32_1 : i32, i32, i32
  }
  func.func @transform_10(%arg0: i32) -> (i32, i32, i32) {
    %c0_i32 = arith.constant 0 : i32
    %c0_i32_0 = arith.constant 0 : i32
    %c0_i32_1 = arith.constant 0 : i32
    %c0_i32_2 = arith.constant 0 : i32
    return %c0_i32, %c0_i32_0, %c0_i32_1 : i32, i32, i32
  }
  func.func @transform_11(%arg0: i32) -> (i32, i32, i32) {
    %c0_i32 = arith.constant 0 : i32
    %c0_i32_0 = arith.constant 0 : i32
    %c0_i32_1 = arith.constant 0 : i32
    %c0_i32_2 = arith.constant 0 : i32
    return %c0_i32, %c0_i32_0, %c0_i32_1 : i32, i32, i32
  }
  func.func @transform_12(%arg0: i32) -> (i32, i32, i32) {
    %c0_i32 = arith.constant 0 : i32
    %c0_i32_0 = arith.constant 0 : i32
    %c0_i32_1 = arith.constant 0 : i32
    %c0_i32_2 = arith.constant 0 : i32
    return %c0_i32, %c0_i32_0, %c0_i32_1 : i32, i32, i32
  }
  func.func @transform_13(%arg0: i32) -> (i32, i32, i32) {
    %c0_i32 = arith.constant 0 : i32
    %c0_i32_0 = arith.constant 0 : i32
    %c0_i32_1 = arith.constant 0 : i32
    %c0_i32_2 = arith.constant 0 : i32
    return %c0_i32, %c0_i32_0, %c0_i32_1 : i32, i32, i32
  }
  func.func @transform_14(%arg0: i32) -> (i32, i32, i32) {
    %c0_i32 = arith.constant 0 : i32
    %c0_i32_0 = arith.constant 0 : i32
    %c0_i32_1 = arith.constant 0 : i32
    %c0_i32_2 = arith.constant 0 : i32
    return %c0_i32, %c0_i32_0, %c0_i32_1 : i32, i32, i32
  }
  func.func @transform_15(%arg0: i32) -> (i32, i32, i32) {
    %c0_i32 = arith.constant 0 : i32
    %c0_i32_0 = arith.constant 0 : i32
    %c0_i32_1 = arith.constant 0 : i32
    %c0_i32_2 = arith.constant 0 : i32
    return %c0_i32, %c0_i32_0, %c0_i32_1 : i32, i32, i32
  }
  func.func @transform_16(%arg0: i32) -> (i32, i32, i32) {
    %c0_i32 = arith.constant 0 : i32
    %c0_i32_0 = arith.constant 0 : i32
    %c0_i32_1 = arith.constant 0 : i32
    %c0_i32_2 = arith.constant 0 : i32
    return %c0_i32, %c0_i32_0, %c0_i32_1 : i32, i32, i32
  }
  func.func @transform_17(%arg0: i32) -> (i32, i32, i32) {
    %c0_i32 = arith.constant 0 : i32
    %c0_i32_0 = arith.constant 0 : i32
    %c0_i32_1 = arith.constant 0 : i32
    %c0_i32_2 = arith.constant 0 : i32
    return %c0_i32, %c0_i32_0, %c0_i32_1 : i32, i32, i32
  }
  func.func @transform_18(%arg0: i32) -> (i32, i32, i32) {
    %c0_i32 = arith.constant 0 : i32
    %c0_i32_0 = arith.constant 0 : i32
    %c0_i32_1 = arith.constant 0 : i32
    %c0_i32_2 = arith.constant 0 : i32
    return %c0_i32, %c0_i32_0, %c0_i32_1 : i32, i32, i32
  }
  func.func @transform_19(%arg0: i32) -> (i32, i32, i32) {
    %c0_i32 = arith.constant 0 : i32
    %c0_i32_0 = arith.constant 0 : i32
    %c0_i32_1 = arith.constant 0 : i32
    %c0_i32_2 = arith.constant 0 : i32
    return %c0_i32, %c0_i32_0, %c0_i32_1 : i32, i32, i32
  }
  func.func @transform_20(%arg0: i32) -> (i32, i32, i32) {
    %c0_i32 = arith.constant 0 : i32
    %c0_i32_0 = arith.constant 0 : i32
    %c0_i32_1 = arith.constant 0 : i32
    %c0_i32_2 = arith.constant 0 : i32
    return %c0_i32, %c0_i32_0, %c0_i32_1 : i32, i32, i32
  }
  func.func @transform_21(%arg0: i32) -> (i32, i32, i32) {
    %c0_i32 = arith.constant 0 : i32
    %c0_i32_0 = arith.constant 0 : i32
    %c0_i32_1 = arith.constant 0 : i32
    %c0_i32_2 = arith.constant 0 : i32
    return %c0_i32, %c0_i32_0, %c0_i32_1 : i32, i32, i32
  }
  func.func @transform_22(%arg0: i32) -> (i32, i32, i32) {
    %c0_i32 = arith.constant 0 : i32
    %c0_i32_0 = arith.constant 0 : i32
    %c0_i32_1 = arith.constant 0 : i32
    %c0_i32_2 = arith.constant 0 : i32
    return %c0_i32, %c0_i32_0, %c0_i32_1 : i32, i32, i32
  }
  func.func @transform_23(%arg0: i32) -> (i32, i32, i32) {
    %c0_i32 = arith.constant 0 : i32
    %c0_i32_0 = arith.constant 0 : i32
    %c0_i32_1 = arith.constant 0 : i32
    %c0_i32_2 = arith.constant 0 : i32
    return %c0_i32, %c0_i32_0, %c0_i32_1 : i32, i32, i32
  }
  func.func @transform_24(%arg0: i32) -> (i32, i32, i32) {
    %c0_i32 = arith.constant 0 : i32
    %c0_i32_0 = arith.constant 0 : i32
    %c0_i32_1 = arith.constant 0 : i32
    %c0_i32_2 = arith.constant 0 : i32
    return %c0_i32, %c0_i32_0, %c0_i32_1 : i32, i32, i32
  }
  func.func @transform_25(%arg0: i32) -> (i32, i32, i32) {
    %c0_i32 = arith.constant 0 : i32
    %c0_i32_0 = arith.constant 0 : i32
    %c0_i32_1 = arith.constant 0 : i32
    %c0_i32_2 = arith.constant 0 : i32
    return %c0_i32, %c0_i32_0, %c0_i32_1 : i32, i32, i32
  }
  func.func @transform_26(%arg0: i32) -> (i32, i32, i32) {
    %c0_i32 = arith.constant 0 : i32
    %c0_i32_0 = arith.constant 0 : i32
    %c0_i32_1 = arith.constant 0 : i32
    return %arg0, %c0_i32, %c0_i32_0 : i32, i32, i32
  }
}

</mosaic_0001>

<llo_original>
// kernel: bart_decoder_forward.1
$region0: #{bart_decoder_forward.1}
  #allocation0 [shape = 'u32[]', space=smem, size = 0x4, offset = 0x4, fixed_abs, tag = 'smem constant byte address 0x4 - core index']
  #allocation1 [shape = 'u32[144,128]{1,0:T(1,128)}', space=vmem, size = 0x12000, scoped, tag = 'internal scratch']
  %s0 = inlined_call_operand.vmem [shape: f32[2,8,32], index: 0, kind: input, shape index: {}]
  %s1 = inlined_call_operand.vmem [shape: f32[2,10,32], index: 1, kind: input, shape index: {}]
  %s2 = inlined_call_operand.vmem [shape: f32[8,8], index: 2, kind: input, shape index: {}]
  %s3 = inlined_call_operand.vmem [shape: f32[2,1,10], index: 3, kind: input, shape index: {}]
  %s4 = inlined_call_operand.vmem [shape: f32[1,32], index: 4, kind: input, shape index: {}]
  %s5 = inlined_call_operand.vmem [shape: f32[1,32], index: 5, kind: input, shape index: {}]
  %s6 = inlined_call_operand.vmem [shape: f32[2,96,32], index: 6, kind: input, shape index: {}]
  %s7 = inlined_call_operand.vmem [shape: f32[2,1,96], index: 7, kind: input, shape index: {}]
  %s8 = inlined_call_operand.vmem [shape: f32[2,32,32], index: 8, kind: input, shape index: {}]
  %s9 = inlined_call_operand.vmem [shape: f32[2,1,32], index: 9, kind: input, shape index: {}]
  %s10 = inlined_call_operand.vmem [shape: f32[2,1,32], index: 10, kind: input, shape index: {}]
  %s11 = inlined_call_operand.vmem [shape: f32[2,1,32], index: 11, kind: input, shape index: {}]
  %s12 = inlined_call_operand.vmem [shape: f32[2,32,32], index: 12, kind: input, shape index: {}]
  %s13 = inlined_call_operand.vmem [shape: f32[2,1,32], index: 13, kind: input, shape index: {}]
  %s14 = inlined_call_operand.vmem [shape: f32[2,64,32], index: 14, kind: input, shape index: {}]
  %s15 = inlined_call_operand.vmem [shape: f32[2,1,64], index: 15, kind: input, shape index: {}]
  %s16 = inlined_call_operand.vmem [shape: f32[2,32,32], index: 16, kind: input, shape index: {}]
  %s17 = inlined_call_operand.vmem [shape: f32[2,1,32], index: 17, kind: input, shape index: {}]
  %s18 = inlined_call_operand.vmem [shape: f32[2,1,32], index: 18, kind: input, shape index: {}]
  %s19 = inlined_call_operand.vmem [shape: f32[2,1,32], index: 19, kind: input, shape index: {}]
  %s20 = inlined_call_operand.vmem [shape: f32[2,64,32], index: 20, kind: input, shape index: {}]
  %s21 = inlined_call_operand.vmem [shape: f32[2,1,64], index: 21, kind: input, shape index: {}]
  %s22 = inlined_call_operand.vmem [shape: f32[2,32,64], index: 22, kind: input, shape index: {}]
  %s23 = inlined_call_operand.vmem [shape: f32[2,1,32], index: 23, kind: input, shape index: {}]
  %s24 = inlined_call_operand.vmem [shape: f32[2,1,32], index: 24, kind: input, shape index: {}]
  %s25 = inlined_call_operand.vmem [shape: f32[2,1,32], index: 25, kind: input, shape index: {}]
  %s26 = inlined_call_operand.hbm [shape: f32[2,8,32], index: 26, kind: output, shape index: {}]
  %s27 = sld [smem:[#allocation0]]
  $region137: #{bart_decoder_forward.1} parent=0
    _
  %s29 = ssub.s32 1, %s27
  %s30 = scalar_select 0, %s29, %s27
  $region1: #{bart_decoder_forward.1} parent=0
    #allocation2 [shape = 'u8[8192]{0}', space=vmem, size = 0x2000, scoped, tag = 'output window, operand 0']
    #allocation3 [shape = 's32[2]{0}', space=sflag, size = 0x8, scoped, tag = 'scoped memory for bart_decoder_forward.1']
    %31 = vsyncpa [#allocation3], 0
    %s32 = scalar_lea.sflag [#allocation3], 1
    %33 = vsyncpa %s32, 0
    loop: start=0, step=1, limit=4
    $region2: #{bart_decoder_forward.1} parent=1 // loop_pre_header
      _
    $region3: #{bart_decoder_forward.1} parent=1 // loop_header
      %s35 = sphi 0, %s39
      %p36 = scmp.ge.s32.totalorder %s35, 4
      %s45 = sphi 0, %s47
      %s48 = sphi 0, %s45
      %s49 = sphi 0, %s48
      %s65 = sphi 0, %s49
      %s71 = sphi 0, %s73
      %s74 = sphi 0, %s71
      %s75 = sphi 0, %s74
      %s91 = sphi 0, %s75
      %s95 = sphi 0, %s95
      %s97 = sphi 0, %s95
      %s98 = sphi 0, %s97
      %s112 = sphi 0, %s98
      %s118 = sphi 0, %s120
      %s121 = sphi 0, %s118
      %s122 = sphi 0, %s121
      %s138 = sphi 0, %s122
      %s142 = sphi 0, %s142
      %s144 = sphi 0, %s142
      %s145 = sphi 0, %s144
      %s159 = sphi 0, %s145
      %s163 = sphi 0, %s163
      %s165 = sphi 0, %s163
      %s166 = sphi 0, %s165
      %s180 = sphi 0, %s166
      %s184 = sphi 0, %s184
      %s186 = sphi 0, %s184
      %s187 = sphi 0, %s186
      %s201 = sphi 0, %s187
      %s205 = sphi 0, %s205
      %s207 = sphi 0, %s205
      %s208 = sphi 0, %s207
      %s222 = sphi 0, %s208
      %s226 = sphi 0, %s226
      %s228 = sphi 0, %s226
      %s229 = sphi 0, %s228
      %s243 = sphi 0, %s229
      %s247 = sphi 0, %s247
      %s249 = sphi 0, %s247
      %s250 = sphi 0, %s249
      %s264 = sphi 0, %s250
      %s268 = sphi 0, %s268
      %s270 = sphi 0, %s268
      %s271 = sphi 0, %s270
      %s285 = sphi 0, %s271
      %s289 = sphi 0, %s289
      %s291 = sphi 0, %s289
      %s292 = sphi 0, %s291
      %s306 = sphi 0, %s292
      %s310 = sphi 0, %s310
      %s312 = sphi 0, %s310
      %s313 = sphi 0, %s312
      %s327 = sphi 0, %s313
      %s331 = sphi 0, %s331
      %s333 = sphi 0, %s331
      %s334 = sphi 0, %s333
      %s348 = sphi 0, %s334
      %s352 = sphi 0, %s352
      %s354 = sphi 0, %s352
      %s355 = sphi 0, %s354
      %s369 = sphi 0, %s355
      %s373 = sphi 0, %s373
      %s375 = sphi 0, %s373
      %s376 = sphi 0, %s375
      %s390 = sphi 0, %s376
      %s394 = sphi 0, %s394
      %s396 = sphi 0, %s394
      %s397 = sphi 0, %s396
      %s411 = sphi 0, %s397
      %s415 = sphi 0, %s415
      %s417 = sphi 0, %s415
      %s418 = sphi 0, %s417
      %s432 = sphi 0, %s418
      %s436 = sphi 0, %s436
      %s438 = sphi 0, %s436
      %s439 = sphi 0, %s438
      %s453 = sphi 0, %s439
      %s457 = sphi 0, %s457
      %s459 = sphi 0, %s457
      %s460 = sphi 0, %s459
      %s474 = sphi 0, %s460
      %s478 = sphi 0, %s478
      %s480 = sphi 0, %s478
      %s481 = sphi 0, %s480
      %s495 = sphi 0, %s481
      %s499 = sphi 0, %s499
      %s501 = sphi 0, %s499
      %s502 = sphi 0, %s501
      %s516 = sphi 0, %s502
      %s520 = sphi 0, %s520
      %s522 = sphi 0, %s520
      %s523 = sphi 0, %s522
      %s537 = sphi 0, %s523
      %s541 = sphi 0, %s541
      %s543 = sphi 0, %s541
      %s544 = sphi 0, %s543
      %s558 = sphi 0, %s544
      %s562 = sphi 0, %s562
      %s564 = sphi 0, %s562
      %s565 = sphi 0, %s564
      %s579 = sphi 0, %s565
      %s583 = sphi 0, %s583
      %s585 = sphi 0, %s583
      %s586 = sphi 0, %s585
      %s600 = sphi 0, %s586
      %s606 = sphi 0, %s608
      %s609 = sphi 0, %s606
      %s610 = sphi 0, %s609
      %s626 = sphi 0, %s610
    $region4: #{bart_decoder_forward.1} parent=1 // loop_header_branch
      %38 = sbr.rel (%p36) target = $region8
    $region5: #{bart_decoder_forward.1} parent=1 // loop_body
      %s40 = ssub.s32 %s35, 1
      %s41 = ssub.s32 %s35, 2
      %s42 = sadd.s32 %s35, 1
      %s43 = ssub.s32 %s35, %s42
      %p44 = scmp.eq.s32.totalorder %s43, 0
      %s46 = sadd.s32 %s45, 1
      %s47 = scalar_select %p44, %s45, %s46
      %p50 = pneg %p44
      %p51 = scmp.eq.s32.totalorder %s35, 1
      %p52 = por %p50, %p51
      %p53 = scmp.ne.s32.totalorder %s45, %s48
      %p54 = scmp.eq.s32.totalorder %s35, 0
      %p55 = por %p53, %p54
      %p56 = scmp.ne.s32.totalorder %s45, %s48
      %p57 = scmp.eq.s32.totalorder %s40, 1
      %p58 = por %p56, %p57
      %p59 = scmp.ne.s32.totalorder %s48, %s49
      %p60 = scmp.eq.s32.totalorder %s40, 0
      %p61 = por %p59, %p60
      %p62 = scmp.ne.s32.totalorder %s48, %s49
      %p63 = scmp.eq.s32.totalorder %s41, 1
      %p64 = por %p62, %p63
      %p66 = scmp.ne.s32.totalorder %s49, %s65
      %p67 = scmp.eq.s32.totalorder %s41, 0
      %p68 = por %p66, %p67
      %s69 = ssub.s32 %s35, %s42
      %p70 = scmp.eq.s32.totalorder %s69, 0
      %s72 = sadd.s32 %s71, 1
      %s73 = scalar_select %p70, %s71, %s72
      %p76 = pneg %p70
      %p77 = scmp.eq.s32.totalorder %s35, 1
      %p78 = por %p76, %p77
      %p79 = scmp.ne.s32.totalorder %s71, %s74
      %p80 = scmp.eq.s32.totalorder %s35, 0
      %p81 = por %p79, %p80
      %p82 = scmp.ne.s32.totalorder %s71, %s74
      %p83 = scmp.eq.s32.totalorder %s40, 1
      %p84 = por %p82, %p83
      %p85 = scmp.ne.s32.totalorder %s74, %s75
      %p86 = scmp.eq.s32.totalorder %s40, 0
      %p87 = por %p85, %p86
      %p88 = scmp.ne.s32.totalorder %s74, %s75
      %p89 = scmp.eq.s32.totalorder %s41, 1
      %p90 = por %p88, %p89
      %p92 = scmp.ne.s32.totalorder %s75, %s91
      %p93 = scmp.eq.s32.totalorder %s41, 0
      %p94 = por %p92, %p93
      %s96 = sadd.s32 %s95, 1
      %p99 = scmp.eq.s32.totalorder %s35, 1
      %p100 = scmp.ne.s32.totalorder %s95, %s97
      %p101 = scmp.eq.s32.totalorder %s35, 0
      %p102 = por %p100, %p101
      %p103 = scmp.ne.s32.totalorder %s95, %s97
      %p104 = scmp.eq.s32.totalorder %s40, 1
      %p105 = por %p103, %p104
      %p106 = scmp.ne.s32.totalorder %s97, %s98
      %p107 = scmp.eq.s32.totalorder %s40, 0
      %p108 = por %p106, %p107
      %p109 = scmp.ne.s32.totalorder %s97, %s98
      %p110 = scmp.eq.s32.totalorder %s41, 1
      %p111 = por %p109, %p110
      %p113 = scmp.ne.s32.totalorder %s98, %s112
      %p114 = scmp.eq.s32.totalorder %s41, 0
      %p115 = por %p113, %p114
      %s116 = ssub.s32 %s35, %s42
      %p117 = scmp.eq.s32.totalorder %s116, 0
      %s119 = sadd.s32 %s118, 1
      %s120 = scalar_select %p117, %s118, %s119
      %p123 = pneg %p117
      %p124 = scmp.eq.s32.totalorder %s35, 1
      %p125 = por %p123, %p124
      %p126 = scmp.ne.s32.totalorder %s118, %s121
      %p127 = scmp.eq.s32.totalorder %s35, 0
      %p128 = por %p126, %p127
      %p129 = scmp.ne.s32.totalorder %s118, %s121
      %p130 = scmp.eq.s32.totalorder %s40, 1
      %p131 = por %p129, %p130
      %p132 = scmp.ne.s32.totalorder %s121, %s122
      %p133 = scmp.eq.s32.totalorder %s40, 0
      %p134 = por %p132, %p133
      %p135 = scmp.ne.s32.totalorder %s121, %s122
      %p136 = scmp.eq.s32.totalorder %s41, 1
      %p137 = por %p135, %p136
      %p139 = scmp.ne.s32.totalorder %s122, %s138
      %p140 = scmp.eq.s32.totalorder %s41, 0
      %p141 = por %p139, %p140
      %s143 = sadd.s32 %s142, 1
      %p146 = scmp.eq.s32.totalorder %s35, 1
      %p147 = scmp.ne.s32.totalorder %s142, %s144
      %p148 = scmp.eq.s32.totalorder %s35, 0
      %p149 = por %p147, %p148
      %p150 = scmp.ne.s32.totalorder %s142, %s144
      %p151 = scmp.eq.s32.totalorder %s40, 1
      %p152 = por %p150, %p151
      %p153 = scmp.ne.s32.totalorder %s144, %s145
      %p154 = scmp.eq.s32.totalorder %s40, 0
      %p155 = por %p153, %p154
      %p156 = scmp.ne.s32.totalorder %s144, %s145
      %p157 = scmp.eq.s32.totalorder %s41, 1
      %p158 = por %p156, %p157
      %p160 = scmp.ne.s32.totalorder %s145, %s159
      %p161 = scmp.eq.s32.totalorder %s41, 0
      %p162 = por %p160, %p161
      %s164 = sadd.s32 %s163, 1
      %p167 = scmp.eq.s32.totalorder %s35, 1
      %p168 = scmp.ne.s32.totalorder %s163, %s165
      %p169 = scmp.eq.s32.totalorder %s35, 0
      %p170 = por %p168, %p169
      %p171 = scmp.ne.s32.totalorder %s163, %s165
      %p172 = scmp.eq.s32.totalorder %s40, 1
      %p173 = por %p171, %p172
      %p174 = scmp.ne.s32.totalorder %s165, %s166
      %p175 = scmp.eq.s32.totalorder %s40, 0
      %p176 = por %p174, %p175
      %p177 = scmp.ne.s32.totalorder %s165, %s166
      %p178 = scmp.eq.s32.totalorder %s41, 1
      %p179 = por %p177, %p178
      %p181 = scmp.ne.s32.totalorder %s166, %s180
      %p182 = scmp.eq.s32.totalorder %s41, 0
      %p183 = por %p181, %p182
      %s185 = sadd.s32 %s184, 1
      %p188 = scmp.eq.s32.totalorder %s35, 1
      %p189 = scmp.ne.s32.totalorder %s184, %s186
      %p190 = scmp.eq.s32.totalorder %s35, 0
      %p191 = por %p189, %p190
      %p192 = scmp.ne.s32.totalorder %s184, %s186
      %p193 = scmp.eq.s32.totalorder %s40, 1
      %p194 = por %p192, %p193
      %p195 = scmp.ne.s32.totalorder %s186, %s187
      %p196 = scmp.eq.s32.totalorder %s40, 0
      %p197 = por %p195, %p196
      %p198 = scmp.ne.s32.totalorder %s186, %s187
      %p199 = scmp.eq.s32.totalorder %s41, 1
      %p200 = por %p198, %p199
      %p202 = scmp.ne.s32.totalorder %s187, %s201
      %p203 = scmp.eq.s32.totalorder %s41, 0
      %p204 = por %p202, %p203
      %s206 = sadd.s32 %s205, 1
      %p209 = scmp.eq.s32.totalorder %s35, 1
      %p210 = scmp.ne.s32.totalorder %s205, %s207
      %p211 = scmp.eq.s32.totalorder %s35, 0
      %p212 = por %p210, %p211
      %p213 = scmp.ne.s32.totalorder %s205, %s207
      %p214 = scmp.eq.s32.totalorder %s40, 1
      %p215 = por %p213, %p214
      %p216 = scmp.ne.s32.totalorder %s207, %s208
      %p217 = scmp.eq.s32.totalorder %s40, 0
      %p218 = por %p216, %p217
      %p219 = scmp.ne.s32.totalorder %s207, %s208
      %p220 = scmp.eq.s32.totalorder %s41, 1
      %p221 = por %p219, %p220
      %p223 = scmp.ne.s32.totalorder %s208, %s222
      %p224 = scmp.eq.s32.totalorder %s41, 0
      %p225 = por %p223, %p224
      %s227 = sadd.s32 %s226, 1
      %p230 = scmp.eq.s32.totalorder %s35, 1
      %p231 = scmp.ne.s32.totalorder %s226, %s228
      %p232 = scmp.eq.s32.totalorder %s35, 0
      %p233 = por %p231, %p232
      %p234 = scmp.ne.s32.totalorder %s226, %s228
      %p235 = scmp.eq.s32.totalorder %s40, 1
      %p236 = por %p234, %p235
      %p237 = scmp.ne.s32.totalorder %s228, %s229
      %p238 = scmp.eq.s32.totalorder %s40, 0
      %p239 = por %p237, %p238
      %p240 = scmp.ne.s32.totalorder %s228, %s229
      %p241 = scmp.eq.s32.totalorder %s41, 1
      %p242 = por %p240, %p241
      %p244 = scmp.ne.s32.totalorder %s229, %s243
      %p245 = scmp.eq.s32.totalorder %s41, 0
      %p246 = por %p244, %p245
      %s248 = sadd.s32 %s247, 1
      %p251 = scmp.eq.s32.totalorder %s35, 1
      %p252 = scmp.ne.s32.totalorder %s247, %s249
      %p253 = scmp.eq.s32.totalorder %s35, 0
      %p254 = por %p252, %p253
      %p255 = scmp.ne.s32.totalorder %s247, %s249
      %p256 = scmp.eq.s32.totalorder %s40, 1
      %p257 = por %p255, %p256
      %p258 = scmp.ne.s32.totalorder %s249, %s250
      %p259 = scmp.eq.s32.totalorder %s40, 0
      %p260 = por %p258, %p259
      %p261 = scmp.ne.s32.totalorder %s249, %s250
      %p262 = scmp.eq.s32.totalorder %s41, 1
      %p263 = por %p261, %p262
      %p265 = scmp.ne.s32.totalorder %s250, %s264
      %p266 = scmp.eq.s32.totalorder %s41, 0
      %p267 = por %p265, %p266
      %s269 = sadd.s32 %s268, 1
      %p272 = scmp.eq.s32.totalorder %s35, 1
      %p273 = scmp.ne.s32.totalorder %s268, %s270
      %p274 = scmp.eq.s32.totalorder %s35, 0
      %p275 = por %p273, %p274
      %p276 = scmp.ne.s32.totalorder %s268, %s270
      %p277 = scmp.eq.s32.totalorder %s40, 1
      %p278 = por %p276, %p277
      %p279 = scmp.ne.s32.totalorder %s270, %s271
      %p280 = scmp.eq.s32.totalorder %s40, 0
      %p281 = por %p279, %p280
      %p282 = scmp.ne.s32.totalorder %s270, %s271
      %p283 = scmp.eq.s32.totalorder %s41, 1
      %p284 = por %p282, %p283
      %p286 = scmp.ne.s32.totalorder %s271, %s285
      %p287 = scmp.eq.s32.totalorder %s41, 0
      %p288 = por %p286, %p287
      %s290 = sadd.s32 %s289, 1
      %p293 = scmp.eq.s32.totalorder %s35, 1
      %p294 = scmp.ne.s32.totalorder %s289, %s291
      %p295 = scmp.eq.s32.totalorder %s35, 0
      %p296 = por %p294, %p295
      %p297 = scmp.ne.s32.totalorder %s289, %s291
      %p298 = scmp.eq.s32.totalorder %s40, 1
      %p299 = por %p297, %p298
      %p300 = scmp.ne.s32.totalorder %s291, %s292
      %p301 = scmp.eq.s32.totalorder %s40, 0
      %p302 = por %p300, %p301
      %p303 = scmp.ne.s32.totalorder %s291, %s292
      %p304 = scmp.eq.s32.totalorder %s41, 1
      %p305 = por %p303, %p304
      %p307 = scmp.ne.s32.totalorder %s292, %s306
      %p308 = scmp.eq.s32.totalorder %s41, 0
      %p309 = por %p307, %p308
      %s311 = sadd.s32 %s310, 1
      %p314 = scmp.eq.s32.totalorder %s35, 1
      %p315 = scmp.ne.s32.totalorder %s310, %s312
      %p316 = scmp.eq.s32.totalorder %s35, 0
      %p317 = por %p315, %p316
      %p318 = scmp.ne.s32.totalorder %s310, %s312
      %p319 = scmp.eq.s32.totalorder %s40, 1
      %p320 = por %p318, %p319
      %p321 = scmp.ne.s32.totalorder %s312, %s313
      %p322 = scmp.eq.s32.totalorder %s40, 0
      %p323 = por %p321, %p322
      %p324 = scmp.ne.s32.totalorder %s312, %s313
      %p325 = scmp.eq.s32.totalorder %s41, 1
      %p326 = por %p324, %p325
      %p328 = scmp.ne.s32.totalorder %s313, %s327
      %p329 = scmp.eq.s32.totalorder %s41, 0
      %p330 = por %p328, %p329
      %s332 = sadd.s32 %s331, 1
      %p335 = scmp.eq.s32.totalorder %s35, 1
      %p336 = scmp.ne.s32.totalorder %s331, %s333
      %p337 = scmp.eq.s32.totalorder %s35, 0
      %p338 = por %p336, %p337
      %p339 = scmp.ne.s32.totalorder %s331, %s333
      %p340 = scmp.eq.s32.totalorder %s40, 1
      %p341 = por %p339, %p340
      %p342 = scmp.ne.s32.totalorder %s333, %s334
      %p343 = scmp.eq.s32.totalorder %s40, 0
      %p344 = por %p342, %p343
      %p345 = scmp.ne.s32.totalorder %s333, %s334
      %p346 = scmp.eq.s32.totalorder %s41, 1
      %p347 = por %p345, %p346
      %p349 = scmp.ne.s32.totalorder %s334, %s348
      %p350 = scmp.eq.s32.totalorder %s41, 0
      %p351 = por %p349, %p350
      %s353 = sadd.s32 %s352, 1
      %p356 = scmp.eq.s32.totalorder %s35, 1
      %p357 = scmp.ne.s32.totalorder %s352, %s354
      %p358 = scmp.eq.s32.totalorder %s35, 0
      %p359 = por %p357, %p358
      %p360 = scmp.ne.s32.totalorder %s352, %s354
      %p361 = scmp.eq.s32.totalorder %s40, 1
      %p362 = por %p360, %p361
      %p363 = scmp.ne.s32.totalorder %s354, %s355
      %p364 = scmp.eq.s32.totalorder %s40, 0
      %p365 = por %p363, %p364
      %p366 = scmp.ne.s32.totalorder %s354, %s355
      %p367 = scmp.eq.s32.totalorder %s41, 1
      %p368 = por %p366, %p367
      %p370 = scmp.ne.s32.totalorder %s355, %s369
      %p371 = scmp.eq.s32.totalorder %s41, 0
      %p372 = por %p370, %p371
      %s374 = sadd.s32 %s373, 1
      %p377 = scmp.eq.s32.totalorder %s35, 1
      %p378 = scmp.ne.s32.totalorder %s373, %s375
      %p379 = scmp.eq.s32.totalorder %s35, 0
      %p380 = por %p378, %p379
      %p381 = scmp.ne.s32.totalorder %s373, %s375
      %p382 = scmp.eq.s32.totalorder %s40, 1
      %p383 = por %p381, %p382
      %p384 = scmp.ne.s32.totalorder %s375, %s376
      %p385 = scmp.eq.s32.totalorder %s40, 0
      %p386 = por %p384, %p385
      %p387 = scmp.ne.s32.totalorder %s375, %s376
      %p388 = scmp.eq.s32.totalorder %s41, 1
      %p389 = por %p387, %p388
      %p391 = scmp.ne.s32.totalorder %s376, %s390
      %p392 = scmp.eq.s32.totalorder %s41, 0
      %p393 = por %p391, %p392
      %s395 = sadd.s32 %s394, 1
      %p398 = scmp.eq.s32.totalorder %s35, 1
      %p399 = scmp.ne.s32.totalorder %s394, %s396
      %p400 = scmp.eq.s32.totalorder %s35, 0
      %p401 = por %p399, %p400
      %p402 = scmp.ne.s32.totalorder %s394, %s396
      %p403 = scmp.eq.s32.totalorder %s40, 1
      %p404 = por %p402, %p403
      %p405 = scmp.ne.s32.totalorder %s396, %s397
      %p406 = scmp.eq.s32.totalorder %s40, 0
      %p407 = por %p405, %p406
      %p408 = scmp.ne.s32.totalorder %s396, %s397
      %p409 = scmp.eq.s32.totalorder %s41, 1
      %p410 = por %p408, %p409
      %p412 = scmp.ne.s32.totalorder %s397, %s411
      %p413 = scmp.eq.s32.totalorder %s41, 0
      %p414 = por %p412, %p413
      %s416 = sadd.s32 %s415, 1
      %p419 = scmp.eq.s32.totalorder %s35, 1
      %p420 = scmp.ne.s32.totalorder %s415, %s417
      %p421 = scmp.eq.s32.totalorder %s35, 0
      %p422 = por %p420, %p421
      %p423 = scmp.ne.s32.totalorder %s415, %s417
      %p424 = scmp.eq.s32.totalorder %s40, 1
      %p425 = por %p423, %p424
      %p426 = scmp.ne.s32.totalorder %s417, %s418
      %p427 = scmp.eq.s32.totalorder %s40, 0
      %p428 = por %p426, %p427
      %p429 = scmp.ne.s32.totalorder %s417, %s418
      %p430 = scmp.eq.s32.totalorder %s41, 1
      %p431 = por %p429, %p430
      %p433 = scmp.ne.s32.totalorder %s418, %s432
      %p434 = scmp.eq.s32.totalorder %s41, 0
      %p435 = por %p433, %p434
      %s437 = sadd.s32 %s436, 1
      %p440 = scmp.eq.s32.totalorder %s35, 1
      %p441 = scmp.ne.s32.totalorder %s436, %s438
      %p442 = scmp.eq.s32.totalorder %s35, 0
      %p443 = por %p441, %p442
      %p444 = scmp.ne.s32.totalorder %s436, %s438
      %p445 = scmp.eq.s32.totalorder %s40, 1
      %p446 = por %p444, %p445
      %p447 = scmp.ne.s32.totalorder %s438, %s439
      %p448 = scmp.eq.s32.totalorder %s40, 0
      %p449 = por %p447, %p448
      %p450 = scmp.ne.s32.totalorder %s438, %s439
      %p451 = scmp.eq.s32.totalorder %s41, 1
      %p452 = por %p450, %p451
      %p454 = scmp.ne.s32.totalorder %s439, %s453
      %p455 = scmp.eq.s32.totalorder %s41, 0
      %p456 = por %p454, %p455
      %s458 = sadd.s32 %s457, 1
      %p461 = scmp.eq.s32.totalorder %s35, 1
      %p462 = scmp.ne.s32.totalorder %s457, %s459
      %p463 = scmp.eq.s32.totalorder %s35, 0
      %p464 = por %p462, %p463
      %p465 = scmp.ne.s32.totalorder %s457, %s459
      %p466 = scmp.eq.s32.totalorder %s40, 1
      %p467 = por %p465, %p466
      %p468 = scmp.ne.s32.totalorder %s459, %s460
      %p469 = scmp.eq.s32.totalorder %s40, 0
      %p470 = por %p468, %p469
      %p471 = scmp.ne.s32.totalorder %s459, %s460
      %p472 = scmp.eq.s32.totalorder %s41, 1
      %p473 = por %p471, %p472
      %p475 = scmp.ne.s32.totalorder %s460, %s474
      %p476 = scmp.eq.s32.totalorder %s41, 0
      %p477 = por %p475, %p476
      %s479 = sadd.s32 %s478, 1
      %p482 = scmp.eq.s32.totalorder %s35, 1
      %p483 = scmp.ne.s32.totalorder %s478, %s480
      %p484 = scmp.eq.s32.totalorder %s35, 0
      %p485 = por %p483, %p484
      %p486 = scmp.ne.s32.totalorder %s478, %s480
      %p487 = scmp.eq.s32.totalorder %s40, 1
      %p488 = por %p486, %p487
      %p489 = scmp.ne.s32.totalorder %s480, %s481
      %p490 = scmp.eq.s32.totalorder %s40, 0
      %p491 = por %p489, %p490
      %p492 = scmp.ne.s32.totalorder %s480, %s481
      %p493 = scmp.eq.s32.totalorder %s41, 1
      %p494 = por %p492, %p493
      %p496 = scmp.ne.s32.totalorder %s481, %s495
      %p497 = scmp.eq.s32.totalorder %s41, 0
      %p498 = por %p496, %p497
      %s500 = sadd.s32 %s499, 1
      %p503 = scmp.eq.s32.totalorder %s35, 1
      %p504 = scmp.ne.s32.totalorder %s499, %s501
      %p505 = scmp.eq.s32.totalorder %s35, 0
      %p506 = por %p504, %p505
      %p507 = scmp.ne.s32.totalorder %s499, %s501
      %p508 = scmp.eq.s32.totalorder %s40, 1
      %p509 = por %p507, %p508
      %p510 = scmp.ne.s32.totalorder %s501, %s502
      %p511 = scmp.eq.s32.totalorder %s40, 0
      %p512 = por %p510, %p511
      %p513 = scmp.ne.s32.totalorder %s501, %s502
      %p514 = scmp.eq.s32.totalorder %s41, 1
      %p515 = por %p513, %p514
      %p517 = scmp.ne.s32.totalorder %s502, %s516
      %p518 = scmp.eq.s32.totalorder %s41, 0
      %p519 = por %p517, %p518
      %s521 = sadd.s32 %s520, 1
      %p524 = scmp.eq.s32.totalorder %s35, 1
      %p525 = scmp.ne.s32.totalorder %s520, %s522
      %p526 = scmp.eq.s32.totalorder %s35, 0
      %p527 = por %p525, %p526
      %p528 = scmp.ne.s32.totalorder %s520, %s522
      %p529 = scmp.eq.s32.totalorder %s40, 1
      %p530 = por %p528, %p529
      %p531 = scmp.ne.s32.totalorder %s522, %s523
      %p532 = scmp.eq.s32.totalorder %s40, 0
      %p533 = por %p531, %p532
      %p534 = scmp.ne.s32.totalorder %s522, %s523
      %p535 = scmp.eq.s32.totalorder %s41, 1
      %p536 = por %p534, %p535
      %p538 = scmp.ne.s32.totalorder %s523, %s537
      %p539 = scmp.eq.s32.totalorder %s41, 0
      %p540 = por %p538, %p539
      %s542 = sadd.s32 %s541, 1
      %p545 = scmp.eq.s32.totalorder %s35, 1
      %p546 = scmp.ne.s32.totalorder %s541, %s543
      %p547 = scmp.eq.s32.totalorder %s35, 0
      %p548 = por %p546, %p547
      %p549 = scmp.ne.s32.totalorder %s541, %s543
      %p550 = scmp.eq.s32.totalorder %s40, 1
      %p551 = por %p549, %p550
      %p552 = scmp.ne.s32.totalorder %s543, %s544
      %p553 = scmp.eq.s32.totalorder %s40, 0
      %p554 = por %p552, %p553
      %p555 = scmp.ne.s32.totalorder %s543, %s544
      %p556 = scmp.eq.s32.totalorder %s41, 1
      %p557 = por %p555, %p556
      %p559 = scmp.ne.s32.totalorder %s544, %s558
      %p560 = scmp.eq.s32.totalorder %s41, 0
      %p561 = por %p559, %p560
      %s563 = sadd.s32 %s562, 1
      %p566 = scmp.eq.s32.totalorder %s35, 1
      %p567 = scmp.ne.s32.totalorder %s562, %s564
      %p568 = scmp.eq.s32.totalorder %s35, 0
      %p569 = por %p567, %p568
      %p570 = scmp.ne.s32.totalorder %s562, %s564
      %p571 = scmp.eq.s32.totalorder %s40, 1
      %p572 = por %p570, %p571
      %p573 = scmp.ne.s32.totalorder %s564, %s565
      %p574 = scmp.eq.s32.totalorder %s40, 0
      %p575 = por %p573, %p574
      %p576 = scmp.ne.s32.totalorder %s564, %s565
      %p577 = scmp.eq.s32.totalorder %s41, 1
      %p578 = por %p576, %p577
      %p580 = scmp.ne.s32.totalorder %s565, %s579
      %p581 = scmp.eq.s32.totalorder %s41, 0
      %p582 = por %p580, %p581
      %s584 = sadd.s32 %s583, 1
      %p587 = scmp.eq.s32.totalorder %s35, 1
      %p588 = scmp.ne.s32.totalorder %s583, %s585
      %p589 = scmp.eq.s32.totalorder %s35, 0
      %p590 = por %p588, %p589
      %p591 = scmp.ne.s32.totalorder %s583, %s585
      %p592 = scmp.eq.s32.totalorder %s40, 1
      %p593 = por %p591, %p592
      %p594 = scmp.ne.s32.totalorder %s585, %s586
      %p595 = scmp.eq.s32.totalorder %s40, 0
      %p596 = por %p594, %p595
      %p597 = scmp.ne.s32.totalorder %s585, %s586
      %p598 = scmp.eq.s32.totalorder %s41, 1
      %p599 = por %p597, %p598
      %p601 = scmp.ne.s32.totalorder %s586, %s600
      %p602 = scmp.eq.s32.totalorder %s41, 0
      %p603 = por %p601, %p602
      %s604 = ssub.s32 %s35, %s42
      %p605 = scmp.eq.s32.totalorder %s604, 0
      %s607 = sadd.s32 %s606, 1
      %s608 = scalar_select %p605, %s606, %s607
      %p611 = pneg %p605
      %p612 = scmp.eq.s32.totalorder %s35, 1
      %p613 = por %p611, %p612
      %p614 = scmp.ne.s32.totalorder %s606, %s609
      %p615 = scmp.eq.s32.totalorder %s35, 0
      %p616 = por %p614, %p615
      %p617 = scmp.ne.s32.totalorder %s606, %s609
      %p618 = scmp.eq.s32.totalorder %s40, 1
      %p619 = por %p617, %p618
      %p620 = scmp.ne.s32.totalorder %s609, %s610
      %p621 = scmp.eq.s32.totalorder %s40, 0
      %p622 = por %p620, %p621
      %p623 = scmp.ne.s32.totalorder %s609, %s610
      %p624 = scmp.eq.s32.totalorder %s41, 1
      %p625 = por %p623, %p624
      %p627 = scmp.ne.s32.totalorder %s610, %s626
      %p628 = scmp.eq.s32.totalorder %s41, 0
      %p629 = por %p627, %p628
      %p630 = scmp.le.s32.totalorder 1, %s35
      %p631 = scmp.lt.s32.totalorder %s35, 3
      %p632 = pnand %p630, %p631
      %p633 = pneg %p632
      // Predicated region
      $region9: #{bart_decoder_forward.1} parent=5 // pred_check
        _
      $region10: #{bart_decoder_forward.1} parent=5 // pred_check_branch
        %635 = sbr.rel (%p632) target = $region12
      $region11: #{bart_decoder_forward.1} parent=5 // pred_region
        %s636 = ssub.s32 %s35, 1
        // Predicated region
        $region13: #{bart_decoder_forward.1} parent=11 // pred_check
          %p637 = pneg %p108
        $region14: #{bart_decoder_forward.1} parent=11 // pred_check_branch
          %639 = sbr.rel (%p637) target = $region16
        $region15: #{bart_decoder_forward.1} parent=11 // pred_region
          _
        $region16: #{bart_decoder_forward.1} parent=11 // pred_fallthru
          _
        // Predicated region
        $region17: #{bart_decoder_forward.1} parent=11 // pred_check
          %p640 = pneg %p155
        $region18: #{bart_decoder_forward.1} parent=11 // pred_check_branch
          %642 = sbr.rel (%p640) target = $region20
        $region19: #{bart_decoder_forward.1} parent=11 // pred_region
          _
        $region20: #{bart_decoder_forward.1} parent=11 // pred_fallthru
          _
        // Predicated region
        $region21: #{bart_decoder_forward.1} parent=11 // pred_check
          %p643 = pneg %p176
        $region22: #{bart_decoder_forward.1} parent=11 // pred_check_branch
          %645 = sbr.rel (%p643) target = $region24
        $region23: #{bart_decoder_forward.1} parent=11 // pred_region
          _
        $region24: #{bart_decoder_forward.1} parent=11 // pred_fallthru
          _
        // Predicated region
        $region25: #{bart_decoder_forward.1} parent=11 // pred_check
          %p646 = pneg %p197
        $region26: #{bart_decoder_forward.1} parent=11 // pred_check_branch
          %648 = sbr.rel (%p646) target = $region28
        $region27: #{bart_decoder_forward.1} parent=11 // pred_region
          _
        $region28: #{bart_decoder_forward.1} parent=11 // pred_fallthru
          _
        // Predicated region
        $region29: #{bart_decoder_forward.1} parent=11 // pred_check
          %p649 = pneg %p218
        $region30: #{bart_decoder_forward.1} parent=11 // pred_check_branch
          %651 = sbr.rel (%p649) target = $region32
        $region31: #{bart_decoder_forward.1} parent=11 // pred_region
          _
        $region32: #{bart_decoder_forward.1} parent=11 // pred_fallthru
          _
        // Predicated region
        $region33: #{bart_decoder_forward.1} parent=11 // pred_check
          %p652 = pneg %p239
        $region34: #{bart_decoder_forward.1} parent=11 // pred_check_branch
          %654 = sbr.rel (%p652) target = $region36
        $region35: #{bart_decoder_forward.1} parent=11 // pred_region
          _
        $region36: #{bart_decoder_forward.1} parent=11 // pred_fallthru
          _
        // Predicated region
        $region37: #{bart_decoder_forward.1} parent=11 // pred_check
          %p655 = pneg %p260
        $region38: #{bart_decoder_forward.1} parent=11 // pred_check_branch
          %657 = sbr.rel (%p655) target = $region40
        $region39: #{bart_decoder_forward.1} parent=11 // pred_region
          _
        $region40: #{bart_decoder_forward.1} parent=11 // pred_fallthru
          _
        // Predicated region
        $region41: #{bart_decoder_forward.1} parent=11 // pred_check
          %p658 = pneg %p281
        $region42: #{bart_decoder_forward.1} parent=11 // pred_check_branch
          %660 = sbr.rel (%p658) target = $region44
        $region43: #{bart_decoder_forward.1} parent=11 // pred_region
          _
        $region44: #{bart_decoder_forward.1} parent=11 // pred_fallthru
          _
        // Predicated region
        $region45: #{bart_decoder_forward.1} parent=11 // pred_check
          %p661 = pneg %p302
        $region46: #{bart_decoder_forward.1} parent=11 // pred_check_branch
          %663 = sbr.rel (%p661) target = $region48
        $region47: #{bart_decoder_forward.1} parent=11 // pred_region
          _
        $region48: #{bart_decoder_forward.1} parent=11 // pred_fallthru
          _
        // Predicated region
        $region49: #{bart_decoder_forward.1} parent=11 // pred_check
          %p664 = pneg %p323
        $region50: #{bart_decoder_forward.1} parent=11 // pred_check_branch
          %666 = sbr.rel (%p664) target = $region52
        $region51: #{bart_decoder_forward.1} parent=11 // pred_region
          _
        $region52: #{bart_decoder_forward.1} parent=11 // pred_fallthru
          _
        // Predicated region
        $region53: #{bart_decoder_forward.1} parent=11 // pred_check
          %p667 = pneg %p344
        $region54: #{bart_decoder_forward.1} parent=11 // pred_check_branch
          %669 = sbr.rel (%p667) target = $region56
        $region55: #{bart_decoder_forward.1} parent=11 // pred_region
          _
        $region56: #{bart_decoder_forward.1} parent=11 // pred_fallthru
          _
        // Predicated region
        $region57: #{bart_decoder_forward.1} parent=11 // pred_check
          %p670 = pneg %p365
        $region58: #{bart_decoder_forward.1} parent=11 // pred_check_branch
          %672 = sbr.rel (%p670) target = $region60
        $region59: #{bart_decoder_forward.1} parent=11 // pred_region
          _
        $region60: #{bart_decoder_forward.1} parent=11 // pred_fallthru
          _
        // Predicated region
        $region61: #{bart_decoder_forward.1} parent=11 // pred_check
          %p673 = pneg %p386
        $region62: #{bart_decoder_forward.1} parent=11 // pred_check_branch
          %675 = sbr.rel (%p673) target = $region64
        $region63: #{bart_decoder_forward.1} parent=11 // pred_region
          _
        $region64: #{bart_decoder_forward.1} parent=11 // pred_fallthru
          _
        // Predicated region
        $region65: #{bart_decoder_forward.1} parent=11 // pred_check
          %p676 = pneg %p407
        $region66: #{bart_decoder_forward.1} parent=11 // pred_check_branch
          %678 = sbr.rel (%p676) target = $region68
        $region67: #{bart_decoder_forward.1} parent=11 // pred_region
          _
        $region68: #{bart_decoder_forward.1} parent=11 // pred_fallthru
          _
        // Predicated region
        $region69: #{bart_decoder_forward.1} parent=11 // pred_check
          %p679 = pneg %p428
        $region70: #{bart_decoder_forward.1} parent=11 // pred_check_branch
          %681 = sbr.rel (%p679) target = $region72
        $region71: #{bart_decoder_forward.1} parent=11 // pred_region
          _
        $region72: #{bart_decoder_forward.1} parent=11 // pred_fallthru
          _
        // Predicated region
        $region73: #{bart_decoder_forward.1} parent=11 // pred_check
          %p682 = pneg %p449
        $region74: #{bart_decoder_forward.1} parent=11 // pred_check_branch
          %684 = sbr.rel (%p682) target = $region76
        $region75: #{bart_decoder_forward.1} parent=11 // pred_region
          _
        $region76: #{bart_decoder_forward.1} parent=11 // pred_fallthru
          _
        // Predicated region
        $region77: #{bart_decoder_forward.1} parent=11 // pred_check
          %p685 = pneg %p470
        $region78: #{bart_decoder_forward.1} parent=11 // pred_check_branch
          %687 = sbr.rel (%p685) target = $region80
        $region79: #{bart_decoder_forward.1} parent=11 // pred_region
          _
        $region80: #{bart_decoder_forward.1} parent=11 // pred_fallthru
          _
        // Predicated region
        $region81: #{bart_decoder_forward.1} parent=11 // pred_check
          %p688 = pneg %p491
        $region82: #{bart_decoder_forward.1} parent=11 // pred_check_branch
          %690 = sbr.rel (%p688) target = $region84
        $region83: #{bart_decoder_forward.1} parent=11 // pred_region
          _
        $region84: #{bart_decoder_forward.1} parent=11 // pred_fallthru
          _
        // Predicated region
        $region85: #{bart_decoder_forward.1} parent=11 // pred_check
          %p691 = pneg %p512
        $region86: #{bart_decoder_forward.1} parent=11 // pred_check_branch
          %693 = sbr.rel (%p691) target = $region88
        $region87: #{bart_decoder_forward.1} parent=11 // pred_region
          _
        $region88: #{bart_decoder_forward.1} parent=11 // pred_fallthru
          _
        // Predicated region
        $region89: #{bart_decoder_forward.1} parent=11 // pred_check
          %p694 = pneg %p533
        $region90: #{bart_decoder_forward.1} parent=11 // pred_check_branch
          %696 = sbr.rel (%p694) target = $region92
        $region91: #{bart_decoder_forward.1} parent=11 // pred_region
          _
        $region92: #{bart_decoder_forward.1} parent=11 // pred_fallthru
          _
        // Predicated region
        $region93: #{bart_decoder_forward.1} parent=11 // pred_check
          %p697 = pneg %p554
        $region94: #{bart_decoder_forward.1} parent=11 // pred_check_branch
          %699 = sbr.rel (%p697) target = $region96
        $region95: #{bart_decoder_forward.1} parent=11 // pred_region
          _
        $region96: #{bart_decoder_forward.1} parent=11 // pred_fallthru
          _
        // Predicated region
        $region97: #{bart_decoder_forward.1} parent=11 // pred_check
          %p700 = pneg %p575
        $region98: #{bart_decoder_forward.1} parent=11 // pred_check_branch
          %702 = sbr.rel (%p700) target = $region100
        $region99: #{bart_decoder_forward.1} parent=11 // pred_region
          _
        $region100: #{bart_decoder_forward.1} parent=11 // pred_fallthru
          _
        // Predicated region
        $region101: #{bart_decoder_forward.1} parent=11 // pred_check
          %p703 = pneg %p596
        $region102: #{bart_decoder_forward.1} parent=11 // pred_check_branch
          %705 = sbr.rel (%p703) target = $region104
        $region103: #{bart_decoder_forward.1} parent=11 // pred_region
          _
        $region104: #{bart_decoder_forward.1} parent=11 // pred_fallthru
          _
      $region12: #{bart_decoder_forward.1} parent=5 // pred_fallthru
        _
      %p706 = scmp.lt.s32.totalorder %s35, 2
      // Predicated region
      $region105: #{bart_decoder_forward.1} parent=5 // pred_check
        %p707 = pneg %p706
      $region106: #{bart_decoder_forward.1} parent=5 // pred_check_branch
        %709 = sbr.rel (%p707) target = $region108
      $region107: #{bart_decoder_forward.1} parent=5 // pred_region
        // Predicated region
        $region109: #{bart_decoder_forward.1} parent=107 // pred_check
          %p710 = pneg %p55
        $region110: #{bart_decoder_forward.1} parent=107 // pred_check_branch
          %712 = sbr.rel (%p710) target = $region112
        $region111: #{bart_decoder_forward.1} parent=107 // pred_region
          %p713 = scmp.lt.s32.totalorder %s35, 1
          %s714 = scalar_select %p713, %s35, 1
          %s715 = smul.addr %s714, 8
          %s716 = scalar_lea.vmem %s0, %s715
        $region112: #{bart_decoder_forward.1} parent=107 // pred_fallthru
          _
        // Predicated region
        $region113: #{bart_decoder_forward.1} parent=107 // pred_check
          %p717 = pneg %p81
        $region114: #{bart_decoder_forward.1} parent=107 // pred_check_branch
          %719 = sbr.rel (%p717) target = $region116
        $region115: #{bart_decoder_forward.1} parent=107 // pred_region
          %p720 = scmp.lt.s32.totalorder %s35, 1
          %s721 = scalar_select %p720, %s35, 1
          %s722 = smul.addr %s721, 2
          %s723 = smul.addr %s722, 8
          %s724 = scalar_lea.vmem %s1, %s723
        $region116: #{bart_decoder_forward.1} parent=107 // pred_fallthru
          _
        // Predicated region
        $region117: #{bart_decoder_forward.1} parent=107 // pred_check
          %p725 = pneg %p128
        $region118: #{bart_decoder_forward.1} parent=107 // pred_check_branch
          %727 = sbr.rel (%p725) target = $region120
        $region119: #{bart_decoder_forward.1} parent=107 // pred_region
          %p728 = scmp.lt.s32.totalorder %s35, 1
          %s729 = scalar_select %p728, %s35, 1
          %s730 = scalar_lea.vmem %s3, %s729
        $region120: #{bart_decoder_forward.1} parent=107 // pred_fallthru
          _
      $region108: #{bart_decoder_forward.1} parent=5 // pred_fallthru
        _
      %p731 = scmp.le.s32.totalorder 1, %s35
      %p732 = scmp.lt.s32.totalorder %s35, 3
      %p733 = pnand %p731, %p732
      %p734 = pneg %p733
      // Predicated region
      $region121: #{bart_decoder_forward.1} parent=5 // pred_check
        _
      $region122: #{bart_decoder_forward.1} parent=5 // pred_check_branch
        %736 = sbr.rel (%p733) target = $region124
      $region123: #{bart_decoder_forward.1} parent=5 // pred_region
        %s737 = ssub.s32 %s35, 1
        %p738 = scmp.lt.s32.totalorder %s40, 1
        %s739 = scalar_select %p738, %s40, 1
        %s740 = smul.addr %s739, 8
        %s741 = scalar_lea.vmem %s0, %s740
        %p742 = pneg %p61
        %p743 = pneg %p58
        %p744 = scmp.lt.s32.totalorder %s40, 1
        %s745 = scalar_select %p744, %s40, 1
        %s746 = smul.addr %s745, 2
        %s747 = smul.addr %s746, 8
        %s748 = scalar_lea.vmem %s1, %s747
        %p749 = pneg %p87
        %p750 = pneg %p84
        %p751 = pneg %p108
        %p752 = pneg %p105
        %p753 = scmp.lt.s32.totalorder %s40, 1
        %s754 = scalar_select %p753, %s40, 1
        %s755 = scalar_lea.vmem %s3, %s754
        %p756 = pneg %p134
        %p757 = pneg %p131
        %p758 = pneg %p155
        %p759 = pneg %p152
        %p760 = pneg %p176
        %p761 = pneg %p173
        %p762 = pneg %p197
        %p763 = pneg %p194
        %p764 = pneg %p218
        %p765 = pneg %p215
        %p766 = pneg %p239
        %p767 = pneg %p236
        %p768 = pneg %p260
        %p769 = pneg %p257
        %p770 = pneg %p281
        %p771 = pneg %p278
        %p772 = pneg %p302
        %p773 = pneg %p299
        %p774 = pneg %p323
        %p775 = pneg %p320
        %p776 = pneg %p344
        %p777 = pneg %p341
        %p778 = pneg %p365
        %p779 = pneg %p362
        %p780 = pneg %p386
        %p781 = pneg %p383
        %p782 = pneg %p407
        %p783 = pneg %p404
        %p784 = pneg %p428
        %p785 = pneg %p425
        %p786 = pneg %p449
        %p787 = pneg %p446
        %p788 = pneg %p470
        %p789 = pneg %p467
        %p790 = pneg %p491
        %p791 = pneg %p488
        %p792 = pneg %p512
        %p793 = pneg %p509
        %p794 = pneg %p533
        %p795 = pneg %p530
        %p796 = pneg %p554
        %p797 = pneg %p551
        %p798 = pneg %p575
        %p799 = pneg %p572
        %p800 = pneg %p596
        %p801 = pneg %p593
        %p802 = pneg %p622
        %p803 = pneg %p619
        %s804 = sand.u32 %s609, 1
        %s805 = scalar_lea.sflag [#allocation3], %s804
        %s806 = sand.u32 %s609, 1
        %s807 = smul.addr %s806, 8
        %s808 = scalar_lea.vmem [#allocation2], %s807
        %p809 = scmp.lt.s32.totalorder %s40, 1
        %s810 = scalar_select %p809, %s40, 1
        %s811 = smul.addr %s810, 8
        %s812 = scalar_lea.vmem %s0, %s811
        %p813 = scmp.lt.s32.totalorder %s40, 1
        %s814 = scalar_select %p813, %s40, 1
        %s815 = smul.addr %s814, 2
        %s816 = smul.addr %s815, 8
        %s817 = scalar_lea.vmem %s1, %s816
        %p818 = scmp.lt.s32.totalorder %s40, 1
        %s819 = scalar_select %p818, %s40, 1
        %s820 = scalar_lea.vmem %s3, %s819
        %v821 = vlaneseq
        %v822 = vand.u32 %v821, 127
        %vm823 = vcmp.ge.s32.totalorder %v822, 0
        %vm824 = vcmp.lt.s32.totalorder %v822, 8
        %vm825 = vmand %vm823, %vm824
        %v826 = vsel %vm825, 1, 0
        %v827 = vcvt.s32.f32 %v826
        %vm828 = vcmp.ge.s32.totalorder %v822, 8
        %vm829 = vcmp.lt.s32.totalorder %v822, 16
        %vm830 = vmand %vm828, %vm829
        %v831 = vsel %vm830, 1, 0
        %v832 = vcvt.s32.f32 %v831
        %vm833 = vcmp.ge.s32.totalorder %v822, 16
        %vm834 = vcmp.lt.s32.totalorder %v822, 24
        %vm835 = vmand %vm833, %vm834
        %v836 = vsel %vm835, 1, 0
        %v837 = vcvt.s32.f32 %v836
        %vm838 = vcmp.ge.s32.totalorder %v822, 24
        %vm839 = vcmp.lt.s32.totalorder %v822, 32
        %vm840 = vmand %vm838, %vm839
        %v841 = vsel %vm840, 1, 0
        %v842 = vcvt.s32.f32 %v841
        %v843 = vld [vmem:[%s2] sm:$0xff]
        %v844 = vld [vmem:[%s820] sm:$0x1]
        %v845 = vld [vmem:[%s817] sm:$0xff]
        %v846 = vld [vmem:[%s817 + $0x8] sm:$0x3]
        %v847 = vld [vmem:[%s812] sm:$0xff]
        %v848 = vld [vmem:[%s4] sm:$0x1]
        %v849 = vld [vmem:[%s5] sm:$0x1]
        %vm850 = vcmask 261120
        %v851 = vsel %vm850, %v847, 0.0
        %852 = vadd.xlane.f32.xlu0 %v851
        %v853 = vpop.xlane.xlu0 %852
        %v854 = vrcp.pop 32.0
        %v855 = vmul.f32 %v853, %v854
        %v856 = vsub.f32 %v847, %v855
        %v857 = vmul.f32 %v856, %v856
        %v858 = vsel %vm850, %v857, 0.0
        %859 = vadd.xlane.f32.xlu0 %v858
        %v860 = vpop.xlane.xlu0 %859
        %v861 = vmul.f32 %v860, %v854
        %v862 = vadd.f32 %v861, 1e-05
        %v863 = vrsqrt.pop %v862
        %v864 = vmul.f32 %v856, %v863
        %v866 = vlaneseq
        %v867 = vshrl.u32 %v866, 7
        %v868 = vsub.s32 0, %v867
        %v869 = vrot.slane %v848, %v868
        %v871 = vmul.f32 %v864, %v869
        %v873 = vlaneseq
        %v874 = vshrl.u32 %v873, 7
        %v875 = vsub.s32 0, %v874
        %v876 = vrot.slane %v849, %v875
        %v878 = vadd.f32 %v871, %v876
        %v879 = vld [vmem:[%s6] sm:$0xff]
        %v880 = vld [vmem:[%s6 + $0x8] sm:$0xff]
        %v881 = vld [vmem:[%s6 + $0x10] sm:$0xff]
        %v882 = vld [vmem:[%s6 + $0x18] sm:$0xff]
        %v883 = vld [vmem:[%s6 + $0x20] sm:$0xff]
        %v884 = vld [vmem:[%s6 + $0x28] sm:$0xff]
        %v885 = vld [vmem:[%s6 + $0x30] sm:$0xff]
        %v886 = vld [vmem:[%s6 + $0x38] sm:$0xff]
        %v887 = vld [vmem:[%s6 + $0x40] sm:$0xff]
        %v888 = vld [vmem:[%s6 + $0x48] sm:$0xff]
        %v889 = vld [vmem:[%s6 + $0x50] sm:$0xff]
        %v890 = vld [vmem:[%s6 + $0x58] sm:$0xff]
        %v891 = vld [vmem:[%s7] sm:$0x1]
        %v893 = vlaneseq
        %v894 = vshrl.u32 %v893, 7
        %v895 = vsub.s32 0, %v894
        %v896 = vrot.slane %v891, %v895
        %v899 = vsel %vm850, %v878, 0
        %v902 = vsel %vm850, %v879, 0
        %v905 = vsel %vm850, %v880, 0
        %v908 = vsel %vm850, %v881, 0
        %v911 = vsel %vm850, %v882, 0
        %v914 = vsel %vm850, %v883, 0
        %v917 = vsel %vm850, %v884, 0
        %v920 = vsel %vm850, %v885, 0
        %v923 = vsel %vm850, %v886, 0
        %v926 = vsel %vm850, %v887, 0
        %v929 = vsel %vm850, %v888, 0
        %v932 = vsel %vm850, %v889, 0
        %v935 = vsel %vm850, %v890, 0
        %937 = vmatprep.subr.mxu0 0.0
        %938 = vmatpush1.xpose.msra.mxu0 %v902
        %939 = vmatprep.subr.mxu0 0.0
        %940 = vmatpush1.xpose.msra.mxu0 %v905
        %941 = vmatprep.subr.mxu0 0.0
        %942 = vmatpush1.xpose.msra.mxu0 %v908
        %943 = vmatprep.subr.mxu0 0.0
        %944 = vmatpush1.xpose.msra.mxu0 %v911
        %945 = vmatprep.subr.mxu0 0.0
        %946 = vmatpush1.xpose.msra.mxu0 %v914
        %947 = vmatprep.subr.mxu0 0.0
        %948 = vmatpush1.xpose.msra.mxu0 %v917
        %949 = vmatprep.subr.mxu0 0.0
        %950 = vmatpush1.xpose.msra.mxu0 %v920
        %951 = vmatprep.subr.mxu0 0.0
        %952 = vmatpush1.xpose.msra.mxu0 %v923
        %953 = vmatprep.subr.mxu0 0.0
        %954 = vmatpush1.xpose.msra.mxu0 %v926
        %955 = vmatprep.subr.mxu0 0.0
        %956 = vmatpush1.xpose.msra.mxu0 %v929
        %957 = vmatprep.subr.mxu0 0.0
        %958 = vmatpush1.xpose.msra.mxu0 %v932
        %959 = vmatprep.subr.mxu0 0.0
        %960 = vmatpush1.xpose.msra.mxu0 %v935
        %961 = vmatprep.subr.mxu0 0.0
        %962 = vmatpush1.xpose.msra.mxu0 0.0
        %963 = vmatprep.subr.mxu0 0.0
        %964 = vmatpush1.xpose.msra.mxu0 0.0
        %965 = vmatprep.subr.mxu0 0.0
        %966 = vmatpush1.xpose.msra.mxu0 0.0
        %967 = vmatprep.subr.mxu0 0.0
        %968 = vmatpush1.xpose.msra.mxu0 0.0
        %969 = vmatprep.subr.mxu0 0.0
        %970 = vmatpush1.xpose.msra.mxu0 0.0
        %971 = vmatprep.subr.mxu0 0.0
        %972 = vmatpush1.xpose.msra.mxu0 0.0
        %973 = vmatprep.subr.mxu0 0.0
        %974 = vmatpush1.xpose.msra.mxu0 0.0
        %975 = vmatprep.subr.mxu0 0.0
        %976 = vmatpush1.xpose.msra.mxu0 0.0
        %977 = vmatprep.subr.mxu0 0.0
        %978 = vmatpush1.xpose.msra.mxu0 0.0
        %979 = vmatprep.subr.mxu0 0.0
        %980 = vmatpush1.xpose.msra.mxu0 0.0
        %981 = vmatprep.subr.mxu0 0.0
        %982 = vmatpush1.xpose.msra.mxu0 0.0
        %983 = vmatprep.subr.mxu0 0.0
        %984 = vmatpush1.xpose.msra.mxu0 0.0
        %985 = vmatprep.subr.mxu0 0.0
        %986 = vmatpush1.xpose.msra.mxu0 0.0
        %987 = vmatprep.subr.mxu0 0.0
        %988 = vmatpush1.xpose.msra.mxu0 0.0
        %989 = vmatprep.subr.mxu0 0.0
        %990 = vmatpush1.xpose.msra.mxu0 0.0
        %991 = vmatprep.subr.mxu0 0.0
        %992 = vmatpush1.xpose.msra.mxu0 0.0
        %993 = vmatprep.subr.mxu0 0.0
        %994 = vmatpush1.xpose.msra.mxu0 0.0
        %995 = vmatprep.subr.mxu0 0.0
        %996 = vmatpush1.xpose.msra.mxu0 0.0
        %997 = vmatprep.subr.mxu0 0.0
        %998 = vmatpush1.xpose.msra.mxu0 0.0
        %999 = vmatprep.subr.mxu0 0.0
        %1000 = vmatpush1.xpose.msra.mxu0 0.0
        %1001 = vmatprep.mubr.f32.mxu0 0.0
        %1002 = vmatmul.mubr.f32.gmra.mrb[0].mxu0 %v899
        %v1003 = vpop.f32.mrb[0].mxu0
        %v1004 = vadd.f32 %v896, %v1003
        %v1005 = vpop.f32.mrb[0].mxu0
        %1006 = vdwg.mxu0
        %v1007 = vmul.f32 %v1004, %v827
        %1009 = vrot.lane.b32.xlu0 %v1004, 96
        %v1010 = vpop.permute.xlu0 %1009
        %v1012 = vsel %vm850, %v1007, 0
        %v1014 = vsel %vm850, %v1010, 0
        %1016 = vmatprep.subr.mxu0 0.0
        %1017 = vmatpush1.xpose.msra.mxu0 %v1014
        %1018 = vmatprep.subr.mxu0 0.0
        %1019 = vmatpush1.xpose.msra.mxu0 0.0
        %1020 = vmatprep.subr.mxu0 0.0
        %1021 = vmatpush1.xpose.msra.mxu0 0.0
        %1022 = vmatprep.subr.mxu0 0.0
        %1023 = vmatpush1.xpose.msra.mxu0 0.0
        %1024 = vmatprep.subr.mxu0 0.0
        %1025 = vmatpush1.xpose.msra.mxu0 0.0
        %1026 = vmatprep.subr.mxu0 0.0
        %1027 = vmatpush1.xpose.msra.mxu0 0.0
        %1028 = vmatprep.subr.mxu0 0.0
        %1029 = vmatpush1.xpose.msra.mxu0 0.0
        %1030 = vmatprep.subr.mxu0 0.0
        %1031 = vmatpush1.xpose.msra.mxu0 0.0
        %1032 = vmatprep.subr.mxu0 0.0
        %1033 = vmatpush1.xpose.msra.mxu0 0.0
        %1034 = vmatprep.subr.mxu0 0.0
        %1035 = vmatpush1.xpose.msra.mxu0 0.0
        %1036 = vmatprep.subr.mxu0 0.0
        %1037 = vmatpush1.xpose.msra.mxu0 0.0
        %1038 = vmatprep.subr.mxu0 0.0
        %1039 = vmatpush1.xpose.msra.mxu0 0.0
        %1040 = vmatprep.subr.mxu0 0.0
        %1041 = vmatpush1.xpose.msra.mxu0 0.0
        %1042 = vmatprep.subr.mxu0 0.0
        %1043 = vmatpush1.xpose.msra.mxu0 0.0
        %1044 = vmatprep.subr.mxu0 0.0
        %1045 = vmatpush1.xpose.msra.mxu0 0.0
        %1046 = vmatprep.subr.mxu0 0.0
        %1047 = vmatpush1.xpose.msra.mxu0 0.0
        %1048 = vmatprep.subr.mxu0 0.0
        %1049 = vmatpush1.xpose.msra.mxu0 0.0
        %1050 = vmatprep.subr.mxu0 0.0
        %1051 = vmatpush1.xpose.msra.mxu0 0.0
        %1052 = vmatprep.subr.mxu0 0.0
        %1053 = vmatpush1.xpose.msra.mxu0 0.0
        %1054 = vmatprep.subr.mxu0 0.0
        %1055 = vmatpush1.xpose.msra.mxu0 0.0
        %1056 = vmatprep.subr.mxu0 0.0
        %1057 = vmatpush1.xpose.msra.mxu0 0.0
        %1058 = vmatprep.subr.mxu0 0.0
        %1059 = vmatpush1.xpose.msra.mxu0 0.0
        %1060 = vmatprep.subr.mxu0 0.0
        %1061 = vmatpush1.xpose.msra.mxu0 0.0
        %1062 = vmatprep.subr.mxu0 0.0
        %1063 = vmatpush1.xpose.msra.mxu0 0.0
        %1064 = vmatprep.subr.mxu0 0.0
        %1065 = vmatpush1.xpose.msra.mxu0 0.0
        %1066 = vmatprep.subr.mxu0 0.0
        %1067 = vmatpush1.xpose.msra.mxu0 0.0
        %1068 = vmatprep.subr.mxu0 0.0
        %1069 = vmatpush1.xpose.msra.mxu0 0.0
        %1070 = vmatprep.subr.mxu0 0.0
        %1071 = vmatpush1.xpose.msra.mxu0 0.0
        %1072 = vmatprep.subr.mxu0 0.0
        %1073 = vmatpush1.xpose.msra.mxu0 0.0
        %1074 = vmatprep.subr.mxu0 0.0
        %1075 = vmatpush1.xpose.msra.mxu0 0.0
        %1076 = vmatprep.subr.mxu0 0.0
        %1077 = vmatpush1.xpose.msra.mxu0 0.0
        %1078 = vmatprep.subr.mxu0 0.0
        %1079 = vmatpush1.xpose.msra.mxu0 0.0
        %1080 = vmatprep.mubr.f32.mxu0 0.0
        %1081 = vmatmul.mubr.f32.gmra.mrb[0].mxu0 %v1012
        %v1082 = vpop.f32.mrb[0].mxu0
        %v1083 = vadd.f32 %v843, %v1082
        %v1084 = vpop.f32.mrb[0].mxu0
        %1085 = vdwg.mxu0
        %vm1086 = vcmask 64512
        %v1087 = vsel %vm1086, %v1083, -inf
        %1088 = vmax.xlane.f32.xlu0 %v1087
        %v1089 = vpop.xlane.xlu0 %1088
        %v1090 = vsub.f32 %v1083, %v1089
        %v1091 = vmul.f32 %v1090, 1.442695
        %v1092 = vpow.pop %v1091
        %v1093 = vsel %vm1086, %v1092, 0.0
        %1094 = vadd.xlane.f32.xlu0 %v1093
        %v1095 = vpop.xlane.xlu0 %1094
        %v1096 = vrcp.pop %v1095
        %v1097 = vmul.f32 %v1092, %v1096
        %1099 = vrot.lane.b32.xlu0 %v827, 64
        %v1100 = vpop.permute.xlu0 %1099
        %v1102 = vmul.f32 %v1004, %v1100
        %v1103 = vmul.f32 %v1004, %v832
        %v1105 = vsel %vm850, %v1103, 0
        %1107 = vmatprep.subr.mxu0 0.0
        %1108 = vmatpush1.xpose.msra.mxu0 %v1014
        %1109 = vmatprep.subr.mxu0 0.0
        %1110 = vmatpush1.xpose.msra.mxu0 0.0
        %1111 = vmatprep.subr.mxu0 0.0
        %1112 = vmatpush1.xpose.msra.mxu0 0.0
        %1113 = vmatprep.subr.mxu0 0.0
        %1114 = vmatpush1.xpose.msra.mxu0 0.0
        %1115 = vmatprep.subr.mxu0 0.0
        %1116 = vmatpush1.xpose.msra.mxu0 0.0
        %1117 = vmatprep.subr.mxu0 0.0
        %1118 = vmatpush1.xpose.msra.mxu0 0.0
        %1119 = vmatprep.subr.mxu0 0.0
        %1120 = vmatpush1.xpose.msra.mxu0 0.0
        %1121 = vmatprep.subr.mxu0 0.0
        %1122 = vmatpush1.xpose.msra.mxu0 0.0
        %1123 = vmatprep.subr.mxu0 0.0
        %1124 = vmatpush1.xpose.msra.mxu0 0.0
        %1125 = vmatprep.subr.mxu0 0.0
        %1126 = vmatpush1.xpose.msra.mxu0 0.0
        %1127 = vmatprep.subr.mxu0 0.0
        %1128 = vmatpush1.xpose.msra.mxu0 0.0
        %1129 = vmatprep.subr.mxu0 0.0
        %1130 = vmatpush1.xpose.msra.mxu0 0.0
        %1131 = vmatprep.subr.mxu0 0.0
        %1132 = vmatpush1.xpose.msra.mxu0 0.0
        %1133 = vmatprep.subr.mxu0 0.0
        %1134 = vmatpush1.xpose.msra.mxu0 0.0
        %1135 = vmatprep.subr.mxu0 0.0
        %1136 = vmatpush1.xpose.msra.mxu0 0.0
        %1137 = vmatprep.subr.mxu0 0.0
        %1138 = vmatpush1.xpose.msra.mxu0 0.0
        %1139 = vmatprep.subr.mxu0 0.0
        %1140 = vmatpush1.xpose.msra.mxu0 0.0
        %1141 = vmatprep.subr.mxu0 0.0
        %1142 = vmatpush1.xpose.msra.mxu0 0.0
        %1143 = vmatprep.subr.mxu0 0.0
        %1144 = vmatpush1.xpose.msra.mxu0 0.0
        %1145 = vmatprep.subr.mxu0 0.0
        %1146 = vmatpush1.xpose.msra.mxu0 0.0
        %1147 = vmatprep.subr.mxu0 0.0
        %1148 = vmatpush1.xpose.msra.mxu0 0.0
        %1149 = vmatprep.subr.mxu0 0.0
        %1150 = vmatpush1.xpose.msra.mxu0 0.0
        %1151 = vmatprep.subr.mxu0 0.0
        %1152 = vmatpush1.xpose.msra.mxu0 0.0
        %1153 = vmatprep.subr.mxu0 0.0
        %1154 = vmatpush1.xpose.msra.mxu0 0.0
        %1155 = vmatprep.subr.mxu0 0.0
        %1156 = vmatpush1.xpose.msra.mxu0 0.0
        %1157 = vmatprep.subr.mxu0 0.0
        %1158 = vmatpush1.xpose.msra.mxu0 0.0
        %1159 = vmatprep.subr.mxu0 0.0
        %1160 = vmatpush1.xpose.msra.mxu0 0.0
        %1161 = vmatprep.subr.mxu0 0.0
        %1162 = vmatpush1.xpose.msra.mxu0 0.0
        %1163 = vmatprep.subr.mxu0 0.0
        %1164 = vmatpush1.xpose.msra.mxu0 0.0
        %1165 = vmatprep.subr.mxu0 0.0
        %1166 = vmatpush1.xpose.msra.mxu0 0.0
        %1167 = vmatprep.subr.mxu0 0.0
        %1168 = vmatpush1.xpose.msra.mxu0 0.0
        %1169 = vmatprep.subr.mxu0 0.0
        %1170 = vmatpush1.xpose.msra.mxu0 0.0
        %1171 = vmatprep.mubr.f32.mxu0 0.0
        %1172 = vmatmul.mubr.f32.gmra.mrb[0].mxu0 %v1105
        %v1173 = vpop.f32.mrb[0].mxu0
        %v1174 = vadd.f32 %v843, %v1173
        %v1175 = vpop.f32.mrb[0].mxu0
        %1176 = vdwg.mxu0
        %v1177 = vsel %vm1086, %v1174, -inf
        %1178 = vmax.xlane.f32.xlu0 %v1177
        %v1179 = vpop.xlane.xlu0 %1178
        %v1180 = vsub.f32 %v1174, %v1179
        %v1181 = vmul.f32 %v1180, 1.442695
        %v1182 = vpow.pop %v1181
        %v1183 = vsel %vm1086, %v1182, 0.0
        %1184 = vadd.xlane.f32.xlu0 %v1183
        %v1185 = vpop.xlane.xlu0 %1184
        %v1186 = vrcp.pop %v1185
        %v1187 = vmul.f32 %v1182, %v1186
        %1189 = vrot.lane.b32.xlu0 %v832, 64
        %v1190 = vpop.permute.xlu0 %1189
        %v1192 = vmul.f32 %v1004, %v1190
        %1194 = vrot.lane.b32.xlu0 %v1192, 64
        %v1195 = vpop.permute.xlu0 %1194
        %v1198 = vsel %vm1086, %v1187, 0
        %1200 = vmatprep.subr.mxu0 0.0
        %1201 = vmatpush1.msra.mxu0 %v1195
        %1202 = vmatprep.subr.mxu0 0.0
        %1203 = vmatpush1.msra.mxu0 0.0
        %1204 = vmatprep.subr.mxu0 0.0
        %1205 = vmatpush1.msra.mxu0 0.0
        %1206 = vmatprep.subr.mxu0 0.0
        %1207 = vmatpush1.msra.mxu0 0.0
        %1208 = vmatprep.subr.mxu0 0.0
        %1209 = vmatpush1.msra.mxu0 0.0
        %1210 = vmatprep.subr.mxu0 0.0
        %1211 = vmatpush1.msra.mxu0 0.0
        %1212 = vmatprep.subr.mxu0 0.0
        %1213 = vmatpush1.msra.mxu0 0.0
        %1214 = vmatprep.subr.mxu0 0.0
        %1215 = vmatpush1.msra.mxu0 0.0
        %1216 = vmatprep.subr.mxu0 0.0
        %1217 = vmatpush1.msra.mxu0 0.0
        %1218 = vmatprep.subr.mxu0 0.0
        %1219 = vmatpush1.msra.mxu0 0.0
        %1220 = vmatprep.subr.mxu0 0.0
        %1221 = vmatpush1.msra.mxu0 0.0
        %1222 = vmatprep.subr.mxu0 0.0
        %1223 = vmatpush1.msra.mxu0 0.0
        %1224 = vmatprep.subr.mxu0 0.0
        %1225 = vmatpush1.msra.mxu0 0.0
        %1226 = vmatprep.subr.mxu0 0.0
        %1227 = vmatpush1.msra.mxu0 0.0
        %1228 = vmatprep.subr.mxu0 0.0
        %1229 = vmatpush1.msra.mxu0 0.0
        %1230 = vmatprep.subr.mxu0 0.0
        %1231 = vmatpush1.msra.mxu0 0.0
        %1232 = vmatprep.subr.mxu0 0.0
        %1233 = vmatpush1.msra.mxu0 0.0
        %1234 = vmatprep.subr.mxu0 0.0
        %1235 = vmatpush1.msra.mxu0 0.0
        %1236 = vmatprep.subr.mxu0 0.0
        %1237 = vmatpush1.msra.mxu0 0.0
        %1238 = vmatprep.subr.mxu0 0.0
        %1239 = vmatpush1.msra.mxu0 0.0
        %1240 = vmatprep.subr.mxu0 0.0
        %1241 = vmatpush1.msra.mxu0 0.0
        %1242 = vmatprep.subr.mxu0 0.0
        %1243 = vmatpush1.msra.mxu0 0.0
        %1244 = vmatprep.subr.mxu0 0.0
        %1245 = vmatpush1.msra.mxu0 0.0
        %1246 = vmatprep.subr.mxu0 0.0
        %1247 = vmatpush1.msra.mxu0 0.0
        %1248 = vmatprep.subr.mxu0 0.0
        %1249 = vmatpush1.msra.mxu0 0.0
        %1250 = vmatprep.subr.mxu0 0.0
        %1251 = vmatpush1.msra.mxu0 0.0
        %1252 = vmatprep.subr.mxu0 0.0
        %1253 = vmatpush1.msra.mxu0 0.0
        %1254 = vmatprep.subr.mxu0 0.0
        %1255 = vmatpush1.msra.mxu0 0.0
        %1256 = vmatprep.subr.mxu0 0.0
        %1257 = vmatpush1.msra.mxu0 0.0
        %1258 = vmatprep.subr.mxu0 0.0
        %1259 = vmatpush1.msra.mxu0 0.0
        %1260 = vmatprep.subr.mxu0 0.0
        %1261 = vmatpush1.msra.mxu0 0.0
        %1262 = vmatprep.subr.mxu0 0.0
        %1263 = vmatpush1.msra.mxu0 0.0
        %1264 = vmatprep.mubr.f32.mxu0 0.0
        %1265 = vmatmul.mubr.f32.gmra.mrb[0].mxu0 %v1198
        %v1266 = vpop.f32.mrb[0].mxu0
        %v1267 = vadd.f32 0.0, %v1266
        %v1268 = vpop.f32.mrb[0].mxu0
        %1269 = vdwg.mxu0
        %1271 = vrot.lane.b32.xlu0 %v1102, 64
        %v1272 = vpop.permute.xlu0 %1271
        %v1275 = vsel %vm1086, %v1097, 0
        %1277 = vmatprep.subr.mxu0 0.0
        %1278 = vmatpush1.msra.mxu0 %v1272
        %1279 = vmatprep.subr.mxu0 0.0
        %1280 = vmatpush1.msra.mxu0 0.0
        %1281 = vmatprep.subr.mxu0 0.0
        %1282 = vmatpush1.msra.mxu0 0.0
        %1283 = vmatprep.subr.mxu0 0.0
        %1284 = vmatpush1.msra.mxu0 0.0
        %1285 = vmatprep.subr.mxu0 0.0
        %1286 = vmatpush1.msra.mxu0 0.0
        %1287 = vmatprep.subr.mxu0 0.0
        %1288 = vmatpush1.msra.mxu0 0.0
        %1289 = vmatprep.subr.mxu0 0.0
        %1290 = vmatpush1.msra.mxu0 0.0
        %1291 = vmatprep.subr.mxu0 0.0
        %1292 = vmatpush1.msra.mxu0 0.0
        %1293 = vmatprep.subr.mxu0 0.0
        %1294 = vmatpush1.msra.mxu0 0.0
        %1295 = vmatprep.subr.mxu0 0.0
        %1296 = vmatpush1.msra.mxu0 0.0
        %1297 = vmatprep.subr.mxu0 0.0
        %1298 = vmatpush1.msra.mxu0 0.0
        %1299 = vmatprep.subr.mxu0 0.0
        %1300 = vmatpush1.msra.mxu0 0.0
        %1301 = vmatprep.subr.mxu0 0.0
        %1302 = vmatpush1.msra.mxu0 0.0
        %1303 = vmatprep.subr.mxu0 0.0
        %1304 = vmatpush1.msra.mxu0 0.0
        %1305 = vmatprep.subr.mxu0 0.0
        %1306 = vmatpush1.msra.mxu0 0.0
        %1307 = vmatprep.subr.mxu0 0.0
        %1308 = vmatpush1.msra.mxu0 0.0
        %1309 = vmatprep.subr.mxu0 0.0
        %1310 = vmatpush1.msra.mxu0 0.0
        %1311 = vmatprep.subr.mxu0 0.0
        %1312 = vmatpush1.msra.mxu0 0.0
        %1313 = vmatprep.subr.mxu0 0.0
        %1314 = vmatpush1.msra.mxu0 0.0
        %1315 = vmatprep.subr.mxu0 0.0
        %1316 = vmatpush1.msra.mxu0 0.0
        %1317 = vmatprep.subr.mxu0 0.0
        %1318 = vmatpush1.msra.mxu0 0.0
        %1319 = vmatprep.subr.mxu0 0.0
        %1320 = vmatpush1.msra.mxu0 0.0
        %1321 = vmatprep.subr.mxu0 0.0
        %1322 = vmatpush1.msra.mxu0 0.0
        %1323 = vmatprep.subr.mxu0 0.0
        %1324 = vmatpush1.msra.mxu0 0.0
        %1325 = vmatprep.subr.mxu0 0.0
        %1326 = vmatpush1.msra.mxu0 0.0
        %1327 = vmatprep.subr.mxu0 0.0
        %1328 = vmatpush1.msra.mxu0 0.0
        %1329 = vmatprep.subr.mxu0 0.0
        %1330 = vmatpush1.msra.mxu0 0.0
        %1331 = vmatprep.subr.mxu0 0.0
        %1332 = vmatpush1.msra.mxu0 0.0
        %1333 = vmatprep.subr.mxu0 0.0
        %1334 = vmatpush1.msra.mxu0 0.0
        %1335 = vmatprep.subr.mxu0 0.0
        %1336 = vmatpush1.msra.mxu0 0.0
        %1337 = vmatprep.subr.mxu0 0.0
        %1338 = vmatpush1.msra.mxu0 0.0
        %1339 = vmatprep.subr.mxu0 0.0
        %1340 = vmatpush1.msra.mxu0 0.0
        %1341 = vmatprep.mubr.f32.mxu0 0.0
        %1342 = vmatmul.mubr.f32.gmra.mrb[0].mxu0 %v1275
        %v1343 = vpop.f32.mrb[0].mxu0
        %v1344 = vadd.f32 %v1267, %v1343
        %v1345 = vpop.f32.mrb[0].mxu0
        %1346 = vdwg.mxu0
        %v1347 = vmul.f32 %v1004, %v837
        %v1349 = vsel %vm850, %v1347, 0
        %1351 = vmatprep.subr.mxu0 0.0
        %1352 = vmatpush1.xpose.msra.mxu0 %v1014
        %1353 = vmatprep.subr.mxu0 0.0
        %1354 = vmatpush1.xpose.msra.mxu0 0.0
        %1355 = vmatprep.subr.mxu0 0.0
        %1356 = vmatpush1.xpose.msra.mxu0 0.0
        %1357 = vmatprep.subr.mxu0 0.0
        %1358 = vmatpush1.xpose.msra.mxu0 0.0
        %1359 = vmatprep.subr.mxu0 0.0
        %1360 = vmatpush1.xpose.msra.mxu0 0.0
        %1361 = vmatprep.subr.mxu0 0.0
        %1362 = vmatpush1.xpose.msra.mxu0 0.0
        %1363 = vmatprep.subr.mxu0 0.0
        %1364 = vmatpush1.xpose.msra.mxu0 0.0
        %1365 = vmatprep.subr.mxu0 0.0
        %1366 = vmatpush1.xpose.msra.mxu0 0.0
        %1367 = vmatprep.subr.mxu0 0.0
        %1368 = vmatpush1.xpose.msra.mxu0 0.0
        %1369 = vmatprep.subr.mxu0 0.0
        %1370 = vmatpush1.xpose.msra.mxu0 0.0
        %1371 = vmatprep.subr.mxu0 0.0
        %1372 = vmatpush1.xpose.msra.mxu0 0.0
        %1373 = vmatprep.subr.mxu0 0.0
        %1374 = vmatpush1.xpose.msra.mxu0 0.0
        %1375 = vmatprep.subr.mxu0 0.0
        %1376 = vmatpush1.xpose.msra.mxu0 0.0
        %1377 = vmatprep.subr.mxu0 0.0
        %1378 = vmatpush1.xpose.msra.mxu0 0.0
        %1379 = vmatprep.subr.mxu0 0.0
        %1380 = vmatpush1.xpose.msra.mxu0 0.0
        %1381 = vmatprep.subr.mxu0 0.0
        %1382 = vmatpush1.xpose.msra.mxu0 0.0
        %1383 = vmatprep.subr.mxu0 0.0
        %1384 = vmatpush1.xpose.msra.mxu0 0.0
        %1385 = vmatprep.subr.mxu0 0.0
        %1386 = vmatpush1.xpose.msra.mxu0 0.0
        %1387 = vmatprep.subr.mxu0 0.0
        %1388 = vmatpush1.xpose.msra.mxu0 0.0
        %1389 = vmatprep.subr.mxu0 0.0
        %1390 = vmatpush1.xpose.msra.mxu0 0.0
        %1391 = vmatprep.subr.mxu0 0.0
        %1392 = vmatpush1.xpose.msra.mxu0 0.0
        %1393 = vmatprep.subr.mxu0 0.0
        %1394 = vmatpush1.xpose.msra.mxu0 0.0
        %1395 = vmatprep.subr.mxu0 0.0
        %1396 = vmatpush1.xpose.msra.mxu0 0.0
        %1397 = vmatprep.subr.mxu0 0.0
        %1398 = vmatpush1.xpose.msra.mxu0 0.0
        %1399 = vmatprep.subr.mxu0 0.0
        %1400 = vmatpush1.xpose.msra.mxu0 0.0
        %1401 = vmatprep.subr.mxu0 0.0
        %1402 = vmatpush1.xpose.msra.mxu0 0.0
        %1403 = vmatprep.subr.mxu0 0.0
        %1404 = vmatpush1.xpose.msra.mxu0 0.0
        %1405 = vmatprep.subr.mxu0 0.0
        %1406 = vmatpush1.xpose.msra.mxu0 0.0
        %1407 = vmatprep.subr.mxu0 0.0
        %1408 = vmatpush1.xpose.msra.mxu0 0.0
        %1409 = vmatprep.subr.mxu0 0.0
        %1410 = vmatpush1.xpose.msra.mxu0 0.0
        %1411 = vmatprep.subr.mxu0 0.0
        %1412 = vmatpush1.xpose.msra.mxu0 0.0
        %1413 = vmatprep.subr.mxu0 0.0
        %1414 = vmatpush1.xpose.msra.mxu0 0.0
        %1415 = vmatprep.mubr.f32.mxu0 0.0
        %1416 = vmatmul.mubr.f32.gmra.mrb[0].mxu0 %v1349
        %v1417 = vpop.f32.mrb[0].mxu0
        %v1418 = vadd.f32 %v843, %v1417
        %v1419 = vpop.f32.mrb[0].mxu0
        %1420 = vdwg.mxu0
        %v1421 = vsel %vm1086, %v1418, -inf
        %1422 = vmax.xlane.f32.xlu0 %v1421
        %v1423 = vpop.xlane.xlu0 %1422
        %v1424 = vsub.f32 %v1418, %v1423
        %v1425 = vmul.f32 %v1424, 1.442695
        %v1426 = vpow.pop %v1425
        %v1427 = vsel %vm1086, %v1426, 0.0
        %1428 = vadd.xlane.f32.xlu0 %v1427
        %v1429 = vpop.xlane.xlu0 %1428
        %v1430 = vrcp.pop %v1429
        %v1431 = vmul.f32 %v1426, %v1430
        %1433 = vrot.lane.b32.xlu0 %v837, 64
        %v1434 = vpop.permute.xlu0 %1433
        %v1436 = vmul.f32 %v1004, %v1434
        %1438 = vrot.lane.b32.xlu0 %v1436, 64
        %v1439 = vpop.permute.xlu0 %1438
        %v1442 = vsel %vm1086, %v1431, 0
        %1444 = vmatprep.subr.mxu0 0.0
        %1445 = vmatpush1.msra.mxu0 %v1439
        %1446 = vmatprep.subr.mxu0 0.0
        %1447 = vmatpush1.msra.mxu0 0.0
        %1448 = vmatprep.subr.mxu0 0.0
        %1449 = vmatpush1.msra.mxu0 0.0
        %1450 = vmatprep.subr.mxu0 0.0
        %1451 = vmatpush1.msra.mxu0 0.0
        %1452 = vmatprep.subr.mxu0 0.0
        %1453 = vmatpush1.msra.mxu0 0.0
        %1454 = vmatprep.subr.mxu0 0.0
        %1455 = vmatpush1.msra.mxu0 0.0
        %1456 = vmatprep.subr.mxu0 0.0
        %1457 = vmatpush1.msra.mxu0 0.0
        %1458 = vmatprep.subr.mxu0 0.0
        %1459 = vmatpush1.msra.mxu0 0.0
        %1460 = vmatprep.subr.mxu0 0.0
        %1461 = vmatpush1.msra.mxu0 0.0
        %1462 = vmatprep.subr.mxu0 0.0
        %1463 = vmatpush1.msra.mxu0 0.0
        %1464 = vmatprep.subr.mxu0 0.0
        %1465 = vmatpush1.msra.mxu0 0.0
        %1466 = vmatprep.subr.mxu0 0.0
        %1467 = vmatpush1.msra.mxu0 0.0
        %1468 = vmatprep.subr.mxu0 0.0
        %1469 = vmatpush1.msra.mxu0 0.0
        %1470 = vmatprep.subr.mxu0 0.0
        %1471 = vmatpush1.msra.mxu0 0.0
        %1472 = vmatprep.subr.mxu0 0.0
        %1473 = vmatpush1.msra.mxu0 0.0
        %1474 = vmatprep.subr.mxu0 0.0
        %1475 = vmatpush1.msra.mxu0 0.0
        %1476 = vmatprep.subr.mxu0 0.0
        %1477 = vmatpush1.msra.mxu0 0.0
        %1478 = vmatprep.subr.mxu0 0.0
        %1479 = vmatpush1.msra.mxu0 0.0
        %1480 = vmatprep.subr.mxu0 0.0
        %1481 = vmatpush1.msra.mxu0 0.0
        %1482 = vmatprep.subr.mxu0 0.0
        %1483 = vmatpush1.msra.mxu0 0.0
        %1484 = vmatprep.subr.mxu0 0.0
        %1485 = vmatpush1.msra.mxu0 0.0
        %1486 = vmatprep.subr.mxu0 0.0
        %1487 = vmatpush1.msra.mxu0 0.0
        %1488 = vmatprep.subr.mxu0 0.0
        %1489 = vmatpush1.msra.mxu0 0.0
        %1490 = vmatprep.subr.mxu0 0.0
        %1491 = vmatpush1.msra.mxu0 0.0
        %1492 = vmatprep.subr.mxu0 0.0
        %1493 = vmatpush1.msra.mxu0 0.0
        %1494 = vmatprep.subr.mxu0 0.0
        %1495 = vmatpush1.msra.mxu0 0.0
        %1496 = vmatprep.subr.mxu0 0.0
        %1497 = vmatpush1.msra.mxu0 0.0
        %1498 = vmatprep.subr.mxu0 0.0
        %1499 = vmatpush1.msra.mxu0 0.0
        %1500 = vmatprep.subr.mxu0 0.0
        %1501 = vmatpush1.msra.mxu0 0.0
        %1502 = vmatprep.subr.mxu0 0.0
        %1503 = vmatpush1.msra.mxu0 0.0
        %1504 = vmatprep.subr.mxu0 0.0
        %1505 = vmatpush1.msra.mxu0 0.0
        %1506 = vmatprep.subr.mxu0 0.0
        %1507 = vmatpush1.msra.mxu0 0.0
        %1508 = vmatprep.mubr.f32.mxu0 0.0
        %1509 = vmatmul.mubr.f32.gmra.mrb[0].mxu0 %v1442
        %v1510 = vpop.f32.mrb[0].mxu0
        %v1511 = vadd.f32 0.0, %v1510
        %v1512 = vpop.f32.mrb[0].mxu0
        %1513 = vdwg.mxu0
        %v1514 = vadd.f32 %v1344, %v1511
        %v1515 = vmul.f32 %v1004, %v842
        %v1517 = vsel %vm850, %v1515, 0
        %1519 = vmatprep.subr.mxu0 0.0
        %1520 = vmatpush1.xpose.msra.mxu0 %v1014
        %1521 = vmatprep.subr.mxu0 0.0
        %1522 = vmatpush1.xpose.msra.mxu0 0.0
        %1523 = vmatprep.subr.mxu0 0.0
        %1524 = vmatpush1.xpose.msra.mxu0 0.0
        %1525 = vmatprep.subr.mxu0 0.0
        %1526 = vmatpush1.xpose.msra.mxu0 0.0
        %1527 = vmatprep.subr.mxu0 0.0
        %1528 = vmatpush1.xpose.msra.mxu0 0.0
        %1529 = vmatprep.subr.mxu0 0.0
        %1530 = vmatpush1.xpose.msra.mxu0 0.0
        %1531 = vmatprep.subr.mxu0 0.0
        %1532 = vmatpush1.xpose.msra.mxu0 0.0
        %1533 = vmatprep.subr.mxu0 0.0
        %1534 = vmatpush1.xpose.msra.mxu0 0.0
        %1535 = vmatprep.subr.mxu0 0.0
        %1536 = vmatpush1.xpose.msra.mxu0 0.0
        %1537 = vmatprep.subr.mxu0 0.0
        %1538 = vmatpush1.xpose.msra.mxu0 0.0
        %1539 = vmatprep.subr.mxu0 0.0
        %1540 = vmatpush1.xpose.msra.mxu0 0.0
        %1541 = vmatprep.subr.mxu0 0.0
        %1542 = vmatpush1.xpose.msra.mxu0 0.0
        %1543 = vmatprep.subr.mxu0 0.0
        %1544 = vmatpush1.xpose.msra.mxu0 0.0
        %1545 = vmatprep.subr.mxu0 0.0
        %1546 = vmatpush1.xpose.msra.mxu0 0.0
        %1547 = vmatprep.subr.mxu0 0.0
        %1548 = vmatpush1.xpose.msra.mxu0 0.0
        %1549 = vmatprep.subr.mxu0 0.0
        %1550 = vmatpush1.xpose.msra.mxu0 0.0
        %1551 = vmatprep.subr.mxu0 0.0
        %1552 = vmatpush1.xpose.msra.mxu0 0.0
        %1553 = vmatprep.subr.mxu0 0.0
        %1554 = vmatpush1.xpose.msra.mxu0 0.0
        %1555 = vmatprep.subr.mxu0 0.0
        %1556 = vmatpush1.xpose.msra.mxu0 0.0
        %1557 = vmatprep.subr.mxu0 0.0
        %1558 = vmatpush1.xpose.msra.mxu0 0.0
        %1559 = vmatprep.subr.mxu0 0.0
        %1560 = vmatpush1.xpose.msra.mxu0 0.0
        %1561 = vmatprep.subr.mxu0 0.0
        %1562 = vmatpush1.xpose.msra.mxu0 0.0
        %1563 = vmatprep.subr.mxu0 0.0
        %1564 = vmatpush1.xpose.msra.mxu0 0.0
        %1565 = vmatprep.subr.mxu0 0.0
        %1566 = vmatpush1.xpose.msra.mxu0 0.0
        %1567 = vmatprep.subr.mxu0 0.0
        %1568 = vmatpush1.xpose.msra.mxu0 0.0
        %1569 = vmatprep.subr.mxu0 0.0
        %1570 = vmatpush1.xpose.msra.mxu0 0.0
        %1571 = vmatprep.subr.mxu0 0.0
        %1572 = vmatpush1.xpose.msra.mxu0 0.0
        %1573 = vmatprep.subr.mxu0 0.0
        %1574 = vmatpush1.xpose.msra.mxu0 0.0
        %1575 = vmatprep.subr.mxu0 0.0
        %1576 = vmatpush1.xpose.msra.mxu0 0.0
        %1577 = vmatprep.subr.mxu0 0.0
        %1578 = vmatpush1.xpose.msra.mxu0 0.0
        %1579 = vmatprep.subr.mxu0 0.0
        %1580 = vmatpush1.xpose.msra.mxu0 0.0
        %1581 = vmatprep.subr.mxu0 0.0
        %1582 = vmatpush1.xpose.msra.mxu0 0.0
        %1583 = vmatprep.mubr.f32.mxu0 0.0
        %1584 = vmatmul.mubr.f32.gmra.mrb[0].mxu0 %v1517
        %v1585 = vpop.f32.mrb[0].mxu0
        %v1586 = vadd.f32 %v843, %v1585
        %v1587 = vpop.f32.mrb[0].mxu0
        %1588 = vdwg.mxu0
        %v1589 = vsel %vm1086, %v1586, -inf
        %1590 = vmax.xlane.f32.xlu0 %v1589
        %v1591 = vpop.xlane.xlu0 %1590
        %v1592 = vsub.f32 %v1586, %v1591
        %v1593 = vmul.f32 %v1592, 1.442695
        %v1594 = vpow.pop %v1593
        %v1595 = vsel %vm1086, %v1594, 0.0
        %1596 = vadd.xlane.f32.xlu0 %v1595
        %v1597 = vpop.xlane.xlu0 %1596
        %v1598 = vrcp.pop %v1597
        %v1599 = vmul.f32 %v1594, %v1598
        %1601 = vrot.lane.b32.xlu0 %v842, 64
        %v1602 = vpop.permute.xlu0 %1601
        %v1604 = vmul.f32 %v1004, %v1602
        %1606 = vrot.lane.b32.xlu0 %v1604, 64
        %v1607 = vpop.permute.xlu0 %1606
        %v1610 = vsel %vm1086, %v1599, 0
        %1612 = vmatprep.subr.mxu0 0.0
        %1613 = vmatpush1.msra.mxu0 %v1607
        %1614 = vmatprep.subr.mxu0 0.0
        %1615 = vmatpush1.msra.mxu0 0.0
        %1616 = vmatprep.subr.mxu0 0.0
        %1617 = vmatpush1.msra.mxu0 0.0
        %1618 = vmatprep.subr.mxu0 0.0
        %1619 = vmatpush1.msra.mxu0 0.0
        %1620 = vmatprep.subr.mxu0 0.0
        %1621 = vmatpush1.msra.mxu0 0.0
        %1622 = vmatprep.subr.mxu0 0.0
        %1623 = vmatpush1.msra.mxu0 0.0
        %1624 = vmatprep.subr.mxu0 0.0
        %1625 = vmatpush1.msra.mxu0 0.0
        %1626 = vmatprep.subr.mxu0 0.0
        %1627 = vmatpush1.msra.mxu0 0.0
        %1628 = vmatprep.subr.mxu0 0.0
        %1629 = vmatpush1.msra.mxu0 0.0
        %1630 = vmatprep.subr.mxu0 0.0
        %1631 = vmatpush1.msra.mxu0 0.0
        %1632 = vmatprep.subr.mxu0 0.0
        %1633 = vmatpush1.msra.mxu0 0.0
        %1634 = vmatprep.subr.mxu0 0.0
        %1635 = vmatpush1.msra.mxu0 0.0
        %1636 = vmatprep.subr.mxu0 0.0
        %1637 = vmatpush1.msra.mxu0 0.0
        %1638 = vmatprep.subr.mxu0 0.0
        %1639 = vmatpush1.msra.mxu0 0.0
        %1640 = vmatprep.subr.mxu0 0.0
        %1641 = vmatpush1.msra.mxu0 0.0
        %1642 = vmatprep.subr.mxu0 0.0
        %1643 = vmatpush1.msra.mxu0 0.0
        %1644 = vmatprep.subr.mxu0 0.0
        %1645 = vmatpush1.msra.mxu0 0.0
        %1646 = vmatprep.subr.mxu0 0.0
        %1647 = vmatpush1.msra.mxu0 0.0
        %1648 = vmatprep.subr.mxu0 0.0
        %1649 = vmatpush1.msra.mxu0 0.0
        %1650 = vmatprep.subr.mxu0 0.0
        %1651 = vmatpush1.msra.mxu0 0.0
        %1652 = vmatprep.subr.mxu0 0.0
        %1653 = vmatpush1.msra.mxu0 0.0
        %1654 = vmatprep.subr.mxu0 0.0
        %1655 = vmatpush1.msra.mxu0 0.0
        %1656 = vmatprep.subr.mxu0 0.0
        %1657 = vmatpush1.msra.mxu0 0.0
        %1658 = vmatprep.subr.mxu0 0.0
        %1659 = vmatpush1.msra.mxu0 0.0
        %1660 = vmatprep.subr.mxu0 0.0
        %1661 = vmatpush1.msra.mxu0 0.0
        %1662 = vmatprep.subr.mxu0 0.0
        %1663 = vmatpush1.msra.mxu0 0.0
        %1664 = vmatprep.subr.mxu0 0.0
        %1665 = vmatpush1.msra.mxu0 0.0
        %1666 = vmatprep.subr.mxu0 0.0
        %1667 = vmatpush1.msra.mxu0 0.0
        %1668 = vmatprep.subr.mxu0 0.0
        %1669 = vmatpush1.msra.mxu0 0.0
        %1670 = vmatprep.subr.mxu0 0.0
        %1671 = vmatpush1.msra.mxu0 0.0
        %1672 = vmatprep.subr.mxu0 0.0
        %1673 = vmatpush1.msra.mxu0 0.0
        %1674 = vmatprep.subr.mxu0 0.0
        %1675 = vmatpush1.msra.mxu0 0.0
        %1676 = vmatprep.mubr.f32.mxu0 0.0
        %1677 = vmatmul.mubr.f32.gmra.mrb[0].mxu0 %v1610
        %v1678 = vpop.f32.mrb[0].mxu0
        %v1679 = vadd.f32 0.0, %v1678
        %v1680 = vpop.f32.mrb[0].mxu0
        %1681 = vdwg.mxu0
        %v1682 = vadd.f32 %v1514, %v1679
        %v1683 = vld [vmem:[%s8] sm:$0xff]
        %v1684 = vld [vmem:[%s8 + $0x8] sm:$0xff]
        %v1685 = vld [vmem:[%s8 + $0x10] sm:$0xff]
        %v1686 = vld [vmem:[%s8 + $0x18] sm:$0xff]
        %v1687 = vld [vmem:[%s9] sm:$0x1]
        %v1689 = vlaneseq
        %v1690 = vshrl.u32 %v1689, 7
        %v1691 = vsub.s32 0, %v1690
        %v1692 = vrot.slane %v1687, %v1691
        %v1695 = vsel %vm850, %v1682, 0
        %v1698 = vsel %vm850, %v1683, 0
        %v1701 = vsel %vm850, %v1684, 0
        %v1704 = vsel %vm850, %v1685, 0
        %v1707 = vsel %vm850, %v1686, 0
        %1709 = vmatprep.subr.mxu0 0.0
        %1710 = vmatpush1.xpose.msra.mxu0 %v1698
        %1711 = vmatprep.subr.mxu0 0.0
        %1712 = vmatpush1.xpose.msra.mxu0 %v1701
        %1713 = vmatprep.subr.mxu0 0.0
        %1714 = vmatpush1.xpose.msra.mxu0 %v1704
        %1715 = vmatprep.subr.mxu0 0.0
        %1716 = vmatpush1.xpose.msra.mxu0 %v1707
        %1717 = vmatprep.subr.mxu0 0.0
        %1718 = vmatpush1.xpose.msra.mxu0 0.0
        %1719 = vmatprep.subr.mxu0 0.0
        %1720 = vmatpush1.xpose.msra.mxu0 0.0
        %1721 = vmatprep.subr.mxu0 0.0
        %1722 = vmatpush1.xpose.msra.mxu0 0.0
        %1723 = vmatprep.subr.mxu0 0.0
        %1724 = vmatpush1.xpose.msra.mxu0 0.0
        %1725 = vmatprep.subr.mxu0 0.0
        %1726 = vmatpush1.xpose.msra.mxu0 0.0
        %1727 = vmatprep.subr.mxu0 0.0
        %1728 = vmatpush1.xpose.msra.mxu0 0.0
        %1729 = vmatprep.subr.mxu0 0.0
        %1730 = vmatpush1.xpose.msra.mxu0 0.0
        %1731 = vmatprep.subr.mxu0 0.0
        %1732 = vmatpush1.xpose.msra.mxu0 0.0
        %1733 = vmatprep.subr.mxu0 0.0
        %1734 = vmatpush1.xpose.msra.mxu0 0.0
        %1735 = vmatprep.subr.mxu0 0.0
        %1736 = vmatpush1.xpose.msra.mxu0 0.0
        %1737 = vmatprep.subr.mxu0 0.0
        %1738 = vmatpush1.xpose.msra.mxu0 0.0
        %1739 = vmatprep.subr.mxu0 0.0
        %1740 = vmatpush1.xpose.msra.mxu0 0.0
        %1741 = vmatprep.subr.mxu0 0.0
        %1742 = vmatpush1.xpose.msra.mxu0 0.0
        %1743 = vmatprep.subr.mxu0 0.0
        %1744 = vmatpush1.xpose.msra.mxu0 0.0
        %1745 = vmatprep.subr.mxu0 0.0
        %1746 = vmatpush1.xpose.msra.mxu0 0.0
        %1747 = vmatprep.subr.mxu0 0.0
        %1748 = vmatpush1.xpose.msra.mxu0 0.0
        %1749 = vmatprep.subr.mxu0 0.0
        %1750 = vmatpush1.xpose.msra.mxu0 0.0
        %1751 = vmatprep.subr.mxu0 0.0
        %1752 = vmatpush1.xpose.msra.mxu0 0.0
        %1753 = vmatprep.subr.mxu0 0.0
        %1754 = vmatpush1.xpose.msra.mxu0 0.0
        %1755 = vmatprep.subr.mxu0 0.0
        %1756 = vmatpush1.xpose.msra.mxu0 0.0
        %1757 = vmatprep.subr.mxu0 0.0
        %1758 = vmatpush1.xpose.msra.mxu0 0.0
        %1759 = vmatprep.subr.mxu0 0.0
        %1760 = vmatpush1.xpose.msra.mxu0 0.0
        %1761 = vmatprep.subr.mxu0 0.0
        %1762 = vmatpush1.xpose.msra.mxu0 0.0
        %1763 = vmatprep.subr.mxu0 0.0
        %1764 = vmatpush1.xpose.msra.mxu0 0.0
        %1765 = vmatprep.subr.mxu0 0.0
        %1766 = vmatpush1.xpose.msra.mxu0 0.0
        %1767 = vmatprep.subr.mxu0 0.0
        %1768 = vmatpush1.xpose.msra.mxu0 0.0
        %1769 = vmatprep.subr.mxu0 0.0
        %1770 = vmatpush1.xpose.msra.mxu0 0.0
        %1771 = vmatprep.subr.mxu0 0.0
        %1772 = vmatpush1.xpose.msra.mxu0 0.0
        %1773 = vmatprep.mubr.f32.mxu0 0.0
        %1774 = vmatmul.mubr.f32.gmra.mrb[0].mxu0 %v1695
        %v1775 = vpop.f32.mrb[0].mxu0
        %v1776 = vadd.f32 %v1692, %v1775
        %v1777 = vpop.f32.mrb[0].mxu0
        %1778 = vdwg.mxu0
        %v1779 = vadd.f32 %v878, %v1776
        %v1780 = vld [vmem:[%s10] sm:$0x1]
        %v1781 = vld [vmem:[%s11] sm:$0x1]
        %v1782 = vsel %vm850, %v1779, 0.0
        %1783 = vadd.xlane.f32.xlu0 %v1782
        %v1784 = vpop.xlane.xlu0 %1783
        %v1785 = vmul.f32 %v1784, %v854
        %v1786 = vsub.f32 %v1779, %v1785
        %v1787 = vmul.f32 %v1786, %v1786
        %v1788 = vsel %vm850, %v1787, 0.0
        %1789 = vadd.xlane.f32.xlu0 %v1788
        %v1790 = vpop.xlane.xlu0 %1789
        %v1791 = vmul.f32 %v1790, %v854
        %v1792 = vadd.f32 %v1791, 1e-05
        %v1793 = vrsqrt.pop %v1792
        %v1794 = vmul.f32 %v1786, %v1793
        %v1796 = vlaneseq
        %v1797 = vshrl.u32 %v1796, 7
        %v1798 = vsub.s32 0, %v1797
        %v1799 = vrot.slane %v1780, %v1798
        %v1801 = vmul.f32 %v1794, %v1799
        %v1803 = vlaneseq
        %v1804 = vshrl.u32 %v1803, 7
        %v1805 = vsub.s32 0, %v1804
        %v1806 = vrot.slane %v1781, %v1805
        %v1808 = vadd.f32 %v1801, %v1806
        %v1809 = vld [vmem:[%s12] sm:$0xff]
        %v1810 = vld [vmem:[%s12 + $0x8] sm:$0xff]
        %v1811 = vld [vmem:[%s12 + $0x10] sm:$0xff]
        %v1812 = vld [vmem:[%s12 + $0x18] sm:$0xff]
        %v1813 = vld [vmem:[%s13] sm:$0x1]
        %v1815 = vlaneseq
        %v1816 = vshrl.u32 %v1815, 7
        %v1817 = vsub.s32 0, %v1816
        %v1818 = vrot.slane %v1813, %v1817
        %v1821 = vsel %vm850, %v1808, 0
        %v1824 = vsel %vm850, %v1809, 0
        %v1827 = vsel %vm850, %v1810, 0
        %v1830 = vsel %vm850, %v1811, 0
        %v1833 = vsel %vm850, %v1812, 0
        %1835 = vmatprep.subr.mxu0 0.0
        %1836 = vmatpush1.xpose.msra.mxu0 %v1824
        %1837 = vmatprep.subr.mxu0 0.0
        %1838 = vmatpush1.xpose.msra.mxu0 %v1827
        %1839 = vmatprep.subr.mxu0 0.0
        %1840 = vmatpush1.xpose.msra.mxu0 %v1830
        %1841 = vmatprep.subr.mxu0 0.0
        %1842 = vmatpush1.xpose.msra.mxu0 %v1833
        %1843 = vmatprep.subr.mxu0 0.0
        %1844 = vmatpush1.xpose.msra.mxu0 0.0
        %1845 = vmatprep.subr.mxu0 0.0
        %1846 = vmatpush1.xpose.msra.mxu0 0.0
        %1847 = vmatprep.subr.mxu0 0.0
        %1848 = vmatpush1.xpose.msra.mxu0 0.0
        %1849 = vmatprep.subr.mxu0 0.0
        %1850 = vmatpush1.xpose.msra.mxu0 0.0
        %1851 = vmatprep.subr.mxu0 0.0
        %1852 = vmatpush1.xpose.msra.mxu0 0.0
        %1853 = vmatprep.subr.mxu0 0.0
        %1854 = vmatpush1.xpose.msra.mxu0 0.0
        %1855 = vmatprep.subr.mxu0 0.0
        %1856 = vmatpush1.xpose.msra.mxu0 0.0
        %1857 = vmatprep.subr.mxu0 0.0
        %1858 = vmatpush1.xpose.msra.mxu0 0.0
        %1859 = vmatprep.subr.mxu0 0.0
        %1860 = vmatpush1.xpose.msra.mxu0 0.0
        %1861 = vmatprep.subr.mxu0 0.0
        %1862 = vmatpush1.xpose.msra.mxu0 0.0
        %1863 = vmatprep.subr.mxu0 0.0
        %1864 = vmatpush1.xpose.msra.mxu0 0.0
        %1865 = vmatprep.subr.mxu0 0.0
        %1866 = vmatpush1.xpose.msra.mxu0 0.0
        %1867 = vmatprep.subr.mxu0 0.0
        %1868 = vmatpush1.xpose.msra.mxu0 0.0
        %1869 = vmatprep.subr.mxu0 0.0
        %1870 = vmatpush1.xpose.msra.mxu0 0.0
        %1871 = vmatprep.subr.mxu0 0.0
        %1872 = vmatpush1.xpose.msra.mxu0 0.0
        %1873 = vmatprep.subr.mxu0 0.0
        %1874 = vmatpush1.xpose.msra.mxu0 0.0
        %1875 = vmatprep.subr.mxu0 0.0
        %1876 = vmatpush1.xpose.msra.mxu0 0.0
        %1877 = vmatprep.subr.mxu0 0.0
        %1878 = vmatpush1.xpose.msra.mxu0 0.0
        %1879 = vmatprep.subr.mxu0 0.0
        %1880 = vmatpush1.xpose.msra.mxu0 0.0
        %1881 = vmatprep.subr.mxu0 0.0
        %1882 = vmatpush1.xpose.msra.mxu0 0.0
        %1883 = vmatprep.subr.mxu0 0.0
        %1884 = vmatpush1.xpose.msra.mxu0 0.0
        %1885 = vmatprep.subr.mxu0 0.0
        %1886 = vmatpush1.xpose.msra.mxu0 0.0
        %1887 = vmatprep.subr.mxu0 0.0
        %1888 = vmatpush1.xpose.msra.mxu0 0.0
        %1889 = vmatprep.subr.mxu0 0.0
        %1890 = vmatpush1.xpose.msra.mxu0 0.0
        %1891 = vmatprep.subr.mxu0 0.0
        %1892 = vmatpush1.xpose.msra.mxu0 0.0
        %1893 = vmatprep.subr.mxu0 0.0
        %1894 = vmatpush1.xpose.msra.mxu0 0.0
        %1895 = vmatprep.subr.mxu0 0.0
        %1896 = vmatpush1.xpose.msra.mxu0 0.0
        %1897 = vmatprep.subr.mxu0 0.0
        %1898 = vmatpush1.xpose.msra.mxu0 0.0
        %1899 = vmatprep.mubr.f32.mxu0 0.0
        %1900 = vmatmul.mubr.f32.gmra.mrb[0].mxu0 %v1821
        %v1901 = vpop.f32.mrb[0].mxu0
        %v1902 = vadd.f32 %v1818, %v1901
        %v1903 = vpop.f32.mrb[0].mxu0
        %1904 = vdwg.mxu0
        %v1905 = vld [vmem:[%s14] sm:$0xff]
        %v1906 = vld [vmem:[%s14 + $0x8] sm:$0xff]
        %v1907 = vld [vmem:[%s14 + $0x10] sm:$0xff]
        %v1908 = vld [vmem:[%s14 + $0x18] sm:$0xff]
        %v1909 = vld [vmem:[%s14 + $0x20] sm:$0xff]
        %v1910 = vld [vmem:[%s14 + $0x28] sm:$0xff]
        %v1911 = vld [vmem:[%s14 + $0x30] sm:$0xff]
        %v1912 = vld [vmem:[%s14 + $0x38] sm:$0xff]
        %v1913 = vld [vmem:[%s15] sm:$0x1]
        %v1915 = vlaneseq
        %v1916 = vshrl.u32 %v1915, 7
        %v1917 = vsub.s32 0, %v1916
        %v1918 = vrot.slane %v1913, %v1917
        %v1921 = vsel %vm850, %v845, 0
        %v1924 = vsel %vm850, %v846, 0
        %v1927 = vsel %vm850, %v1905, 0
        %v1930 = vsel %vm850, %v1906, 0
        %v1933 = vsel %vm850, %v1907, 0
        %v1936 = vsel %vm850, %v1908, 0
        %v1939 = vsel %vm850, %v1909, 0
        %v1942 = vsel %vm850, %v1910, 0
        %v1945 = vsel %vm850, %v1911, 0
        %v1948 = vsel %vm850, %v1912, 0
        %1950 = vmatprep.subr.mxu0 0.0
        %1951 = vmatpush1.xpose.msra.mxu0 %v1927
        %1952 = vmatprep.subr.mxu0 0.0
        %1953 = vmatpush1.xpose.msra.mxu0 %v1930
        %1954 = vmatprep.subr.mxu0 0.0
        %1955 = vmatpush1.xpose.msra.mxu0 %v1933
        %1956 = vmatprep.subr.mxu0 0.0
        %1957 = vmatpush1.xpose.msra.mxu0 %v1936
        %1958 = vmatprep.subr.mxu0 0.0
        %1959 = vmatpush1.xpose.msra.mxu0 %v1939
        %1960 = vmatprep.subr.mxu0 0.0
        %1961 = vmatpush1.xpose.msra.mxu0 %v1942
        %1962 = vmatprep.subr.mxu0 0.0
        %1963 = vmatpush1.xpose.msra.mxu0 %v1945
        %1964 = vmatprep.subr.mxu0 0.0
        %1965 = vmatpush1.xpose.msra.mxu0 %v1948
        %1966 = vmatprep.subr.mxu0 0.0
        %1967 = vmatpush1.xpose.msra.mxu0 0.0
        %1968 = vmatprep.subr.mxu0 0.0
        %1969 = vmatpush1.xpose.msra.mxu0 0.0
        %1970 = vmatprep.subr.mxu0 0.0
        %1971 = vmatpush1.xpose.msra.mxu0 0.0
        %1972 = vmatprep.subr.mxu0 0.0
        %1973 = vmatpush1.xpose.msra.mxu0 0.0
        %1974 = vmatprep.subr.mxu0 0.0
        %1975 = vmatpush1.xpose.msra.mxu0 0.0
        %1976 = vmatprep.subr.mxu0 0.0
        %1977 = vmatpush1.xpose.msra.mxu0 0.0
        %1978 = vmatprep.subr.mxu0 0.0
        %1979 = vmatpush1.xpose.msra.mxu0 0.0
        %1980 = vmatprep.subr.mxu0 0.0
        %1981 = vmatpush1.xpose.msra.mxu0 0.0
        %1982 = vmatprep.subr.mxu0 0.0
        %1983 = vmatpush1.xpose.msra.mxu0 0.0
        %1984 = vmatprep.subr.mxu0 0.0
        %1985 = vmatpush1.xpose.msra.mxu0 0.0
        %1986 = vmatprep.subr.mxu0 0.0
        %1987 = vmatpush1.xpose.msra.mxu0 0.0
        %1988 = vmatprep.subr.mxu0 0.0
        %1989 = vmatpush1.xpose.msra.mxu0 0.0
        %1990 = vmatprep.subr.mxu0 0.0
        %1991 = vmatpush1.xpose.msra.mxu0 0.0
        %1992 = vmatprep.subr.mxu0 0.0
        %1993 = vmatpush1.xpose.msra.mxu0 0.0
        %1994 = vmatprep.subr.mxu0 0.0
        %1995 = vmatpush1.xpose.msra.mxu0 0.0
        %1996 = vmatprep.subr.mxu0 0.0
        %1997 = vmatpush1.xpose.msra.mxu0 0.0
        %1998 = vmatprep.subr.mxu0 0.0
        %1999 = vmatpush1.xpose.msra.mxu0 0.0
        %2000 = vmatprep.subr.mxu0 0.0
        %2001 = vmatpush1.xpose.msra.mxu0 0.0
        %2002 = vmatprep.subr.mxu0 0.0
        %2003 = vmatpush1.xpose.msra.mxu0 0.0
        %2004 = vmatprep.subr.mxu0 0.0
        %2005 = vmatpush1.xpose.msra.mxu0 0.0
        %2006 = vmatprep.subr.mxu0 0.0
        %2007 = vmatpush1.xpose.msra.mxu0 0.0
        %2008 = vmatprep.subr.mxu0 0.0
        %2009 = vmatpush1.xpose.msra.mxu0 0.0
        %2010 = vmatprep.subr.mxu0 0.0
        %2011 = vmatpush1.xpose.msra.mxu0 0.0
        %2012 = vmatprep.subr.mxu0 0.0
        %2013 = vmatpush1.xpose.msra.mxu0 0.0
        %2014 = vmatprep.mubr.f32.mxu0 0.0
        %2015 = vmatmul.mubr.f32.gmra.mrb[0].mxu0 %v1921
        %v2016 = vpop.f32.mrb[0].mxu0
        %v2017 = vadd.f32 %v1918, %v2016
        %v2018 = vpop.f32.mrb[0].mxu0
        %2019 = vmatprep.mubr.f32.mxu0 0.0
        %2020 = vmatmul.mubr.f32.gmra.mrb[0].mxu0 %v1924
        %v2021 = vpop.f32.mrb[0].mxu0
        %v2022 = vadd.f32 %v1918, %v2021
        %v2023 = vpop.f32.mrb[0].mxu0
        %2024 = vdwg.mxu0
        %v2025 = vmul.f32 %v1902, %v827
        %v2027 = vlaneseq
        %v2028 = vshrl.u32 %v2027, 7
        %v2029 = vsub.s32 0, %v2028
        %v2030 = vrot.slane %v844, %v2029
        %v2033 = vsel %vm850, %v2025, 0
        %v2036 = vsel %vm850, %v2017, 0
        %v2039 = vsel %vm850, %v2022, 0
        %2041 = vmatprep.subr.mxu0 0.0
        %2042 = vmatpush1.xpose.msra.mxu0 %v2036
        %2043 = vmatprep.subr.mxu0 0.0
        %2044 = vmatpush1.xpose.msra.mxu0 %v2039
        %2045 = vmatprep.subr.mxu0 0.0
        %2046 = vmatpush1.xpose.msra.mxu0 0.0
        %2047 = vmatprep.subr.mxu0 0.0
        %2048 = vmatpush1.xpose.msra.mxu0 0.0
        %2049 = vmatprep.subr.mxu0 0.0
        %2050 = vmatpush1.xpose.msra.mxu0 0.0
        %2051 = vmatprep.subr.mxu0 0.0
        %2052 = vmatpush1.xpose.msra.mxu0 0.0
        %2053 = vmatprep.subr.mxu0 0.0
        %2054 = vmatpush1.xpose.msra.mxu0 0.0
        %2055 = vmatprep.subr.mxu0 0.0
        %2056 = vmatpush1.xpose.msra.mxu0 0.0
        %2057 = vmatprep.subr.mxu0 0.0
        %2058 = vmatpush1.xpose.msra.mxu0 0.0
        %2059 = vmatprep.subr.mxu0 0.0
        %2060 = vmatpush1.xpose.msra.mxu0 0.0
        %2061 = vmatprep.subr.mxu0 0.0
        %2062 = vmatpush1.xpose.msra.mxu0 0.0
        %2063 = vmatprep.subr.mxu0 0.0
        %2064 = vmatpush1.xpose.msra.mxu0 0.0
        %2065 = vmatprep.subr.mxu0 0.0
        %2066 = vmatpush1.xpose.msra.mxu0 0.0
        %2067 = vmatprep.subr.mxu0 0.0
        %2068 = vmatpush1.xpose.msra.mxu0 0.0
        %2069 = vmatprep.subr.mxu0 0.0
        %2070 = vmatpush1.xpose.msra.mxu0 0.0
        %2071 = vmatprep.subr.mxu0 0.0
        %2072 = vmatpush1.xpose.msra.mxu0 0.0
        %2073 = vmatprep.subr.mxu0 0.0
        %2074 = vmatpush1.xpose.msra.mxu0 0.0
        %2075 = vmatprep.subr.mxu0 0.0
        %2076 = vmatpush1.xpose.msra.mxu0 0.0
        %2077 = vmatprep.subr.mxu0 0.0
        %2078 = vmatpush1.xpose.msra.mxu0 0.0
        %2079 = vmatprep.subr.mxu0 0.0
        %2080 = vmatpush1.xpose.msra.mxu0 0.0
        %2081 = vmatprep.subr.mxu0 0.0
        %2082 = vmatpush1.xpose.msra.mxu0 0.0
        %2083 = vmatprep.subr.mxu0 0.0
        %2084 = vmatpush1.xpose.msra.mxu0 0.0
        %2085 = vmatprep.subr.mxu0 0.0
        %2086 = vmatpush1.xpose.msra.mxu0 0.0
        %2087 = vmatprep.subr.mxu0 0.0
        %2088 = vmatpush1.xpose.msra.mxu0 0.0
        %2089 = vmatprep.subr.mxu0 0.0
        %2090 = vmatpush1.xpose.msra.mxu0 0.0
        %2091 = vmatprep.subr.mxu0 0.0
        %2092 = vmatpush1.xpose.msra.mxu0 0.0
        %2093 = vmatprep.subr.mxu0 0.0
        %2094 = vmatpush1.xpose.msra.mxu0 0.0
        %2095 = vmatprep.subr.mxu0 0.0
        %2096 = vmatpush1.xpose.msra.mxu0 0.0
        %2097 = vmatprep.subr.mxu0 0.0
        %2098 = vmatpush1.xpose.msra.mxu0 0.0
        %2099 = vmatprep.subr.mxu0 0.0
        %2100 = vmatpush1.xpose.msra.mxu0 0.0
        %2101 = vmatprep.subr.mxu0 0.0
        %2102 = vmatpush1.xpose.msra.mxu0 0.0
        %2103 = vmatprep.subr.mxu0 0.0
        %2104 = vmatpush1.xpose.msra.mxu0 0.0
        %2105 = vmatprep.mubr.f32.mxu0 0.0
        %2106 = vmatmul.mubr.f32.gmra.mrb[0].mxu0 %v2033
        %v2107 = vpop.f32.mrb[0].mxu0
        %v2108 = vadd.f32 %v2030, %v2107
        %v2109 = vpop.f32.mrb[0].mxu0
        %2110 = vdwg.mxu0
        %vm2111 = vcmask 80896
        %v2112 = vsel %vm2111, %v2108, -inf
        %2113 = vmax.xlane.f32.xlu0 %v2112
        %v2114 = vpop.xlane.xlu0 %2113
        %v2115 = vsub.f32 %v2108, %v2114
        %v2116 = vmul.f32 %v2115, 1.442695
        %v2117 = vpow.pop %v2116
        %v2118 = vsel %vm2111, %v2117, 0.0
        %2119 = vadd.xlane.f32.xlu0 %v2118
        %v2120 = vpop.xlane.xlu0 %2119
        %v2121 = vrcp.pop %v2120
        %v2122 = vmul.f32 %v2117, %v2121
        %2123 = vrot.lane.b32.xlu0 %v827, 32
        %v2124 = vpop.permute.xlu0 %2123
        %v2126 = vmul.f32 %v2017, %v2124
        %v2127 = vmul.f32 %v2022, %v2124
        %v2128 = vmul.f32 %v1902, %v832
        %v2130 = vsel %vm850, %v2128, 0
        %2132 = vmatprep.subr.mxu0 0.0
        %2133 = vmatpush1.xpose.msra.mxu0 %v2036
        %2134 = vmatprep.subr.mxu0 0.0
        %2135 = vmatpush1.xpose.msra.mxu0 %v2039
        %2136 = vmatprep.subr.mxu0 0.0
        %2137 = vmatpush1.xpose.msra.mxu0 0.0
        %2138 = vmatprep.subr.mxu0 0.0
        %2139 = vmatpush1.xpose.msra.mxu0 0.0
        %2140 = vmatprep.subr.mxu0 0.0
        %2141 = vmatpush1.xpose.msra.mxu0 0.0
        %2142 = vmatprep.subr.mxu0 0.0
        %2143 = vmatpush1.xpose.msra.mxu0 0.0
        %2144 = vmatprep.subr.mxu0 0.0
        %2145 = vmatpush1.xpose.msra.mxu0 0.0
        %2146 = vmatprep.subr.mxu0 0.0
        %2147 = vmatpush1.xpose.msra.mxu0 0.0
        %2148 = vmatprep.subr.mxu0 0.0
        %2149 = vmatpush1.xpose.msra.mxu0 0.0
        %2150 = vmatprep.subr.mxu0 0.0
        %2151 = vmatpush1.xpose.msra.mxu0 0.0
        %2152 = vmatprep.subr.mxu0 0.0
        %2153 = vmatpush1.xpose.msra.mxu0 0.0
        %2154 = vmatprep.subr.mxu0 0.0
        %2155 = vmatpush1.xpose.msra.mxu0 0.0
        %2156 = vmatprep.subr.mxu0 0.0
        %2157 = vmatpush1.xpose.msra.mxu0 0.0
        %2158 = vmatprep.subr.mxu0 0.0
        %2159 = vmatpush1.xpose.msra.mxu0 0.0
        %2160 = vmatprep.subr.mxu0 0.0
        %2161 = vmatpush1.xpose.msra.mxu0 0.0
        %2162 = vmatprep.subr.mxu0 0.0
        %2163 = vmatpush1.xpose.msra.mxu0 0.0
        %2164 = vmatprep.subr.mxu0 0.0
        %2165 = vmatpush1.xpose.msra.mxu0 0.0
        %2166 = vmatprep.subr.mxu0 0.0
        %2167 = vmatpush1.xpose.msra.mxu0 0.0
        %2168 = vmatprep.subr.mxu0 0.0
        %2169 = vmatpush1.xpose.msra.mxu0 0.0
        %2170 = vmatprep.subr.mxu0 0.0
        %2171 = vmatpush1.xpose.msra.mxu0 0.0
        %2172 = vmatprep.subr.mxu0 0.0
        %2173 = vmatpush1.xpose.msra.mxu0 0.0
        %2174 = vmatprep.subr.mxu0 0.0
        %2175 = vmatpush1.xpose.msra.mxu0 0.0
        %2176 = vmatprep.subr.mxu0 0.0
        %2177 = vmatpush1.xpose.msra.mxu0 0.0
        %2178 = vmatprep.subr.mxu0 0.0
        %2179 = vmatpush1.xpose.msra.mxu0 0.0
        %2180 = vmatprep.subr.mxu0 0.0
        %2181 = vmatpush1.xpose.msra.mxu0 0.0
        %2182 = vmatprep.subr.mxu0 0.0
        %2183 = vmatpush1.xpose.msra.mxu0 0.0
        %2184 = vmatprep.subr.mxu0 0.0
        %2185 = vmatpush1.xpose.msra.mxu0 0.0
        %2186 = vmatprep.subr.mxu0 0.0
        %2187 = vmatpush1.xpose.msra.mxu0 0.0
        %2188 = vmatprep.subr.mxu0 0.0
        %2189 = vmatpush1.xpose.msra.mxu0 0.0
        %2190 = vmatprep.subr.mxu0 0.0
        %2191 = vmatpush1.xpose.msra.mxu0 0.0
        %2192 = vmatprep.subr.mxu0 0.0
        %2193 = vmatpush1.xpose.msra.mxu0 0.0
        %2194 = vmatprep.subr.mxu0 0.0
        %2195 = vmatpush1.xpose.msra.mxu0 0.0
        %2196 = vmatprep.mubr.f32.mxu0 0.0
        %2197 = vmatmul.mubr.f32.gmra.mrb[0].mxu0 %v2130
        %v2198 = vpop.f32.mrb[0].mxu0
        %v2199 = vadd.f32 %v2030, %v2198
        %v2200 = vpop.f32.mrb[0].mxu0
        %2201 = vdwg.mxu0
        %v2202 = vsel %vm2111, %v2199, -inf
        %2203 = vmax.xlane.f32.xlu0 %v2202
        %v2204 = vpop.xlane.xlu0 %2203
        %v2205 = vsub.f32 %v2199, %v2204
        %v2206 = vmul.f32 %v2205, 1.442695
        %v2207 = vpow.pop %v2206
        %v2208 = vsel %vm2111, %v2207, 0.0
        %2209 = vadd.xlane.f32.xlu0 %v2208
        %v2210 = vpop.xlane.xlu0 %2209
        %v2211 = vrcp.pop %v2210
        %v2212 = vmul.f32 %v2207, %v2211
        %2213 = vrot.lane.b32.xlu0 %v832, 32
        %v2214 = vpop.permute.xlu0 %2213
        %v2216 = vmul.f32 %v2017, %v2214
        %v2217 = vmul.f32 %v2022, %v2214
        %2220 = vrot.lane.b32.xlu0 %v2216, 96
        %v2221 = vpop.permute.xlu0 %2220
        %2222 = vrot.lane.b32.xlu0 %v2217, 96
        %v2223 = vpop.permute.xlu0 %2222
        %v2226 = vsel %vm2111, %v2212, 0
        %vm2228 = vcmask 1041408
        %v2229 = vsel %vm2228, %v2223, 0
        %2231 = vmatprep.subr.mxu0 0.0
        %2232 = vmatpush1.msra.mxu0 %v2221
        %2233 = vmatprep.subr.mxu0 0.0
        %2234 = vmatpush1.msra.mxu0 %v2229
        %2235 = vmatprep.subr.mxu0 0.0
        %2236 = vmatpush1.msra.mxu0 0.0
        %2237 = vmatprep.subr.mxu0 0.0
        %2238 = vmatpush1.msra.mxu0 0.0
        %2239 = vmatprep.subr.mxu0 0.0
        %2240 = vmatpush1.msra.mxu0 0.0
        %2241 = vmatprep.subr.mxu0 0.0
        %2242 = vmatpush1.msra.mxu0 0.0
        %2243 = vmatprep.subr.mxu0 0.0
        %2244 = vmatpush1.msra.mxu0 0.0
        %2245 = vmatprep.subr.mxu0 0.0
        %2246 = vmatpush1.msra.mxu0 0.0
        %2247 = vmatprep.subr.mxu0 0.0
        %2248 = vmatpush1.msra.mxu0 0.0
        %2249 = vmatprep.subr.mxu0 0.0
        %2250 = vmatpush1.msra.mxu0 0.0
        %2251 = vmatprep.subr.mxu0 0.0
        %2252 = vmatpush1.msra.mxu0 0.0
        %2253 = vmatprep.subr.mxu0 0.0
        %2254 = vmatpush1.msra.mxu0 0.0
        %2255 = vmatprep.subr.mxu0 0.0
        %2256 = vmatpush1.msra.mxu0 0.0
        %2257 = vmatprep.subr.mxu0 0.0
        %2258 = vmatpush1.msra.mxu0 0.0
        %2259 = vmatprep.subr.mxu0 0.0
        %2260 = vmatpush1.msra.mxu0 0.0
        %2261 = vmatprep.subr.mxu0 0.0
        %2262 = vmatpush1.msra.mxu0 0.0
        %2263 = vmatprep.subr.mxu0 0.0
        %2264 = vmatpush1.msra.mxu0 0.0
        %2265 = vmatprep.subr.mxu0 0.0
        %2266 = vmatpush1.msra.mxu0 0.0
        %2267 = vmatprep.subr.mxu0 0.0
        %2268 = vmatpush1.msra.mxu0 0.0
        %2269 = vmatprep.subr.mxu0 0.0
        %2270 = vmatpush1.msra.mxu0 0.0
        %2271 = vmatprep.subr.mxu0 0.0
        %2272 = vmatpush1.msra.mxu0 0.0
        %2273 = vmatprep.subr.mxu0 0.0
        %2274 = vmatpush1.msra.mxu0 0.0
        %2275 = vmatprep.subr.mxu0 0.0
        %2276 = vmatpush1.msra.mxu0 0.0
        %2277 = vmatprep.subr.mxu0 0.0
        %2278 = vmatpush1.msra.mxu0 0.0
        %2279 = vmatprep.subr.mxu0 0.0
        %2280 = vmatpush1.msra.mxu0 0.0
        %2281 = vmatprep.subr.mxu0 0.0
        %2282 = vmatpush1.msra.mxu0 0.0
        %2283 = vmatprep.subr.mxu0 0.0
        %2284 = vmatpush1.msra.mxu0 0.0
        %2285 = vmatprep.subr.mxu0 0.0
        %2286 = vmatpush1.msra.mxu0 0.0
        %2287 = vmatprep.subr.mxu0 0.0
        %2288 = vmatpush1.msra.mxu0 0.0
        %2289 = vmatprep.subr.mxu0 0.0
        %2290 = vmatpush1.msra.mxu0 0.0
        %2291 = vmatprep.subr.mxu0 0.0
        %2292 = vmatpush1.msra.mxu0 0.0
        %2293 = vmatprep.subr.mxu0 0.0
        %2294 = vmatpush1.msra.mxu0 0.0
        %2295 = vmatprep.mubr.f32.mxu0 0.0
        %2296 = vmatmul.mubr.f32.gmra.mrb[0].mxu0 %v2226
        %v2297 = vpop.f32.mrb[0].mxu0
        %v2298 = vadd.f32 0.0, %v2297
        %v2299 = vpop.f32.mrb[0].mxu0
        %2300 = vdwg.mxu0
        %2303 = vrot.lane.b32.xlu0 %v2126, 96
        %v2304 = vpop.permute.xlu0 %2303
        %2305 = vrot.lane.b32.xlu0 %v2127, 96
        %v2306 = vpop.permute.xlu0 %2305
        %v2309 = vsel %vm2111, %v2122, 0
        %v2311 = vsel %vm2228, %v2306, 0
        %2313 = vmatprep.subr.mxu0 0.0
        %2314 = vmatpush1.msra.mxu0 %v2304
        %2315 = vmatprep.subr.mxu0 0.0
        %2316 = vmatpush1.msra.mxu0 %v2311
        %2317 = vmatprep.subr.mxu0 0.0
        %2318 = vmatpush1.msra.mxu0 0.0
        %2319 = vmatprep.subr.mxu0 0.0
        %2320 = vmatpush1.msra.mxu0 0.0
        %2321 = vmatprep.subr.mxu0 0.0
        %2322 = vmatpush1.msra.mxu0 0.0
        %2323 = vmatprep.subr.mxu0 0.0
        %2324 = vmatpush1.msra.mxu0 0.0
        %2325 = vmatprep.subr.mxu0 0.0
        %2326 = vmatpush1.msra.mxu0 0.0
        %2327 = vmatprep.subr.mxu0 0.0
        %2328 = vmatpush1.msra.mxu0 0.0
        %2329 = vmatprep.subr.mxu0 0.0
        %2330 = vmatpush1.msra.mxu0 0.0
        %2331 = vmatprep.subr.mxu0 0.0
        %2332 = vmatpush1.msra.mxu0 0.0
        %2333 = vmatprep.subr.mxu0 0.0
        %2334 = vmatpush1.msra.mxu0 0.0
        %2335 = vmatprep.subr.mxu0 0.0
        %2336 = vmatpush1.msra.mxu0 0.0
        %2337 = vmatprep.subr.mxu0 0.0
        %2338 = vmatpush1.msra.mxu0 0.0
        %2339 = vmatprep.subr.mxu0 0.0
        %2340 = vmatpush1.msra.mxu0 0.0
        %2341 = vmatprep.subr.mxu0 0.0
        %2342 = vmatpush1.msra.mxu0 0.0
        %2343 = vmatprep.subr.mxu0 0.0
        %2344 = vmatpush1.msra.mxu0 0.0
        %2345 = vmatprep.subr.mxu0 0.0
        %2346 = vmatpush1.msra.mxu0 0.0
        %2347 = vmatprep.subr.mxu0 0.0
        %2348 = vmatpush1.msra.mxu0 0.0
        %2349 = vmatprep.subr.mxu0 0.0
        %2350 = vmatpush1.msra.mxu0 0.0
        %2351 = vmatprep.subr.mxu0 0.0
        %2352 = vmatpush1.msra.mxu0 0.0
        %2353 = vmatprep.subr.mxu0 0.0
        %2354 = vmatpush1.msra.mxu0 0.0
        %2355 = vmatprep.subr.mxu0 0.0
        %2356 = vmatpush1.msra.mxu0 0.0
        %2357 = vmatprep.subr.mxu0 0.0
        %2358 = vmatpush1.msra.mxu0 0.0
        %2359 = vmatprep.subr.mxu0 0.0
        %2360 = vmatpush1.msra.mxu0 0.0
        %2361 = vmatprep.subr.mxu0 0.0
        %2362 = vmatpush1.msra.mxu0 0.0
        %2363 = vmatprep.subr.mxu0 0.0
        %2364 = vmatpush1.msra.mxu0 0.0
        %2365 = vmatprep.subr.mxu0 0.0
        %2366 = vmatpush1.msra.mxu0 0.0
        %2367 = vmatprep.subr.mxu0 0.0
        %2368 = vmatpush1.msra.mxu0 0.0
        %2369 = vmatprep.subr.mxu0 0.0
        %2370 = vmatpush1.msra.mxu0 0.0
        %2371 = vmatprep.subr.mxu0 0.0
        %2372 = vmatpush1.msra.mxu0 0.0
        %2373 = vmatprep.subr.mxu0 0.0
        %2374 = vmatpush1.msra.mxu0 0.0
        %2375 = vmatprep.subr.mxu0 0.0
        %2376 = vmatpush1.msra.mxu0 0.0
        %2377 = vmatprep.mubr.f32.mxu0 0.0
        %2378 = vmatmul.mubr.f32.gmra.mrb[0].mxu0 %v2309
        %v2379 = vpop.f32.mrb[0].mxu0
        %v2380 = vadd.f32 %v2298, %v2379
        %v2381 = vpop.f32.mrb[0].mxu0
        %2382 = vdwg.mxu0
        %v2383 = vmul.f32 %v1902, %v837
        %v2385 = vsel %vm850, %v2383, 0
        %2387 = vmatprep.subr.mxu0 0.0
        %2388 = vmatpush1.xpose.msra.mxu0 %v2036
        %2389 = vmatprep.subr.mxu0 0.0
        %2390 = vmatpush1.xpose.msra.mxu0 %v2039
        %2391 = vmatprep.subr.mxu0 0.0
        %2392 = vmatpush1.xpose.msra.mxu0 0.0
        %2393 = vmatprep.subr.mxu0 0.0
        %2394 = vmatpush1.xpose.msra.mxu0 0.0
        %2395 = vmatprep.subr.mxu0 0.0
        %2396 = vmatpush1.xpose.msra.mxu0 0.0
        %2397 = vmatprep.subr.mxu0 0.0
        %2398 = vmatpush1.xpose.msra.mxu0 0.0
        %2399 = vmatprep.subr.mxu0 0.0
        %2400 = vmatpush1.xpose.msra.mxu0 0.0
        %2401 = vmatprep.subr.mxu0 0.0
        %2402 = vmatpush1.xpose.msra.mxu0 0.0
        %2403 = vmatprep.subr.mxu0 0.0
        %2404 = vmatpush1.xpose.msra.mxu0 0.0
        %2405 = vmatprep.subr.mxu0 0.0
        %2406 = vmatpush1.xpose.msra.mxu0 0.0
        %2407 = vmatprep.subr.mxu0 0.0
        %2408 = vmatpush1.xpose.msra.mxu0 0.0
        %2409 = vmatprep.subr.mxu0 0.0
        %2410 = vmatpush1.xpose.msra.mxu0 0.0
        %2411 = vmatprep.subr.mxu0 0.0
        %2412 = vmatpush1.xpose.msra.mxu0 0.0
        %2413 = vmatprep.subr.mxu0 0.0
        %2414 = vmatpush1.xpose.msra.mxu0 0.0
        %2415 = vmatprep.subr.mxu0 0.0
        %2416 = vmatpush1.xpose.msra.mxu0 0.0
        %2417 = vmatprep.subr.mxu0 0.0
        %2418 = vmatpush1.xpose.msra.mxu0 0.0
        %2419 = vmatprep.subr.mxu0 0.0
        %2420 = vmatpush1.xpose.msra.mxu0 0.0
        %2421 = vmatprep.subr.mxu0 0.0
        %2422 = vmatpush1.xpose.msra.mxu0 0.0
        %2423 = vmatprep.subr.mxu0 0.0
        %2424 = vmatpush1.xpose.msra.mxu0 0.0
        %2425 = vmatprep.subr.mxu0 0.0
        %2426 = vmatpush1.xpose.msra.mxu0 0.0
        %2427 = vmatprep.subr.mxu0 0.0
        %2428 = vmatpush1.xpose.msra.mxu0 0.0
        %2429 = vmatprep.subr.mxu0 0.0
        %2430 = vmatpush1.xpose.msra.mxu0 0.0
        %2431 = vmatprep.subr.mxu0 0.0
        %2432 = vmatpush1.xpose.msra.mxu0 0.0
        %2433 = vmatprep.subr.mxu0 0.0
        %2434 = vmatpush1.xpose.msra.mxu0 0.0
        %2435 = vmatprep.subr.mxu0 0.0
        %2436 = vmatpush1.xpose.msra.mxu0 0.0
        %2437 = vmatprep.subr.mxu0 0.0
        %2438 = vmatpush1.xpose.msra.mxu0 0.0
        %2439 = vmatprep.subr.mxu0 0.0
        %2440 = vmatpush1.xpose.msra.mxu0 0.0
        %2441 = vmatprep.subr.mxu0 0.0
        %2442 = vmatpush1.xpose.msra.mxu0 0.0
        %2443 = vmatprep.subr.mxu0 0.0
        %2444 = vmatpush1.xpose.msra.mxu0 0.0
        %2445 = vmatprep.subr.mxu0 0.0
        %2446 = vmatpush1.xpose.msra.mxu0 0.0
        %2447 = vmatprep.subr.mxu0 0.0
        %2448 = vmatpush1.xpose.msra.mxu0 0.0
        %2449 = vmatprep.subr.mxu0 0.0
        %2450 = vmatpush1.xpose.msra.mxu0 0.0
        %2451 = vmatprep.mubr.f32.mxu0 0.0
        %2452 = vmatmul.mubr.f32.gmra.mrb[0].mxu0 %v2385
        %v2453 = vpop.f32.mrb[0].mxu0
        %v2454 = vadd.f32 %v2030, %v2453
        %v2455 = vpop.f32.mrb[0].mxu0
        %2456 = vdwg.mxu0
        %v2457 = vsel %vm2111, %v2454, -inf
        %2458 = vmax.xlane.f32.xlu0 %v2457
        %v2459 = vpop.xlane.xlu0 %2458
        %v2460 = vsub.f32 %v2454, %v2459
        %v2461 = vmul.f32 %v2460, 1.442695
        %v2462 = vpow.pop %v2461
        %v2463 = vsel %vm2111, %v2462, 0.0
        %2464 = vadd.xlane.f32.xlu0 %v2463
        %v2465 = vpop.xlane.xlu0 %2464
        %v2466 = vrcp.pop %v2465
        %v2467 = vmul.f32 %v2462, %v2466
        %2468 = vrot.lane.b32.xlu0 %v837, 32
        %v2469 = vpop.permute.xlu0 %2468
        %v2471 = vmul.f32 %v2017, %v2469
        %v2472 = vmul.f32 %v2022, %v2469
        %2475 = vrot.lane.b32.xlu0 %v2471, 96
        %v2476 = vpop.permute.xlu0 %2475
        %2477 = vrot.lane.b32.xlu0 %v2472, 96
        %v2478 = vpop.permute.xlu0 %2477
        %v2481 = vsel %vm2111, %v2467, 0
        %v2483 = vsel %vm2228, %v2478, 0
        %2485 = vmatprep.subr.mxu0 0.0
        %2486 = vmatpush1.msra.mxu0 %v2476
        %2487 = vmatprep.subr.mxu0 0.0
        %2488 = vmatpush1.msra.mxu0 %v2483
        %2489 = vmatprep.subr.mxu0 0.0
        %2490 = vmatpush1.msra.mxu0 0.0
        %2491 = vmatprep.subr.mxu0 0.0
        %2492 = vmatpush1.msra.mxu0 0.0
        %2493 = vmatprep.subr.mxu0 0.0
        %2494 = vmatpush1.msra.mxu0 0.0
        %2495 = vmatprep.subr.mxu0 0.0
        %2496 = vmatpush1.msra.mxu0 0.0
        %2497 = vmatprep.subr.mxu0 0.0
        %2498 = vmatpush1.msra.mxu0 0.0
        %2499 = vmatprep.subr.mxu0 0.0
        %2500 = vmatpush1.msra.mxu0 0.0
        %2501 = vmatprep.subr.mxu0 0.0
        %2502 = vmatpush1.msra.mxu0 0.0
        %2503 = vmatprep.subr.mxu0 0.0
        %2504 = vmatpush1.msra.mxu0 0.0
        %2505 = vmatprep.subr.mxu0 0.0
        %2506 = vmatpush1.msra.mxu0 0.0
        %2507 = vmatprep.subr.mxu0 0.0
        %2508 = vmatpush1.msra.mxu0 0.0
        %2509 = vmatprep.subr.mxu0 0.0
        %2510 = vmatpush1.msra.mxu0 0.0
        %2511 = vmatprep.subr.mxu0 0.0
        %2512 = vmatpush1.msra.mxu0 0.0
        %2513 = vmatprep.subr.mxu0 0.0
        %2514 = vmatpush1.msra.mxu0 0.0
        %2515 = vmatprep.subr.mxu0 0.0
        %2516 = vmatpush1.msra.mxu0 0.0
        %2517 = vmatprep.subr.mxu0 0.0
        %2518 = vmatpush1.msra.mxu0 0.0
        %2519 = vmatprep.subr.mxu0 0.0
        %2520 = vmatpush1.msra.mxu0 0.0
        %2521 = vmatprep.subr.mxu0 0.0
        %2522 = vmatpush1.msra.mxu0 0.0
        %2523 = vmatprep.subr.mxu0 0.0
        %2524 = vmatpush1.msra.mxu0 0.0
        %2525 = vmatprep.subr.mxu0 0.0
        %2526 = vmatpush1.msra.mxu0 0.0
        %2527 = vmatprep.subr.mxu0 0.0
        %2528 = vmatpush1.msra.mxu0 0.0
        %2529 = vmatprep.subr.mxu0 0.0
        %2530 = vmatpush1.msra.mxu0 0.0
        %2531 = vmatprep.subr.mxu0 0.0
        %2532 = vmatpush1.msra.mxu0 0.0
        %2533 = vmatprep.subr.mxu0 0.0
        %2534 = vmatpush1.msra.mxu0 0.0
        %2535 = vmatprep.subr.mxu0 0.0
        %2536 = vmatpush1.msra.mxu0 0.0
        %2537 = vmatprep.subr.mxu0 0.0
        %2538 = vmatpush1.msra.mxu0 0.0
        %2539 = vmatprep.subr.mxu0 0.0
        %2540 = vmatpush1.msra.mxu0 0.0
        %2541 = vmatprep.subr.mxu0 0.0
        %2542 = vmatpush1.msra.mxu0 0.0
        %2543 = vmatprep.subr.mxu0 0.0
        %2544 = vmatpush1.msra.mxu0 0.0
        %2545 = vmatprep.subr.mxu0 0.0
        %2546 = vmatpush1.msra.mxu0 0.0
        %2547 = vmatprep.subr.mxu0 0.0
        %2548 = vmatpush1.msra.mxu0 0.0
        %2549 = vmatprep.mubr.f32.mxu0 0.0
        %2550 = vmatmul.mubr.f32.gmra.mrb[0].mxu0 %v2481
        %v2551 = vpop.f32.mrb[0].mxu0
        %v2552 = vadd.f32 0.0, %v2551
        %v2553 = vpop.f32.mrb[0].mxu0
        %2554 = vdwg.mxu0
        %v2555 = vadd.f32 %v2380, %v2552
        %v2556 = vmul.f32 %v1902, %v842
        %v2558 = vsel %vm850, %v2556, 0
        %2560 = vmatprep.subr.mxu0 0.0
        %2561 = vmatpush1.xpose.msra.mxu0 %v2036
        %2562 = vmatprep.subr.mxu0 0.0
        %2563 = vmatpush1.xpose.msra.mxu0 %v2039
        %2564 = vmatprep.subr.mxu0 0.0
        %2565 = vmatpush1.xpose.msra.mxu0 0.0
        %2566 = vmatprep.subr.mxu0 0.0
        %2567 = vmatpush1.xpose.msra.mxu0 0.0
        %2568 = vmatprep.subr.mxu0 0.0
        %2569 = vmatpush1.xpose.msra.mxu0 0.0
        %2570 = vmatprep.subr.mxu0 0.0
        %2571 = vmatpush1.xpose.msra.mxu0 0.0
        %2572 = vmatprep.subr.mxu0 0.0
        %2573 = vmatpush1.xpose.msra.mxu0 0.0
        %2574 = vmatprep.subr.mxu0 0.0
        %2575 = vmatpush1.xpose.msra.mxu0 0.0
        %2576 = vmatprep.subr.mxu0 0.0
        %2577 = vmatpush1.xpose.msra.mxu0 0.0
        %2578 = vmatprep.subr.mxu0 0.0
        %2579 = vmatpush1.xpose.msra.mxu0 0.0
        %2580 = vmatprep.subr.mxu0 0.0
        %2581 = vmatpush1.xpose.msra.mxu0 0.0
        %2582 = vmatprep.subr.mxu0 0.0
        %2583 = vmatpush1.xpose.msra.mxu0 0.0
        %2584 = vmatprep.subr.mxu0 0.0
        %2585 = vmatpush1.xpose.msra.mxu0 0.0
        %2586 = vmatprep.subr.mxu0 0.0
        %2587 = vmatpush1.xpose.msra.mxu0 0.0
        %2588 = vmatprep.subr.mxu0 0.0
        %2589 = vmatpush1.xpose.msra.mxu0 0.0
        %2590 = vmatprep.subr.mxu0 0.0
        %2591 = vmatpush1.xpose.msra.mxu0 0.0
        %2592 = vmatprep.subr.mxu0 0.0
        %2593 = vmatpush1.xpose.msra.mxu0 0.0
        %2594 = vmatprep.subr.mxu0 0.0
        %2595 = vmatpush1.xpose.msra.mxu0 0.0
        %2596 = vmatprep.subr.mxu0 0.0
        %2597 = vmatpush1.xpose.msra.mxu0 0.0
        %2598 = vmatprep.subr.mxu0 0.0
        %2599 = vmatpush1.xpose.msra.mxu0 0.0
        %2600 = vmatprep.subr.mxu0 0.0
        %2601 = vmatpush1.xpose.msra.mxu0 0.0
        %2602 = vmatprep.subr.mxu0 0.0
        %2603 = vmatpush1.xpose.msra.mxu0 0.0
        %2604 = vmatprep.subr.mxu0 0.0
        %2605 = vmatpush1.xpose.msra.mxu0 0.0
        %2606 = vmatprep.subr.mxu0 0.0
        %2607 = vmatpush1.xpose.msra.mxu0 0.0
        %2608 = vmatprep.subr.mxu0 0.0
        %2609 = vmatpush1.xpose.msra.mxu0 0.0
        %2610 = vmatprep.subr.mxu0 0.0
        %2611 = vmatpush1.xpose.msra.mxu0 0.0
        %2612 = vmatprep.subr.mxu0 0.0
        %2613 = vmatpush1.xpose.msra.mxu0 0.0
        %2614 = vmatprep.subr.mxu0 0.0
        %2615 = vmatpush1.xpose.msra.mxu0 0.0
        %2616 = vmatprep.subr.mxu0 0.0
        %2617 = vmatpush1.xpose.msra.mxu0 0.0
        %2618 = vmatprep.subr.mxu0 0.0
        %2619 = vmatpush1.xpose.msra.mxu0 0.0
        %2620 = vmatprep.subr.mxu0 0.0
        %2621 = vmatpush1.xpose.msra.mxu0 0.0
        %2622 = vmatprep.subr.mxu0 0.0
        %2623 = vmatpush1.xpose.msra.mxu0 0.0
        %2624 = vmatprep.mubr.f32.mxu0 0.0
        %2625 = vmatmul.mubr.f32.gmra.mrb[0].mxu0 %v2558
        %v2626 = vpop.f32.mrb[0].mxu0
        %v2627 = vadd.f32 %v2030, %v2626
        %v2628 = vpop.f32.mrb[0].mxu0
        %2629 = vdwg.mxu0
        %v2630 = vsel %vm2111, %v2627, -inf
        %2631 = vmax.xlane.f32.xlu0 %v2630
        %v2632 = vpop.xlane.xlu0 %2631
        %v2633 = vsub.f32 %v2627, %v2632
        %v2634 = vmul.f32 %v2633, 1.442695
        %v2635 = vpow.pop %v2634
        %v2636 = vsel %vm2111, %v2635, 0.0
        %2637 = vadd.xlane.f32.xlu0 %v2636
        %v2638 = vpop.xlane.xlu0 %2637
        %v2639 = vrcp.pop %v2638
        %v2640 = vmul.f32 %v2635, %v2639
        %2641 = vrot.lane.b32.xlu0 %v842, 32
        %v2642 = vpop.permute.xlu0 %2641
        %v2644 = vmul.f32 %v2017, %v2642
        %v2645 = vmul.f32 %v2022, %v2642
        %2648 = vrot.lane.b32.xlu0 %v2644, 96
        %v2649 = vpop.permute.xlu0 %2648
        %2650 = vrot.lane.b32.xlu0 %v2645, 96
        %v2651 = vpop.permute.xlu0 %2650
        %v2654 = vsel %vm2111, %v2640, 0
        %v2656 = vsel %vm2228, %v2651, 0
        %2658 = vmatprep.subr.mxu0 0.0
        %2659 = vmatpush1.msra.mxu0 %v2649
        %2660 = vmatprep.subr.mxu0 0.0
        %2661 = vmatpush1.msra.mxu0 %v2656
        %2662 = vmatprep.subr.mxu0 0.0
        %2663 = vmatpush1.msra.mxu0 0.0
        %2664 = vmatprep.subr.mxu0 0.0
        %2665 = vmatpush1.msra.mxu0 0.0
        %2666 = vmatprep.subr.mxu0 0.0
        %2667 = vmatpush1.msra.mxu0 0.0
        %2668 = vmatprep.subr.mxu0 0.0
        %2669 = vmatpush1.msra.mxu0 0.0
        %2670 = vmatprep.subr.mxu0 0.0
        %2671 = vmatpush1.msra.mxu0 0.0
        %2672 = vmatprep.subr.mxu0 0.0
        %2673 = vmatpush1.msra.mxu0 0.0
        %2674 = vmatprep.subr.mxu0 0.0
        %2675 = vmatpush1.msra.mxu0 0.0
        %2676 = vmatprep.subr.mxu0 0.0
        %2677 = vmatpush1.msra.mxu0 0.0
        %2678 = vmatprep.subr.mxu0 0.0
        %2679 = vmatpush1.msra.mxu0 0.0
        %2680 = vmatprep.subr.mxu0 0.0
        %2681 = vmatpush1.msra.mxu0 0.0
        %2682 = vmatprep.subr.mxu0 0.0
        %2683 = vmatpush1.msra.mxu0 0.0
        %2684 = vmatprep.subr.mxu0 0.0
        %2685 = vmatpush1.msra.mxu0 0.0
        %2686 = vmatprep.subr.mxu0 0.0
        %2687 = vmatpush1.msra.mxu0 0.0
        %2688 = vmatprep.subr.mxu0 0.0
        %2689 = vmatpush1.msra.mxu0 0.0
        %2690 = vmatprep.subr.mxu0 0.0
        %2691 = vmatpush1.msra.mxu0 0.0
        %2692 = vmatprep.subr.mxu0 0.0
        %2693 = vmatpush1.msra.mxu0 0.0
        %2694 = vmatprep.subr.mxu0 0.0
        %2695 = vmatpush1.msra.mxu0 0.0
        %2696 = vmatprep.subr.mxu0 0.0
        %2697 = vmatpush1.msra.mxu0 0.0
        %2698 = vmatprep.subr.mxu0 0.0
        %2699 = vmatpush1.msra.mxu0 0.0
        %2700 = vmatprep.subr.mxu0 0.0
        %2701 = vmatpush1.msra.mxu0 0.0
        %2702 = vmatprep.subr.mxu0 0.0
        %2703 = vmatpush1.msra.mxu0 0.0
        %2704 = vmatprep.subr.mxu0 0.0
        %2705 = vmatpush1.msra.mxu0 0.0
        %2706 = vmatprep.subr.mxu0 0.0
        %2707 = vmatpush1.msra.mxu0 0.0
        %2708 = vmatprep.subr.mxu0 0.0
        %2709 = vmatpush1.msra.mxu0 0.0
        %2710 = vmatprep.subr.mxu0 0.0
        %2711 = vmatpush1.msra.mxu0 0.0
        %2712 = vmatprep.subr.mxu0 0.0
        %2713 = vmatpush1.msra.mxu0 0.0
        %2714 = vmatprep.subr.mxu0 0.0
        %2715 = vmatpush1.msra.mxu0 0.0
        %2716 = vmatprep.subr.mxu0 0.0
        %2717 = vmatpush1.msra.mxu0 0.0
        %2718 = vmatprep.subr.mxu0 0.0
        %2719 = vmatpush1.msra.mxu0 0.0
        %2720 = vmatprep.subr.mxu0 0.0
        %2721 = vmatpush1.msra.mxu0 0.0
        %2722 = vmatprep.mubr.f32.mxu0 0.0
        %2723 = vmatmul.mubr.f32.gmra.mrb[0].mxu0 %v2654
        %v2724 = vpop.f32.mrb[0].mxu0
        %v2725 = vadd.f32 0.0, %v2724
        %v2726 = vpop.f32.mrb[0].mxu0
        %2727 = vdwg.mxu0
        %v2728 = vadd.f32 %v2555, %v2725
        %v2729 = vld [vmem:[%s16] sm:$0xff]
        %v2730 = vld [vmem:[%s16 + $0x8] sm:$0xff]
        %v2731 = vld [vmem:[%s16 + $0x10] sm:$0xff]
        %v2732 = vld [vmem:[%s16 + $0x18] sm:$0xff]
        %v2733 = vld [vmem:[%s17] sm:$0x1]
        %v2735 = vlaneseq
        %v2736 = vshrl.u32 %v2735, 7
        %v2737 = vsub.s32 0, %v2736
        %v2738 = vrot.slane %v2733, %v2737
        %v2741 = vsel %vm850, %v2728, 0
        %v2744 = vsel %vm850, %v2729, 0
        %v2747 = vsel %vm850, %v2730, 0
        %v2750 = vsel %vm850, %v2731, 0
        %v2753 = vsel %vm850, %v2732, 0
        %2755 = vmatprep.subr.mxu0 0.0
        %2756 = vmatpush1.xpose.msra.mxu0 %v2744
        %2757 = vmatprep.subr.mxu0 0.0
        %2758 = vmatpush1.xpose.msra.mxu0 %v2747
        %2759 = vmatprep.subr.mxu0 0.0
        %2760 = vmatpush1.xpose.msra.mxu0 %v2750
        %2761 = vmatprep.subr.mxu0 0.0
        %2762 = vmatpush1.xpose.msra.mxu0 %v2753
        %2763 = vmatprep.subr.mxu0 0.0
        %2764 = vmatpush1.xpose.msra.mxu0 0.0
        %2765 = vmatprep.subr.mxu0 0.0
        %2766 = vmatpush1.xpose.msra.mxu0 0.0
        %2767 = vmatprep.subr.mxu0 0.0
        %2768 = vmatpush1.xpose.msra.mxu0 0.0
        %2769 = vmatprep.subr.mxu0 0.0
        %2770 = vmatpush1.xpose.msra.mxu0 0.0
        %2771 = vmatprep.subr.mxu0 0.0
        %2772 = vmatpush1.xpose.msra.mxu0 0.0
        %2773 = vmatprep.subr.mxu0 0.0
        %2774 = vmatpush1.xpose.msra.mxu0 0.0
        %2775 = vmatprep.subr.mxu0 0.0
        %2776 = vmatpush1.xpose.msra.mxu0 0.0
        %2777 = vmatprep.subr.mxu0 0.0
        %2778 = vmatpush1.xpose.msra.mxu0 0.0
        %2779 = vmatprep.subr.mxu0 0.0
        %2780 = vmatpush1.xpose.msra.mxu0 0.0
        %2781 = vmatprep.subr.mxu0 0.0
        %2782 = vmatpush1.xpose.msra.mxu0 0.0
        %2783 = vmatprep.subr.mxu0 0.0
        %2784 = vmatpush1.xpose.msra.mxu0 0.0
        %2785 = vmatprep.subr.mxu0 0.0
        %2786 = vmatpush1.xpose.msra.mxu0 0.0
        %2787 = vmatprep.subr.mxu0 0.0
        %2788 = vmatpush1.xpose.msra.mxu0 0.0
        %2789 = vmatprep.subr.mxu0 0.0
        %2790 = vmatpush1.xpose.msra.mxu0 0.0
        %2791 = vmatprep.subr.mxu0 0.0
        %2792 = vmatpush1.xpose.msra.mxu0 0.0
        %2793 = vmatprep.subr.mxu0 0.0
        %2794 = vmatpush1.xpose.msra.mxu0 0.0
        %2795 = vmatprep.subr.mxu0 0.0
        %2796 = vmatpush1.xpose.msra.mxu0 0.0
        %2797 = vmatprep.subr.mxu0 0.0
        %2798 = vmatpush1.xpose.msra.mxu0 0.0
        %2799 = vmatprep.subr.mxu0 0.0
        %2800 = vmatpush1.xpose.msra.mxu0 0.0
        %2801 = vmatprep.subr.mxu0 0.0
        %2802 = vmatpush1.xpose.msra.mxu0 0.0
        %2803 = vmatprep.subr.mxu0 0.0
        %2804 = vmatpush1.xpose.msra.mxu0 0.0
        %2805 = vmatprep.subr.mxu0 0.0
        %2806 = vmatpush1.xpose.msra.mxu0 0.0
        %2807 = vmatprep.subr.mxu0 0.0
        %2808 = vmatpush1.xpose.msra.mxu0 0.0
        %2809 = vmatprep.subr.mxu0 0.0
        %2810 = vmatpush1.xpose.msra.mxu0 0.0
        %2811 = vmatprep.subr.mxu0 0.0
        %2812 = vmatpush1.xpose.msra.mxu0 0.0
        %2813 = vmatprep.subr.mxu0 0.0
        %2814 = vmatpush1.xpose.msra.mxu0 0.0
        %2815 = vmatprep.subr.mxu0 0.0
        %2816 = vmatpush1.xpose.msra.mxu0 0.0
        %2817 = vmatprep.subr.mxu0 0.0
        %2818 = vmatpush1.xpose.msra.mxu0 0.0
        %2819 = vmatprep.mubr.f32.mxu0 0.0
        %2820 = vmatmul.mubr.f32.gmra.mrb[0].mxu0 %v2741
        %v2821 = vpop.f32.mrb[0].mxu0
        %v2822 = vadd.f32 %v2738, %v2821
        %v2823 = vpop.f32.mrb[0].mxu0
        %2824 = vdwg.mxu0
        %v2825 = vadd.f32 %v1808, %v2822
        %v2826 = vld [vmem:[%s18] sm:$0x1]
        %v2827 = vld [vmem:[%s19] sm:$0x1]
        %v2828 = vsel %vm850, %v2825, 0.0
        %2829 = vadd.xlane.f32.xlu0 %v2828
        %v2830 = vpop.xlane.xlu0 %2829
        %v2831 = vmul.f32 %v2830, %v854
        %v2832 = vsub.f32 %v2825, %v2831
        %v2833 = vmul.f32 %v2832, %v2832
        %v2834 = vsel %vm850, %v2833, 0.0
        %2835 = vadd.xlane.f32.xlu0 %v2834
        %v2836 = vpop.xlane.xlu0 %2835
        %v2837 = vmul.f32 %v2836, %v854
        %v2838 = vadd.f32 %v2837, 1e-05
        %v2839 = vrsqrt.pop %v2838
        %v2840 = vmul.f32 %v2832, %v2839
        %v2842 = vlaneseq
        %v2843 = vshrl.u32 %v2842, 7
        %v2844 = vsub.s32 0, %v2843
        %v2845 = vrot.slane %v2826, %v2844
        %v2847 = vmul.f32 %v2840, %v2845
        %v2849 = vlaneseq
        %v2850 = vshrl.u32 %v2849, 7
        %v2851 = vsub.s32 0, %v2850
        %v2852 = vrot.slane %v2827, %v2851
        %v2854 = vadd.f32 %v2847, %v2852
        %v2855 = vld [vmem:[%s20] sm:$0xff]
        %v2856 = vld [vmem:[%s20 + $0x8] sm:$0xff]
        %v2857 = vld [vmem:[%s20 + $0x10] sm:$0xff]
        %v2858 = vld [vmem:[%s20 + $0x18] sm:$0xff]
        %v2859 = vld [vmem:[%s20 + $0x20] sm:$0xff]
        %v2860 = vld [vmem:[%s20 + $0x28] sm:$0xff]
        %v2861 = vld [vmem:[%s20 + $0x30] sm:$0xff]
        %v2862 = vld [vmem:[%s20 + $0x38] sm:$0xff]
        %v2863 = vld [vmem:[%s21] sm:$0x1]
        %v2865 = vlaneseq
        %v2866 = vshrl.u32 %v2865, 7
        %v2867 = vsub.s32 0, %v2866
        %v2868 = vrot.slane %v2863, %v2867
        %v2871 = vsel %vm850, %v2854, 0
        %v2874 = vsel %vm850, %v2855, 0
        %v2877 = vsel %vm850, %v2856, 0
        %v2880 = vsel %vm850, %v2857, 0
        %v2883 = vsel %vm850, %v2858, 0
        %v2886 = vsel %vm850, %v2859, 0
        %v2889 = vsel %vm850, %v2860, 0
        %v2892 = vsel %vm850, %v2861, 0
        %v2895 = vsel %vm850, %v2862, 0
        %2897 = vmatprep.subr.mxu0 0.0
        %2898 = vmatpush1.xpose.msra.mxu0 %v2874
        %2899 = vmatprep.subr.mxu0 0.0
        %2900 = vmatpush1.xpose.msra.mxu0 %v2877
        %2901 = vmatprep.subr.mxu0 0.0
        %2902 = vmatpush1.xpose.msra.mxu0 %v2880
        %2903 = vmatprep.subr.mxu0 0.0
        %2904 = vmatpush1.xpose.msra.mxu0 %v2883
        %2905 = vmatprep.subr.mxu0 0.0
        %2906 = vmatpush1.xpose.msra.mxu0 %v2886
        %2907 = vmatprep.subr.mxu0 0.0
        %2908 = vmatpush1.xpose.msra.mxu0 %v2889
        %2909 = vmatprep.subr.mxu0 0.0
        %2910 = vmatpush1.xpose.msra.mxu0 %v2892
        %2911 = vmatprep.subr.mxu0 0.0
        %2912 = vmatpush1.xpose.msra.mxu0 %v2895
        %2913 = vmatprep.subr.mxu0 0.0
        %2914 = vmatpush1.xpose.msra.mxu0 0.0
        %2915 = vmatprep.subr.mxu0 0.0
        %2916 = vmatpush1.xpose.msra.mxu0 0.0
        %2917 = vmatprep.subr.mxu0 0.0
        %2918 = vmatpush1.xpose.msra.mxu0 0.0
        %2919 = vmatprep.subr.mxu0 0.0
        %2920 = vmatpush1.xpose.msra.mxu0 0.0
        %2921 = vmatprep.subr.mxu0 0.0
        %2922 = vmatpush1.xpose.msra.mxu0 0.0
        %2923 = vmatprep.subr.mxu0 0.0
        %2924 = vmatpush1.xpose.msra.mxu0 0.0
        %2925 = vmatprep.subr.mxu0 0.0
        %2926 = vmatpush1.xpose.msra.mxu0 0.0
        %2927 = vmatprep.subr.mxu0 0.0
        %2928 = vmatpush1.xpose.msra.mxu0 0.0
        %2929 = vmatprep.subr.mxu0 0.0
        %2930 = vmatpush1.xpose.msra.mxu0 0.0
        %2931 = vmatprep.subr.mxu0 0.0
        %2932 = vmatpush1.xpose.msra.mxu0 0.0
        %2933 = vmatprep.subr.mxu0 0.0
        %2934 = vmatpush1.xpose.msra.mxu0 0.0
        %2935 = vmatprep.subr.mxu0 0.0
        %2936 = vmatpush1.xpose.msra.mxu0 0.0
        %2937 = vmatprep.subr.mxu0 0.0
        %2938 = vmatpush1.xpose.msra.mxu0 0.0
        %2939 = vmatprep.subr.mxu0 0.0
        %2940 = vmatpush1.xpose.msra.mxu0 0.0
        %2941 = vmatprep.subr.mxu0 0.0
        %2942 = vmatpush1.xpose.msra.mxu0 0.0
        %2943 = vmatprep.subr.mxu0 0.0
        %2944 = vmatpush1.xpose.msra.mxu0 0.0
        %2945 = vmatprep.subr.mxu0 0.0
        %2946 = vmatpush1.xpose.msra.mxu0 0.0
        %2947 = vmatprep.subr.mxu0 0.0
        %2948 = vmatpush1.xpose.msra.mxu0 0.0
        %2949 = vmatprep.subr.mxu0 0.0
        %2950 = vmatpush1.xpose.msra.mxu0 0.0
        %2951 = vmatprep.subr.mxu0 0.0
        %2952 = vmatpush1.xpose.msra.mxu0 0.0
        %2953 = vmatprep.subr.mxu0 0.0
        %2954 = vmatpush1.xpose.msra.mxu0 0.0
        %2955 = vmatprep.subr.mxu0 0.0
        %2956 = vmatpush1.xpose.msra.mxu0 0.0
        %2957 = vmatprep.subr.mxu0 0.0
        %2958 = vmatpush1.xpose.msra.mxu0 0.0
        %2959 = vmatprep.subr.mxu0 0.0
        %2960 = vmatpush1.xpose.msra.mxu0 0.0
        %2961 = vmatprep.mubr.f32.mxu0 0.0
        %2962 = vmatmul.mubr.f32.gmra.mrb[0].mxu0 %v2871
        %v2963 = vpop.f32.mrb[0].mxu0
        %v2964 = vadd.f32 %v2868, %v2963
        %v2965 = vpop.f32.mrb[0].mxu0
        %2966 = vdwg.mxu0
        %v2967 = vmul.f32 %v2964, 0.5
        %v2968 = vmul.f32 %v2964, 0.70710677
        %v2969 = verf.f32.pop %v2968
        %v2970 = vadd.f32 %v2969, 1.0
        %v2971 = vmul.f32 %v2967, %v2970
        %v2972 = vld [vmem:[%s22] sm:$0xff]
        %v2973 = vld [vmem:[%s22 + $0x8] sm:$0xff]
        %v2974 = vld [vmem:[%s22 + $0x10] sm:$0xff]
        %v2975 = vld [vmem:[%s22 + $0x18] sm:$0xff]
        %v2976 = vld [vmem:[%s23] sm:$0x1]
        %v2978 = vlaneseq
        %v2979 = vshrl.u32 %v2978, 7
        %v2980 = vsub.s32 0, %v2979
        %v2981 = vrot.slane %v2976, %v2980
        %vm2983 = vcmask 523264
        %v2985 = vsel %vm2983, %v2971, 0
        %v2988 = vsel %vm2983, %v2972, 0
        %v2991 = vsel %vm2983, %v2973, 0
        %v2994 = vsel %vm2983, %v2974, 0
        %v2997 = vsel %vm2983, %v2975, 0
        %2999 = vmatprep.subr.mxu0 0.0
        %3000 = vmatpush1.xpose.msra.mxu0 %v2988
        %3001 = vmatprep.subr.mxu0 0.0
        %3002 = vmatpush1.xpose.msra.mxu0 %v2991
        %3003 = vmatprep.subr.mxu0 0.0
        %3004 = vmatpush1.xpose.msra.mxu0 %v2994
        %3005 = vmatprep.subr.mxu0 0.0
        %3006 = vmatpush1.xpose.msra.mxu0 %v2997
        %3007 = vmatprep.subr.mxu0 0.0
        %3008 = vmatpush1.xpose.msra.mxu0 0.0
        %3009 = vmatprep.subr.mxu0 0.0
        %3010 = vmatpush1.xpose.msra.mxu0 0.0
        %3011 = vmatprep.subr.mxu0 0.0
        %3012 = vmatpush1.xpose.msra.mxu0 0.0
        %3013 = vmatprep.subr.mxu0 0.0
        %3014 = vmatpush1.xpose.msra.mxu0 0.0
        %3015 = vmatprep.subr.mxu0 0.0
        %3016 = vmatpush1.xpose.msra.mxu0 0.0
        %3017 = vmatprep.subr.mxu0 0.0
        %3018 = vmatpush1.xpose.msra.mxu0 0.0
        %3019 = vmatprep.subr.mxu0 0.0
        %3020 = vmatpush1.xpose.msra.mxu0 0.0
        %3021 = vmatprep.subr.mxu0 0.0
        %3022 = vmatpush1.xpose.msra.mxu0 0.0
        %3023 = vmatprep.subr.mxu0 0.0
        %3024 = vmatpush1.xpose.msra.mxu0 0.0
        %3025 = vmatprep.subr.mxu0 0.0
        %3026 = vmatpush1.xpose.msra.mxu0 0.0
        %3027 = vmatprep.subr.mxu0 0.0
        %3028 = vmatpush1.xpose.msra.mxu0 0.0
        %3029 = vmatprep.subr.mxu0 0.0
        %3030 = vmatpush1.xpose.msra.mxu0 0.0
        %3031 = vmatprep.subr.mxu0 0.0
        %3032 = vmatpush1.xpose.msra.mxu0 0.0
        %3033 = vmatprep.subr.mxu0 0.0
        %3034 = vmatpush1.xpose.msra.mxu0 0.0
        %3035 = vmatprep.subr.mxu0 0.0
        %3036 = vmatpush1.xpose.msra.mxu0 0.0
        %3037 = vmatprep.subr.mxu0 0.0
        %3038 = vmatpush1.xpose.msra.mxu0 0.0
        %3039 = vmatprep.subr.mxu0 0.0
        %3040 = vmatpush1.xpose.msra.mxu0 0.0
        %3041 = vmatprep.subr.mxu0 0.0
        %3042 = vmatpush1.xpose.msra.mxu0 0.0
        %3043 = vmatprep.subr.mxu0 0.0
        %3044 = vmatpush1.xpose.msra.mxu0 0.0
        %3045 = vmatprep.subr.mxu0 0.0
        %3046 = vmatpush1.xpose.msra.mxu0 0.0
        %3047 = vmatprep.subr.mxu0 0.0
        %3048 = vmatpush1.xpose.msra.mxu0 0.0
        %3049 = vmatprep.subr.mxu0 0.0
        %3050 = vmatpush1.xpose.msra.mxu0 0.0
        %3051 = vmatprep.subr.mxu0 0.0
        %3052 = vmatpush1.xpose.msra.mxu0 0.0
        %3053 = vmatprep.subr.mxu0 0.0
        %3054 = vmatpush1.xpose.msra.mxu0 0.0
        %3055 = vmatprep.subr.mxu0 0.0
        %3056 = vmatpush1.xpose.msra.mxu0 0.0
        %3057 = vmatprep.subr.mxu0 0.0
        %3058 = vmatpush1.xpose.msra.mxu0 0.0
        %3059 = vmatprep.subr.mxu0 0.0
        %3060 = vmatpush1.xpose.msra.mxu0 0.0
        %3061 = vmatprep.subr.mxu0 0.0
        %3062 = vmatpush1.xpose.msra.mxu0 0.0
        %3063 = vmatprep.mubr.f32.mxu0 0.0
        %3064 = vmatmul.mubr.f32.gmra.mrb[0].mxu0 %v2985
        %v3065 = vpop.f32.mrb[0].mxu0
        %v3066 = vadd.f32 %v2981, %v3065
        %v3067 = vpop.f32.mrb[0].mxu0
        %3068 = vdwg.mxu0
        %v3069 = vadd.f32 %v2854, %v3066
        %v3070 = vld [vmem:[%s24] sm:$0x1]
        %v3071 = vld [vmem:[%s25] sm:$0x1]
        %v3072 = vsel %vm850, %v3069, 0.0
        %3073 = vadd.xlane.f32.xlu0 %v3072
        %v3074 = vpop.xlane.xlu0 %3073
        %v3075 = vmul.f32 %v3074, %v854
        %v3076 = vsub.f32 %v3069, %v3075
        %v3077 = vmul.f32 %v3076, %v3076
        %v3078 = vsel %vm850, %v3077, 0.0
        %3079 = vadd.xlane.f32.xlu0 %v3078
        %v3080 = vpop.xlane.xlu0 %3079
        %v3081 = vmul.f32 %v3080, %v854
        %v3082 = vadd.f32 %v3081, 1e-05
        %v3083 = vrsqrt.pop %v3082
        %v3084 = vmul.f32 %v3076, %v3083
        %v3086 = vlaneseq
        %v3087 = vshrl.u32 %v3086, 7
        %v3088 = vsub.s32 0, %v3087
        %v3089 = vrot.slane %v3070, %v3088
        %v3091 = vmul.f32 %v3084, %v3089
        %v3093 = vlaneseq
        %v3094 = vshrl.u32 %v3093, 7
        %v3095 = vsub.s32 0, %v3094
        %v3096 = vrot.slane %v3071, %v3095
        %v3098 = vadd.f32 %v3091, %v3096
        %s3099 = scalar_lea.vmem %s6, 96
        %v3100 = vld [vmem:[%s3099] sm:$0xff]
        %v3101 = vld [vmem:[%s3099 + $0x8] sm:$0xff]
        %v3102 = vld [vmem:[%s3099 + $0x10] sm:$0xff]
        %v3103 = vld [vmem:[%s3099 + $0x18] sm:$0xff]
        %v3104 = vld [vmem:[%s3099 + $0x20] sm:$0xff]
        %v3105 = vld [vmem:[%s3099 + $0x28] sm:$0xff]
        %v3106 = vld [vmem:[%s3099 + $0x30] sm:$0xff]
        %v3107 = vld [vmem:[%s3099 + $0x38] sm:$0xff]
        %v3108 = vld [vmem:[%s3099 + $0x40] sm:$0xff]
        %v3109 = vld [vmem:[%s3099 + $0x48] sm:$0xff]
        %v3110 = vld [vmem:[%s3099 + $0x50] sm:$0xff]
        %v3111 = vld [vmem:[%s3099 + $0x58] sm:$0xff]
        %s3112 = scalar_lea.vmem %s7, 1
        %v3113 = vld [vmem:[%s3112] sm:$0x1]
        %v3115 = vlaneseq
        %v3116 = vshrl.u32 %v3115, 7
        %v3117 = vsub.s32 0, %v3116
        %v3118 = vrot.slane %v3113, %v3117
        %v3121 = vsel %vm850, %v3098, 0
        %v3124 = vsel %vm850, %v3100, 0
        %v3127 = vsel %vm850, %v3101, 0
        %v3130 = vsel %vm850, %v3102, 0
        %v3133 = vsel %vm850, %v3103, 0
        %v3136 = vsel %vm850, %v3104, 0
        %v3139 = vsel %vm850, %v3105, 0
        %v3142 = vsel %vm850, %v3106, 0
        %v3145 = vsel %vm850, %v3107, 0
        %v3148 = vsel %vm850, %v3108, 0
        %v3151 = vsel %vm850, %v3109, 0
        %v3154 = vsel %vm850, %v3110, 0
        %v3157 = vsel %vm850, %v3111, 0
        %3159 = vmatprep.subr.mxu0 0.0
        %3160 = vmatpush1.xpose.msra.mxu0 %v3124
        %3161 = vmatprep.subr.mxu0 0.0
        %3162 = vmatpush1.xpose.msra.mxu0 %v3127
        %3163 = vmatprep.subr.mxu0 0.0
        %3164 = vmatpush1.xpose.msra.mxu0 %v3130
        %3165 = vmatprep.subr.mxu0 0.0
        %3166 = vmatpush1.xpose.msra.mxu0 %v3133
        %3167 = vmatprep.subr.mxu0 0.0
        %3168 = vmatpush1.xpose.msra.mxu0 %v3136
        %3169 = vmatprep.subr.mxu0 0.0
        %3170 = vmatpush1.xpose.msra.mxu0 %v3139
        %3171 = vmatprep.subr.mxu0 0.0
        %3172 = vmatpush1.xpose.msra.mxu0 %v3142
        %3173 = vmatprep.subr.mxu0 0.0
        %3174 = vmatpush1.xpose.msra.mxu0 %v3145
        %3175 = vmatprep.subr.mxu0 0.0
        %3176 = vmatpush1.xpose.msra.mxu0 %v3148
        %3177 = vmatprep.subr.mxu0 0.0
        %3178 = vmatpush1.xpose.msra.mxu0 %v3151
        %3179 = vmatprep.subr.mxu0 0.0
        %3180 = vmatpush1.xpose.msra.mxu0 %v3154
        %3181 = vmatprep.subr.mxu0 0.0
        %3182 = vmatpush1.xpose.msra.mxu0 %v3157
        %3183 = vmatprep.subr.mxu0 0.0
        %3184 = vmatpush1.xpose.msra.mxu0 0.0
        %3185 = vmatprep.subr.mxu0 0.0
        %3186 = vmatpush1.xpose.msra.mxu0 0.0
        %3187 = vmatprep.subr.mxu0 0.0
        %3188 = vmatpush1.xpose.msra.mxu0 0.0
        %3189 = vmatprep.subr.mxu0 0.0
        %3190 = vmatpush1.xpose.msra.mxu0 0.0
        %3191 = vmatprep.subr.mxu0 0.0
        %3192 = vmatpush1.xpose.msra.mxu0 0.0
        %3193 = vmatprep.subr.mxu0 0.0
        %3194 = vmatpush1.xpose.msra.mxu0 0.0
        %3195 = vmatprep.subr.mxu0 0.0
        %3196 = vmatpush1.xpose.msra.mxu0 0.0
        %3197 = vmatprep.subr.mxu0 0.0
        %3198 = vmatpush1.xpose.msra.mxu0 0.0
        %3199 = vmatprep.subr.mxu0 0.0
        %3200 = vmatpush1.xpose.msra.mxu0 0.0
        %3201 = vmatprep.subr.mxu0 0.0
        %3202 = vmatpush1.xpose.msra.mxu0 0.0
        %3203 = vmatprep.subr.mxu0 0.0
        %3204 = vmatpush1.xpose.msra.mxu0 0.0
        %3205 = vmatprep.subr.mxu0 0.0
        %3206 = vmatpush1.xpose.msra.mxu0 0.0
        %3207 = vmatprep.subr.mxu0 0.0
        %3208 = vmatpush1.xpose.msra.mxu0 0.0
        %3209 = vmatprep.subr.mxu0 0.0
        %3210 = vmatpush1.xpose.msra.mxu0 0.0
        %3211 = vmatprep.subr.mxu0 0.0
        %3212 = vmatpush1.xpose.msra.mxu0 0.0
        %3213 = vmatprep.subr.mxu0 0.0
        %3214 = vmatpush1.xpose.msra.mxu0 0.0
        %3215 = vmatprep.subr.mxu0 0.0
        %3216 = vmatpush1.xpose.msra.mxu0 0.0
        %3217 = vmatprep.subr.mxu0 0.0
        %3218 = vmatpush1.xpose.msra.mxu0 0.0
        %3219 = vmatprep.subr.mxu0 0.0
        %3220 = vmatpush1.xpose.msra.mxu0 0.0
        %3221 = vmatprep.subr.mxu0 0.0
        %3222 = vmatpush1.xpose.msra.mxu0 0.0
        %3223 = vmatprep.mubr.f32.mxu0 0.0
        %3224 = vmatmul.mubr.f32.gmra.mrb[0].mxu0 %v3121
        %v3225 = vpop.f32.mrb[0].mxu0
        %v3226 = vadd.f32 %v3118, %v3225
        %v3227 = vpop.f32.mrb[0].mxu0
        %3228 = vdwg.mxu0
        %v3229 = vmul.f32 %v3226, %v827
        %3231 = vrot.lane.b32.xlu0 %v3226, 96
        %v3232 = vpop.permute.xlu0 %3231
        %v3234 = vsel %vm850, %v3229, 0
        %v3236 = vsel %vm850, %v3232, 0
        %3238 = vmatprep.subr.mxu0 0.0
        %3239 = vmatpush1.xpose.msra.mxu0 %v3236
        %3240 = vmatprep.subr.mxu0 0.0
        %3241 = vmatpush1.xpose.msra.mxu0 0.0
        %3242 = vmatprep.subr.mxu0 0.0
        %3243 = vmatpush1.xpose.msra.mxu0 0.0
        %3244 = vmatprep.subr.mxu0 0.0
        %3245 = vmatpush1.xpose.msra.mxu0 0.0
        %3246 = vmatprep.subr.mxu0 0.0
        %3247 = vmatpush1.xpose.msra.mxu0 0.0
        %3248 = vmatprep.subr.mxu0 0.0
        %3249 = vmatpush1.xpose.msra.mxu0 0.0
        %3250 = vmatprep.subr.mxu0 0.0
        %3251 = vmatpush1.xpose.msra.mxu0 0.0
        %3252 = vmatprep.subr.mxu0 0.0
        %3253 = vmatpush1.xpose.msra.mxu0 0.0
        %3254 = vmatprep.subr.mxu0 0.0
        %3255 = vmatpush1.xpose.msra.mxu0 0.0
        %3256 = vmatprep.subr.mxu0 0.0
        %3257 = vmatpush1.xpose.msra.mxu0 0.0
        %3258 = vmatprep.subr.mxu0 0.0
        %3259 = vmatpush1.xpose.msra.mxu0 0.0
        %3260 = vmatprep.subr.mxu0 0.0
        %3261 = vmatpush1.xpose.msra.mxu0 0.0
        %3262 = vmatprep.subr.mxu0 0.0
        %3263 = vmatpush1.xpose.msra.mxu0 0.0
        %3264 = vmatprep.subr.mxu0 0.0
        %3265 = vmatpush1.xpose.msra.mxu0 0.0
        %3266 = vmatprep.subr.mxu0 0.0
        %3267 = vmatpush1.xpose.msra.mxu0 0.0
        %3268 = vmatprep.subr.mxu0 0.0
        %3269 = vmatpush1.xpose.msra.mxu0 0.0
        %3270 = vmatprep.subr.mxu0 0.0
        %3271 = vmatpush1.xpose.msra.mxu0 0.0
        %3272 = vmatprep.subr.mxu0 0.0
        %3273 = vmatpush1.xpose.msra.mxu0 0.0
        %3274 = vmatprep.subr.mxu0 0.0
        %3275 = vmatpush1.xpose.msra.mxu0 0.0
        %3276 = vmatprep.subr.mxu0 0.0
        %3277 = vmatpush1.xpose.msra.mxu0 0.0
        %3278 = vmatprep.subr.mxu0 0.0
        %3279 = vmatpush1.xpose.msra.mxu0 0.0
        %3280 = vmatprep.subr.mxu0 0.0
        %3281 = vmatpush1.xpose.msra.mxu0 0.0
        %3282 = vmatprep.subr.mxu0 0.0
        %3283 = vmatpush1.xpose.msra.mxu0 0.0
        %3284 = vmatprep.subr.mxu0 0.0
        %3285 = vmatpush1.xpose.msra.mxu0 0.0
        %3286 = vmatprep.subr.mxu0 0.0
        %3287 = vmatpush1.xpose.msra.mxu0 0.0
        %3288 = vmatprep.subr.mxu0 0.0
        %3289 = vmatpush1.xpose.msra.mxu0 0.0
        %3290 = vmatprep.subr.mxu0 0.0
        %3291 = vmatpush1.xpose.msra.mxu0 0.0
        %3292 = vmatprep.subr.mxu0 0.0
        %3293 = vmatpush1.xpose.msra.mxu0 0.0
        %3294 = vmatprep.subr.mxu0 0.0
        %3295 = vmatpush1.xpose.msra.mxu0 0.0
        %3296 = vmatprep.subr.mxu0 0.0
        %3297 = vmatpush1.xpose.msra.mxu0 0.0
        %3298 = vmatprep.subr.mxu0 0.0
        %3299 = vmatpush1.xpose.msra.mxu0 0.0
        %3300 = vmatprep.subr.mxu0 0.0
        %3301 = vmatpush1.xpose.msra.mxu0 0.0
        %3302 = vmatprep.mubr.f32.mxu0 0.0
        %3303 = vmatmul.mubr.f32.gmra.mrb[0].mxu0 %v3234
        %v3304 = vpop.f32.mrb[0].mxu0
        %v3305 = vadd.f32 %v843, %v3304
        %v3306 = vpop.f32.mrb[0].mxu0
        %3307 = vdwg.mxu0
        %v3308 = vsel %vm1086, %v3305, -inf
        %3309 = vmax.xlane.f32.xlu0 %v3308
        %v3310 = vpop.xlane.xlu0 %3309
        %v3311 = vsub.f32 %v3305, %v3310
        %v3312 = vmul.f32 %v3311, 1.442695
        %v3313 = vpow.pop %v3312
        %v3314 = vsel %vm1086, %v3313, 0.0
        %3315 = vadd.xlane.f32.xlu0 %v3314
        %v3316 = vpop.xlane.xlu0 %3315
        %v3317 = vrcp.pop %v3316
        %v3318 = vmul.f32 %v3313, %v3317
        %v3319 = vmul.f32 %v3226, %v1100
        %v3320 = vmul.f32 %v3226, %v832
        %v3322 = vsel %vm850, %v3320, 0
        %3324 = vmatprep.subr.mxu0 0.0
        %3325 = vmatpush1.xpose.msra.mxu0 %v3236
        %3326 = vmatprep.subr.mxu0 0.0
        %3327 = vmatpush1.xpose.msra.mxu0 0.0
        %3328 = vmatprep.subr.mxu0 0.0
        %3329 = vmatpush1.xpose.msra.mxu0 0.0
        %3330 = vmatprep.subr.mxu0 0.0
        %3331 = vmatpush1.xpose.msra.mxu0 0.0
        %3332 = vmatprep.subr.mxu0 0.0
        %3333 = vmatpush1.xpose.msra.mxu0 0.0
        %3334 = vmatprep.subr.mxu0 0.0
        %3335 = vmatpush1.xpose.msra.mxu0 0.0
        %3336 = vmatprep.subr.mxu0 0.0
        %3337 = vmatpush1.xpose.msra.mxu0 0.0
        %3338 = vmatprep.subr.mxu0 0.0
        %3339 = vmatpush1.xpose.msra.mxu0 0.0
        %3340 = vmatprep.subr.mxu0 0.0
        %3341 = vmatpush1.xpose.msra.mxu0 0.0
        %3342 = vmatprep.subr.mxu0 0.0
        %3343 = vmatpush1.xpose.msra.mxu0 0.0
        %3344 = vmatprep.subr.mxu0 0.0
        %3345 = vmatpush1.xpose.msra.mxu0 0.0
        %3346 = vmatprep.subr.mxu0 0.0
        %3347 = vmatpush1.xpose.msra.mxu0 0.0
        %3348 = vmatprep.subr.mxu0 0.0
        %3349 = vmatpush1.xpose.msra.mxu0 0.0
        %3350 = vmatprep.subr.mxu0 0.0
        %3351 = vmatpush1.xpose.msra.mxu0 0.0
        %3352 = vmatprep.subr.mxu0 0.0
        %3353 = vmatpush1.xpose.msra.mxu0 0.0
        %3354 = vmatprep.subr.mxu0 0.0
        %3355 = vmatpush1.xpose.msra.mxu0 0.0
        %3356 = vmatprep.subr.mxu0 0.0
        %3357 = vmatpush1.xpose.msra.mxu0 0.0
        %3358 = vmatprep.subr.mxu0 0.0
        %3359 = vmatpush1.xpose.msra.mxu0 0.0
        %3360 = vmatprep.subr.mxu0 0.0
        %3361 = vmatpush1.xpose.msra.mxu0 0.0
        %3362 = vmatprep.subr.mxu0 0.0
        %3363 = vmatpush1.xpose.msra.mxu0 0.0
        %3364 = vmatprep.subr.mxu0 0.0
        %3365 = vmatpush1.xpose.msra.mxu0 0.0
        %3366 = vmatprep.subr.mxu0 0.0
        %3367 = vmatpush1.xpose.msra.mxu0 0.0
        %3368 = vmatprep.subr.mxu0 0.0
        %3369 = vmatpush1.xpose.msra.mxu0 0.0
        %3370 = vmatprep.subr.mxu0 0.0
        %3371 = vmatpush1.xpose.msra.mxu0 0.0
        %3372 = vmatprep.subr.mxu0 0.0
        %3373 = vmatpush1.xpose.msra.mxu0 0.0
        %3374 = vmatprep.subr.mxu0 0.0
        %3375 = vmatpush1.xpose.msra.mxu0 0.0
        %3376 = vmatprep.subr.mxu0 0.0
        %3377 = vmatpush1.xpose.msra.mxu0 0.0
        %3378 = vmatprep.subr.mxu0 0.0
        %3379 = vmatpush1.xpose.msra.mxu0 0.0
        %3380 = vmatprep.subr.mxu0 0.0
        %3381 = vmatpush1.xpose.msra.mxu0 0.0
        %3382 = vmatprep.subr.mxu0 0.0
        %3383 = vmatpush1.xpose.msra.mxu0 0.0
        %3384 = vmatprep.subr.mxu0 0.0
        %3385 = vmatpush1.xpose.msra.mxu0 0.0
        %3386 = vmatprep.subr.mxu0 0.0
        %3387 = vmatpush1.xpose.msra.mxu0 0.0
        %3388 = vmatprep.mubr.f32.mxu0 0.0
        %3389 = vmatmul.mubr.f32.gmra.mrb[0].mxu0 %v3322
        %v3390 = vpop.f32.mrb[0].mxu0
        %v3391 = vadd.f32 %v843, %v3390
        %v3392 = vpop.f32.mrb[0].mxu0
        %3393 = vdwg.mxu0
        %v3394 = vsel %vm1086, %v3391, -inf
        %3395 = vmax.xlane.f32.xlu0 %v3394
        %v3396 = vpop.xlane.xlu0 %3395
        %v3397 = vsub.f32 %v3391, %v3396
        %v3398 = vmul.f32 %v3397, 1.442695
        %v3399 = vpow.pop %v3398
        %v3400 = vsel %vm1086, %v3399, 0.0
        %3401 = vadd.xlane.f32.xlu0 %v3400
        %v3402 = vpop.xlane.xlu0 %3401
        %v3403 = vrcp.pop %v3402
        %v3404 = vmul.f32 %v3399, %v3403
        %v3405 = vmul.f32 %v3226, %v1190
        %3407 = vrot.lane.b32.xlu0 %v3405, 64
        %v3408 = vpop.permute.xlu0 %3407
        %v3411 = vsel %vm1086, %v3404, 0
        %3413 = vmatprep.subr.mxu0 0.0
        %3414 = vmatpush1.msra.mxu0 %v3408
        %3415 = vmatprep.subr.mxu0 0.0
        %3416 = vmatpush1.msra.mxu0 0.0
        %3417 = vmatprep.subr.mxu0 0.0
        %3418 = vmatpush1.msra.mxu0 0.0
        %3419 = vmatprep.subr.mxu0 0.0
        %3420 = vmatpush1.msra.mxu0 0.0
        %3421 = vmatprep.subr.mxu0 0.0
        %3422 = vmatpush1.msra.mxu0 0.0
        %3423 = vmatprep.subr.mxu0 0.0
        %3424 = vmatpush1.msra.mxu0 0.0
        %3425 = vmatprep.subr.mxu0 0.0
        %3426 = vmatpush1.msra.mxu0 0.0
        %3427 = vmatprep.subr.mxu0 0.0
        %3428 = vmatpush1.msra.mxu0 0.0
        %3429 = vmatprep.subr.mxu0 0.0
        %3430 = vmatpush1.msra.mxu0 0.0
        %3431 = vmatprep.subr.mxu0 0.0
        %3432 = vmatpush1.msra.mxu0 0.0
        %3433 = vmatprep.subr.mxu0 0.0
        %3434 = vmatpush1.msra.mxu0 0.0
        %3435 = vmatprep.subr.mxu0 0.0
        %3436 = vmatpush1.msra.mxu0 0.0
        %3437 = vmatprep.subr.mxu0 0.0
        %3438 = vmatpush1.msra.mxu0 0.0
        %3439 = vmatprep.subr.mxu0 0.0
        %3440 = vmatpush1.msra.mxu0 0.0
        %3441 = vmatprep.subr.mxu0 0.0
        %3442 = vmatpush1.msra.mxu0 0.0
        %3443 = vmatprep.subr.mxu0 0.0
        %3444 = vmatpush1.msra.mxu0 0.0
        %3445 = vmatprep.subr.mxu0 0.0
        %3446 = vmatpush1.msra.mxu0 0.0
        %3447 = vmatprep.subr.mxu0 0.0
        %3448 = vmatpush1.msra.mxu0 0.0
        %3449 = vmatprep.subr.mxu0 0.0
        %3450 = vmatpush1.msra.mxu0 0.0
        %3451 = vmatprep.subr.mxu0 0.0
        %3452 = vmatpush1.msra.mxu0 0.0
        %3453 = vmatprep.subr.mxu0 0.0
        %3454 = vmatpush1.msra.mxu0 0.0
        %3455 = vmatprep.subr.mxu0 0.0
        %3456 = vmatpush1.msra.mxu0 0.0
        %3457 = vmatprep.subr.mxu0 0.0
        %3458 = vmatpush1.msra.mxu0 0.0
        %3459 = vmatprep.subr.mxu0 0.0
        %3460 = vmatpush1.msra.mxu0 0.0
        %3461 = vmatprep.subr.mxu0 0.0
        %3462 = vmatpush1.msra.mxu0 0.0
        %3463 = vmatprep.subr.mxu0 0.0
        %3464 = vmatpush1.msra.mxu0 0.0
        %3465 = vmatprep.subr.mxu0 0.0
        %3466 = vmatpush1.msra.mxu0 0.0
        %3467 = vmatprep.subr.mxu0 0.0
        %3468 = vmatpush1.msra.mxu0 0.0
        %3469 = vmatprep.subr.mxu0 0.0
        %3470 = vmatpush1.msra.mxu0 0.0
        %3471 = vmatprep.subr.mxu0 0.0
        %3472 = vmatpush1.msra.mxu0 0.0
        %3473 = vmatprep.subr.mxu0 0.0
        %3474 = vmatpush1.msra.mxu0 0.0
        %3475 = vmatprep.subr.mxu0 0.0
        %3476 = vmatpush1.msra.mxu0 0.0
        %3477 = vmatprep.mubr.f32.mxu0 0.0
        %3478 = vmatmul.mubr.f32.gmra.mrb[0].mxu0 %v3411
        %v3479 = vpop.f32.mrb[0].mxu0
        %v3480 = vadd.f32 0.0, %v3479
        %v3481 = vpop.f32.mrb[0].mxu0
        %3482 = vdwg.mxu0
        %3484 = vrot.lane.b32.xlu0 %v3319, 64
        %v3485 = vpop.permute.xlu0 %3484
        %v3488 = vsel %vm1086, %v3318, 0
        %3490 = vmatprep.subr.mxu0 0.0
        %3491 = vmatpush1.msra.mxu0 %v3485
        %3492 = vmatprep.subr.mxu0 0.0
        %3493 = vmatpush1.msra.mxu0 0.0
        %3494 = vmatprep.subr.mxu0 0.0
        %3495 = vmatpush1.msra.mxu0 0.0
        %3496 = vmatprep.subr.mxu0 0.0
        %3497 = vmatpush1.msra.mxu0 0.0
        %3498 = vmatprep.subr.mxu0 0.0
        %3499 = vmatpush1.msra.mxu0 0.0
        %3500 = vmatprep.subr.mxu0 0.0
        %3501 = vmatpush1.msra.mxu0 0.0
        %3502 = vmatprep.subr.mxu0 0.0
        %3503 = vmatpush1.msra.mxu0 0.0
        %3504 = vmatprep.subr.mxu0 0.0
        %3505 = vmatpush1.msra.mxu0 0.0
        %3506 = vmatprep.subr.mxu0 0.0
        %3507 = vmatpush1.msra.mxu0 0.0
        %3508 = vmatprep.subr.mxu0 0.0
        %3509 = vmatpush1.msra.mxu0 0.0
        %3510 = vmatprep.subr.mxu0 0.0
        %3511 = vmatpush1.msra.mxu0 0.0
        %3512 = vmatprep.subr.mxu0 0.0
        %3513 = vmatpush1.msra.mxu0 0.0
        %3514 = vmatprep.subr.mxu0 0.0
        %3515 = vmatpush1.msra.mxu0 0.0
        %3516 = vmatprep.subr.mxu0 0.0
        %3517 = vmatpush1.msra.mxu0 0.0
        %3518 = vmatprep.subr.mxu0 0.0
        %3519 = vmatpush1.msra.mxu0 0.0
        %3520 = vmatprep.subr.mxu0 0.0
        %3521 = vmatpush1.msra.mxu0 0.0
        %3522 = vmatprep.subr.mxu0 0.0
        %3523 = vmatpush1.msra.mxu0 0.0
        %3524 = vmatprep.subr.mxu0 0.0
        %3525 = vmatpush1.msra.mxu0 0.0
        %3526 = vmatprep.subr.mxu0 0.0
        %3527 = vmatpush1.msra.mxu0 0.0
        %3528 = vmatprep.subr.mxu0 0.0
        %3529 = vmatpush1.msra.mxu0 0.0
        %3530 = vmatprep.subr.mxu0 0.0
        %3531 = vmatpush1.msra.mxu0 0.0
        %3532 = vmatprep.subr.mxu0 0.0
        %3533 = vmatpush1.msra.mxu0 0.0
        %3534 = vmatprep.subr.mxu0 0.0
        %3535 = vmatpush1.msra.mxu0 0.0
        %3536 = vmatprep.subr.mxu0 0.0
        %3537 = vmatpush1.msra.mxu0 0.0
        %3538 = vmatprep.subr.mxu0 0.0
        %3539 = vmatpush1.msra.mxu0 0.0
        %3540 = vmatprep.subr.mxu0 0.0
        %3541 = vmatpush1.msra.mxu0 0.0
        %3542 = vmatprep.subr.mxu0 0.0
        %3543 = vmatpush1.msra.mxu0 0.0
        %3544 = vmatprep.subr.mxu0 0.0
        %3545 = vmatpush1.msra.mxu0 0.0
        %3546 = vmatprep.subr.mxu0 0.0
        %3547 = vmatpush1.msra.mxu0 0.0
        %3548 = vmatprep.subr.mxu0 0.0
        %3549 = vmatpush1.msra.mxu0 0.0
        %3550 = vmatprep.subr.mxu0 0.0
        %3551 = vmatpush1.msra.mxu0 0.0
        %3552 = vmatprep.subr.mxu0 0.0
        %3553 = vmatpush1.msra.mxu0 0.0
        %3554 = vmatprep.mubr.f32.mxu0 0.0
        %3555 = vmatmul.mubr.f32.gmra.mrb[0].mxu0 %v3488
        %v3556 = vpop.f32.mrb[0].mxu0
        %v3557 = vadd.f32 %v3480, %v3556
        %v3558 = vpop.f32.mrb[0].mxu0
        %3559 = vdwg.mxu0
        %v3560 = vmul.f32 %v3226, %v837
        %v3562 = vsel %vm850, %v3560, 0
        %3564 = vmatprep.subr.mxu0 0.0
        %3565 = vmatpush1.xpose.msra.mxu0 %v3236
        %3566 = vmatprep.subr.mxu0 0.0
        %3567 = vmatpush1.xpose.msra.mxu0 0.0
        %3568 = vmatprep.subr.mxu0 0.0
        %3569 = vmatpush1.xpose.msra.mxu0 0.0
        %3570 = vmatprep.subr.mxu0 0.0
        %3571 = vmatpush1.xpose.msra.mxu0 0.0
        %3572 = vmatprep.subr.mxu0 0.0
        %3573 = vmatpush1.xpose.msra.mxu0 0.0
        %3574 = vmatprep.subr.mxu0 0.0
        %3575 = vmatpush1.xpose.msra.mxu0 0.0
        %3576 = vmatprep.subr.mxu0 0.0
        %3577 = vmatpush1.xpose.msra.mxu0 0.0
        %3578 = vmatprep.subr.mxu0 0.0
        %3579 = vmatpush1.xpose.msra.mxu0 0.0
        %3580 = vmatprep.subr.mxu0 0.0
        %3581 = vmatpush1.xpose.msra.mxu0 0.0
        %3582 = vmatprep.subr.mxu0 0.0
        %3583 = vmatpush1.xpose.msra.mxu0 0.0
        %3584 = vmatprep.subr.mxu0 0.0
        %3585 = vmatpush1.xpose.msra.mxu0 0.0
        %3586 = vmatprep.subr.mxu0 0.0
        %3587 = vmatpush1.xpose.msra.mxu0 0.0
        %3588 = vmatprep.subr.mxu0 0.0
        %3589 = vmatpush1.xpose.msra.mxu0 0.0
        %3590 = vmatprep.subr.mxu0 0.0
        %3591 = vmatpush1.xpose.msra.mxu0 0.0
        %3592 = vmatprep.subr.mxu0 0.0
        %3593 = vmatpush1.xpose.msra.mxu0 0.0
        %3594 = vmatprep.subr.mxu0 0.0
        %3595 = vmatpush1.xpose.msra.mxu0 0.0
        %3596 = vmatprep.subr.mxu0 0.0
        %3597 = vmatpush1.xpose.msra.mxu0 0.0
        %3598 = vmatprep.subr.mxu0 0.0
        %3599 = vmatpush1.xpose.msra.mxu0 0.0
        %3600 = vmatprep.subr.mxu0 0.0
        %3601 = vmatpush1.xpose.msra.mxu0 0.0
        %3602 = vmatprep.subr.mxu0 0.0
        %3603 = vmatpush1.xpose.msra.mxu0 0.0
        %3604 = vmatprep.subr.mxu0 0.0
        %3605 = vmatpush1.xpose.msra.mxu0 0.0
        %3606 = vmatprep.subr.mxu0 0.0
        %3607 = vmatpush1.xpose.msra.mxu0 0.0
        %3608 = vmatprep.subr.mxu0 0.0
        %3609 = vmatpush1.xpose.msra.mxu0 0.0
        %3610 = vmatprep.subr.mxu0 0.0
        %3611 = vmatpush1.xpose.msra.mxu0 0.0
        %3612 = vmatprep.subr.mxu0 0.0
        %3613 = vmatpush1.xpose.msra.mxu0 0.0
        %3614 = vmatprep.subr.mxu0 0.0
        %3615 = vmatpush1.xpose.msra.mxu0 0.0
        %3616 = vmatprep.subr.mxu0 0.0
        %3617 = vmatpush1.xpose.msra.mxu0 0.0
        %3618 = vmatprep.subr.mxu0 0.0
        %3619 = vmatpush1.xpose.msra.mxu0 0.0
        %3620 = vmatprep.subr.mxu0 0.0
        %3621 = vmatpush1.xpose.msra.mxu0 0.0
        %3622 = vmatprep.subr.mxu0 0.0
        %3623 = vmatpush1.xpose.msra.mxu0 0.0
        %3624 = vmatprep.subr.mxu0 0.0
        %3625 = vmatpush1.xpose.msra.mxu0 0.0
        %3626 = vmatprep.subr.mxu0 0.0
        %3627 = vmatpush1.xpose.msra.mxu0 0.0
        %3628 = vmatprep.mubr.f32.mxu0 0.0
        %3629 = vmatmul.mubr.f32.gmra.mrb[0].mxu0 %v3562
        %v3630 = vpop.f32.mrb[0].mxu0
        %v3631 = vadd.f32 %v843, %v3630
        %v3632 = vpop.f32.mrb[0].mxu0
        %3633 = vdwg.mxu0
        %v3634 = vsel %vm1086, %v3631, -inf
        %3635 = vmax.xlane.f32.xlu0 %v3634
        %v3636 = vpop.xlane.xlu0 %3635
        %v3637 = vsub.f32 %v3631, %v3636
        %v3638 = vmul.f32 %v3637, 1.442695
        %v3639 = vpow.pop %v3638
        %v3640 = vsel %vm1086, %v3639, 0.0
        %3641 = vadd.xlane.f32.xlu0 %v3640
        %v3642 = vpop.xlane.xlu0 %3641
        %v3643 = vrcp.pop %v3642
        %v3644 = vmul.f32 %v3639, %v3643
        %v3645 = vmul.f32 %v3226, %v1434
        %3647 = vrot.lane.b32.xlu0 %v3645, 64
        %v3648 = vpop.permute.xlu0 %3647
        %v3651 = vsel %vm1086, %v3644, 0
        %3653 = vmatprep.subr.mxu0 0.0
        %3654 = vmatpush1.msra.mxu0 %v3648
        %3655 = vmatprep.subr.mxu0 0.0
        %3656 = vmatpush1.msra.mxu0 0.0
        %3657 = vmatprep.subr.mxu0 0.0
        %3658 = vmatpush1.msra.mxu0 0.0
        %3659 = vmatprep.subr.mxu0 0.0
        %3660 = vmatpush1.msra.mxu0 0.0
        %3661 = vmatprep.subr.mxu0 0.0
        %3662 = vmatpush1.msra.mxu0 0.0
        %3663 = vmatprep.subr.mxu0 0.0
        %3664 = vmatpush1.msra.mxu0 0.0
        %3665 = vmatprep.subr.mxu0 0.0
        %3666 = vmatpush1.msra.mxu0 0.0
        %3667 = vmatprep.subr.mxu0 0.0
        %3668 = vmatpush1.msra.mxu0 0.0
        %3669 = vmatprep.subr.mxu0 0.0
        %3670 = vmatpush1.msra.mxu0 0.0
        %3671 = vmatprep.subr.mxu0 0.0
        %3672 = vmatpush1.msra.mxu0 0.0
        %3673 = vmatprep.subr.mxu0 0.0
        %3674 = vmatpush1.msra.mxu0 0.0
        %3675 = vmatprep.subr.mxu0 0.0
        %3676 = vmatpush1.msra.mxu0 0.0
        %3677 = vmatprep.subr.mxu0 0.0
        %3678 = vmatpush1.msra.mxu0 0.0
        %3679 = vmatprep.subr.mxu0 0.0
        %3680 = vmatpush1.msra.mxu0 0.0
        %3681 = vmatprep.subr.mxu0 0.0
        %3682 = vmatpush1.msra.mxu0 0.0
        %3683 = vmatprep.subr.mxu0 0.0
        %3684 = vmatpush1.msra.mxu0 0.0
        %3685 = vmatprep.subr.mxu0 0.0
        %3686 = vmatpush1.msra.mxu0 0.0
        %3687 = vmatprep.subr.mxu0 0.0
        %3688 = vmatpush1.msra.mxu0 0.0
        %3689 = vmatprep.subr.mxu0 0.0
        %3690 = vmatpush1.msra.mxu0 0.0
        %3691 = vmatprep.subr.mxu0 0.0
        %3692 = vmatpush1.msra.mxu0 0.0
        %3693 = vmatprep.subr.mxu0 0.0
        %3694 = vmatpush1.msra.mxu0 0.0
        %3695 = vmatprep.subr.mxu0 0.0
        %3696 = vmatpush1.msra.mxu0 0.0
        %3697 = vmatprep.subr.mxu0 0.0
        %3698 = vmatpush1.msra.mxu0 0.0
        %3699 = vmatprep.subr.mxu0 0.0
        %3700 = vmatpush1.msra.mxu0 0.0
        %3701 = vmatprep.subr.mxu0 0.0
        %3702 = vmatpush1.msra.mxu0 0.0
        %3703 = vmatprep.subr.mxu0 0.0
        %3704 = vmatpush1.msra.mxu0 0.0
        %3705 = vmatprep.subr.mxu0 0.0
        %3706 = vmatpush1.msra.mxu0 0.0
        %3707 = vmatprep.subr.mxu0 0.0
        %3708 = vmatpush1.msra.mxu0 0.0
        %3709 = vmatprep.subr.mxu0 0.0
        %3710 = vmatpush1.msra.mxu0 0.0
        %3711 = vmatprep.subr.mxu0 0.0
        %3712 = vmatpush1.msra.mxu0 0.0
        %3713 = vmatprep.subr.mxu0 0.0
        %3714 = vmatpush1.msra.mxu0 0.0
        %3715 = vmatprep.subr.mxu0 0.0
        %3716 = vmatpush1.msra.mxu0 0.0
        %3717 = vmatprep.mubr.f32.mxu0 0.0
        %3718 = vmatmul.mubr.f32.gmra.mrb[0].mxu0 %v3651
        %v3719 = vpop.f32.mrb[0].mxu0
        %v3720 = vadd.f32 0.0, %v3719
        %v3721 = vpop.f32.mrb[0].mxu0
        %3722 = vdwg.mxu0
        %v3723 = vadd.f32 %v3557, %v3720
        %v3724 = vmul.f32 %v3226, %v842
        %v3726 = vsel %vm850, %v3724, 0
        %3728 = vmatprep.subr.mxu0 0.0
        %3729 = vmatpush1.xpose.msra.mxu0 %v3236
        %3730 = vmatprep.subr.mxu0 0.0
        %3731 = vmatpush1.xpose.msra.mxu0 0.0
        %3732 = vmatprep.subr.mxu0 0.0
        %3733 = vmatpush1.xpose.msra.mxu0 0.0
        %3734 = vmatprep.subr.mxu0 0.0
        %3735 = vmatpush1.xpose.msra.mxu0 0.0
        %3736 = vmatprep.subr.mxu0 0.0
        %3737 = vmatpush1.xpose.msra.mxu0 0.0
        %3738 = vmatprep.subr.mxu0 0.0
        %3739 = vmatpush1.xpose.msra.mxu0 0.0
        %3740 = vmatprep.subr.mxu0 0.0
        %3741 = vmatpush1.xpose.msra.mxu0 0.0
        %3742 = vmatprep.subr.mxu0 0.0
        %3743 = vmatpush1.xpose.msra.mxu0 0.0
        %3744 = vmatprep.subr.mxu0 0.0
        %3745 = vmatpush1.xpose.msra.mxu0 0.0
        %3746 = vmatprep.subr.mxu0 0.0
        %3747 = vmatpush1.xpose.msra.mxu0 0.0
        %3748 = vmatprep.subr.mxu0 0.0
        %3749 = vmatpush1.xpose.msra.mxu0 0.0
        %3750 = vmatprep.subr.mxu0 0.0
        %3751 = vmatpush1.xpose.msra.mxu0 0.0
        %3752 = vmatprep.subr.mxu0 0.0
        %3753 = vmatpush1.xpose.msra.mxu0 0.0
        %3754 = vmatprep.subr.mxu0 0.0
        %3755 = vmatpush1.xpose.msra.mxu0 0.0
        %3756 = vmatprep.subr.mxu0 0.0
        %3757 = vmatpush1.xpose.msra.mxu0 0.0
        %3758 = vmatprep.subr.mxu0 0.0
        %3759 = vmatpush1.xpose.msra.mxu0 0.0
        %3760 = vmatprep.subr.mxu0 0.0
        %3761 = vmatpush1.xpose.msra.mxu0 0.0
        %3762 = vmatprep.subr.mxu0 0.0
        %3763 = vmatpush1.xpose.msra.mxu0 0.0
        %3764 = vmatprep.subr.mxu0 0.0
        %3765 = vmatpush1.xpose.msra.mxu0 0.0
        %3766 = vmatprep.subr.mxu0 0.0
        %3767 = vmatpush1.xpose.msra.mxu0 0.0
        %3768 = vmatprep.subr.mxu0 0.0
        %3769 = vmatpush1.xpose.msra.mxu0 0.0
        %3770 = vmatprep.subr.mxu0 0.0
        %3771 = vmatpush1.xpose.msra.mxu0 0.0
        %3772 = vmatprep.subr.mxu0 0.0
        %3773 = vmatpush1.xpose.msra.mxu0 0.0
        %3774 = vmatprep.subr.mxu0 0.0
        %3775 = vmatpush1.xpose.msra.mxu0 0.0
        %3776 = vmatprep.subr.mxu0 0.0
        %3777 = vmatpush1.xpose.msra.mxu0 0.0
        %3778 = vmatprep.subr.mxu0 0.0
        %3779 = vmatpush1.xpose.msra.mxu0 0.0
        %3780 = vmatprep.subr.mxu0 0.0
        %3781 = vmatpush1.xpose.msra.mxu0 0.0
        %3782 = vmatprep.subr.mxu0 0.0
        %3783 = vmatpush1.xpose.msra.mxu0 0.0
        %3784 = vmatprep.subr.mxu0 0.0
        %3785 = vmatpush1.xpose.msra.mxu0 0.0
        %3786 = vmatprep.subr.mxu0 0.0
        %3787 = vmatpush1.xpose.msra.mxu0 0.0
        %3788 = vmatprep.subr.mxu0 0.0
        %3789 = vmatpush1.xpose.msra.mxu0 0.0
        %3790 = vmatprep.subr.mxu0 0.0
        %3791 = vmatpush1.xpose.msra.mxu0 0.0
        %3792 = vmatprep.mubr.f32.mxu0 0.0
        %3793 = vmatmul.mubr.f32.gmra.mrb[0].mxu0 %v3726
        %v3794 = vpop.f32.mrb[0].mxu0
        %v3795 = vadd.f32 %v843, %v3794
        %v3796 = vpop.f32.mrb[0].mxu0
        %3797 = vdwg.mxu0
        %v3798 = vsel %vm1086, %v3795, -inf
        %3799 = vmax.xlane.f32.xlu0 %v3798
        %v3800 = vpop.xlane.xlu0 %3799
        %v3801 = vsub.f32 %v3795, %v3800
        %v3802 = vmul.f32 %v3801, 1.442695
        %v3803 = vpow.pop %v3802
        %v3804 = vsel %vm1086, %v3803, 0.0
        %3805 = vadd.xlane.f32.xlu0 %v3804
        %v3806 = vpop.xlane.xlu0 %3805
        %v3807 = vrcp.pop %v3806
        %v3808 = vmul.f32 %v3803, %v3807
        %v3809 = vmul.f32 %v3226, %v1602
        %3811 = vrot.lane.b32.xlu0 %v3809, 64
        %v3812 = vpop.permute.xlu0 %3811
        %v3815 = vsel %vm1086, %v3808, 0
        %3817 = vmatprep.subr.mxu0 0.0
        %3818 = vmatpush1.msra.mxu0 %v3812
        %3819 = vmatprep.subr.mxu0 0.0
        %3820 = vmatpush1.msra.mxu0 0.0
        %3821 = vmatprep.subr.mxu0 0.0
        %3822 = vmatpush1.msra.mxu0 0.0
        %3823 = vmatprep.subr.mxu0 0.0
        %3824 = vmatpush1.msra.mxu0 0.0
        %3825 = vmatprep.subr.mxu0 0.0
        %3826 = vmatpush1.msra.mxu0 0.0
        %3827 = vmatprep.subr.mxu0 0.0
        %3828 = vmatpush1.msra.mxu0 0.0
        %3829 = vmatprep.subr.mxu0 0.0
        %3830 = vmatpush1.msra.mxu0 0.0
        %3831 = vmatprep.subr.mxu0 0.0
        %3832 = vmatpush1.msra.mxu0 0.0
        %3833 = vmatprep.subr.mxu0 0.0
        %3834 = vmatpush1.msra.mxu0 0.0
        %3835 = vmatprep.subr.mxu0 0.0
        %3836 = vmatpush1.msra.mxu0 0.0
        %3837 = vmatprep.subr.mxu0 0.0
        %3838 = vmatpush1.msra.mxu0 0.0
        %3839 = vmatprep.subr.mxu0 0.0
        %3840 = vmatpush1.msra.mxu0 0.0
        %3841 = vmatprep.subr.mxu0 0.0
        %3842 = vmatpush1.msra.mxu0 0.0
        %3843 = vmatprep.subr.mxu0 0.0
        %3844 = vmatpush1.msra.mxu0 0.0
        %3845 = vmatprep.subr.mxu0 0.0
        %3846 = vmatpush1.msra.mxu0 0.0
        %3847 = vmatprep.subr.mxu0 0.0
        %3848 = vmatpush1.msra.mxu0 0.0
        %3849 = vmatprep.subr.mxu0 0.0
        %3850 = vmatpush1.msra.mxu0 0.0
        %3851 = vmatprep.subr.mxu0 0.0
        %3852 = vmatpush1.msra.mxu0 0.0
        %3853 = vmatprep.subr.mxu0 0.0
        %3854 = vmatpush1.msra.mxu0 0.0
        %3855 = vmatprep.subr.mxu0 0.0
        %3856 = vmatpush1.msra.mxu0 0.0
        %3857 = vmatprep.subr.mxu0 0.0
        %3858 = vmatpush1.msra.mxu0 0.0
        %3859 = vmatprep.subr.mxu0 0.0
        %3860 = vmatpush1.msra.mxu0 0.0
        %3861 = vmatprep.subr.mxu0 0.0
        %3862 = vmatpush1.msra.mxu0 0.0
        %3863 = vmatprep.subr.mxu0 0.0
        %3864 = vmatpush1.msra.mxu0 0.0
        %3865 = vmatprep.subr.mxu0 0.0
        %3866 = vmatpush1.msra.mxu0 0.0
        %3867 = vmatprep.subr.mxu0 0.0
        %3868 = vmatpush1.msra.mxu0 0.0
        %3869 = vmatprep.subr.mxu0 0.0
        %3870 = vmatpush1.msra.mxu0 0.0
        %3871 = vmatprep.subr.mxu0 0.0
        %3872 = vmatpush1.msra.mxu0 0.0
        %3873 = vmatprep.subr.mxu0 0.0
        %3874 = vmatpush1.msra.mxu0 0.0
        %3875 = vmatprep.subr.mxu0 0.0
        %3876 = vmatpush1.msra.mxu0 0.0
        %3877 = vmatprep.subr.mxu0 0.0
        %3878 = vmatpush1.msra.mxu0 0.0
        %3879 = vmatprep.subr.mxu0 0.0
        %3880 = vmatpush1.msra.mxu0 0.0
        %3881 = vmatprep.mubr.f32.mxu0 0.0
        %3882 = vmatmul.mubr.f32.gmra.mrb[0].mxu0 %v3815
        %v3883 = vpop.f32.mrb[0].mxu0
        %v3884 = vadd.f32 0.0, %v3883
        %v3885 = vpop.f32.mrb[0].mxu0
        %3886 = vdwg.mxu0
        %v3887 = vadd.f32 %v3723, %v3884
        %s3888 = scalar_lea.vmem %s8, 32
        %v3889 = vld [vmem:[%s3888] sm:$0xff]
        %v3890 = vld [vmem:[%s3888 + $0x8] sm:$0xff]
        %v3891 = vld [vmem:[%s3888 + $0x10] sm:$0xff]
        %v3892 = vld [vmem:[%s3888 + $0x18] sm:$0xff]
        %s3893 = scalar_lea.vmem %s9, 1
        %v3894 = vld [vmem:[%s3893] sm:$0x1]
        %v3896 = vlaneseq
        %v3897 = vshrl.u32 %v3896, 7
        %v3898 = vsub.s32 0, %v3897
        %v3899 = vrot.slane %v3894, %v3898
        %v3902 = vsel %vm850, %v3887, 0
        %v3905 = vsel %vm850, %v3889, 0
        %v3908 = vsel %vm850, %v3890, 0
        %v3911 = vsel %vm850, %v3891, 0
        %v3914 = vsel %vm850, %v3892, 0
        %3916 = vmatprep.subr.mxu0 0.0
        %3917 = vmatpush1.xpose.msra.mxu0 %v3905
        %3918 = vmatprep.subr.mxu0 0.0
        %3919 = vmatpush1.xpose.msra.mxu0 %v3908
        %3920 = vmatprep.subr.mxu0 0.0
        %3921 = vmatpush1.xpose.msra.mxu0 %v3911
        %3922 = vmatprep.subr.mxu0 0.0
        %3923 = vmatpush1.xpose.msra.mxu0 %v3914
        %3924 = vmatprep.subr.mxu0 0.0
        %3925 = vmatpush1.xpose.msra.mxu0 0.0
        %3926 = vmatprep.subr.mxu0 0.0
        %3927 = vmatpush1.xpose.msra.mxu0 0.0
        %3928 = vmatprep.subr.mxu0 0.0
        %3929 = vmatpush1.xpose.msra.mxu0 0.0
        %3930 = vmatprep.subr.mxu0 0.0
        %3931 = vmatpush1.xpose.msra.mxu0 0.0
        %3932 = vmatprep.subr.mxu0 0.0
        %3933 = vmatpush1.xpose.msra.mxu0 0.0
        %3934 = vmatprep.subr.mxu0 0.0
        %3935 = vmatpush1.xpose.msra.mxu0 0.0
        %3936 = vmatprep.subr.mxu0 0.0
        %3937 = vmatpush1.xpose.msra.mxu0 0.0
        %3938 = vmatprep.subr.mxu0 0.0
        %3939 = vmatpush1.xpose.msra.mxu0 0.0
        %3940 = vmatprep.subr.mxu0 0.0
        %3941 = vmatpush1.xpose.msra.mxu0 0.0
        %3942 = vmatprep.subr.mxu0 0.0
        %3943 = vmatpush1.xpose.msra.mxu0 0.0
        %3944 = vmatprep.subr.mxu0 0.0
        %3945 = vmatpush1.xpose.msra.mxu0 0.0
        %3946 = vmatprep.subr.mxu0 0.0
        %3947 = vmatpush1.xpose.msra.mxu0 0.0
        %3948 = vmatprep.subr.mxu0 0.0
        %3949 = vmatpush1.xpose.msra.mxu0 0.0
        %3950 = vmatprep.subr.mxu0 0.0
        %3951 = vmatpush1.xpose.msra.mxu0 0.0
        %3952 = vmatprep.subr.mxu0 0.0
        %3953 = vmatpush1.xpose.msra.mxu0 0.0
        %3954 = vmatprep.subr.mxu0 0.0
        %3955 = vmatpush1.xpose.msra.mxu0 0.0
        %3956 = vmatprep.subr.mxu0 0.0
        %3957 = vmatpush1.xpose.msra.mxu0 0.0
        %3958 = vmatprep.subr.mxu0 0.0
        %3959 = vmatpush1.xpose.msra.mxu0 0.0
        %3960 = vmatprep.subr.mxu0 0.0
        %3961 = vmatpush1.xpose.msra.mxu0 0.0
        %3962 = vmatprep.subr.mxu0 0.0
        %3963 = vmatpush1.xpose.msra.mxu0 0.0
        %3964 = vmatprep.subr.mxu0 0.0
        %3965 = vmatpush1.xpose.msra.mxu0 0.0
        %3966 = vmatprep.subr.mxu0 0.0
        %3967 = vmatpush1.xpose.msra.mxu0 0.0
        %3968 = vmatprep.subr.mxu0 0.0
        %3969 = vmatpush1.xpose.msra.mxu0 0.0
        %3970 = vmatprep.subr.mxu0 0.0
        %3971 = vmatpush1.xpose.msra.mxu0 0.0
        %3972 = vmatprep.subr.mxu0 0.0
        %3973 = vmatpush1.xpose.msra.mxu0 0.0
        %3974 = vmatprep.subr.mxu0 0.0
        %3975 = vmatpush1.xpose.msra.mxu0 0.0
        %3976 = vmatprep.subr.mxu0 0.0
        %3977 = vmatpush1.xpose.msra.mxu0 0.0
        %3978 = vmatprep.subr.mxu0 0.0
        %3979 = vmatpush1.xpose.msra.mxu0 0.0
        %3980 = vmatprep.mubr.f32.mxu0 0.0
        %3981 = vmatmul.mubr.f32.gmra.mrb[0].mxu0 %v3902
        %v3982 = vpop.f32.mrb[0].mxu0
        %v3983 = vadd.f32 %v3899, %v3982
        %v3984 = vpop.f32.mrb[0].mxu0
        %3985 = vdwg.mxu0
        %v3986 = vadd.f32 %v3098, %v3983
        %s3987 = scalar_lea.vmem %s10, 1
        %v3988 = vld [vmem:[%s3987] sm:$0x1]
        %s3989 = scalar_lea.vmem %s11, 1
        %v3990 = vld [vmem:[%s3989] sm:$0x1]
        %v3991 = vsel %vm850, %v3986, 0.0
        %3992 = vadd.xlane.f32.xlu0 %v3991
        %v3993 = vpop.xlane.xlu0 %3992
        %v3994 = vmul.f32 %v3993, %v854
        %v3995 = vsub.f32 %v3986, %v3994
        %v3996 = vmul.f32 %v3995, %v3995
        %v3997 = vsel %vm850, %v3996, 0.0
        %3998 = vadd.xlane.f32.xlu0 %v3997
        %v3999 = vpop.xlane.xlu0 %3998
        %v4000 = vmul.f32 %v3999, %v854
        %v4001 = vadd.f32 %v4000, 1e-05
        %v4002 = vrsqrt.pop %v4001
        %v4003 = vmul.f32 %v3995, %v4002
        %v4005 = vlaneseq
        %v4006 = vshrl.u32 %v4005, 7
        %v4007 = vsub.s32 0, %v4006
        %v4008 = vrot.slane %v3988, %v4007
        %v4010 = vmul.f32 %v4003, %v4008
        %v4012 = vlaneseq
        %v4013 = vshrl.u32 %v4012, 7
        %v4014 = vsub.s32 0, %v4013
        %v4015 = vrot.slane %v3990, %v4014
        %v4017 = vadd.f32 %v4010, %v4015
        %s4018 = scalar_lea.vmem %s12, 32
        %v4019 = vld [vmem:[%s4018] sm:$0xff]
        %v4020 = vld [vmem:[%s4018 + $0x8] sm:$0xff]
        %v4021 = vld [vmem:[%s4018 + $0x10] sm:$0xff]
        %v4022 = vld [vmem:[%s4018 + $0x18] sm:$0xff]
        %s4023 = scalar_lea.vmem %s13, 1
        %v4024 = vld [vmem:[%s4023] sm:$0x1]
        %v4026 = vlaneseq
        %v4027 = vshrl.u32 %v4026, 7
        %v4028 = vsub.s32 0, %v4027
        %v4029 = vrot.slane %v4024, %v4028
        %v4032 = vsel %vm850, %v4017, 0
        %v4035 = vsel %vm850, %v4019, 0
        %v4038 = vsel %vm850, %v4020, 0
        %v4041 = vsel %vm850, %v4021, 0
        %v4044 = vsel %vm850, %v4022, 0
        %4046 = vmatprep.subr.mxu0 0.0
        %4047 = vmatpush1.xpose.msra.mxu0 %v4035
        %4048 = vmatprep.subr.mxu0 0.0
        %4049 = vmatpush1.xpose.msra.mxu0 %v4038
        %4050 = vmatprep.subr.mxu0 0.0
        %4051 = vmatpush1.xpose.msra.mxu0 %v4041
        %4052 = vmatprep.subr.mxu0 0.0
        %4053 = vmatpush1.xpose.msra.mxu0 %v4044
        %4054 = vmatprep.subr.mxu0 0.0
        %4055 = vmatpush1.xpose.msra.mxu0 0.0
        %4056 = vmatprep.subr.mxu0 0.0
        %4057 = vmatpush1.xpose.msra.mxu0 0.0
        %4058 = vmatprep.subr.mxu0 0.0
        %4059 = vmatpush1.xpose.msra.mxu0 0.0
        %4060 = vmatprep.subr.mxu0 0.0
        %4061 = vmatpush1.xpose.msra.mxu0 0.0
        %4062 = vmatprep.subr.mxu0 0.0
        %4063 = vmatpush1.xpose.msra.mxu0 0.0
        %4064 = vmatprep.subr.mxu0 0.0
        %4065 = vmatpush1.xpose.msra.mxu0 0.0
        %4066 = vmatprep.subr.mxu0 0.0
        %4067 = vmatpush1.xpose.msra.mxu0 0.0
        %4068 = vmatprep.subr.mxu0 0.0
        %4069 = vmatpush1.xpose.msra.mxu0 0.0
        %4070 = vmatprep.subr.mxu0 0.0
        %4071 = vmatpush1.xpose.msra.mxu0 0.0
        %4072 = vmatprep.subr.mxu0 0.0
        %4073 = vmatpush1.xpose.msra.mxu0 0.0
        %4074 = vmatprep.subr.mxu0 0.0
        %4075 = vmatpush1.xpose.msra.mxu0 0.0
        %4076 = vmatprep.subr.mxu0 0.0
        %4077 = vmatpush1.xpose.msra.mxu0 0.0
        %4078 = vmatprep.subr.mxu0 0.0
        %4079 = vmatpush1.xpose.msra.mxu0 0.0
        %4080 = vmatprep.subr.mxu0 0.0
        %4081 = vmatpush1.xpose.msra.mxu0 0.0
        %4082 = vmatprep.subr.mxu0 0.0
        %4083 = vmatpush1.xpose.msra.mxu0 0.0
        %4084 = vmatprep.subr.mxu0 0.0
        %4085 = vmatpush1.xpose.msra.mxu0 0.0
        %4086 = vmatprep.subr.mxu0 0.0
        %4087 = vmatpush1.xpose.msra.mxu0 0.0
        %4088 = vmatprep.subr.mxu0 0.0
        %4089 = vmatpush1.xpose.msra.mxu0 0.0
        %4090 = vmatprep.subr.mxu0 0.0
        %4091 = vmatpush1.xpose.msra.mxu0 0.0
        %4092 = vmatprep.subr.mxu0 0.0
        %4093 = vmatpush1.xpose.msra.mxu0 0.0
        %4094 = vmatprep.subr.mxu0 0.0
        %4095 = vmatpush1.xpose.msra.mxu0 0.0
        %4096 = vmatprep.subr.mxu0 0.0
        %4097 = vmatpush1.xpose.msra.mxu0 0.0
        %4098 = vmatprep.subr.mxu0 0.0
        %4099 = vmatpush1.xpose.msra.mxu0 0.0
        %4100 = vmatprep.subr.mxu0 0.0
        %4101 = vmatpush1.xpose.msra.mxu0 0.0
        %4102 = vmatprep.subr.mxu0 0.0
        %4103 = vmatpush1.xpose.msra.mxu0 0.0
        %4104 = vmatprep.subr.mxu0 0.0
        %4105 = vmatpush1.xpose.msra.mxu0 0.0
        %4106 = vmatprep.subr.mxu0 0.0
        %4107 = vmatpush1.xpose.msra.mxu0 0.0
        %4108 = vmatprep.subr.mxu0 0.0
        %4109 = vmatpush1.xpose.msra.mxu0 0.0
        %4110 = vmatprep.mubr.f32.mxu0 0.0
        %4111 = vmatmul.mubr.f32.gmra.mrb[0].mxu0 %v4032
        %v4112 = vpop.f32.mrb[0].mxu0
        %v4113 = vadd.f32 %v4029, %v4112
        %v4114 = vpop.f32.mrb[0].mxu0
        %4115 = vdwg.mxu0
        %s4116 = scalar_lea.vmem %s14, 64
        %v4117 = vld [vmem:[%s4116] sm:$0xff]
        %v4118 = vld [vmem:[%s4116 + $0x8] sm:$0xff]
        %v4119 = vld [vmem:[%s4116 + $0x10] sm:$0xff]
        %v4120 = vld [vmem:[%s4116 + $0x18] sm:$0xff]
        %v4121 = vld [vmem:[%s4116 + $0x20] sm:$0xff]
        %v4122 = vld [vmem:[%s4116 + $0x28] sm:$0xff]
        %v4123 = vld [vmem:[%s4116 + $0x30] sm:$0xff]
        %v4124 = vld [vmem:[%s4116 + $0x38] sm:$0xff]
        %s4125 = scalar_lea.vmem %s15, 1
        %v4126 = vld [vmem:[%s4125] sm:$0x1]
        %v4128 = vlaneseq
        %v4129 = vshrl.u32 %v4128, 7
        %v4130 = vsub.s32 0, %v4129
        %v4131 = vrot.slane %v4126, %v4130
        %v4134 = vsel %vm850, %v4117, 0
        %v4137 = vsel %vm850, %v4118, 0
        %v4140 = vsel %vm850, %v4119, 0
        %v4143 = vsel %vm850, %v4120, 0
        %v4146 = vsel %vm850, %v4121, 0
        %v4149 = vsel %vm850, %v4122, 0
        %v4152 = vsel %vm850, %v4123, 0
        %v4155 = vsel %vm850, %v4124, 0
        %4157 = vmatprep.subr.mxu0 0.0
        %4158 = vmatpush1.xpose.msra.mxu0 %v4134
        %4159 = vmatprep.subr.mxu0 0.0
        %4160 = vmatpush1.xpose.msra.mxu0 %v4137
        %4161 = vmatprep.subr.mxu0 0.0
        %4162 = vmatpush1.xpose.msra.mxu0 %v4140
        %4163 = vmatprep.subr.mxu0 0.0
        %4164 = vmatpush1.xpose.msra.mxu0 %v4143
        %4165 = vmatprep.subr.mxu0 0.0
        %4166 = vmatpush1.xpose.msra.mxu0 %v4146
        %4167 = vmatprep.subr.mxu0 0.0
        %4168 = vmatpush1.xpose.msra.mxu0 %v4149
        %4169 = vmatprep.subr.mxu0 0.0
        %4170 = vmatpush1.xpose.msra.mxu0 %v4152
        %4171 = vmatprep.subr.mxu0 0.0
        %4172 = vmatpush1.xpose.msra.mxu0 %v4155
        %4173 = vmatprep.subr.mxu0 0.0
        %4174 = vmatpush1.xpose.msra.mxu0 0.0
        %4175 = vmatprep.subr.mxu0 0.0
        %4176 = vmatpush1.xpose.msra.mxu0 0.0
        %4177 = vmatprep.subr.mxu0 0.0
        %4178 = vmatpush1.xpose.msra.mxu0 0.0
        %4179 = vmatprep.subr.mxu0 0.0
        %4180 = vmatpush1.xpose.msra.mxu0 0.0
        %4181 = vmatprep.subr.mxu0 0.0
        %4182 = vmatpush1.xpose.msra.mxu0 0.0
        %4183 = vmatprep.subr.mxu0 0.0
        %4184 = vmatpush1.xpose.msra.mxu0 0.0
        %4185 = vmatprep.subr.mxu0 0.0
        %4186 = vmatpush1.xpose.msra.mxu0 0.0
        %4187 = vmatprep.subr.mxu0 0.0
        %4188 = vmatpush1.xpose.msra.mxu0 0.0
        %4189 = vmatprep.subr.mxu0 0.0
        %4190 = vmatpush1.xpose.msra.mxu0 0.0
        %4191 = vmatprep.subr.mxu0 0.0
        %4192 = vmatpush1.xpose.msra.mxu0 0.0
        %4193 = vmatprep.subr.mxu0 0.0
        %4194 = vmatpush1.xpose.msra.mxu0 0.0
        %4195 = vmatprep.subr.mxu0 0.0
        %4196 = vmatpush1.xpose.msra.mxu0 0.0
        %4197 = vmatprep.subr.mxu0 0.0
        %4198 = vmatpush1.xpose.msra.mxu0 0.0
        %4199 = vmatprep.subr.mxu0 0.0
        %4200 = vmatpush1.xpose.msra.mxu0 0.0
        %4201 = vmatprep.subr.mxu0 0.0
        %4202 = vmatpush1.xpose.msra.mxu0 0.0
        %4203 = vmatprep.subr.mxu0 0.0
        %4204 = vmatpush1.xpose.msra.mxu0 0.0
        %4205 = vmatprep.subr.mxu0 0.0
        %4206 = vmatpush1.xpose.msra.mxu0 0.0
        %4207 = vmatprep.subr.mxu0 0.0
        %4208 = vmatpush1.xpose.msra.mxu0 0.0
        %4209 = vmatprep.subr.mxu0 0.0
        %4210 = vmatpush1.xpose.msra.mxu0 0.0
        %4211 = vmatprep.subr.mxu0 0.0
        %4212 = vmatpush1.xpose.msra.mxu0 0.0
        %4213 = vmatprep.subr.mxu0 0.0
        %4214 = vmatpush1.xpose.msra.mxu0 0.0
        %4215 = vmatprep.subr.mxu0 0.0
        %4216 = vmatpush1.xpose.msra.mxu0 0.0
        %4217 = vmatprep.subr.mxu0 0.0
        %4218 = vmatpush1.xpose.msra.mxu0 0.0
        %4219 = vmatprep.subr.mxu0 0.0
        %4220 = vmatpush1.xpose.msra.mxu0 0.0
        %4221 = vmatprep.mubr.f32.mxu0 0.0
        %4222 = vmatmul.mubr.f32.gmra.mrb[0].mxu0 %v1921
        %v4223 = vpop.f32.mrb[0].mxu0
        %v4224 = vadd.f32 %v4131, %v4223
        %v4225 = vpop.f32.mrb[0].mxu0
        %4226 = vmatprep.mubr.f32.mxu0 0.0
        %4227 = vmatmul.mubr.f32.gmra.mrb[0].mxu0 %v1924
        %v4228 = vpop.f32.mrb[0].mxu0
        %v4229 = vadd.f32 %v4131, %v4228
        %v4230 = vpop.f32.mrb[0].mxu0
        %4231 = vdwg.mxu0
        %v4232 = vmul.f32 %v4113, %v827
        %v4234 = vsel %vm850, %v4232, 0
        %v4237 = vsel %vm850, %v4224, 0
        %v4240 = vsel %vm850, %v4229, 0
        %4242 = vmatprep.subr.mxu0 0.0
        %4243 = vmatpush1.xpose.msra.mxu0 %v4237
        %4244 = vmatprep.subr.mxu0 0.0
        %4245 = vmatpush1.xpose.msra.mxu0 %v4240
        %4246 = vmatprep.subr.mxu0 0.0
        %4247 = vmatpush1.xpose.msra.mxu0 0.0
        %4248 = vmatprep.subr.mxu0 0.0
        %4249 = vmatpush1.xpose.msra.mxu0 0.0
        %4250 = vmatprep.subr.mxu0 0.0
        %4251 = vmatpush1.xpose.msra.mxu0 0.0
        %4252 = vmatprep.subr.mxu0 0.0
        %4253 = vmatpush1.xpose.msra.mxu0 0.0
        %4254 = vmatprep.subr.mxu0 0.0
        %4255 = vmatpush1.xpose.msra.mxu0 0.0
        %4256 = vmatprep.subr.mxu0 0.0
        %4257 = vmatpush1.xpose.msra.mxu0 0.0
        %4258 = vmatprep.subr.mxu0 0.0
        %4259 = vmatpush1.xpose.msra.mxu0 0.0
        %4260 = vmatprep.subr.mxu0 0.0
        %4261 = vmatpush1.xpose.msra.mxu0 0.0
        %4262 = vmatprep.subr.mxu0 0.0
        %4263 = vmatpush1.xpose.msra.mxu0 0.0
        %4264 = vmatprep.subr.mxu0 0.0
        %4265 = vmatpush1.xpose.msra.mxu0 0.0
        %4266 = vmatprep.subr.mxu0 0.0
        %4267 = vmatpush1.xpose.msra.mxu0 0.0
        %4268 = vmatprep.subr.mxu0 0.0
        %4269 = vmatpush1.xpose.msra.mxu0 0.0
        %4270 = vmatprep.subr.mxu0 0.0
        %4271 = vmatpush1.xpose.msra.mxu0 0.0
        %4272 = vmatprep.subr.mxu0 0.0
        %4273 = vmatpush1.xpose.msra.mxu0 0.0
        %4274 = vmatprep.subr.mxu0 0.0
        %4275 = vmatpush1.xpose.msra.mxu0 0.0
        %4276 = vmatprep.subr.mxu0 0.0
        %4277 = vmatpush1.xpose.msra.mxu0 0.0
        %4278 = vmatprep.subr.mxu0 0.0
        %4279 = vmatpush1.xpose.msra.mxu0 0.0
        %4280 = vmatprep.subr.mxu0 0.0
        %4281 = vmatpush1.xpose.msra.mxu0 0.0
        %4282 = vmatprep.subr.mxu0 0.0
        %4283 = vmatpush1.xpose.msra.mxu0 0.0
        %4284 = vmatprep.subr.mxu0 0.0
        %4285 = vmatpush1.xpose.msra.mxu0 0.0
        %4286 = vmatprep.subr.mxu0 0.0
        %4287 = vmatpush1.xpose.msra.mxu0 0.0
        %4288 = vmatprep.subr.mxu0 0.0
        %4289 = vmatpush1.xpose.msra.mxu0 0.0
        %4290 = vmatprep.subr.mxu0 0.0
        %4291 = vmatpush1.xpose.msra.mxu0 0.0
        %4292 = vmatprep.subr.mxu0 0.0
        %4293 = vmatpush1.xpose.msra.mxu0 0.0
        %4294 = vmatprep.subr.mxu0 0.0
        %4295 = vmatpush1.xpose.msra.mxu0 0.0
        %4296 = vmatprep.subr.mxu0 0.0
        %4297 = vmatpush1.xpose.msra.mxu0 0.0
        %4298 = vmatprep.subr.mxu0 0.0
        %4299 = vmatpush1.xpose.msra.mxu0 0.0
        %4300 = vmatprep.subr.mxu0 0.0
        %4301 = vmatpush1.xpose.msra.mxu0 0.0
        %4302 = vmatprep.subr.mxu0 0.0
        %4303 = vmatpush1.xpose.msra.mxu0 0.0
        %4304 = vmatprep.subr.mxu0 0.0
        %4305 = vmatpush1.xpose.msra.mxu0 0.0
        %4306 = vmatprep.mubr.f32.mxu0 0.0
        %4307 = vmatmul.mubr.f32.gmra.mrb[0].mxu0 %v4234
        %v4308 = vpop.f32.mrb[0].mxu0
        %v4309 = vadd.f32 %v2030, %v4308
        %v4310 = vpop.f32.mrb[0].mxu0
        %4311 = vdwg.mxu0
        %v4312 = vsel %vm2111, %v4309, -inf
        %4313 = vmax.xlane.f32.xlu0 %v4312
        %v4314 = vpop.xlane.xlu0 %4313
        %v4315 = vsub.f32 %v4309, %v4314
        %v4316 = vmul.f32 %v4315, 1.442695
        %v4317 = vpow.pop %v4316
        %v4318 = vsel %vm2111, %v4317, 0.0
        %4319 = vadd.xlane.f32.xlu0 %v4318
        %v4320 = vpop.xlane.xlu0 %4319
        %v4321 = vrcp.pop %v4320
        %v4322 = vmul.f32 %v4317, %v4321
        %v4323 = vmul.f32 %v4224, %v2124
        %v4324 = vmul.f32 %v4229, %v2124
        %v4325 = vmul.f32 %v4113, %v832
        %v4327 = vsel %vm850, %v4325, 0
        %4329 = vmatprep.subr.mxu0 0.0
        %4330 = vmatpush1.xpose.msra.mxu0 %v4237
        %4331 = vmatprep.subr.mxu0 0.0
        %4332 = vmatpush1.xpose.msra.mxu0 %v4240
        %4333 = vmatprep.subr.mxu0 0.0
        %4334 = vmatpush1.xpose.msra.mxu0 0.0
        %4335 = vmatprep.subr.mxu0 0.0
        %4336 = vmatpush1.xpose.msra.mxu0 0.0
        %4337 = vmatprep.subr.mxu0 0.0
        %4338 = vmatpush1.xpose.msra.mxu0 0.0
        %4339 = vmatprep.subr.mxu0 0.0
        %4340 = vmatpush1.xpose.msra.mxu0 0.0
        %4341 = vmatprep.subr.mxu0 0.0
        %4342 = vmatpush1.xpose.msra.mxu0 0.0
        %4343 = vmatprep.subr.mxu0 0.0
        %4344 = vmatpush1.xpose.msra.mxu0 0.0
        %4345 = vmatprep.subr.mxu0 0.0
        %4346 = vmatpush1.xpose.msra.mxu0 0.0
        %4347 = vmatprep.subr.mxu0 0.0
        %4348 = vmatpush1.xpose.msra.mxu0 0.0
        %4349 = vmatprep.subr.mxu0 0.0
        %4350 = vmatpush1.xpose.msra.mxu0 0.0
        %4351 = vmatprep.subr.mxu0 0.0
        %4352 = vmatpush1.xpose.msra.mxu0 0.0
        %4353 = vmatprep.subr.mxu0 0.0
        %4354 = vmatpush1.xpose.msra.mxu0 0.0
        %4355 = vmatprep.subr.mxu0 0.0
        %4356 = vmatpush1.xpose.msra.mxu0 0.0
        %4357 = vmatprep.subr.mxu0 0.0
        %4358 = vmatpush1.xpose.msra.mxu0 0.0
        %4359 = vmatprep.subr.mxu0 0.0
        %4360 = vmatpush1.xpose.msra.mxu0 0.0
        %4361 = vmatprep.subr.mxu0 0.0
        %4362 = vmatpush1.xpose.msra.mxu0 0.0
        %4363 = vmatprep.subr.mxu0 0.0
        %4364 = vmatpush1.xpose.msra.mxu0 0.0
        %4365 = vmatprep.subr.mxu0 0.0
        %4366 = vmatpush1.xpose.msra.mxu0 0.0
        %4367 = vmatprep.subr.mxu0 0.0
        %4368 = vmatpush1.xpose.msra.mxu0 0.0
        %4369 = vmatprep.subr.mxu0 0.0
        %4370 = vmatpush1.xpose.msra.mxu0 0.0
        %4371 = vmatprep.subr.mxu0 0.0
        %4372 = vmatpush1.xpose.msra.mxu0 0.0
        %4373 = vmatprep.subr.mxu0 0.0
        %4374 = vmatpush1.xpose.msra.mxu0 0.0
        %4375 = vmatprep.subr.mxu0 0.0
        %4376 = vmatpush1.xpose.msra.mxu0 0.0
        %4377 = vmatprep.subr.mxu0 0.0
        %4378 = vmatpush1.xpose.msra.mxu0 0.0
        %4379 = vmatprep.subr.mxu0 0.0
        %4380 = vmatpush1.xpose.msra.mxu0 0.0
        %4381 = vmatprep.subr.mxu0 0.0
        %4382 = vmatpush1.xpose.msra.mxu0 0.0
        %4383 = vmatprep.subr.mxu0 0.0
        %4384 = vmatpush1.xpose.msra.mxu0 0.0
        %4385 = vmatprep.subr.mxu0 0.0
        %4386 = vmatpush1.xpose.msra.mxu0 0.0
        %4387 = vmatprep.subr.mxu0 0.0
        %4388 = vmatpush1.xpose.msra.mxu0 0.0
        %4389 = vmatprep.subr.mxu0 0.0
        %4390 = vmatpush1.xpose.msra.mxu0 0.0
        %4391 = vmatprep.subr.mxu0 0.0
        %4392 = vmatpush1.xpose.msra.mxu0 0.0
        %4393 = vmatprep.mubr.f32.mxu0 0.0
        %4394 = vmatmul.mubr.f32.gmra.mrb[0].mxu0 %v4327
        %v4395 = vpop.f32.mrb[0].mxu0
        %v4396 = vadd.f32 %v2030, %v4395
        %v4397 = vpop.f32.mrb[0].mxu0
        %4398 = vdwg.mxu0
        %v4399 = vsel %vm2111, %v4396, -inf
        %4400 = vmax.xlane.f32.xlu0 %v4399
        %v4401 = vpop.xlane.xlu0 %4400
        %v4402 = vsub.f32 %v4396, %v4401
        %v4403 = vmul.f32 %v4402, 1.442695
        %v4404 = vpow.pop %v4403
        %v4405 = vsel %vm2111, %v4404, 0.0
        %4406 = vadd.xlane.f32.xlu0 %v4405
        %v4407 = vpop.xlane.xlu0 %4406
        %v4408 = vrcp.pop %v4407
        %v4409 = vmul.f32 %v4404, %v4408
        %v4410 = vmul.f32 %v4224, %v2214
        %v4411 = vmul.f32 %v4229, %v2214
        %4414 = vrot.lane.b32.xlu0 %v4410, 96
        %v4415 = vpop.permute.xlu0 %4414
        %4416 = vrot.lane.b32.xlu0 %v4411, 96
        %v4417 = vpop.permute.xlu0 %4416
        %v4420 = vsel %vm2111, %v4409, 0
        %v4422 = vsel %vm2228, %v4417, 0
        %4424 = vmatprep.subr.mxu0 0.0
        %4425 = vmatpush1.msra.mxu0 %v4415
        %4426 = vmatprep.subr.mxu0 0.0
        %4427 = vmatpush1.msra.mxu0 %v4422
        %4428 = vmatprep.subr.mxu0 0.0
        %4429 = vmatpush1.msra.mxu0 0.0
        %4430 = vmatprep.subr.mxu0 0.0
        %4431 = vmatpush1.msra.mxu0 0.0
        %4432 = vmatprep.subr.mxu0 0.0
        %4433 = vmatpush1.msra.mxu0 0.0
        %4434 = vmatprep.subr.mxu0 0.0
        %4435 = vmatpush1.msra.mxu0 0.0
        %4436 = vmatprep.subr.mxu0 0.0
        %4437 = vmatpush1.msra.mxu0 0.0
        %4438 = vmatprep.subr.mxu0 0.0
        %4439 = vmatpush1.msra.mxu0 0.0
        %4440 = vmatprep.subr.mxu0 0.0
        %4441 = vmatpush1.msra.mxu0 0.0
        %4442 = vmatprep.subr.mxu0 0.0
        %4443 = vmatpush1.msra.mxu0 0.0
        %4444 = vmatprep.subr.mxu0 0.0
        %4445 = vmatpush1.msra.mxu0 0.0
        %4446 = vmatprep.subr.mxu0 0.0
        %4447 = vmatpush1.msra.mxu0 0.0
        %4448 = vmatprep.subr.mxu0 0.0
        %4449 = vmatpush1.msra.mxu0 0.0
        %4450 = vmatprep.subr.mxu0 0.0
        %4451 = vmatpush1.msra.mxu0 0.0
        %4452 = vmatprep.subr.mxu0 0.0
        %4453 = vmatpush1.msra.mxu0 0.0
        %4454 = vmatprep.subr.mxu0 0.0
        %4455 = vmatpush1.msra.mxu0 0.0
        %4456 = vmatprep.subr.mxu0 0.0
        %4457 = vmatpush1.msra.mxu0 0.0
        %4458 = vmatprep.subr.mxu0 0.0
        %4459 = vmatpush1.msra.mxu0 0.0
        %4460 = vmatprep.subr.mxu0 0.0
        %4461 = vmatpush1.msra.mxu0 0.0
        %4462 = vmatprep.subr.mxu0 0.0
        %4463 = vmatpush1.msra.mxu0 0.0
        %4464 = vmatprep.subr.mxu0 0.0
        %4465 = vmatpush1.msra.mxu0 0.0
        %4466 = vmatprep.subr.mxu0 0.0
        %4467 = vmatpush1.msra.mxu0 0.0
        %4468 = vmatprep.subr.mxu0 0.0
        %4469 = vmatpush1.msra.mxu0 0.0
        %4470 = vmatprep.subr.mxu0 0.0
        %4471 = vmatpush1.msra.mxu0 0.0
        %4472 = vmatprep.subr.mxu0 0.0
        %4473 = vmatpush1.msra.mxu0 0.0
        %4474 = vmatprep.subr.mxu0 0.0
        %4475 = vmatpush1.msra.mxu0 0.0
        %4476 = vmatprep.subr.mxu0 0.0
        %4477 = vmatpush1.msra.mxu0 0.0
        %4478 = vmatprep.subr.mxu0 0.0
        %4479 = vmatpush1.msra.mxu0 0.0
        %4480 = vmatprep.subr.mxu0 0.0
        %4481 = vmatpush1.msra.mxu0 0.0
        %4482 = vmatprep.subr.mxu0 0.0
        %4483 = vmatpush1.msra.mxu0 0.0
        %4484 = vmatprep.subr.mxu0 0.0
        %4485 = vmatpush1.msra.mxu0 0.0
        %4486 = vmatprep.subr.mxu0 0.0
        %4487 = vmatpush1.msra.mxu0 0.0
        %4488 = vmatprep.mubr.f32.mxu0 0.0
        %4489 = vmatmul.mubr.f32.gmra.mrb[0].mxu0 %v4420
        %v4490 = vpop.f32.mrb[0].mxu0
        %v4491 = vadd.f32 0.0, %v4490
        %v4492 = vpop.f32.mrb[0].mxu0
        %4493 = vdwg.mxu0
        %4496 = vrot.lane.b32.xlu0 %v4323, 96
        %v4497 = vpop.permute.xlu0 %4496
        %4498 = vrot.lane.b32.xlu0 %v4324, 96
        %v4499 = vpop.permute.xlu0 %4498
        %v4502 = vsel %vm2111, %v4322, 0
        %v4504 = vsel %vm2228, %v4499, 0
        %4506 = vmatprep.subr.mxu0 0.0
        %4507 = vmatpush1.msra.mxu0 %v4497
        %4508 = vmatprep.subr.mxu0 0.0
        %4509 = vmatpush1.msra.mxu0 %v4504
        %4510 = vmatprep.subr.mxu0 0.0
        %4511 = vmatpush1.msra.mxu0 0.0
        %4512 = vmatprep.subr.mxu0 0.0
        %4513 = vmatpush1.msra.mxu0 0.0
        %4514 = vmatprep.subr.mxu0 0.0
        %4515 = vmatpush1.msra.mxu0 0.0
        %4516 = vmatprep.subr.mxu0 0.0
        %4517 = vmatpush1.msra.mxu0 0.0
        %4518 = vmatprep.subr.mxu0 0.0
        %4519 = vmatpush1.msra.mxu0 0.0
        %4520 = vmatprep.subr.mxu0 0.0
        %4521 = vmatpush1.msra.mxu0 0.0
        %4522 = vmatprep.subr.mxu0 0.0
        %4523 = vmatpush1.msra.mxu0 0.0
        %4524 = vmatprep.subr.mxu0 0.0
        %4525 = vmatpush1.msra.mxu0 0.0
        %4526 = vmatprep.subr.mxu0 0.0
        %4527 = vmatpush1.msra.mxu0 0.0
        %4528 = vmatprep.subr.mxu0 0.0
        %4529 = vmatpush1.msra.mxu0 0.0
        %4530 = vmatprep.subr.mxu0 0.0
        %4531 = vmatpush1.msra.mxu0 0.0
        %4532 = vmatprep.subr.mxu0 0.0
        %4533 = vmatpush1.msra.mxu0 0.0
        %4534 = vmatprep.subr.mxu0 0.0
        %4535 = vmatpush1.msra.mxu0 0.0
        %4536 = vmatprep.subr.mxu0 0.0
        %4537 = vmatpush1.msra.mxu0 0.0
        %4538 = vmatprep.subr.mxu0 0.0
        %4539 = vmatpush1.msra.mxu0 0.0
        %4540 = vmatprep.subr.mxu0 0.0
        %4541 = vmatpush1.msra.mxu0 0.0
        %4542 = vmatprep.subr.mxu0 0.0
        %4543 = vmatpush1.msra.mxu0 0.0
        %4544 = vmatprep.subr.mxu0 0.0
        %4545 = vmatpush1.msra.mxu0 0.0
        %4546 = vmatprep.subr.mxu0 0.0
        %4547 = vmatpush1.msra.mxu0 0.0
        %4548 = vmatprep.subr.mxu0 0.0
        %4549 = vmatpush1.msra.mxu0 0.0
        %4550 = vmatprep.subr.mxu0 0.0
        %4551 = vmatpush1.msra.mxu0 0.0
        %4552 = vmatprep.subr.mxu0 0.0
        %4553 = vmatpush1.msra.mxu0 0.0
        %4554 = vmatprep.subr.mxu0 0.0
        %4555 = vmatpush1.msra.mxu0 0.0
        %4556 = vmatprep.subr.mxu0 0.0
        %4557 = vmatpush1.msra.mxu0 0.0
        %4558 = vmatprep.subr.mxu0 0.0
        %4559 = vmatpush1.msra.mxu0 0.0
        %4560 = vmatprep.subr.mxu0 0.0
        %4561 = vmatpush1.msra.mxu0 0.0
        %4562 = vmatprep.subr.mxu0 0.0
        %4563 = vmatpush1.msra.mxu0 0.0
        %4564 = vmatprep.subr.mxu0 0.0
        %4565 = vmatpush1.msra.mxu0 0.0
        %4566 = vmatprep.subr.mxu0 0.0
        %4567 = vmatpush1.msra.mxu0 0.0
        %4568 = vmatprep.subr.mxu0 0.0
        %4569 = vmatpush1.msra.mxu0 0.0
        %4570 = vmatprep.mubr.f32.mxu0 0.0
        %4571 = vmatmul.mubr.f32.gmra.mrb[0].mxu0 %v4502
        %v4572 = vpop.f32.mrb[0].mxu0
        %v4573 = vadd.f32 %v4491, %v4572
        %v4574 = vpop.f32.mrb[0].mxu0
        %4575 = vdwg.mxu0
        %v4576 = vmul.f32 %v4113, %v837
        %v4578 = vsel %vm850, %v4576, 0
        %4580 = vmatprep.subr.mxu0 0.0
        %4581 = vmatpush1.xpose.msra.mxu0 %v4237
        %4582 = vmatprep.subr.mxu0 0.0
        %4583 = vmatpush1.xpose.msra.mxu0 %v4240
        %4584 = vmatprep.subr.mxu0 0.0
        %4585 = vmatpush1.xpose.msra.mxu0 0.0
        %4586 = vmatprep.subr.mxu0 0.0
        %4587 = vmatpush1.xpose.msra.mxu0 0.0
        %4588 = vmatprep.subr.mxu0 0.0
        %4589 = vmatpush1.xpose.msra.mxu0 0.0
        %4590 = vmatprep.subr.mxu0 0.0
        %4591 = vmatpush1.xpose.msra.mxu0 0.0
        %4592 = vmatprep.subr.mxu0 0.0
        %4593 = vmatpush1.xpose.msra.mxu0 0.0
        %4594 = vmatprep.subr.mxu0 0.0
        %4595 = vmatpush1.xpose.msra.mxu0 0.0
        %4596 = vmatprep.subr.mxu0 0.0
        %4597 = vmatpush1.xpose.msra.mxu0 0.0
        %4598 = vmatprep.subr.mxu0 0.0
        %4599 = vmatpush1.xpose.msra.mxu0 0.0
        %4600 = vmatprep.subr.mxu0 0.0
        %4601 = vmatpush1.xpose.msra.mxu0 0.0
        %4602 = vmatprep.subr.mxu0 0.0
        %4603 = vmatpush1.xpose.msra.mxu0 0.0
        %4604 = vmatprep.subr.mxu0 0.0
        %4605 = vmatpush1.xpose.msra.mxu0 0.0
        %4606 = vmatprep.subr.mxu0 0.0
        %4607 = vmatpush1.xpose.msra.mxu0 0.0
        %4608 = vmatprep.subr.mxu0 0.0
        %4609 = vmatpush1.xpose.msra.mxu0 0.0
        %4610 = vmatprep.subr.mxu0 0.0
        %4611 = vmatpush1.xpose.msra.mxu0 0.0
        %4612 = vmatprep.subr.mxu0 0.0
        %4613 = vmatpush1.xpose.msra.mxu0 0.0
        %4614 = vmatprep.subr.mxu0 0.0
        %4615 = vmatpush1.xpose.msra.mxu0 0.0
        %4616 = vmatprep.subr.mxu0 0.0
        %4617 = vmatpush1.xpose.msra.mxu0 0.0
        %4618 = vmatprep.subr.mxu0 0.0
        %4619 = vmatpush1.xpose.msra.mxu0 0.0
        %4620 = vmatprep.subr.mxu0 0.0
        %4621 = vmatpush1.xpose.msra.mxu0 0.0
        %4622 = vmatprep.subr.mxu0 0.0
        %4623 = vmatpush1.xpose.msra.mxu0 0.0
        %4624 = vmatprep.subr.mxu0 0.0
        %4625 = vmatpush1.xpose.msra.mxu0 0.0
        %4626 = vmatprep.subr.mxu0 0.0
        %4627 = vmatpush1.xpose.msra.mxu0 0.0
        %4628 = vmatprep.subr.mxu0 0.0
        %4629 = vmatpush1.xpose.msra.mxu0 0.0
        %4630 = vmatprep.subr.mxu0 0.0
        %4631 = vmatpush1.xpose.msra.mxu0 0.0
        %4632 = vmatprep.subr.mxu0 0.0
        %4633 = vmatpush1.xpose.msra.mxu0 0.0
        %4634 = vmatprep.subr.mxu0 0.0
        %4635 = vmatpush1.xpose.msra.mxu0 0.0
        %4636 = vmatprep.subr.mxu0 0.0
        %4637 = vmatpush1.xpose.msra.mxu0 0.0
        %4638 = vmatprep.subr.mxu0 0.0
        %4639 = vmatpush1.xpose.msra.mxu0 0.0
        %4640 = vmatprep.subr.mxu0 0.0
        %4641 = vmatpush1.xpose.msra.mxu0 0.0
        %4642 = vmatprep.subr.mxu0 0.0
        %4643 = vmatpush1.xpose.msra.mxu0 0.0
        %4644 = vmatprep.mubr.f32.mxu0 0.0
        %4645 = vmatmul.mubr.f32.gmra.mrb[0].mxu0 %v4578
        %v4646 = vpop.f32.mrb[0].mxu0
        %v4647 = vadd.f32 %v2030, %v4646
        %v4648 = vpop.f32.mrb[0].mxu0
        %4649 = vdwg.mxu0
        %v4650 = vsel %vm2111, %v4647, -inf
        %4651 = vmax.xlane.f32.xlu0 %v4650
        %v4652 = vpop.xlane.xlu0 %4651
        %v4653 = vsub.f32 %v4647, %v4652
        %v4654 = vmul.f32 %v4653, 1.442695
        %v4655 = vpow.pop %v4654
        %v4656 = vsel %vm2111, %v4655, 0.0
        %4657 = vadd.xlane.f32.xlu0 %v4656
        %v4658 = vpop.xlane.xlu0 %4657
        %v4659 = vrcp.pop %v4658
        %v4660 = vmul.f32 %v4655, %v4659
        %v4661 = vmul.f32 %v4224, %v2469
        %v4662 = vmul.f32 %v4229, %v2469
        %4665 = vrot.lane.b32.xlu0 %v4661, 96
        %v4666 = vpop.permute.xlu0 %4665
        %4667 = vrot.lane.b32.xlu0 %v4662, 96
        %v4668 = vpop.permute.xlu0 %4667
        %v4671 = vsel %vm2111, %v4660, 0
        %v4673 = vsel %vm2228, %v4668, 0
        %4675 = vmatprep.subr.mxu0 0.0
        %4676 = vmatpush1.msra.mxu0 %v4666
        %4677 = vmatprep.subr.mxu0 0.0
        %4678 = vmatpush1.msra.mxu0 %v4673
        %4679 = vmatprep.subr.mxu0 0.0
        %4680 = vmatpush1.msra.mxu0 0.0
        %4681 = vmatprep.subr.mxu0 0.0
        %4682 = vmatpush1.msra.mxu0 0.0
        %4683 = vmatprep.subr.mxu0 0.0
        %4684 = vmatpush1.msra.mxu0 0.0
        %4685 = vmatprep.subr.mxu0 0.0
        %4686 = vmatpush1.msra.mxu0 0.0
        %4687 = vmatprep.subr.mxu0 0.0
        %4688 = vmatpush1.msra.mxu0 0.0
        %4689 = vmatprep.subr.mxu0 0.0
        %4690 = vmatpush1.msra.mxu0 0.0
        %4691 = vmatprep.subr.mxu0 0.0
        %4692 = vmatpush1.msra.mxu0 0.0
        %4693 = vmatprep.subr.mxu0 0.0
        %4694 = vmatpush1.msra.mxu0 0.0
        %4695 = vmatprep.subr.mxu0 0.0
        %4696 = vmatpush1.msra.mxu0 0.0
        %4697 = vmatprep.subr.mxu0 0.0
        %4698 = vmatpush1.msra.mxu0 0.0
        %4699 = vmatprep.subr.mxu0 0.0
        %4700 = vmatpush1.msra.mxu0 0.0
        %4701 = vmatprep.subr.mxu0 0.0
        %4702 = vmatpush1.msra.mxu0 0.0
        %4703 = vmatprep.subr.mxu0 0.0
        %4704 = vmatpush1.msra.mxu0 0.0
        %4705 = vmatprep.subr.mxu0 0.0
        %4706 = vmatpush1.msra.mxu0 0.0
        %4707 = vmatprep.subr.mxu0 0.0
        %4708 = vmatpush1.msra.mxu0 0.0
        %4709 = vmatprep.subr.mxu0 0.0
        %4710 = vmatpush1.msra.mxu0 0.0
        %4711 = vmatprep.subr.mxu0 0.0
        %4712 = vmatpush1.msra.mxu0 0.0
        %4713 = vmatprep.subr.mxu0 0.0
        %4714 = vmatpush1.msra.mxu0 0.0
        %4715 = vmatprep.subr.mxu0 0.0
        %4716 = vmatpush1.msra.mxu0 0.0
        %4717 = vmatprep.subr.mxu0 0.0
        %4718 = vmatpush1.msra.mxu0 0.0
        %4719 = vmatprep.subr.mxu0 0.0
        %4720 = vmatpush1.msra.mxu0 0.0
        %4721 = vmatprep.subr.mxu0 0.0
        %4722 = vmatpush1.msra.mxu0 0.0
        %4723 = vmatprep.subr.mxu0 0.0
        %4724 = vmatpush1.msra.mxu0 0.0
        %4725 = vmatprep.subr.mxu0 0.0
        %4726 = vmatpush1.msra.mxu0 0.0
        %4727 = vmatprep.subr.mxu0 0.0
        %4728 = vmatpush1.msra.mxu0 0.0
        %4729 = vmatprep.subr.mxu0 0.0
        %4730 = vmatpush1.msra.mxu0 0.0
        %4731 = vmatprep.subr.mxu0 0.0
        %4732 = vmatpush1.msra.mxu0 0.0
        %4733 = vmatprep.subr.mxu0 0.0
        %4734 = vmatpush1.msra.mxu0 0.0
        %4735 = vmatprep.subr.mxu0 0.0
        %4736 = vmatpush1.msra.mxu0 0.0
        %4737 = vmatprep.subr.mxu0 0.0
        %4738 = vmatpush1.msra.mxu0 0.0
        %4739 = vmatprep.mubr.f32.mxu0 0.0
        %4740 = vmatmul.mubr.f32.gmra.mrb[0].mxu0 %v4671
        %v4741 = vpop.f32.mrb[0].mxu0
        %v4742 = vadd.f32 0.0, %v4741
        %v4743 = vpop.f32.mrb[0].mxu0
        %4744 = vdwg.mxu0
        %v4745 = vadd.f32 %v4573, %v4742
        %v4746 = vmul.f32 %v4113, %v842
        %v4748 = vsel %vm850, %v4746, 0
        %4750 = vmatprep.subr.mxu0 0.0
        %4751 = vmatpush1.xpose.msra.mxu0 %v4237
        %4752 = vmatprep.subr.mxu0 0.0
        %4753 = vmatpush1.xpose.msra.mxu0 %v4240
        %4754 = vmatprep.subr.mxu0 0.0
        %4755 = vmatpush1.xpose.msra.mxu0 0.0
        %4756 = vmatprep.subr.mxu0 0.0
        %4757 = vmatpush1.xpose.msra.mxu0 0.0
        %4758 = vmatprep.subr.mxu0 0.0
        %4759 = vmatpush1.xpose.msra.mxu0 0.0
        %4760 = vmatprep.subr.mxu0 0.0
        %4761 = vmatpush1.xpose.msra.mxu0 0.0
        %4762 = vmatprep.subr.mxu0 0.0
        %4763 = vmatpush1.xpose.msra.mxu0 0.0
        %4764 = vmatprep.subr.mxu0 0.0
        %4765 = vmatpush1.xpose.msra.mxu0 0.0
        %4766 = vmatprep.subr.mxu0 0.0
        %4767 = vmatpush1.xpose.msra.mxu0 0.0
        %4768 = vmatprep.subr.mxu0 0.0
        %4769 = vmatpush1.xpose.msra.mxu0 0.0
        %4770 = vmatprep.subr.mxu0 0.0
        %4771 = vmatpush1.xpose.msra.mxu0 0.0
        %4772 = vmatprep.subr.mxu0 0.0
        %4773 = vmatpush1.xpose.msra.mxu0 0.0
        %4774 = vmatprep.subr.mxu0 0.0
        %4775 = vmatpush1.xpose.msra.mxu0 0.0
        %4776 = vmatprep.subr.mxu0 0.0
        %4777 = vmatpush1.xpose.msra.mxu0 0.0
        %4778 = vmatprep.subr.mxu0 0.0
        %4779 = vmatpush1.xpose.msra.mxu0 0.0
        %4780 = vmatprep.subr.mxu0 0.0
        %4781 = vmatpush1.xpose.msra.mxu0 0.0
        %4782 = vmatprep.subr.mxu0 0.0
        %4783 = vmatpush1.xpose.msra.mxu0 0.0
        %4784 = vmatprep.subr.mxu0 0.0
        %4785 = vmatpush1.xpose.msra.mxu0 0.0
        %4786 = vmatprep.subr.mxu0 0.0
        %4787 = vmatpush1.xpose.msra.mxu0 0.0
        %4788 = vmatprep.subr.mxu0 0.0
        %4789 = vmatpush1.xpose.msra.mxu0 0.0
        %4790 = vmatprep.subr.mxu0 0.0
        %4791 = vmatpush1.xpose.msra.mxu0 0.0
        %4792 = vmatprep.subr.mxu0 0.0
        %4793 = vmatpush1.xpose.msra.mxu0 0.0
        %4794 = vmatprep.subr.mxu0 0.0
        %4795 = vmatpush1.xpose.msra.mxu0 0.0
        %4796 = vmatprep.subr.mxu0 0.0
        %4797 = vmatpush1.xpose.msra.mxu0 0.0
        %4798 = vmatprep.subr.mxu0 0.0
        %4799 = vmatpush1.xpose.msra.mxu0 0.0
        %4800 = vmatprep.subr.mxu0 0.0
        %4801 = vmatpush1.xpose.msra.mxu0 0.0
        %4802 = vmatprep.subr.mxu0 0.0
        %4803 = vmatpush1.xpose.msra.mxu0 0.0
        %4804 = vmatprep.subr.mxu0 0.0
        %4805 = vmatpush1.xpose.msra.mxu0 0.0
        %4806 = vmatprep.subr.mxu0 0.0
        %4807 = vmatpush1.xpose.msra.mxu0 0.0
        %4808 = vmatprep.subr.mxu0 0.0
        %4809 = vmatpush1.xpose.msra.mxu0 0.0
        %4810 = vmatprep.subr.mxu0 0.0
        %4811 = vmatpush1.xpose.msra.mxu0 0.0
        %4812 = vmatprep.subr.mxu0 0.0
        %4813 = vmatpush1.xpose.msra.mxu0 0.0
        %4814 = vmatprep.mubr.f32.mxu0 0.0
        %4815 = vmatmul.mubr.f32.gmra.mrb[0].mxu0 %v4748
        %v4816 = vpop.f32.mrb[0].mxu0
        %v4817 = vadd.f32 %v2030, %v4816
        %v4818 = vpop.f32.mrb[0].mxu0
        %4819 = vdwg.mxu0
        %v4820 = vsel %vm2111, %v4817, -inf
        %4821 = vmax.xlane.f32.xlu0 %v4820
        %v4822 = vpop.xlane.xlu0 %4821
        %v4823 = vsub.f32 %v4817, %v4822
        %v4824 = vmul.f32 %v4823, 1.442695
        %v4825 = vpow.pop %v4824
        %v4826 = vsel %vm2111, %v4825, 0.0
        %4827 = vadd.xlane.f32.xlu0 %v4826
        %v4828 = vpop.xlane.xlu0 %4827
        %v4829 = vrcp.pop %v4828
        %v4830 = vmul.f32 %v4825, %v4829
        %v4831 = vmul.f32 %v4224, %v2642
        %v4832 = vmul.f32 %v4229, %v2642
        %4835 = vrot.lane.b32.xlu0 %v4831, 96
        %v4836 = vpop.permute.xlu0 %4835
        %4837 = vrot.lane.b32.xlu0 %v4832, 96
        %v4838 = vpop.permute.xlu0 %4837
        %v4841 = vsel %vm2111, %v4830, 0
        %v4843 = vsel %vm2228, %v4838, 0
        %4845 = vmatprep.subr.mxu0 0.0
        %4846 = vmatpush1.msra.mxu0 %v4836
        %4847 = vmatprep.subr.mxu0 0.0
        %4848 = vmatpush1.msra.mxu0 %v4843
        %4849 = vmatprep.subr.mxu0 0.0
        %4850 = vmatpush1.msra.mxu0 0.0
        %4851 = vmatprep.subr.mxu0 0.0
        %4852 = vmatpush1.msra.mxu0 0.0
        %4853 = vmatprep.subr.mxu0 0.0
        %4854 = vmatpush1.msra.mxu0 0.0
        %4855 = vmatprep.subr.mxu0 0.0
        %4856 = vmatpush1.msra.mxu0 0.0
        %4857 = vmatprep.subr.mxu0 0.0
        %4858 = vmatpush1.msra.mxu0 0.0
        %4859 = vmatprep.subr.mxu0 0.0
        %4860 = vmatpush1.msra.mxu0 0.0
        %4861 = vmatprep.subr.mxu0 0.0
        %4862 = vmatpush1.msra.mxu0 0.0
        %4863 = vmatprep.subr.mxu0 0.0
        %4864 = vmatpush1.msra.mxu0 0.0
        %4865 = vmatprep.subr.mxu0 0.0
        %4866 = vmatpush1.msra.mxu0 0.0
        %4867 = vmatprep.subr.mxu0 0.0
        %4868 = vmatpush1.msra.mxu0 0.0
        %4869 = vmatprep.subr.mxu0 0.0
        %4870 = vmatpush1.msra.mxu0 0.0
        %4871 = vmatprep.subr.mxu0 0.0
        %4872 = vmatpush1.msra.mxu0 0.0
        %4873 = vmatprep.subr.mxu0 0.0
        %4874 = vmatpush1.msra.mxu0 0.0
        %4875 = vmatprep.subr.mxu0 0.0
        %4876 = vmatpush1.msra.mxu0 0.0
        %4877 = vmatprep.subr.mxu0 0.0
        %4878 = vmatpush1.msra.mxu0 0.0
        %4879 = vmatprep.subr.mxu0 0.0
        %4880 = vmatpush1.msra.mxu0 0.0
        %4881 = vmatprep.subr.mxu0 0.0
        %4882 = vmatpush1.msra.mxu0 0.0
        %4883 = vmatprep.subr.mxu0 0.0
        %4884 = vmatpush1.msra.mxu0 0.0
        %4885 = vmatprep.subr.mxu0 0.0
        %4886 = vmatpush1.msra.mxu0 0.0
        %4887 = vmatprep.subr.mxu0 0.0
        %4888 = vmatpush1.msra.mxu0 0.0
        %4889 = vmatprep.subr.mxu0 0.0
        %4890 = vmatpush1.msra.mxu0 0.0
        %4891 = vmatprep.subr.mxu0 0.0
        %4892 = vmatpush1.msra.mxu0 0.0
        %4893 = vmatprep.subr.mxu0 0.0
        %4894 = vmatpush1.msra.mxu0 0.0
        %4895 = vmatprep.subr.mxu0 0.0
        %4896 = vmatpush1.msra.mxu0 0.0
        %4897 = vmatprep.subr.mxu0 0.0
        %4898 = vmatpush1.msra.mxu0 0.0
        %4899 = vmatprep.subr.mxu0 0.0
        %4900 = vmatpush1.msra.mxu0 0.0
        %4901 = vmatprep.subr.mxu0 0.0
        %4902 = vmatpush1.msra.mxu0 0.0
        %4903 = vmatprep.subr.mxu0 0.0
        %4904 = vmatpush1.msra.mxu0 0.0
        %4905 = vmatprep.subr.mxu0 0.0
        %4906 = vmatpush1.msra.mxu0 0.0
        %4907 = vmatprep.subr.mxu0 0.0
        %4908 = vmatpush1.msra.mxu0 0.0
        %4909 = vmatprep.mubr.f32.mxu0 0.0
        %4910 = vmatmul.mubr.f32.gmra.mrb[0].mxu0 %v4841
        %v4911 = vpop.f32.mrb[0].mxu0
        %v4912 = vadd.f32 0.0, %v4911
        %v4913 = vpop.f32.mrb[0].mxu0
        %4914 = vdwg.mxu0
        %v4915 = vadd.f32 %v4745, %v4912
        %s4916 = scalar_lea.vmem %s16, 32
        %v4917 = vld [vmem:[%s4916] sm:$0xff]
        %v4918 = vld [vmem:[%s4916 + $0x8] sm:$0xff]
        %v4919 = vld [vmem:[%s4916 + $0x10] sm:$0xff]
        %v4920 = vld [vmem:[%s4916 + $0x18] sm:$0xff]
        %s4921 = scalar_lea.vmem %s17, 1
        %v4922 = vld [vmem:[%s4921] sm:$0x1]
        %v4924 = vlaneseq
        %v4925 = vshrl.u32 %v4924, 7
        %v4926 = vsub.s32 0, %v4925
        %v4927 = vrot.slane %v4922, %v4926
        %v4930 = vsel %vm850, %v4915, 0
        %v4933 = vsel %vm850, %v4917, 0
        %v4936 = vsel %vm850, %v4918, 0
        %v4939 = vsel %vm850, %v4919, 0
        %v4942 = vsel %vm850, %v4920, 0
        %4944 = vmatprep.subr.mxu0 0.0
        %4945 = vmatpush1.xpose.msra.mxu0 %v4933
        %4946 = vmatprep.subr.mxu0 0.0
        %4947 = vmatpush1.xpose.msra.mxu0 %v4936
        %4948 = vmatprep.subr.mxu0 0.0
        %4949 = vmatpush1.xpose.msra.mxu0 %v4939
        %4950 = vmatprep.subr.mxu0 0.0
        %4951 = vmatpush1.xpose.msra.mxu0 %v4942
        %4952 = vmatprep.subr.mxu0 0.0
        %4953 = vmatpush1.xpose.msra.mxu0 0.0
        %4954 = vmatprep.subr.mxu0 0.0
        %4955 = vmatpush1.xpose.msra.mxu0 0.0
        %4956 = vmatprep.subr.mxu0 0.0
        %4957 = vmatpush1.xpose.msra.mxu0 0.0
        %4958 = vmatprep.subr.mxu0 0.0
        %4959 = vmatpush1.xpose.msra.mxu0 0.0
        %4960 = vmatprep.subr.mxu0 0.0
        %4961 = vmatpush1.xpose.msra.mxu0 0.0
        %4962 = vmatprep.subr.mxu0 0.0
        %4963 = vmatpush1.xpose.msra.mxu0 0.0
        %4964 = vmatprep.subr.mxu0 0.0
        %4965 = vmatpush1.xpose.msra.mxu0 0.0
        %4966 = vmatprep.subr.mxu0 0.0
        %4967 = vmatpush1.xpose.msra.mxu0 0.0
        %4968 = vmatprep.subr.mxu0 0.0
        %4969 = vmatpush1.xpose.msra.mxu0 0.0
        %4970 = vmatprep.subr.mxu0 0.0
        %4971 = vmatpush1.xpose.msra.mxu0 0.0
        %4972 = vmatprep.subr.mxu0 0.0
        %4973 = vmatpush1.xpose.msra.mxu0 0.0
        %4974 = vmatprep.subr.mxu0 0.0
        %4975 = vmatpush1.xpose.msra.mxu0 0.0
        %4976 = vmatprep.subr.mxu0 0.0
        %4977 = vmatpush1.xpose.msra.mxu0 0.0
        %4978 = vmatprep.subr.mxu0 0.0
        %4979 = vmatpush1.xpose.msra.mxu0 0.0
        %4980 = vmatprep.subr.mxu0 0.0
        %4981 = vmatpush1.xpose.msra.mxu0 0.0
        %4982 = vmatprep.subr.mxu0 0.0
        %4983 = vmatpush1.xpose.msra.mxu0 0.0
        %4984 = vmatprep.subr.mxu0 0.0
        %4985 = vmatpush1.xpose.msra.mxu0 0.0
        %4986 = vmatprep.subr.mxu0 0.0
        %4987 = vmatpush1.xpose.msra.mxu0 0.0
        %4988 = vmatprep.subr.mxu0 0.0
        %4989 = vmatpush1.xpose.msra.mxu0 0.0
        %4990 = vmatprep.subr.mxu0 0.0
        %4991 = vmatpush1.xpose.msra.mxu0 0.0
        %4992 = vmatprep.subr.mxu0 0.0
        %4993 = vmatpush1.xpose.msra.mxu0 0.0
        %4994 = vmatprep.subr.mxu0 0.0
        %4995 = vmatpush1.xpose.msra.mxu0 0.0
        %4996 = vmatprep.subr.mxu0 0.0
        %4997 = vmatpush1.xpose.msra.mxu0 0.0
        %4998 = vmatprep.subr.mxu0 0.0
        %4999 = vmatpush1.xpose.msra.mxu0 0.0
        %5000 = vmatprep.subr.mxu0 0.0
        %5001 = vmatpush1.xpose.msra.mxu0 0.0
        %5002 = vmatprep.subr.mxu0 0.0
        %5003 = vmatpush1.xpose.msra.mxu0 0.0
        %5004 = vmatprep.subr.mxu0 0.0
        %5005 = vmatpush1.xpose.msra.mxu0 0.0
        %5006 = vmatprep.subr.mxu0 0.0
        %5007 = vmatpush1.xpose.msra.mxu0 0.0
        %5008 = vmatprep.mubr.f32.mxu0 0.0
        %5009 = vmatmul.mubr.f32.gmra.mrb[0].mxu0 %v4930
        %v5010 = vpop.f32.mrb[0].mxu0
        %v5011 = vadd.f32 %v4927, %v5010
        %v5012 = vpop.f32.mrb[0].mxu0
        %5013 = vdwg.mxu0
        %v5014 = vadd.f32 %v4017, %v5011
        %s5015 = scalar_lea.vmem %s18, 1
        %v5016 = vld [vmem:[%s5015] sm:$0x1]
        %s5017 = scalar_lea.vmem %s19, 1
        %v5018 = vld [vmem:[%s5017] sm:$0x1]
        %v5019 = vsel %vm850, %v5014, 0.0
        %5020 = vadd.xlane.f32.xlu0 %v5019
        %v5021 = vpop.xlane.xlu0 %5020
        %v5022 = vmul.f32 %v5021, %v854
        %v5023 = vsub.f32 %v5014, %v5022
        %v5024 = vmul.f32 %v5023, %v5023
        %v5025 = vsel %vm850, %v5024, 0.0
        %5026 = vadd.xlane.f32.xlu0 %v5025
        %v5027 = vpop.xlane.xlu0 %5026
        %v5028 = vmul.f32 %v5027, %v854
        %v5029 = vadd.f32 %v5028, 1e-05
        %v5030 = vrsqrt.pop %v5029
        %v5031 = vmul.f32 %v5023, %v5030
        %v5033 = vlaneseq
        %v5034 = vshrl.u32 %v5033, 7
        %v5035 = vsub.s32 0, %v5034
        %v5036 = vrot.slane %v5016, %v5035
        %v5038 = vmul.f32 %v5031, %v5036
        %v5040 = vlaneseq
        %v5041 = vshrl.u32 %v5040, 7
        %v5042 = vsub.s32 0, %v5041
        %v5043 = vrot.slane %v5018, %v5042
        %v5045 = vadd.f32 %v5038, %v5043
        %s5046 = scalar_lea.vmem %s20, 64
        %v5047 = vld [vmem:[%s5046] sm:$0xff]
        %v5048 = vld [vmem:[%s5046 + $0x8] sm:$0xff]
        %v5049 = vld [vmem:[%s5046 + $0x10] sm:$0xff]
        %v5050 = vld [vmem:[%s5046 + $0x18] sm:$0xff]
        %v5051 = vld [vmem:[%s5046 + $0x20] sm:$0xff]
        %v5052 = vld [vmem:[%s5046 + $0x28] sm:$0xff]
        %v5053 = vld [vmem:[%s5046 + $0x30] sm:$0xff]
        %v5054 = vld [vmem:[%s5046 + $0x38] sm:$0xff]
        %s5055 = scalar_lea.vmem %s21, 1
        %v5056 = vld [vmem:[%s5055] sm:$0x1]
        %v5058 = vlaneseq
        %v5059 = vshrl.u32 %v5058, 7
        %v5060 = vsub.s32 0, %v5059
        %v5061 = vrot.slane %v5056, %v5060
        %v5064 = vsel %vm850, %v5045, 0
        %v5067 = vsel %vm850, %v5047, 0
        %v5070 = vsel %vm850, %v5048, 0
        %v5073 = vsel %vm850, %v5049, 0
        %v5076 = vsel %vm850, %v5050, 0
        %v5079 = vsel %vm850, %v5051, 0
        %v5082 = vsel %vm850, %v5052, 0
        %v5085 = vsel %vm850, %v5053, 0
        %v5088 = vsel %vm850, %v5054, 0
        %5090 = vmatprep.subr.mxu0 0.0
        %5091 = vmatpush1.xpose.msra.mxu0 %v5067
        %5092 = vmatprep.subr.mxu0 0.0
        %5093 = vmatpush1.xpose.msra.mxu0 %v5070
        %5094 = vmatprep.subr.mxu0 0.0
        %5095 = vmatpush1.xpose.msra.mxu0 %v5073
        %5096 = vmatprep.subr.mxu0 0.0
        %5097 = vmatpush1.xpose.msra.mxu0 %v5076
        %5098 = vmatprep.subr.mxu0 0.0
        %5099 = vmatpush1.xpose.msra.mxu0 %v5079
        %5100 = vmatprep.subr.mxu0 0.0
        %5101 = vmatpush1.xpose.msra.mxu0 %v5082
        %5102 = vmatprep.subr.mxu0 0.0
        %5103 = vmatpush1.xpose.msra.mxu0 %v5085
        %5104 = vmatprep.subr.mxu0 0.0
        %5105 = vmatpush1.xpose.msra.mxu0 %v5088
        %5106 = vmatprep.subr.mxu0 0.0
        %5107 = vmatpush1.xpose.msra.mxu0 0.0
        %5108 = vmatprep.subr.mxu0 0.0
        %5109 = vmatpush1.xpose.msra.mxu0 0.0
        %5110 = vmatprep.subr.mxu0 0.0
        %5111 = vmatpush1.xpose.msra.mxu0 0.0
        %5112 = vmatprep.subr.mxu0 0.0
        %5113 = vmatpush1.xpose.msra.mxu0 0.0
        %5114 = vmatprep.subr.mxu0 0.0
        %5115 = vmatpush1.xpose.msra.mxu0 0.0
        %5116 = vmatprep.subr.mxu0 0.0
        %5117 = vmatpush1.xpose.msra.mxu0 0.0
        %5118 = vmatprep.subr.mxu0 0.0
        %5119 = vmatpush1.xpose.msra.mxu0 0.0
        %5120 = vmatprep.subr.mxu0 0.0
        %5121 = vmatpush1.xpose.msra.mxu0 0.0
        %5122 = vmatprep.subr.mxu0 0.0
        %5123 = vmatpush1.xpose.msra.mxu0 0.0
        %5124 = vmatprep.subr.mxu0 0.0
        %5125 = vmatpush1.xpose.msra.mxu0 0.0
        %5126 = vmatprep.subr.mxu0 0.0
        %5127 = vmatpush1.xpose.msra.mxu0 0.0
        %5128 = vmatprep.subr.mxu0 0.0
        %5129 = vmatpush1.xpose.msra.mxu0 0.0
        %5130 = vmatprep.subr.mxu0 0.0
        %5131 = vmatpush1.xpose.msra.mxu0 0.0
        %5132 = vmatprep.subr.mxu0 0.0
        %5133 = vmatpush1.xpose.msra.mxu0 0.0
        %5134 = vmatprep.subr.mxu0 0.0
        %5135 = vmatpush1.xpose.msra.mxu0 0.0
        %5136 = vmatprep.subr.mxu0 0.0
        %5137 = vmatpush1.xpose.msra.mxu0 0.0
        %5138 = vmatprep.subr.mxu0 0.0
        %5139 = vmatpush1.xpose.msra.mxu0 0.0
        %5140 = vmatprep.subr.mxu0 0.0
        %5141 = vmatpush1.xpose.msra.mxu0 0.0
        %5142 = vmatprep.subr.mxu0 0.0
        %5143 = vmatpush1.xpose.msra.mxu0 0.0
        %5144 = vmatprep.subr.mxu0 0.0
        %5145 = vmatpush1.xpose.msra.mxu0 0.0
        %5146 = vmatprep.subr.mxu0 0.0
        %5147 = vmatpush1.xpose.msra.mxu0 0.0
        %5148 = vmatprep.subr.mxu0 0.0
        %5149 = vmatpush1.xpose.msra.mxu0 0.0
        %5150 = vmatprep.subr.mxu0 0.0
        %5151 = vmatpush1.xpose.msra.mxu0 0.0
        %5152 = vmatprep.subr.mxu0 0.0
        %5153 = vmatpush1.xpose.msra.mxu0 0.0
        %5154 = vmatprep.mubr.f32.mxu0 0.0
        %5155 = vmatmul.mubr.f32.gmra.mrb[0].mxu0 %v5064
        %v5156 = vpop.f32.mrb[0].mxu0
        %v5157 = vadd.f32 %v5061, %v5156
        %v5158 = vpop.f32.mrb[0].mxu0
        %5159 = vdwg.mxu0
        %v5160 = vmul.f32 %v5157, 0.5
        %v5161 = vmul.f32 %v5157, 0.70710677
        %v5162 = verf.f32.pop %v5161
        %v5163 = vadd.f32 %v5162, 1.0
        %v5164 = vmul.f32 %v5160, %v5163
        %s5165 = scalar_lea.vmem %s22, 32
        %v5166 = vld [vmem:[%s5165] sm:$0xff]
        %v5167 = vld [vmem:[%s5165 + $0x8] sm:$0xff]
        %v5168 = vld [vmem:[%s5165 + $0x10] sm:$0xff]
        %v5169 = vld [vmem:[%s5165 + $0x18] sm:$0xff]
        %s5170 = scalar_lea.vmem %s23, 1
        %v5171 = vld [vmem:[%s5170] sm:$0x1]
        %v5173 = vlaneseq
        %v5174 = vshrl.u32 %v5173, 7
        %v5175 = vsub.s32 0, %v5174
        %v5176 = vrot.slane %v5171, %v5175
        %v5179 = vsel %vm2983, %v5164, 0
        %v5182 = vsel %vm2983, %v5166, 0
        %v5185 = vsel %vm2983, %v5167, 0
        %v5188 = vsel %vm2983, %v5168, 0
        %v5191 = vsel %vm2983, %v5169, 0
        %5193 = vmatprep.subr.mxu0 0.0
        %5194 = vmatpush1.xpose.msra.mxu0 %v5182
        %5195 = vmatprep.subr.mxu0 0.0
        %5196 = vmatpush1.xpose.msra.mxu0 %v5185
        %5197 = vmatprep.subr.mxu0 0.0
        %5198 = vmatpush1.xpose.msra.mxu0 %v5188
        %5199 = vmatprep.subr.mxu0 0.0
        %5200 = vmatpush1.xpose.msra.mxu0 %v5191
        %5201 = vmatprep.subr.mxu0 0.0
        %5202 = vmatpush1.xpose.msra.mxu0 0.0
        %5203 = vmatprep.subr.mxu0 0.0
        %5204 = vmatpush1.xpose.msra.mxu0 0.0
        %5205 = vmatprep.subr.mxu0 0.0
        %5206 = vmatpush1.xpose.msra.mxu0 0.0
        %5207 = vmatprep.subr.mxu0 0.0
        %5208 = vmatpush1.xpose.msra.mxu0 0.0
        %5209 = vmatprep.subr.mxu0 0.0
        %5210 = vmatpush1.xpose.msra.mxu0 0.0
        %5211 = vmatprep.subr.mxu0 0.0
        %5212 = vmatpush1.xpose.msra.mxu0 0.0
        %5213 = vmatprep.subr.mxu0 0.0
        %5214 = vmatpush1.xpose.msra.mxu0 0.0
        %5215 = vmatprep.subr.mxu0 0.0
        %5216 = vmatpush1.xpose.msra.mxu0 0.0
        %5217 = vmatprep.subr.mxu0 0.0
        %5218 = vmatpush1.xpose.msra.mxu0 0.0
        %5219 = vmatprep.subr.mxu0 0.0
        %5220 = vmatpush1.xpose.msra.mxu0 0.0
        %5221 = vmatprep.subr.mxu0 0.0
        %5222 = vmatpush1.xpose.msra.mxu0 0.0
        %5223 = vmatprep.subr.mxu0 0.0
        %5224 = vmatpush1.xpose.msra.mxu0 0.0
        %5225 = vmatprep.subr.mxu0 0.0
        %5226 = vmatpush1.xpose.msra.mxu0 0.0
        %5227 = vmatprep.subr.mxu0 0.0
        %5228 = vmatpush1.xpose.msra.mxu0 0.0
        %5229 = vmatprep.subr.mxu0 0.0
        %5230 = vmatpush1.xpose.msra.mxu0 0.0
        %5231 = vmatprep.subr.mxu0 0.0
        %5232 = vmatpush1.xpose.msra.mxu0 0.0
        %5233 = vmatprep.subr.mxu0 0.0
        %5234 = vmatpush1.xpose.msra.mxu0 0.0
        %5235 = vmatprep.subr.mxu0 0.0
        %5236 = vmatpush1.xpose.msra.mxu0 0.0
        %5237 = vmatprep.subr.mxu0 0.0
        %5238 = vmatpush1.xpose.msra.mxu0 0.0
        %5239 = vmatprep.subr.mxu0 0.0
        %5240 = vmatpush1.xpose.msra.mxu0 0.0
        %5241 = vmatprep.subr.mxu0 0.0
        %5242 = vmatpush1.xpose.msra.mxu0 0.0
        %5243 = vmatprep.subr.mxu0 0.0
        %5244 = vmatpush1.xpose.msra.mxu0 0.0
        %5245 = vmatprep.subr.mxu0 0.0
        %5246 = vmatpush1.xpose.msra.mxu0 0.0
        %5247 = vmatprep.subr.mxu0 0.0
        %5248 = vmatpush1.xpose.msra.mxu0 0.0
        %5249 = vmatprep.subr.mxu0 0.0
        %5250 = vmatpush1.xpose.msra.mxu0 0.0
        %5251 = vmatprep.subr.mxu0 0.0
        %5252 = vmatpush1.xpose.msra.mxu0 0.0
        %5253 = vmatprep.subr.mxu0 0.0
        %5254 = vmatpush1.xpose.msra.mxu0 0.0
        %5255 = vmatprep.subr.mxu0 0.0
        %5256 = vmatpush1.xpose.msra.mxu0 0.0
        %5257 = vmatprep.mubr.f32.mxu0 0.0
        %5258 = vmatmul.mubr.f32.gmra.mrb[0].mxu0 %v5179
        %v5259 = vpop.f32.mrb[0].mxu0
        %v5260 = vadd.f32 %v5176, %v5259
        %v5261 = vpop.f32.mrb[0].mxu0
        %5262 = vdwg.mxu0
        %v5263 = vadd.f32 %v5045, %v5260
        %s5264 = scalar_lea.vmem %s24, 1
        %v5265 = vld [vmem:[%s5264] sm:$0x1]
        %s5266 = scalar_lea.vmem %s25, 1
        %v5267 = vld [vmem:[%s5266] sm:$0x1]
        %v5268 = vsel %vm850, %v5263, 0.0
        %5269 = vadd.xlane.f32.xlu0 %v5268
        %v5270 = vpop.xlane.xlu0 %5269
        %v5271 = vmul.f32 %v5270, %v854
        %v5272 = vsub.f32 %v5263, %v5271
        %v5273 = vmul.f32 %v5272, %v5272
        %v5274 = vsel %vm850, %v5273, 0.0
        %5275 = vadd.xlane.f32.xlu0 %v5274
        %v5276 = vpop.xlane.xlu0 %5275
        %v5277 = vmul.f32 %v5276, %v854
        %v5278 = vadd.f32 %v5277, 1e-05
        %v5279 = vrsqrt.pop %v5278
        %v5280 = vmul.f32 %v5272, %v5279
        %v5282 = vlaneseq
        %v5283 = vshrl.u32 %v5282, 7
        %v5284 = vsub.s32 0, %v5283
        %v5285 = vrot.slane %v5265, %v5284
        %v5287 = vmul.f32 %v5280, %v5285
        %v5289 = vlaneseq
        %v5290 = vshrl.u32 %v5289, 7
        %v5291 = vsub.s32 0, %v5290
        %v5292 = vrot.slane %v5267, %v5291
        %v5294 = vadd.f32 %v5287, %v5292
        %5295 = vst.msk [vmem:[%s808] sm:$0xff] %vm850, %v5294
        %s5296 = sand.u32 %s609, 1
        %s5297 = scalar_lea.sflag [#allocation3], %s5296
        %s5298 = sand.u32 %s609, 1
        %s5299 = smul.addr %s5298, 8
        %s5300 = scalar_lea.vmem [#allocation2], %s5299
        // Predicated region
        $region125: #{bart_decoder_forward.1} parent=123 // pred_check
          %p5301 = pneg %p619
        $region126: #{bart_decoder_forward.1} parent=123 // pred_check_branch
          %5303 = sbr.rel (%p5301) target = $region128
        $region127: #{bart_decoder_forward.1} parent=123 // pred_region
          %s5305 = ssub.s32 128, 128
          %5306 = vsyncadd %s5297, %s5305
          %s5307 = smul.addr %s40, 128
          %s5308 = scalar_lea.hbm %s26, %s5307
          %s5310 = sshll.u32 %s5300, 4
          %s5311 = int_to_ptr.vmem [resolvable:$true] %s5310
          %5313 = dma.vmem_to_hbm [thread:$0]  %s5311, 128, %s5308, %s5297
        $region128: #{bart_decoder_forward.1} parent=123 // pred_fallthru
          _
      $region124: #{bart_decoder_forward.1} parent=5 // pred_fallthru
        _
      %p5314 = scmp.le.s32.totalorder 2, %s35
      // Predicated region
      $region129: #{bart_decoder_forward.1} parent=5 // pred_check
        %p5315 = pneg %p5314
      $region130: #{bart_decoder_forward.1} parent=5 // pred_check_branch
        %5317 = sbr.rel (%p5315) target = $region132
      $region131: #{bart_decoder_forward.1} parent=5 // pred_region
        %s5318 = ssub.s32 %s35, 2
        // Predicated region
        $region133: #{bart_decoder_forward.1} parent=131 // pred_check
          %p5319 = pneg %p625
        $region134: #{bart_decoder_forward.1} parent=131 // pred_check_branch
          %5321 = sbr.rel (%p5319) target = $region136
        $region135: #{bart_decoder_forward.1} parent=131 // pred_region
          %s5322 = sand.u32 %s610, 1
          %s5323 = scalar_lea.sflag [#allocation3], %s5322
          %s5324 = sand.u32 %s610, 1
          %s5325 = smul.addr %s5324, 8
          %s5326 = scalar_lea.vmem [#allocation2], %s5325
          %5327 = dma.done %s5323, 128
        $region136: #{bart_decoder_forward.1} parent=131 // pred_fallthru
          _
      $region132: #{bart_decoder_forward.1} parent=5 // pred_fallthru
        _
    $region6: #{bart_decoder_forward.1} parent=1 // loop_footer
      %s39 = sadd.s32 1, %s35
    $region7: #{bart_decoder_forward.1} parent=1 // loop_footer_branch
      %34 = sbr.rel target = $region3
    $region8: #{bart_decoder_forward.1} parent=1 // loop_exit
      _
    %5328 = vsyncpa [#allocation3], 1
    %s5329 = scalar_lea.sflag [#allocation3], 1
    %5330 = vsyncpa %s5329, 1

</llo_original>
